<compile_context>
chip_gen: v7x
topology: tpu7x:2x2x1
jax: 0.10.0
libtpu: 0.0.40
codegen_flags: <defaults>
</compile_context>

<pallas_src>
import functools

import jax
import jax.numpy as jnp
import numpy as np
from jax.experimental import pallas as pl
from jax.experimental.pallas import tpu as pltpu

NUM_GROUPS = 8
GN_EPS = 1e-5
LRELU_SLOPE = 0.01  # PyTorch nn.LeakyReLU default negative_slope
_TAPS = tuple((kh, kw) for kh in range(3) for kw in range(3))


# --------------------------------------------------------------------------
# kernel helpers
# --------------------------------------------------------------------------
def _gn_scale_shift(acc, m_ref, g_ref, b_ref, stacked):
    """GroupNorm(8) folded to a per-channel affine: returns (scale, shift), (1, C).

    acc is an f32 tile whose columns fold to channels through m_ref:
      * column layout: acc (H*W, C),   m_ref (C, C)      group-mean matrix
      * wide   layout: acc (H, W*C),   m_ref (W*C, C)     fold+group-mean matrix
    Single pass statistics (E[x^2] - mean^2), all in f32.
    """
    s1 = jnp.sum(acc, axis=0, keepdims=True)
    s2 = jnp.sum(acc * acc, axis=0, keepdims=True)
    if stacked:
        stats = jnp.dot(jnp.concatenate([s1, s2], axis=0), m_ref[...],
                        preferred_element_type=jnp.float32)      # (2, C)
        mean, ex2 = stats[0:1], stats[1:2]
    else:
        mean = jnp.dot(s1, m_ref[...], preferred_element_type=jnp.float32)
        ex2 = jnp.dot(s2, m_ref[...], preferred_element_type=jnp.float32)
    var = ex2 - mean * mean
    scale = g_ref[...] * jax.lax.rsqrt(var + GN_EPS)
    shift = b_ref[...] - mean * scale
    return scale, shift


# --------------------------------------------------------------------------
# kernel body
# --------------------------------------------------------------------------
def _double_conv_kernel(*refs, H, W, NB, NSLOT, lane_dense):
    if lane_dense:
        (x_ref, w1_ref, m1_ref, g1_ref, b1_ref,
         w2_ref, mf2_ref, rep2_ref, g2_ref, b2_ref,
         o_ref, mid_ref, patch1_ref, patch2_ref) = refs
    else:
        (x_ref, w1_ref, m1_ref, g1_ref, b1_ref,
         w2_ref, m2_ref, g2_ref, b2_ref,
         o_ref, mid_ref, patch1_ref, patch2_ref) = refs

    cin = w1_ref.shape[0] // 9
    cmid = w1_ref.shape[1]
    cout = w2_ref.shape[1]

    # Zero only the 1-pixel halo ring of the conv2 staging scratch (bf16); the
    # interior is fully rewritten for every sample below.  Done every invocation
    # (not just program_id==0) so the kernel stays megacore-safe.
    mid_ref[0:1, :, :] = jnp.zeros((1, W + 2, cmid), jnp.bfloat16)
    mid_ref[H + 1:H + 2, :, :] = jnp.zeros((1, W + 2, cmid), jnp.bfloat16)
    mid_ref[:, 0:1, :] = jnp.zeros((H + 2, 1, cmid), jnp.bfloat16)
    mid_ref[:, W + 1:W + 2, :] = jnp.zeros((H + 2, 1, cmid), jnp.bfloat16)

    for s in range(NB):                                  # unrolled; NB is small
        # Double-buffered patch slots: sample s+1's patch build can overlap
        # sample s's conv matmul (no WAR hazard on the patch scratch).
        p1 = patch1_ref if NSLOT == 1 else patch1_ref.at[s % NSLOT]
        p2 = patch2_ref if NSLOT == 1 else patch2_ref.at[s % NSLOT]

        # ---- conv1: im2col taps straight from the pre-padded bf16 input ----
        for t, (kh, kw) in enumerate(_TAPS):
            p1[:, t * cin:(t + 1) * cin] = (
                x_ref[s, kh:kh + H, kw:kw + W, :].reshape(H * W, cin))
        acc1 = jnp.dot(p1[...], w1_ref[...],
                       preferred_element_type=jnp.float32)       # (H*W, cmid) f32

        scale1, shift1 = _gn_scale_shift(acc1, m1_ref, g1_ref, b1_ref, lane_dense)
        y1 = acc1 * scale1 + shift1
        act1 = jnp.where(y1 > 0.0, y1, LRELU_SLOPE * y1)
        mid_ref[1:H + 1, 1:W + 1, :] = act1.reshape(H, W, cmid).astype(jnp.bfloat16)

        # ---- conv2: im2col from the bf16 halo staging, one bf16 MXU matmul ----
        for t, (kh, kw) in enumerate(_TAPS):
            p2[:, t * cmid:(t + 1) * cmid] = (
                mid_ref[kh:kh + H, kw:kw + W, :].reshape(H * W, cmid))
        acc2 = jnp.dot(p2[...], w2_ref[...],
                       preferred_element_type=jnp.float32)       # (H*W, cout) f32

        if lane_dense:
            # Stats + normalize-apply + LeakyReLU in the lane-dense (H, W*cout)
            # layout the output store needs anyway (full-lane VPU work).
            acc2w = acc2.reshape(H, W * cout)
            scale, shift = _gn_scale_shift(acc2w, mf2_ref, g2_ref, b2_ref, True)
            ssw = jnp.dot(jnp.concatenate([scale, shift], axis=0), rep2_ref[...],
                          preferred_element_type=jnp.float32)    # (2, W*cout)
            y2 = acc2w * ssw[0:1] + ssw[1:2]
            o_ref[s] = jnp.where(y2 > 0.0, y2, LRELU_SLOPE * y2)
        else:
            scale2, shift2 = _gn_scale_shift(acc2, m2_ref, g2_ref, b2_ref, False)
            y2 = acc2 * scale2 + shift2
            act2 = jnp.where(y2 > 0.0, y2, LRELU_SLOPE * y2)
            o_ref[s] = act2.reshape(H, W, cout)


# --------------------------------------------------------------------------
# wrapper-side constants
# --------------------------------------------------------------------------
def _group_matrix(C, HW):
    gs = C // NUM_GROUPS
    grp = np.arange(C) // gs
    m = (grp[:, None] == grp[None, :]).astype(np.float32) / float(HW * gs)
    return jnp.asarray(m)


def _fold_group_matrix(C, W, HW):
    """(W*C, C): folds a (1, W*C) wide column-sum to per-group means over channels."""
    gs = C // NUM_GROUPS
    grp = np.arange(C) // gs
    same = (grp[:, None] == grp[None, :]).astype(np.float32) / float(HW * gs)
    return jnp.asarray(np.tile(same, (W, 1)))


def _replicate_matrix(C, W):
    """(C, W*C): replicates a (1, C) per-channel vector to the wide (1, W*C) layout."""
    r = np.zeros((C, W * C), np.float32)
    for w in range(W):
        r[np.arange(C), w * C + np.arange(C)] = 1.0
    return jnp.asarray(r)


_VMEM_CAP = None


def _vmem_capacity_bytes():
    global _VMEM_CAP
    if _VMEM_CAP is None:
        try:
            _VMEM_CAP = int(pltpu.get_tpu_info().vmem_capacity_bytes)
        except Exception:
            _VMEM_CAP = 64 * 2 ** 20           # conservative (v7x per-core VMEM)
    return _VMEM_CAP


def _vmem_limit_bytes(NB, H, W, Cin, Cmid, Cout, NSLOT, lane_dense):
    f32, bf16 = 4, 2
    blocks = (NB * (H + 2) * (W + 2) * Cin * bf16        # padded bf16 input block
              + NB * H * W * Cout * f32                  # output block
              + 9 * Cin * Cmid * bf16 + 9 * Cmid * Cout * bf16
              + Cmid * Cmid * f32
              + 2 * (Cmid + Cout) * f32)
    blocks += (2 * W * Cout * Cout * f32) if lane_dense else (Cout * Cout * f32)
    scratch = ((H + 2) * (W + 2) * Cmid * bf16
               + NSLOT * H * W * 9 * (Cin + Cmid) * bf16)
    est = 2 * blocks + scratch                           # blocks are double-buffered
    # generation-aware cap (~48 MiB on v7x, ~96-100 MiB on v5e/v6e), generous
    # multiplier for layout padding + compiler temporaries.
    cap = min(int(0.75 * _vmem_capacity_bytes()), 100 * 2 ** 20)
    return int(min(cap, max(32 * 2 ** 20, 4 * est)))


# --------------------------------------------------------------------------
# pallas_call wrapper
# --------------------------------------------------------------------------
@functools.partial(jax.jit, static_argnames=("samples_per_step", "lane_dense_out"))
def _double_conv_impl(x_nchw, w1, g1, b1, w2, g2, b2, *, samples_per_step,
                      lane_dense_out):
    N, Cin, H, W = x_nchw.shape
    Cmid = w1.shape[-1]
    Cout = w2.shape[-1]
    assert Cmid % NUM_GROUPS == 0 and Cout % NUM_GROUPS == 0
    NB = samples_per_step
    assert N % NB == 0
    NSLOT = 2 if NB > 1 else 1

    # NHWC, bf16, SAME-conv halo pre-padded in HBM: conv1 taps are read directly
    # from the input block (no in-kernel staging / halo zeroing / interior copy).
    x_pad = jnp.pad(jnp.transpose(x_nchw, (0, 2, 3, 1)).astype(jnp.bfloat16),
                    ((0, 0), (1, 1), (1, 1), (0, 0)))

    # im2col weight layout: rows ordered (kh, kw, cin); bf16 MXU operands.
    w1r = w1.reshape(9 * Cin, Cmid).astype(jnp.bfloat16)
    w2r = w2.reshape(9 * Cmid, Cout).astype(jnp.bfloat16)

    m1 = _group_matrix(Cmid, H * W)
    g1_2d = g1.reshape(1, Cmid).astype(jnp.float32)
    b1_2d = b1.reshape(1, Cmid).astype(jnp.float32)
    g2_2d = g2.reshape(1, Cout).astype(jnp.float32)
    b2_2d = b2.reshape(1, Cout).astype(jnp.float32)

    kernel = functools.partial(_double_conv_kernel, H=H, W=W, NB=NB,
                               NSLOT=NSLOT, lane_dense=lane_dense_out)

    in_specs = [
        pl.BlockSpec((NB, H + 2, W + 2, Cin), lambda n: (n, 0, 0, 0)),
        pl.BlockSpec((9 * Cin, Cmid), lambda n: (0, 0)),
        pl.BlockSpec((Cmid, Cmid), lambda n: (0, 0)),
        pl.BlockSpec((1, Cmid), lambda n: (0, 0)),
        pl.BlockSpec((1, Cmid), lambda n: (0, 0)),
        pl.BlockSpec((9 * Cmid, Cout), lambda n: (0, 0)),
    ]
    operands = [x_pad, w1r, m1, g1_2d, b1_2d, w2r]

    if lane_dense_out:
        mf2 = _fold_group_matrix(Cout, W, H * W)
        rep2 = _replicate_matrix(Cout, W)
        in_specs += [pl.BlockSpec((W * Cout, Cout), lambda n: (0, 0)),
                     pl.BlockSpec((Cout, W * Cout), lambda n: (0, 0))]
        operands += [mf2, rep2]
        out_shape = jax.ShapeDtypeStruct((N, H, W * Cout), jnp.float32)
        out_spec = pl.BlockSpec((NB, H, W * Cout), lambda n: (n, 0, 0))
    else:
        m2 = _group_matrix(Cout, H * W)
        in_specs += [pl.BlockSpec((Cout, Cout), lambda n: (0, 0))]
        operands += [m2]
        out_shape = jax.ShapeDtypeStruct((N, H, W, Cout), jnp.float32)
        out_spec = pl.BlockSpec((NB, H, W, Cout), lambda n: (n, 0, 0, 0))

    in_specs += [pl.BlockSpec((1, Cout), lambda n: (0, 0)),
                 pl.BlockSpec((1, Cout), lambda n: (0, 0))]
    operands += [g2_2d, b2_2d]

    patch1_shape = (H * W, 9 * Cin) if NSLOT == 1 else (NSLOT, H * W, 9 * Cin)
    patch2_shape = (H * W, 9 * Cmid) if NSLOT == 1 else (NSLOT, H * W, 9 * Cmid)

    out = pl.pallas_call(
        kernel,
        out_shape=out_shape,
        grid_spec=pltpu.PrefetchScalarGridSpec(
            num_scalar_prefetch=0,
            grid=(N // NB,),
            in_specs=in_specs,
            out_specs=out_spec,
            scratch_shapes=[
                pltpu.VMEM((H + 2, W + 2, Cmid), jnp.bfloat16),  # conv2 halo staging
                pltpu.VMEM(patch1_shape, jnp.bfloat16),          # conv1 im2col patch
                pltpu.VMEM(patch2_shape, jnp.bfloat16),          # conv2 im2col patch
            ],
        ),
        compiler_params=pltpu.CompilerParams(
            dimension_semantics=("parallel",),
            vmem_limit_bytes=_vmem_limit_bytes(NB, H, W, Cin, Cmid, Cout,
                                               NSLOT, lane_dense_out),
        ),
    )(*operands)

    if lane_dense_out:
        out = out.reshape(N, H, W, Cout)
    # TODO(synk): the NCHW<->NHWC transposes stay as single XLA ops outside the
    # kernel; folding them in would need an in-kernel (C, H*W) transposed store.
    return jnp.transpose(out, (0, 3, 1, 2))              # back to NCHW


def _default_samples_per_step(N):
    # Keep >= 2 grid steps when possible so both v7x TensorCores get work; for
    # bigger batches use modest blocks to amortize per-step overhead on
    # single-TC chips (v5e/v6e).
    if N <= 2:
        return 1
    for nb in (4, 2):
        if N % nb == 0 and N // nb >= 2:
            return nb
    return 1


_LAYOUT_CACHE = {}


def double_conv(x_nchw, w1, g1, b1, w2, g2, b2, *, samples_per_step=None):
    """DoubleConv forward.  x_nchw: (N, Cin, H, W) f32 -> (N, Cout, H, W) f32.

    w1: (3, 3, Cin, Cmid) HWIO, w2: (3, 3, Cmid, Cout) HWIO (bias-free convs);
    g*/b*: per-channel GroupNorm affine parameters.
    """
    N = x_nchw.shape[0]
    NB = samples_per_step or _default_samples_per_step(N)
    key = (x_nchw.shape, w1.shape, w2.shape, NB)
    lane_dense = _LAYOUT_CACHE.get(key)
    if lane_dense is None:
        # One-time probe per shape config: prefer the lane-dense GN/store path,
        # fall back to the NHWC-blocked store (+ column-layout GN for conv2) if
        # this Mosaic build rejects the in-kernel (H*W, C) -> (H, W*C) relayout.
        try:
            out = _double_conv_impl(x_nchw, w1, g1, b1, w2, g2, b2,
                                    samples_per_step=NB, lane_dense_out=True)
            jax.block_until_ready(out)
            _LAYOUT_CACHE[key] = True
            return out
        except Exception:
            _LAYOUT_CACHE[key] = False
            lane_dense = False
    return _double_conv_impl(x_nchw, w1, g1, b1, w2, g2, b2,
                             samples_per_step=NB, lane_dense_out=lane_dense)


# --------------------------------------------------------------------------
# pure-JAX reference (f32 everywhere) for the correctness check
# --------------------------------------------------------------------------
def _ref_double_conv(x_nchw, w1, g1, b1, w2, g2, b2):
    x = jnp.transpose(x_nchw, (0, 2, 3, 1))

    def conv(x, w):
        return jax.lax.conv_general_dilated(
            x, w, (1, 1), "SAME", dimension_numbers=("NHWC", "HWIO", "NHWC"))

    def gn(x, gamma, beta):
        N, H, W, C = x.shape
        xg = x.reshape(N, H * W, NUM_GROUPS, C // NUM_GROUPS)
        mean = xg.mean(axis=(1, 3), keepdims=True)
        var = ((xg - mean) ** 2).mean(axis=(1, 3), keepdims=True)
        xn = ((xg - mean) / jnp.sqrt(var + GN_EPS)).reshape(N, H, W, C)
        return xn * gamma.reshape(1, 1, 1, C) + beta.reshape(1, 1, 1, C)

    def lrelu(y):
        return jnp.where(y > 0, y, LRELU_SLOPE * y)

    y = lrelu(gn(conv(x, w1), g1, b1))
    y = lrelu(gn(conv(y, w2), g2, b2))
    return jnp.transpose(y, (0, 3, 1, 2))


if __name__ == "__main__":
    N, Cin, H, W = 2, 4, 16, 16
    Cmid, Cout = 16, 16  # GroupNorm(8) requires multiples of 8

    key = jax.random.PRNGKey(0)
    kx, k1, k2 = jax.random.split(key, 3)

    x = jax.random.normal(kx, (N, Cin, H, W), jnp.float32)
    # Conv weights (HWIO), kaiming-ish scale; GN affine at PyTorch defaults.
    w1 = jax.random.normal(k1, (3, 3, Cin, Cmid), jnp.float32) * (2.0 / (9 * Cin)) ** 0.5
    w2 = jax.random.normal(k2, (3, 3, Cmid, Cout), jnp.float32) * (2.0 / (9 * Cmid)) ** 0.5
    g1 = jnp.ones((Cmid,), jnp.float32)
    b1 = jnp.zeros((Cmid,), jnp.float32)
    g2 = jnp.ones((Cout,), jnp.float32)
    b2 = jnp.zeros((Cout,), jnp.float32)

    out = jax.block_until_ready(double_conv(x, w1, g1, b1, w2, g2, b2))
    ref = jax.block_until_ready(_ref_double_conv(x, w1, g1, b1, w2, g2, b2))

    assert out.shape == (N, Cout, H, W), out.shape
    # bf16 MXU/input operands vs. f32 reference; outputs are GroupNorm-normalized
    # (~unit scale), so a 5e-2 absolute bound is a comfortable margin.
    max_err = float(jnp.max(jnp.abs(out - ref)))
    assert max_err < 5e-2, max_err
    print("KERNEL_OK")
</pallas_src>

<mosaic_0001>
module attributes {stable_mosaic.version = 11 : i64} {
  func.func @_double_conv_kernel(%arg0: i32, %arg1: memref<1x18x18x4xbf16, #tpu.memory_space<vmem>>, %arg2: memref<36x16xbf16, #tpu.memory_space<vmem>>, %arg3: memref<16x16xf32, #tpu.memory_space<vmem>>, %arg4: memref<1x16xf32, #tpu.memory_space<vmem>>, %arg5: memref<1x16xf32, #tpu.memory_space<vmem>>, %arg6: memref<144x16xbf16, #tpu.memory_space<vmem>>, %arg7: memref<256x16xf32, #tpu.memory_space<vmem>>, %arg8: memref<16x256xf32, #tpu.memory_space<vmem>>, %arg9: memref<1x16xf32, #tpu.memory_space<vmem>>, %arg10: memref<1x16xf32, #tpu.memory_space<vmem>>, %arg11: memref<1x16x256xf32, #tpu.memory_space<vmem>>, %arg12: memref<18x18x16xbf16, #tpu.memory_space<vmem>>, %arg13: memref<256x36xbf16, #tpu.memory_space<vmem>>, %arg14: memref<256x144xbf16, #tpu.memory_space<vmem>>) attributes {dimension_semantics = [#tpu.dimension_semantics<parallel>], iteration_bounds = array<i64: 2>, scalar_prefetch = 0 : i64, scratch_operands = 3 : i64, tpu.core_type = #tpu.core_type<tc>, window_params = [{transform_indices = @transform_0, window_bounds = array<i64: 1, 18, 18, 4>}, {pipeline_mode = #tpu.pipeline_mode<synchronous>, transform_indices = @transform_1, window_bounds = array<i64: 36, 16>}, {pipeline_mode = #tpu.pipeline_mode<synchronous>, transform_indices = @transform_2, window_bounds = array<i64: 16, 16>}, {pipeline_mode = #tpu.pipeline_mode<synchronous>, transform_indices = @transform_3, window_bounds = array<i64: 1, 16>}, {pipeline_mode = #tpu.pipeline_mode<synchronous>, transform_indices = @transform_4, window_bounds = array<i64: 1, 16>}, {pipeline_mode = #tpu.pipeline_mode<synchronous>, transform_indices = @transform_5, window_bounds = array<i64: 144, 16>}, {pipeline_mode = #tpu.pipeline_mode<synchronous>, transform_indices = @transform_6, window_bounds = array<i64: 256, 16>}, {pipeline_mode = #tpu.pipeline_mode<synchronous>, transform_indices = @transform_7, window_bounds = array<i64: 16, 256>}, {pipeline_mode = #tpu.pipeline_mode<synchronous>, transform_indices = @transform_8, window_bounds = array<i64: 1, 16>}, {pipeline_mode = #tpu.pipeline_mode<synchronous>, transform_indices = @transform_9, window_bounds = array<i64: 1, 16>}, {transform_indices = @transform_10, window_bounds = array<i64: 1, 16, 256>}]} {
    %cst = arith.constant 0.000000e+00 : bf16
    %0 = vector.broadcast %cst : bf16 to vector<1x18x16xbf16>
    %c0 = arith.constant 0 : index
    %c0_0 = arith.constant 0 : index
    %c0_1 = arith.constant 0 : index
    %1 = vector.load %arg12[%c0, %c0_0, %c0_1] : memref<18x18x16xbf16, #tpu.memory_space<vmem>>, vector<1x18x16xbf16>
    tpu.vector_store %arg12[%c0, %c0_0, %c0_1], %0 {strides = array<i32>} : memref<18x18x16xbf16, #tpu.memory_space<vmem>>, vector<1x18x16xbf16>,
    %cst_2 = arith.constant 0.000000e+00 : bf16
    %2 = vector.broadcast %cst_2 : bf16 to vector<1x18x16xbf16>
    %c17 = arith.constant 17 : index
    %c0_3 = arith.constant 0 : index
    %c0_4 = arith.constant 0 : index
    %3 = vector.load %arg12[%c17, %c0_3, %c0_4] : memref<18x18x16xbf16, #tpu.memory_space<vmem>>, vector<1x18x16xbf16>
    tpu.vector_store %arg12[%c17, %c0_3, %c0_4], %2 {strides = array<i32>} : memref<18x18x16xbf16, #tpu.memory_space<vmem>>, vector<1x18x16xbf16>,
    %cst_5 = arith.constant 0.000000e+00 : bf16
    %4 = vector.broadcast %cst_5 : bf16 to vector<18x1x16xbf16>
    %c0_6 = arith.constant 0 : index
    %c0_7 = arith.constant 0 : index
    %c0_8 = arith.constant 0 : index
    %5 = vector.load %arg12[%c0_6, %c0_7, %c0_8] : memref<18x18x16xbf16, #tpu.memory_space<vmem>>, vector<18x1x16xbf16>
    tpu.vector_store %arg12[%c0_6, %c0_7, %c0_8], %4 {strides = array<i32>} : memref<18x18x16xbf16, #tpu.memory_space<vmem>>, vector<18x1x16xbf16>,
    %cst_9 = arith.constant 0.000000e+00 : bf16
    %6 = vector.broadcast %cst_9 : bf16 to vector<18x1x16xbf16>
    %c0_10 = arith.constant 0 : index
    %c17_11 = arith.constant 17 : index
    %c0_12 = arith.constant 0 : index
    %7 = vector.load %arg12[%c0_10, %c17_11, %c0_12] : memref<18x18x16xbf16, #tpu.memory_space<vmem>>, vector<18x1x16xbf16>
    tpu.vector_store %arg12[%c0_10, %c17_11, %c0_12], %6 {strides = array<i32>} : memref<18x18x16xbf16, #tpu.memory_space<vmem>>, vector<18x1x16xbf16>,
    %c0_13 = arith.constant 0 : index
    %c0_14 = arith.constant 0 : index
    %c0_15 = arith.constant 0 : index
    %c0_16 = arith.constant 0 : index
    %8 = vector.load %arg1[%c0_13, %c0_14, %c0_15, %c0_16] : memref<1x18x18x4xbf16, #tpu.memory_space<vmem>>, vector<1x16x16x4xbf16>
    %9 = vector.shape_cast %8 : vector<1x16x16x4xbf16> to vector<16x16x4xbf16>
    %10 = vector.shape_cast %9 : vector<16x16x4xbf16> to vector<256x4xbf16>
    %c0_17 = arith.constant 0 : index
    %c0_18 = arith.constant 0 : index
    %11 = vector.load %arg13[%c0_17, %c0_18] : memref<256x36xbf16, #tpu.memory_space<vmem>>, vector<256x4xbf16>
    tpu.vector_store %arg13[%c0_17, %c0_18], %10 {strides = array<i32>} : memref<256x36xbf16, #tpu.memory_space<vmem>>, vector<256x4xbf16>,
    %c0_19 = arith.constant 0 : index
    %c0_20 = arith.constant 0 : index
    %c1 = arith.constant 1 : index
    %c0_21 = arith.constant 0 : index
    %12 = vector.load %arg1[%c0_19, %c0_20, %c1, %c0_21] : memref<1x18x18x4xbf16, #tpu.memory_space<vmem>>, vector<1x16x16x4xbf16>
    %13 = vector.shape_cast %12 : vector<1x16x16x4xbf16> to vector<16x16x4xbf16>
    %14 = vector.shape_cast %13 : vector<16x16x4xbf16> to vector<256x4xbf16>
    %c0_22 = arith.constant 0 : index
    %c4 = arith.constant 4 : index
    %15 = vector.load %arg13[%c0_22, %c4] : memref<256x36xbf16, #tpu.memory_space<vmem>>, vector<256x4xbf16>
    tpu.vector_store %arg13[%c0_22, %c4], %14 {strides = array<i32>} : memref<256x36xbf16, #tpu.memory_space<vmem>>, vector<256x4xbf16>,
    %c0_23 = arith.constant 0 : index
    %c0_24 = arith.constant 0 : index
    %c2 = arith.constant 2 : index
    %c0_25 = arith.constant 0 : index
    %16 = vector.load %arg1[%c0_23, %c0_24, %c2, %c0_25] : memref<1x18x18x4xbf16, #tpu.memory_space<vmem>>, vector<1x16x16x4xbf16>
    %17 = vector.shape_cast %16 : vector<1x16x16x4xbf16> to vector<16x16x4xbf16>
    %18 = vector.shape_cast %17 : vector<16x16x4xbf16> to vector<256x4xbf16>
    %c0_26 = arith.constant 0 : index
    %c8 = arith.constant 8 : index
    %19 = vector.load %arg13[%c0_26, %c8] : memref<256x36xbf16, #tpu.memory_space<vmem>>, vector<256x4xbf16>
    tpu.vector_store %arg13[%c0_26, %c8], %18 {strides = array<i32>} : memref<256x36xbf16, #tpu.memory_space<vmem>>, vector<256x4xbf16>,
    %c0_27 = arith.constant 0 : index
    %c1_28 = arith.constant 1 : index
    %c0_29 = arith.constant 0 : index
    %c0_30 = arith.constant 0 : index
    %20 = vector.load %arg1[%c0_27, %c1_28, %c0_29, %c0_30] : memref<1x18x18x4xbf16, #tpu.memory_space<vmem>>, vector<1x16x16x4xbf16>
    %21 = vector.shape_cast %20 : vector<1x16x16x4xbf16> to vector<16x16x4xbf16>
    %22 = vector.shape_cast %21 : vector<16x16x4xbf16> to vector<256x4xbf16>
    %c0_31 = arith.constant 0 : index
    %c12 = arith.constant 12 : index
    %23 = vector.load %arg13[%c0_31, %c12] : memref<256x36xbf16, #tpu.memory_space<vmem>>, vector<256x4xbf16>
    tpu.vector_store %arg13[%c0_31, %c12], %22 {strides = array<i32>} : memref<256x36xbf16, #tpu.memory_space<vmem>>, vector<256x4xbf16>,
    %c0_32 = arith.constant 0 : index
    %c1_33 = arith.constant 1 : index
    %c1_34 = arith.constant 1 : index
    %c0_35 = arith.constant 0 : index
    %24 = vector.load %arg1[%c0_32, %c1_33, %c1_34, %c0_35] : memref<1x18x18x4xbf16, #tpu.memory_space<vmem>>, vector<1x16x16x4xbf16>
    %25 = vector.shape_cast %24 : vector<1x16x16x4xbf16> to vector<16x16x4xbf16>
    %26 = vector.shape_cast %25 : vector<16x16x4xbf16> to vector<256x4xbf16>
    %c0_36 = arith.constant 0 : index
    %c16 = arith.constant 16 : index
    %27 = vector.load %arg13[%c0_36, %c16] : memref<256x36xbf16, #tpu.memory_space<vmem>>, vector<256x4xbf16>
    tpu.vector_store %arg13[%c0_36, %c16], %26 {strides = array<i32>} : memref<256x36xbf16, #tpu.memory_space<vmem>>, vector<256x4xbf16>,
    %c0_37 = arith.constant 0 : index
    %c1_38 = arith.constant 1 : index
    %c2_39 = arith.constant 2 : index
    %c0_40 = arith.constant 0 : index
    %28 = vector.load %arg1[%c0_37, %c1_38, %c2_39, %c0_40] : memref<1x18x18x4xbf16, #tpu.memory_space<vmem>>, vector<1x16x16x4xbf16>
    %29 = vector.shape_cast %28 : vector<1x16x16x4xbf16> to vector<16x16x4xbf16>
    %30 = vector.shape_cast %29 : vector<16x16x4xbf16> to vector<256x4xbf16>
    %c0_41 = arith.constant 0 : index
    %c20 = arith.constant 20 : index
    %31 = vector.load %arg13[%c0_41, %c20] : memref<256x36xbf16, #tpu.memory_space<vmem>>, vector<256x4xbf16>
    tpu.vector_store %arg13[%c0_41, %c20], %30 {strides = array<i32>} : memref<256x36xbf16, #tpu.memory_space<vmem>>, vector<256x4xbf16>,
    %c0_42 = arith.constant 0 : index
    %c2_43 = arith.constant 2 : index
    %c0_44 = arith.constant 0 : index
    %c0_45 = arith.constant 0 : index
    %32 = vector.load %arg1[%c0_42, %c2_43, %c0_44, %c0_45] : memref<1x18x18x4xbf16, #tpu.memory_space<vmem>>, vector<1x16x16x4xbf16>
    %33 = vector.shape_cast %32 : vector<1x16x16x4xbf16> to vector<16x16x4xbf16>
    %34 = vector.shape_cast %33 : vector<16x16x4xbf16> to vector<256x4xbf16>
    %c0_46 = arith.constant 0 : index
    %c24 = arith.constant 24 : index
    %35 = vector.load %arg13[%c0_46, %c24] : memref<256x36xbf16, #tpu.memory_space<vmem>>, vector<256x4xbf16>
    tpu.vector_store %arg13[%c0_46, %c24], %34 {strides = array<i32>} : memref<256x36xbf16, #tpu.memory_space<vmem>>, vector<256x4xbf16>,
    %c0_47 = arith.constant 0 : index
    %c2_48 = arith.constant 2 : index
    %c1_49 = arith.constant 1 : index
    %c0_50 = arith.constant 0 : index
    %36 = vector.load %arg1[%c0_47, %c2_48, %c1_49, %c0_50] : memref<1x18x18x4xbf16, #tpu.memory_space<vmem>>, vector<1x16x16x4xbf16>
    %37 = vector.shape_cast %36 : vector<1x16x16x4xbf16> to vector<16x16x4xbf16>
    %38 = vector.shape_cast %37 : vector<16x16x4xbf16> to vector<256x4xbf16>
    %c0_51 = arith.constant 0 : index
    %c28 = arith.constant 28 : index
    %39 = vector.load %arg13[%c0_51, %c28] : memref<256x36xbf16, #tpu.memory_space<vmem>>, vector<256x4xbf16>
    tpu.vector_store %arg13[%c0_51, %c28], %38 {strides = array<i32>} : memref<256x36xbf16, #tpu.memory_space<vmem>>, vector<256x4xbf16>,
    %c0_52 = arith.constant 0 : index
    %c2_53 = arith.constant 2 : index
    %c2_54 = arith.constant 2 : index
    %c0_55 = arith.constant 0 : index
    %40 = vector.load %arg1[%c0_52, %c2_53, %c2_54, %c0_55] : memref<1x18x18x4xbf16, #tpu.memory_space<vmem>>, vector<1x16x16x4xbf16>
    %41 = vector.shape_cast %40 : vector<1x16x16x4xbf16> to vector<16x16x4xbf16>
    %42 = vector.shape_cast %41 : vector<16x16x4xbf16> to vector<256x4xbf16>
    %c0_56 = arith.constant 0 : index
    %c32 = arith.constant 32 : index
    %43 = vector.load %arg13[%c0_56, %c32] : memref<256x36xbf16, #tpu.memory_space<vmem>>, vector<256x4xbf16>
    tpu.vector_store %arg13[%c0_56, %c32], %42 {strides = array<i32>} : memref<256x36xbf16, #tpu.memory_space<vmem>>, vector<256x4xbf16>,
    %c0_57 = arith.constant 0 : index
    %c0_58 = arith.constant 0 : index
    %44 = vector.load %arg13[%c0_57, %c0_58] : memref<256x36xbf16, #tpu.memory_space<vmem>>, vector<256x36xbf16>
    %c0_59 = arith.constant 0 : index
    %c0_60 = arith.constant 0 : index
    %45 = vector.load %arg2[%c0_59, %c0_60] : memref<36x16xbf16, #tpu.memory_space<vmem>>, vector<36x16xbf16>
    %cst_61 = arith.constant dense<0.000000e+00> : vector<256x16xf32>
    %46 = tpu.matmul %44, %45, %cst_61 {dimension_numbers = #tpu.dot_dimension_numbers<[1], [0], [0], [1], [0, 0, 1, 1], [], []>} : vector<256x36xbf16>, vector<36x16xbf16>, vector<256x16xf32> -> vector<256x16xf32>
    %cst_62 = arith.constant dense<0.000000e+00> : vector<16xf32>
    %47 = vector.multi_reduction <add>, %46, %cst_62 [0] : vector<256x16xf32> to vector<16xf32>
    %48 = vector.shape_cast %47 : vector<16xf32> to vector<1x16xf32>
    %49 = arith.mulf %46, %46 : vector<256x16xf32>
    %cst_63 = arith.constant dense<0.000000e+00> : vector<16xf32>
    %50 = vector.multi_reduction <add>, %49, %cst_63 [0] : vector<256x16xf32> to vector<16xf32>
    %51 = vector.shape_cast %50 : vector<16xf32> to vector<1x16xf32>
    %52 = tpu.concatenate %48, %51 in 0 : vector<1x16xf32>, vector<1x16xf32> -> vector<2x16xf32>
    %c0_64 = arith.constant 0 : index
    %c0_65 = arith.constant 0 : index
    %53 = vector.load %arg3[%c0_64, %c0_65] : memref<16x16xf32, #tpu.memory_space<vmem>>, vector<16x16xf32>
    %cst_66 = arith.constant dense<0.000000e+00> : vector<2x16xf32>
    %54 = tpu.matmul %52, %53, %cst_66 {dimension_numbers = #tpu.dot_dimension_numbers<[1], [0], [0], [1], [0, 0, 1, 1], [], []>} : vector<2x16xf32>, vector<16x16xf32>, vector<2x16xf32> -> vector<2x16xf32>
    %55 = vector.extract_strided_slice %54 {offsets = [0, 0], sizes = [1, 16], strides = [1, 1]} : vector<2x16xf32> to vector<1x16xf32>
    %56 = vector.extract_strided_slice %54 {offsets = [1, 0], sizes = [1, 16], strides = [1, 1]} : vector<2x16xf32> to vector<1x16xf32>
    %57 = arith.mulf %55, %55 : vector<1x16xf32>
    %58 = arith.subf %56, %57 : vector<1x16xf32>
    %c0_67 = arith.constant 0 : index
    %c0_68 = arith.constant 0 : index
    %59 = vector.load %arg4[%c0_67, %c0_68] : memref<1x16xf32, #tpu.memory_space<vmem>>, vector<1x16xf32>
    %cst_69 = arith.constant 9.99999974E-6 : f32
    %60 = vector.broadcast %cst_69 : f32 to vector<1x16xf32>
    %61 = arith.addf %58, %60 : vector<1x16xf32>
    %62 = math.rsqrt %61 : vector<1x16xf32>
    %63 = arith.mulf %59, %62 : vector<1x16xf32>
    %c0_70 = arith.constant 0 : index
    %c0_71 = arith.constant 0 : index
    %64 = vector.load %arg5[%c0_70, %c0_71] : memref<1x16xf32, #tpu.memory_space<vmem>>, vector<1x16xf32>
    %65 = arith.mulf %55, %63 : vector<1x16xf32>
    %66 = arith.subf %64, %65 : vector<1x16xf32>
    %67 = vector.broadcast %63 : vector<1x16xf32> to vector<256x16xf32>
    %68 = arith.mulf %46, %67 : vector<256x16xf32>
    %69 = vector.broadcast %66 : vector<1x16xf32> to vector<256x16xf32>
    %70 = arith.addf %68, %69 : vector<256x16xf32>
    %cst_72 = arith.constant 0.000000e+00 : f32
    %71 = vector.broadcast %cst_72 : f32 to vector<256x16xf32>
    %72 = arith.cmpf ogt, %70, %71 : vector<256x16xf32>
    %cst_73 = arith.constant 0.00999999977 : f32
    %73 = vector.broadcast %cst_73 : f32 to vector<256x16xf32>
    %74 = arith.mulf %73, %70 : vector<256x16xf32>
    %75 = arith.select %72, %70, %74 : vector<256x16xi1>, vector<256x16xf32>
    %76 = vector.shape_cast %75 : vector<256x16xf32> to vector<16x16x16xf32>
    %77 = arith.truncf %76 : vector<16x16x16xf32> to vector<16x16x16xbf16>
    %c1_74 = arith.constant 1 : index
    %c1_75 = arith.constant 1 : index
    %c0_76 = arith.constant 0 : index
    %78 = vector.load %arg12[%c1_74, %c1_75, %c0_76] : memref<18x18x16xbf16, #tpu.memory_space<vmem>>, vector<16x16x16xbf16>
    tpu.vector_store %arg12[%c1_74, %c1_75, %c0_76], %77 {strides = array<i32>} : memref<18x18x16xbf16, #tpu.memory_space<vmem>>, vector<16x16x16xbf16>,
    %c0_77 = arith.constant 0 : index
    %c0_78 = arith.constant 0 : index
    %c0_79 = arith.constant 0 : index
    %79 = vector.load %arg12[%c0_77, %c0_78, %c0_79] : memref<18x18x16xbf16, #tpu.memory_space<vmem>>, vector<16x16x16xbf16>
    %80 = vector.shape_cast %79 : vector<16x16x16xbf16> to vector<256x16xbf16>
    %c0_80 = arith.constant 0 : index
    %c0_81 = arith.constant 0 : index
    %81 = vector.load %arg14[%c0_80, %c0_81] : memref<256x144xbf16, #tpu.memory_space<vmem>>, vector<256x16xbf16>
    tpu.vector_store %arg14[%c0_80, %c0_81], %80 {strides = array<i32>} : memref<256x144xbf16, #tpu.memory_space<vmem>>, vector<256x16xbf16>,
    %c0_82 = arith.constant 0 : index
    %c1_83 = arith.constant 1 : index
    %c0_84 = arith.constant 0 : index
    %82 = vector.load %arg12[%c0_82, %c1_83, %c0_84] : memref<18x18x16xbf16, #tpu.memory_space<vmem>>, vector<16x16x16xbf16>
    %83 = vector.shape_cast %82 : vector<16x16x16xbf16> to vector<256x16xbf16>
    %c0_85 = arith.constant 0 : index
    %c16_86 = arith.constant 16 : index
    %84 = vector.load %arg14[%c0_85, %c16_86] : memref<256x144xbf16, #tpu.memory_space<vmem>>, vector<256x16xbf16>
    tpu.vector_store %arg14[%c0_85, %c16_86], %83 {strides = array<i32>} : memref<256x144xbf16, #tpu.memory_space<vmem>>, vector<256x16xbf16>,
    %c0_87 = arith.constant 0 : index
    %c2_88 = arith.constant 2 : index
    %c0_89 = arith.constant 0 : index
    %85 = vector.load %arg12[%c0_87, %c2_88, %c0_89] : memref<18x18x16xbf16, #tpu.memory_space<vmem>>, vector<16x16x16xbf16>
    %86 = vector.shape_cast %85 : vector<16x16x16xbf16> to vector<256x16xbf16>
    %c0_90 = arith.constant 0 : index
    %c32_91 = arith.constant 32 : index
    %87 = vector.load %arg14[%c0_90, %c32_91] : memref<256x144xbf16, #tpu.memory_space<vmem>>, vector<256x16xbf16>
    tpu.vector_store %arg14[%c0_90, %c32_91], %86 {strides = array<i32>} : memref<256x144xbf16, #tpu.memory_space<vmem>>, vector<256x16xbf16>,
    %c1_92 = arith.constant 1 : index
    %c0_93 = arith.constant 0 : index
    %c0_94 = arith.constant 0 : index
    %88 = vector.load %arg12[%c1_92, %c0_93, %c0_94] : memref<18x18x16xbf16, #tpu.memory_space<vmem>>, vector<16x16x16xbf16>
    %89 = vector.shape_cast %88 : vector<16x16x16xbf16> to vector<256x16xbf16>
    %c0_95 = arith.constant 0 : index
    %c48 = arith.constant 48 : index
    %90 = vector.load %arg14[%c0_95, %c48] : memref<256x144xbf16, #tpu.memory_space<vmem>>, vector<256x16xbf16>
    tpu.vector_store %arg14[%c0_95, %c48], %89 {strides = array<i32>} : memref<256x144xbf16, #tpu.memory_space<vmem>>, vector<256x16xbf16>,
    %c1_96 = arith.constant 1 : index
    %c1_97 = arith.constant 1 : index
    %c0_98 = arith.constant 0 : index
    %91 = vector.load %arg12[%c1_96, %c1_97, %c0_98] : memref<18x18x16xbf16, #tpu.memory_space<vmem>>, vector<16x16x16xbf16>
    %92 = vector.shape_cast %91 : vector<16x16x16xbf16> to vector<256x16xbf16>
    %c0_99 = arith.constant 0 : index
    %c64 = arith.constant 64 : index
    %93 = vector.load %arg14[%c0_99, %c64] : memref<256x144xbf16, #tpu.memory_space<vmem>>, vector<256x16xbf16>
    tpu.vector_store %arg14[%c0_99, %c64], %92 {strides = array<i32>} : memref<256x144xbf16, #tpu.memory_space<vmem>>, vector<256x16xbf16>,
    %c1_100 = arith.constant 1 : index
    %c2_101 = arith.constant 2 : index
    %c0_102 = arith.constant 0 : index
    %94 = vector.load %arg12[%c1_100, %c2_101, %c0_102] : memref<18x18x16xbf16, #tpu.memory_space<vmem>>, vector<16x16x16xbf16>
    %95 = vector.shape_cast %94 : vector<16x16x16xbf16> to vector<256x16xbf16>
    %c0_103 = arith.constant 0 : index
    %c80 = arith.constant 80 : index
    %96 = vector.load %arg14[%c0_103, %c80] : memref<256x144xbf16, #tpu.memory_space<vmem>>, vector<256x16xbf16>
    tpu.vector_store %arg14[%c0_103, %c80], %95 {strides = array<i32>} : memref<256x144xbf16, #tpu.memory_space<vmem>>, vector<256x16xbf16>,
    %c2_104 = arith.constant 2 : index
    %c0_105 = arith.constant 0 : index
    %c0_106 = arith.constant 0 : index
    %97 = vector.load %arg12[%c2_104, %c0_105, %c0_106] : memref<18x18x16xbf16, #tpu.memory_space<vmem>>, vector<16x16x16xbf16>
    %98 = vector.shape_cast %97 : vector<16x16x16xbf16> to vector<256x16xbf16>
    %c0_107 = arith.constant 0 : index
    %c96 = arith.constant 96 : index
    %99 = vector.load %arg14[%c0_107, %c96] : memref<256x144xbf16, #tpu.memory_space<vmem>>, vector<256x16xbf16>
    tpu.vector_store %arg14[%c0_107, %c96], %98 {strides = array<i32>} : memref<256x144xbf16, #tpu.memory_space<vmem>>, vector<256x16xbf16>,
    %c2_108 = arith.constant 2 : index
    %c1_109 = arith.constant 1 : index
    %c0_110 = arith.constant 0 : index
    %100 = vector.load %arg12[%c2_108, %c1_109, %c0_110] : memref<18x18x16xbf16, #tpu.memory_space<vmem>>, vector<16x16x16xbf16>
    %101 = vector.shape_cast %100 : vector<16x16x16xbf16> to vector<256x16xbf16>
    %c0_111 = arith.constant 0 : index
    %c112 = arith.constant 112 : index
    %102 = vector.load %arg14[%c0_111, %c112] : memref<256x144xbf16, #tpu.memory_space<vmem>>, vector<256x16xbf16>
    tpu.vector_store %arg14[%c0_111, %c112], %101 {strides = array<i32>} : memref<256x144xbf16, #tpu.memory_space<vmem>>, vector<256x16xbf16>,
    %c2_112 = arith.constant 2 : index
    %c2_113 = arith.constant 2 : index
    %c0_114 = arith.constant 0 : index
    %103 = vector.load %arg12[%c2_112, %c2_113, %c0_114] : memref<18x18x16xbf16, #tpu.memory_space<vmem>>, vector<16x16x16xbf16>
    %104 = vector.shape_cast %103 : vector<16x16x16xbf16> to vector<256x16xbf16>
    %c0_115 = arith.constant 0 : index
    %c128 = arith.constant 128 : index
    %105 = vector.load %arg14[%c0_115, %c128] : memref<256x144xbf16, #tpu.memory_space<vmem>>, vector<256x16xbf16>
    tpu.vector_store %arg14[%c0_115, %c128], %104 {strides = array<i32>} : memref<256x144xbf16, #tpu.memory_space<vmem>>, vector<256x16xbf16>,
    %c0_116 = arith.constant 0 : index
    %c0_117 = arith.constant 0 : index
    %106 = vector.load %arg14[%c0_116, %c0_117] : memref<256x144xbf16, #tpu.memory_space<vmem>>, vector<256x144xbf16>
    %c0_118 = arith.constant 0 : index
    %c0_119 = arith.constant 0 : index
    %107 = vector.load %arg6[%c0_118, %c0_119] : memref<144x16xbf16, #tpu.memory_space<vmem>>, vector<144x16xbf16>
    %cst_120 = arith.constant dense<0.000000e+00> : vector<256x16xf32>
    %108 = tpu.matmul %106, %107, %cst_120 {dimension_numbers = #tpu.dot_dimension_numbers<[1], [0], [0], [1], [0, 0, 1, 1], [], []>} : vector<256x144xbf16>, vector<144x16xbf16>, vector<256x16xf32> -> vector<256x16xf32>
    %109 = vector.shape_cast %108 : vector<256x16xf32> to vector<16x256xf32>
    %cst_121 = arith.constant dense<0.000000e+00> : vector<256xf32>
    %110 = vector.multi_reduction <add>, %109, %cst_121 [0] : vector<16x256xf32> to vector<256xf32>
    %111 = vector.shape_cast %110 : vector<256xf32> to vector<1x256xf32>
    %112 = arith.mulf %109, %109 : vector<16x256xf32>
    %cst_122 = arith.constant dense<0.000000e+00> : vector<256xf32>
    %113 = vector.multi_reduction <add>, %112, %cst_122 [0] : vector<16x256xf32> to vector<256xf32>
    %114 = vector.shape_cast %113 : vector<256xf32> to vector<1x256xf32>
    %115 = tpu.concatenate %111, %114 in 0 : vector<1x256xf32>, vector<1x256xf32> -> vector<2x256xf32>
    %c0_123 = arith.constant 0 : index
    %c0_124 = arith.constant 0 : index
    %116 = vector.load %arg7[%c0_123, %c0_124] : memref<256x16xf32, #tpu.memory_space<vmem>>, vector<256x16xf32>
    %cst_125 = arith.constant dense<0.000000e+00> : vector<2x16xf32>
    %117 = tpu.matmul %115, %116, %cst_125 {dimension_numbers = #tpu.dot_dimension_numbers<[1], [0], [0], [1], [0, 0, 1, 1], [], []>} : vector<2x256xf32>, vector<256x16xf32>, vector<2x16xf32> -> vector<2x16xf32>
    %118 = vector.extract_strided_slice %117 {offsets = [0, 0], sizes = [1, 16], strides = [1, 1]} : vector<2x16xf32> to vector<1x16xf32>
    %119 = vector.extract_strided_slice %117 {offsets = [1, 0], sizes = [1, 16], strides = [1, 1]} : vector<2x16xf32> to vector<1x16xf32>
    %120 = arith.mulf %118, %118 : vector<1x16xf32>
    %121 = arith.subf %119, %120 : vector<1x16xf32>
    %c0_126 = arith.constant 0 : index
    %c0_127 = arith.constant 0 : index
    %122 = vector.load %arg9[%c0_126, %c0_127] : memref<1x16xf32, #tpu.memory_space<vmem>>, vector<1x16xf32>
    %cst_128 = arith.constant 9.99999974E-6 : f32
    %123 = vector.broadcast %cst_128 : f32 to vector<1x16xf32>
    %124 = arith.addf %121, %123 : vector<1x16xf32>
    %125 = math.rsqrt %124 : vector<1x16xf32>
    %126 = arith.mulf %122, %125 : vector<1x16xf32>
    %c0_129 = arith.constant 0 : index
    %c0_130 = arith.constant 0 : index
    %127 = vector.load %arg10[%c0_129, %c0_130] : memref<1x16xf32, #tpu.memory_space<vmem>>, vector<1x16xf32>
    %128 = arith.mulf %118, %126 : vector<1x16xf32>
    %129 = arith.subf %127, %128 : vector<1x16xf32>
    %130 = tpu.concatenate %126, %129 in 0 : vector<1x16xf32>, vector<1x16xf32> -> vector<2x16xf32>
    %c0_131 = arith.constant 0 : index
    %c0_132 = arith.constant 0 : index
    %131 = vector.load %arg8[%c0_131, %c0_132] : memref<16x256xf32, #tpu.memory_space<vmem>>, vector<16x256xf32>
    %cst_133 = arith.constant dense<0.000000e+00> : vector<2x256xf32>
    %132 = tpu.matmul %130, %131, %cst_133 {dimension_numbers = #tpu.dot_dimension_numbers<[1], [0], [0], [1], [0, 0, 1, 1], [], []>} : vector<2x16xf32>, vector<16x256xf32>, vector<2x256xf32> -> vector<2x256xf32>
    %133 = vector.extract_strided_slice %132 {offsets = [0, 0], sizes = [1, 256], strides = [1, 1]} : vector<2x256xf32> to vector<1x256xf32>
    %134 = vector.broadcast %133 : vector<1x256xf32> to vector<16x256xf32>
    %135 = arith.mulf %109, %134 : vector<16x256xf32>
    %136 = vector.extract_strided_slice %132 {offsets = [1, 0], sizes = [1, 256], strides = [1, 1]} : vector<2x256xf32> to vector<1x256xf32>
    %137 = vector.broadcast %136 : vector<1x256xf32> to vector<16x256xf32>
    %138 = arith.addf %135, %137 : vector<16x256xf32>
    %cst_134 = arith.constant 0.000000e+00 : f32
    %139 = vector.broadcast %cst_134 : f32 to vector<16x256xf32>
    %140 = arith.cmpf ogt, %138, %139 : vector<16x256xf32>
    %cst_135 = arith.constant 0.00999999977 : f32
    %141 = vector.broadcast %cst_135 : f32 to vector<16x256xf32>
    %142 = arith.mulf %141, %138 : vector<16x256xf32>
    %143 = arith.select %140, %138, %142 : vector<16x256xi1>, vector<16x256xf32>
    %c0_136 = arith.constant 0 : index
    %c0_137 = arith.constant 0 : index
    %c0_138 = arith.constant 0 : index
    %144 = vector.load %arg11[%c0_136, %c0_137, %c0_138] : memref<1x16x256xf32, #tpu.memory_space<vmem>>, vector<1x16x256xf32>
    %145 = vector.shape_cast %144 : vector<1x16x256xf32> to vector<16x256xf32>
    %146 = vector.shape_cast %143 : vector<16x256xf32> to vector<1x16x256xf32>
    tpu.vector_store %arg11[%c0_136, %c0_137, %c0_138], %146 {strides = array<i32>} : memref<1x16x256xf32, #tpu.memory_space<vmem>>, vector<1x16x256xf32>,
    return
  }
  func.func @transform_0(%arg0: i32) -> (i32, i32, i32, i32) {
    %c0_i32 = arith.constant 0 : i32
    %c0_i32_0 = arith.constant 0 : i32
    %c0_i32_1 = arith.constant 0 : i32
    %c0_i32_2 = arith.constant 0 : i32
    return %arg0, %c0_i32, %c0_i32_0, %c0_i32_1 : i32, i32, i32, i32
  }
  func.func @transform_1(%arg0: i32) -> (i32, i32) {
    %c0_i32 = arith.constant 0 : i32
    %c0_i32_0 = arith.constant 0 : i32
    %c0_i32_1 = arith.constant 0 : i32
    return %c0_i32, %c0_i32_0 : i32, i32
  }
  func.func @transform_2(%arg0: i32) -> (i32, i32) {
    %c0_i32 = arith.constant 0 : i32
    %c0_i32_0 = arith.constant 0 : i32
    %c0_i32_1 = arith.constant 0 : i32
    return %c0_i32, %c0_i32_0 : i32, i32
  }
  func.func @transform_3(%arg0: i32) -> (i32, i32) {
    %c0_i32 = arith.constant 0 : i32
    %c0_i32_0 = arith.constant 0 : i32
    %c0_i32_1 = arith.constant 0 : i32
    return %c0_i32, %c0_i32_0 : i32, i32
  }
  func.func @transform_4(%arg0: i32) -> (i32, i32) {
    %c0_i32 = arith.constant 0 : i32
    %c0_i32_0 = arith.constant 0 : i32
    %c0_i32_1 = arith.constant 0 : i32
    return %c0_i32, %c0_i32_0 : i32, i32
  }
  func.func @transform_5(%arg0: i32) -> (i32, i32) {
    %c0_i32 = arith.constant 0 : i32
    %c0_i32_0 = arith.constant 0 : i32
    %c0_i32_1 = arith.constant 0 : i32
    return %c0_i32, %c0_i32_0 : i32, i32
  }
  func.func @transform_6(%arg0: i32) -> (i32, i32) {
    %c0_i32 = arith.constant 0 : i32
    %c0_i32_0 = arith.constant 0 : i32
    %c0_i32_1 = arith.constant 0 : i32
    return %c0_i32, %c0_i32_0 : i32, i32
  }
  func.func @transform_7(%arg0: i32) -> (i32, i32) {
    %c0_i32 = arith.constant 0 : i32
    %c0_i32_0 = arith.constant 0 : i32
    %c0_i32_1 = arith.constant 0 : i32
    return %c0_i32, %c0_i32_0 : i32, i32
  }
  func.func @transform_8(%arg0: i32) -> (i32, i32) {
    %c0_i32 = arith.constant 0 : i32
    %c0_i32_0 = arith.constant 0 : i32
    %c0_i32_1 = arith.constant 0 : i32
    return %c0_i32, %c0_i32_0 : i32, i32
  }
  func.func @transform_9(%arg0: i32) -> (i32, i32) {
    %c0_i32 = arith.constant 0 : i32
    %c0_i32_0 = arith.constant 0 : i32
    %c0_i32_1 = arith.constant 0 : i32
    return %c0_i32, %c0_i32_0 : i32, i32
  }
  func.func @transform_10(%arg0: i32) -> (i32, i32, i32) {
    %c0_i32 = arith.constant 0 : i32
    %c0_i32_0 = arith.constant 0 : i32
    %c0_i32_1 = arith.constant 0 : i32
    return %arg0, %c0_i32, %c0_i32_0 : i32, i32, i32
  }
}

module attributes {stable_mosaic.version = 11 : i64} {
  func.func @_double_conv_kernel(%arg0: i32, %arg1: memref<1x18x18x4xbf16, #tpu.memory_space<vmem>>, %arg2: memref<36x16xbf16, #tpu.memory_space<vmem>>, %arg3: memref<16x16xf32, #tpu.memory_space<vmem>>, %arg4: memref<1x16xf32, #tpu.memory_space<vmem>>, %arg5: memref<1x16xf32, #tpu.memory_space<vmem>>, %arg6: memref<144x16xbf16, #tpu.memory_space<vmem>>, %arg7: memref<16x16xf32, #tpu.memory_space<vmem>>, %arg8: memref<1x16xf32, #tpu.memory_space<vmem>>, %arg9: memref<1x16xf32, #tpu.memory_space<vmem>>, %arg10: memref<1x16x16x16xf32, #tpu.memory_space<vmem>>, %arg11: memref<18x18x16xbf16, #tpu.memory_space<vmem>>, %arg12: memref<256x36xbf16, #tpu.memory_space<vmem>>, %arg13: memref<256x144xbf16, #tpu.memory_space<vmem>>) attributes {dimension_semantics = [#tpu.dimension_semantics<parallel>], iteration_bounds = array<i64: 2>, scalar_prefetch = 0 : i64, scratch_operands = 3 : i64, tpu.core_type = #tpu.core_type<tc>, window_params = [{transform_indices = @transform_0, window_bounds = array<i64: 1, 18, 18, 4>}, {pipeline_mode = #tpu.pipeline_mode<synchronous>, transform_indices = @transform_1, window_bounds = array<i64: 36, 16>}, {pipeline_mode = #tpu.pipeline_mode<synchronous>, transform_indices = @transform_2, window_bounds = array<i64: 16, 16>}, {pipeline_mode = #tpu.pipeline_mode<synchronous>, transform_indices = @transform_3, window_bounds = array<i64: 1, 16>}, {pipeline_mode = #tpu.pipeline_mode<synchronous>, transform_indices = @transform_4, window_bounds = array<i64: 1, 16>}, {pipeline_mode = #tpu.pipeline_mode<synchronous>, transform_indices = @transform_5, window_bounds = array<i64: 144, 16>}, {pipeline_mode = #tpu.pipeline_mode<synchronous>, transform_indices = @transform_6, window_bounds = array<i64: 16, 16>}, {pipeline_mode = #tpu.pipeline_mode<synchronous>, transform_indices = @transform_7, window_bounds = array<i64: 1, 16>}, {pipeline_mode = #tpu.pipeline_mode<synchronous>, transform_indices = @transform_8, window_bounds = array<i64: 1, 16>}, {transform_indices = @transform_9, window_bounds = array<i64: 1, 16, 16, 16>}]} {
    %cst = arith.constant 0.000000e+00 : bf16
    %0 = vector.broadcast %cst : bf16 to vector<1x18x16xbf16>
    %c0 = arith.constant 0 : index
    %c0_0 = arith.constant 0 : index
    %c0_1 = arith.constant 0 : index
    %1 = vector.load %arg11[%c0, %c0_0, %c0_1] : memref<18x18x16xbf16, #tpu.memory_space<vmem>>, vector<1x18x16xbf16>
    tpu.vector_store %arg11[%c0, %c0_0, %c0_1], %0 {strides = array<i32>} : memref<18x18x16xbf16, #tpu.memory_space<vmem>>, vector<1x18x16xbf16>,
    %cst_2 = arith.constant 0.000000e+00 : bf16
    %2 = vector.broadcast %cst_2 : bf16 to vector<1x18x16xbf16>
    %c17 = arith.constant 17 : index
    %c0_3 = arith.constant 0 : index
    %c0_4 = arith.constant 0 : index
    %3 = vector.load %arg11[%c17, %c0_3, %c0_4] : memref<18x18x16xbf16, #tpu.memory_space<vmem>>, vector<1x18x16xbf16>
    tpu.vector_store %arg11[%c17, %c0_3, %c0_4], %2 {strides = array<i32>} : memref<18x18x16xbf16, #tpu.memory_space<vmem>>, vector<1x18x16xbf16>,
    %cst_5 = arith.constant 0.000000e+00 : bf16
    %4 = vector.broadcast %cst_5 : bf16 to vector<18x1x16xbf16>
    %c0_6 = arith.constant 0 : index
    %c0_7 = arith.constant 0 : index
    %c0_8 = arith.constant 0 : index
    %5 = vector.load %arg11[%c0_6, %c0_7, %c0_8] : memref<18x18x16xbf16, #tpu.memory_space<vmem>>, vector<18x1x16xbf16>
    tpu.vector_store %arg11[%c0_6, %c0_7, %c0_8], %4 {strides = array<i32>} : memref<18x18x16xbf16, #tpu.memory_space<vmem>>, vector<18x1x16xbf16>,
    %cst_9 = arith.constant 0.000000e+00 : bf16
    %6 = vector.broadcast %cst_9 : bf16 to vector<18x1x16xbf16>
    %c0_10 = arith.constant 0 : index
    %c17_11 = arith.constant 17 : index
    %c0_12 = arith.constant 0 : index
    %7 = vector.load %arg11[%c0_10, %c17_11, %c0_12] : memref<18x18x16xbf16, #tpu.memory_space<vmem>>, vector<18x1x16xbf16>
    tpu.vector_store %arg11[%c0_10, %c17_11, %c0_12], %6 {strides = array<i32>} : memref<18x18x16xbf16, #tpu.memory_space<vmem>>, vector<18x1x16xbf16>,
    %c0_13 = arith.constant 0 : index
    %c0_14 = arith.constant 0 : index
    %c0_15 = arith.constant 0 : index
    %c0_16 = arith.constant 0 : index
    %8 = vector.load %arg1[%c0_13, %c0_14, %c0_15, %c0_16] : memref<1x18x18x4xbf16, #tpu.memory_space<vmem>>, vector<1x16x16x4xbf16>
    %9 = vector.shape_cast %8 : vector<1x16x16x4xbf16> to vector<16x16x4xbf16>
    %10 = vector.shape_cast %9 : vector<16x16x4xbf16> to vector<256x4xbf16>
    %c0_17 = arith.constant 0 : index
    %c0_18 = arith.constant 0 : index
    %11 = vector.load %arg12[%c0_17, %c0_18] : memref<256x36xbf16, #tpu.memory_space<vmem>>, vector<256x4xbf16>
    tpu.vector_store %arg12[%c0_17, %c0_18], %10 {strides = array<i32>} : memref<256x36xbf16, #tpu.memory_space<vmem>>, vector<256x4xbf16>,
    %c0_19 = arith.constant 0 : index
    %c0_20 = arith.constant 0 : index
    %c1 = arith.constant 1 : index
    %c0_21 = arith.constant 0 : index
    %12 = vector.load %arg1[%c0_19, %c0_20, %c1, %c0_21] : memref<1x18x18x4xbf16, #tpu.memory_space<vmem>>, vector<1x16x16x4xbf16>
    %13 = vector.shape_cast %12 : vector<1x16x16x4xbf16> to vector<16x16x4xbf16>
    %14 = vector.shape_cast %13 : vector<16x16x4xbf16> to vector<256x4xbf16>
    %c0_22 = arith.constant 0 : index
    %c4 = arith.constant 4 : index
    %15 = vector.load %arg12[%c0_22, %c4] : memref<256x36xbf16, #tpu.memory_space<vmem>>, vector<256x4xbf16>
    tpu.vector_store %arg12[%c0_22, %c4], %14 {strides = array<i32>} : memref<256x36xbf16, #tpu.memory_space<vmem>>, vector<256x4xbf16>,
    %c0_23 = arith.constant 0 : index
    %c0_24 = arith.constant 0 : index
    %c2 = arith.constant 2 : index
    %c0_25 = arith.constant 0 : index
    %16 = vector.load %arg1[%c0_23, %c0_24, %c2, %c0_25] : memref<1x18x18x4xbf16, #tpu.memory_space<vmem>>, vector<1x16x16x4xbf16>
    %17 = vector.shape_cast %16 : vector<1x16x16x4xbf16> to vector<16x16x4xbf16>
    %18 = vector.shape_cast %17 : vector<16x16x4xbf16> to vector<256x4xbf16>
    %c0_26 = arith.constant 0 : index
    %c8 = arith.constant 8 : index
    %19 = vector.load %arg12[%c0_26, %c8] : memref<256x36xbf16, #tpu.memory_space<vmem>>, vector<256x4xbf16>
    tpu.vector_store %arg12[%c0_26, %c8], %18 {strides = array<i32>} : memref<256x36xbf16, #tpu.memory_space<vmem>>, vector<256x4xbf16>,
    %c0_27 = arith.constant 0 : index
    %c1_28 = arith.constant 1 : index
    %c0_29 = arith.constant 0 : index
    %c0_30 = arith.constant 0 : index
    %20 = vector.load %arg1[%c0_27, %c1_28, %c0_29, %c0_30] : memref<1x18x18x4xbf16, #tpu.memory_space<vmem>>, vector<1x16x16x4xbf16>
    %21 = vector.shape_cast %20 : vector<1x16x16x4xbf16> to vector<16x16x4xbf16>
    %22 = vector.shape_cast %21 : vector<16x16x4xbf16> to vector<256x4xbf16>
    %c0_31 = arith.constant 0 : index
    %c12 = arith.constant 12 : index
    %23 = vector.load %arg12[%c0_31, %c12] : memref<256x36xbf16, #tpu.memory_space<vmem>>, vector<256x4xbf16>
    tpu.vector_store %arg12[%c0_31, %c12], %22 {strides = array<i32>} : memref<256x36xbf16, #tpu.memory_space<vmem>>, vector<256x4xbf16>,
    %c0_32 = arith.constant 0 : index
    %c1_33 = arith.constant 1 : index
    %c1_34 = arith.constant 1 : index
    %c0_35 = arith.constant 0 : index
    %24 = vector.load %arg1[%c0_32, %c1_33, %c1_34, %c0_35] : memref<1x18x18x4xbf16, #tpu.memory_space<vmem>>, vector<1x16x16x4xbf16>
    %25 = vector.shape_cast %24 : vector<1x16x16x4xbf16> to vector<16x16x4xbf16>
    %26 = vector.shape_cast %25 : vector<16x16x4xbf16> to vector<256x4xbf16>
    %c0_36 = arith.constant 0 : index
    %c16 = arith.constant 16 : index
    %27 = vector.load %arg12[%c0_36, %c16] : memref<256x36xbf16, #tpu.memory_space<vmem>>, vector<256x4xbf16>
    tpu.vector_store %arg12[%c0_36, %c16], %26 {strides = array<i32>} : memref<256x36xbf16, #tpu.memory_space<vmem>>, vector<256x4xbf16>,
    %c0_37 = arith.constant 0 : index
    %c1_38 = arith.constant 1 : index
    %c2_39 = arith.constant 2 : index
    %c0_40 = arith.constant 0 : index
    %28 = vector.load %arg1[%c0_37, %c1_38, %c2_39, %c0_40] : memref<1x18x18x4xbf16, #tpu.memory_space<vmem>>, vector<1x16x16x4xbf16>
    %29 = vector.shape_cast %28 : vector<1x16x16x4xbf16> to vector<16x16x4xbf16>
    %30 = vector.shape_cast %29 : vector<16x16x4xbf16> to vector<256x4xbf16>
    %c0_41 = arith.constant 0 : index
    %c20 = arith.constant 20 : index
    %31 = vector.load %arg12[%c0_41, %c20] : memref<256x36xbf16, #tpu.memory_space<vmem>>, vector<256x4xbf16>
    tpu.vector_store %arg12[%c0_41, %c20], %30 {strides = array<i32>} : memref<256x36xbf16, #tpu.memory_space<vmem>>, vector<256x4xbf16>,
    %c0_42 = arith.constant 0 : index
    %c2_43 = arith.constant 2 : index
    %c0_44 = arith.constant 0 : index
    %c0_45 = arith.constant 0 : index
    %32 = vector.load %arg1[%c0_42, %c2_43, %c0_44, %c0_45] : memref<1x18x18x4xbf16, #tpu.memory_space<vmem>>, vector<1x16x16x4xbf16>
    %33 = vector.shape_cast %32 : vector<1x16x16x4xbf16> to vector<16x16x4xbf16>
    %34 = vector.shape_cast %33 : vector<16x16x4xbf16> to vector<256x4xbf16>
    %c0_46 = arith.constant 0 : index
    %c24 = arith.constant 24 : index
    %35 = vector.load %arg12[%c0_46, %c24] : memref<256x36xbf16, #tpu.memory_space<vmem>>, vector<256x4xbf16>
    tpu.vector_store %arg12[%c0_46, %c24], %34 {strides = array<i32>} : memref<256x36xbf16, #tpu.memory_space<vmem>>, vector<256x4xbf16>,
    %c0_47 = arith.constant 0 : index
    %c2_48 = arith.constant 2 : index
    %c1_49 = arith.constant 1 : index
    %c0_50 = arith.constant 0 : index
    %36 = vector.load %arg1[%c0_47, %c2_48, %c1_49, %c0_50] : memref<1x18x18x4xbf16, #tpu.memory_space<vmem>>, vector<1x16x16x4xbf16>
    %37 = vector.shape_cast %36 : vector<1x16x16x4xbf16> to vector<16x16x4xbf16>
    %38 = vector.shape_cast %37 : vector<16x16x4xbf16> to vector<256x4xbf16>
    %c0_51 = arith.constant 0 : index
    %c28 = arith.constant 28 : index
    %39 = vector.load %arg12[%c0_51, %c28] : memref<256x36xbf16, #tpu.memory_space<vmem>>, vector<256x4xbf16>
    tpu.vector_store %arg12[%c0_51, %c28], %38 {strides = array<i32>} : memref<256x36xbf16, #tpu.memory_space<vmem>>, vector<256x4xbf16>,
    %c0_52 = arith.constant 0 : index
    %c2_53 = arith.constant 2 : index
    %c2_54 = arith.constant 2 : index
    %c0_55 = arith.constant 0 : index
    %40 = vector.load %arg1[%c0_52, %c2_53, %c2_54, %c0_55] : memref<1x18x18x4xbf16, #tpu.memory_space<vmem>>, vector<1x16x16x4xbf16>
    %41 = vector.shape_cast %40 : vector<1x16x16x4xbf16> to vector<16x16x4xbf16>
    %42 = vector.shape_cast %41 : vector<16x16x4xbf16> to vector<256x4xbf16>
    %c0_56 = arith.constant 0 : index
    %c32 = arith.constant 32 : index
    %43 = vector.load %arg12[%c0_56, %c32] : memref<256x36xbf16, #tpu.memory_space<vmem>>, vector<256x4xbf16>
    tpu.vector_store %arg12[%c0_56, %c32], %42 {strides = array<i32>} : memref<256x36xbf16, #tpu.memory_space<vmem>>, vector<256x4xbf16>,
    %c0_57 = arith.constant 0 : index
    %c0_58 = arith.constant 0 : index
    %44 = vector.load %arg12[%c0_57, %c0_58] : memref<256x36xbf16, #tpu.memory_space<vmem>>, vector<256x36xbf16>
    %c0_59 = arith.constant 0 : index
    %c0_60 = arith.constant 0 : index
    %45 = vector.load %arg2[%c0_59, %c0_60] : memref<36x16xbf16, #tpu.memory_space<vmem>>, vector<36x16xbf16>
    %cst_61 = arith.constant dense<0.000000e+00> : vector<256x16xf32>
    %46 = tpu.matmul %44, %45, %cst_61 {dimension_numbers = #tpu.dot_dimension_numbers<[1], [0], [0], [1], [0, 0, 1, 1], [], []>} : vector<256x36xbf16>, vector<36x16xbf16>, vector<256x16xf32> -> vector<256x16xf32>
    %cst_62 = arith.constant dense<0.000000e+00> : vector<16xf32>
    %47 = vector.multi_reduction <add>, %46, %cst_62 [0] : vector<256x16xf32> to vector<16xf32>
    %48 = vector.shape_cast %47 : vector<16xf32> to vector<1x16xf32>
    %49 = arith.mulf %46, %46 : vector<256x16xf32>
    %cst_63 = arith.constant dense<0.000000e+00> : vector<16xf32>
    %50 = vector.multi_reduction <add>, %49, %cst_63 [0] : vector<256x16xf32> to vector<16xf32>
    %51 = vector.shape_cast %50 : vector<16xf32> to vector<1x16xf32>
    %c0_64 = arith.constant 0 : index
    %c0_65 = arith.constant 0 : index
    %52 = vector.load %arg3[%c0_64, %c0_65] : memref<16x16xf32, #tpu.memory_space<vmem>>, vector<16x16xf32>
    %cst_66 = arith.constant dense<0.000000e+00> : vector<1x16xf32>
    %53 = tpu.matmul %48, %52, %cst_66 {dimension_numbers = #tpu.dot_dimension_numbers<[1], [0], [0], [1], [0, 0, 1, 1], [], []>} : vector<1x16xf32>, vector<16x16xf32>, vector<1x16xf32> -> vector<1x16xf32>
    %c0_67 = arith.constant 0 : index
    %c0_68 = arith.constant 0 : index
    %54 = vector.load %arg3[%c0_67, %c0_68] : memref<16x16xf32, #tpu.memory_space<vmem>>, vector<16x16xf32>
    %cst_69 = arith.constant dense<0.000000e+00> : vector<1x16xf32>
    %55 = tpu.matmul %51, %54, %cst_69 {dimension_numbers = #tpu.dot_dimension_numbers<[1], [0], [0], [1], [0, 0, 1, 1], [], []>} : vector<1x16xf32>, vector<16x16xf32>, vector<1x16xf32> -> vector<1x16xf32>
    %56 = arith.mulf %53, %53 : vector<1x16xf32>
    %57 = arith.subf %55, %56 : vector<1x16xf32>
    %c0_70 = arith.constant 0 : index
    %c0_71 = arith.constant 0 : index
    %58 = vector.load %arg4[%c0_70, %c0_71] : memref<1x16xf32, #tpu.memory_space<vmem>>, vector<1x16xf32>
    %cst_72 = arith.constant 9.99999974E-6 : f32
    %59 = vector.broadcast %cst_72 : f32 to vector<1x16xf32>
    %60 = arith.addf %57, %59 : vector<1x16xf32>
    %61 = math.rsqrt %60 : vector<1x16xf32>
    %62 = arith.mulf %58, %61 : vector<1x16xf32>
    %c0_73 = arith.constant 0 : index
    %c0_74 = arith.constant 0 : index
    %63 = vector.load %arg5[%c0_73, %c0_74] : memref<1x16xf32, #tpu.memory_space<vmem>>, vector<1x16xf32>
    %64 = arith.mulf %53, %62 : vector<1x16xf32>
    %65 = arith.subf %63, %64 : vector<1x16xf32>
    %66 = vector.broadcast %62 : vector<1x16xf32> to vector<256x16xf32>
    %67 = arith.mulf %46, %66 : vector<256x16xf32>
    %68 = vector.broadcast %65 : vector<1x16xf32> to vector<256x16xf32>
    %69 = arith.addf %67, %68 : vector<256x16xf32>
    %cst_75 = arith.constant 0.000000e+00 : f32
    %70 = vector.broadcast %cst_75 : f32 to vector<256x16xf32>
    %71 = arith.cmpf ogt, %69, %70 : vector<256x16xf32>
    %cst_76 = arith.constant 0.00999999977 : f32
    %72 = vector.broadcast %cst_76 : f32 to vector<256x16xf32>
    %73 = arith.mulf %72, %69 : vector<256x16xf32>
    %74 = arith.select %71, %69, %73 : vector<256x16xi1>, vector<256x16xf32>
    %75 = vector.shape_cast %74 : vector<256x16xf32> to vector<16x16x16xf32>
    %76 = arith.truncf %75 : vector<16x16x16xf32> to vector<16x16x16xbf16>
    %c1_77 = arith.constant 1 : index
    %c1_78 = arith.constant 1 : index
    %c0_79 = arith.constant 0 : index
    %77 = vector.load %arg11[%c1_77, %c1_78, %c0_79] : memref<18x18x16xbf16, #tpu.memory_space<vmem>>, vector<16x16x16xbf16>
    tpu.vector_store %arg11[%c1_77, %c1_78, %c0_79], %76 {strides = array<i32>} : memref<18x18x16xbf16, #tpu.memory_space<vmem>>, vector<16x16x16xbf16>,
    %c0_80 = arith.constant 0 : index
    %c0_81 = arith.constant 0 : index
    %c0_82 = arith.constant 0 : index
    %78 = vector.load %arg11[%c0_80, %c0_81, %c0_82] : memref<18x18x16xbf16, #tpu.memory_space<vmem>>, vector<16x16x16xbf16>
    %79 = vector.shape_cast %78 : vector<16x16x16xbf16> to vector<256x16xbf16>
    %c0_83 = arith.constant 0 : index
    %c0_84 = arith.constant 0 : index
    %80 = vector.load %arg13[%c0_83, %c0_84] : memref<256x144xbf16, #tpu.memory_space<vmem>>, vector<256x16xbf16>
    tpu.vector_store %arg13[%c0_83, %c0_84], %79 {strides = array<i32>} : memref<256x144xbf16, #tpu.memory_space<vmem>>, vector<256x16xbf16>,
    %c0_85 = arith.constant 0 : index
    %c1_86 = arith.constant 1 : index
    %c0_87 = arith.constant 0 : index
    %81 = vector.load %arg11[%c0_85, %c1_86, %c0_87] : memref<18x18x16xbf16, #tpu.memory_space<vmem>>, vector<16x16x16xbf16>
    %82 = vector.shape_cast %81 : vector<16x16x16xbf16> to vector<256x16xbf16>
    %c0_88 = arith.constant 0 : index
    %c16_89 = arith.constant 16 : index
    %83 = vector.load %arg13[%c0_88, %c16_89] : memref<256x144xbf16, #tpu.memory_space<vmem>>, vector<256x16xbf16>
    tpu.vector_store %arg13[%c0_88, %c16_89], %82 {strides = array<i32>} : memref<256x144xbf16, #tpu.memory_space<vmem>>, vector<256x16xbf16>,
    %c0_90 = arith.constant 0 : index
    %c2_91 = arith.constant 2 : index
    %c0_92 = arith.constant 0 : index
    %84 = vector.load %arg11[%c0_90, %c2_91, %c0_92] : memref<18x18x16xbf16, #tpu.memory_space<vmem>>, vector<16x16x16xbf16>
    %85 = vector.shape_cast %84 : vector<16x16x16xbf16> to vector<256x16xbf16>
    %c0_93 = arith.constant 0 : index
    %c32_94 = arith.constant 32 : index
    %86 = vector.load %arg13[%c0_93, %c32_94] : memref<256x144xbf16, #tpu.memory_space<vmem>>, vector<256x16xbf16>
    tpu.vector_store %arg13[%c0_93, %c32_94], %85 {strides = array<i32>} : memref<256x144xbf16, #tpu.memory_space<vmem>>, vector<256x16xbf16>,
    %c1_95 = arith.constant 1 : index
    %c0_96 = arith.constant 0 : index
    %c0_97 = arith.constant 0 : index
    %87 = vector.load %arg11[%c1_95, %c0_96, %c0_97] : memref<18x18x16xbf16, #tpu.memory_space<vmem>>, vector<16x16x16xbf16>
    %88 = vector.shape_cast %87 : vector<16x16x16xbf16> to vector<256x16xbf16>
    %c0_98 = arith.constant 0 : index
    %c48 = arith.constant 48 : index
    %89 = vector.load %arg13[%c0_98, %c48] : memref<256x144xbf16, #tpu.memory_space<vmem>>, vector<256x16xbf16>
    tpu.vector_store %arg13[%c0_98, %c48], %88 {strides = array<i32>} : memref<256x144xbf16, #tpu.memory_space<vmem>>, vector<256x16xbf16>,
    %c1_99 = arith.constant 1 : index
    %c1_100 = arith.constant 1 : index
    %c0_101 = arith.constant 0 : index
    %90 = vector.load %arg11[%c1_99, %c1_100, %c0_101] : memref<18x18x16xbf16, #tpu.memory_space<vmem>>, vector<16x16x16xbf16>
    %91 = vector.shape_cast %90 : vector<16x16x16xbf16> to vector<256x16xbf16>
    %c0_102 = arith.constant 0 : index
    %c64 = arith.constant 64 : index
    %92 = vector.load %arg13[%c0_102, %c64] : memref<256x144xbf16, #tpu.memory_space<vmem>>, vector<256x16xbf16>
    tpu.vector_store %arg13[%c0_102, %c64], %91 {strides = array<i32>} : memref<256x144xbf16, #tpu.memory_space<vmem>>, vector<256x16xbf16>,
    %c1_103 = arith.constant 1 : index
    %c2_104 = arith.constant 2 : index
    %c0_105 = arith.constant 0 : index
    %93 = vector.load %arg11[%c1_103, %c2_104, %c0_105] : memref<18x18x16xbf16, #tpu.memory_space<vmem>>, vector<16x16x16xbf16>
    %94 = vector.shape_cast %93 : vector<16x16x16xbf16> to vector<256x16xbf16>
    %c0_106 = arith.constant 0 : index
    %c80 = arith.constant 80 : index
    %95 = vector.load %arg13[%c0_106, %c80] : memref<256x144xbf16, #tpu.memory_space<vmem>>, vector<256x16xbf16>
    tpu.vector_store %arg13[%c0_106, %c80], %94 {strides = array<i32>} : memref<256x144xbf16, #tpu.memory_space<vmem>>, vector<256x16xbf16>,
    %c2_107 = arith.constant 2 : index
    %c0_108 = arith.constant 0 : index
    %c0_109 = arith.constant 0 : index
    %96 = vector.load %arg11[%c2_107, %c0_108, %c0_109] : memref<18x18x16xbf16, #tpu.memory_space<vmem>>, vector<16x16x16xbf16>
    %97 = vector.shape_cast %96 : vector<16x16x16xbf16> to vector<256x16xbf16>
    %c0_110 = arith.constant 0 : index
    %c96 = arith.constant 96 : index
    %98 = vector.load %arg13[%c0_110, %c96] : memref<256x144xbf16, #tpu.memory_space<vmem>>, vector<256x16xbf16>
    tpu.vector_store %arg13[%c0_110, %c96], %97 {strides = array<i32>} : memref<256x144xbf16, #tpu.memory_space<vmem>>, vector<256x16xbf16>,
    %c2_111 = arith.constant 2 : index
    %c1_112 = arith.constant 1 : index
    %c0_113 = arith.constant 0 : index
    %99 = vector.load %arg11[%c2_111, %c1_112, %c0_113] : memref<18x18x16xbf16, #tpu.memory_space<vmem>>, vector<16x16x16xbf16>
    %100 = vector.shape_cast %99 : vector<16x16x16xbf16> to vector<256x16xbf16>
    %c0_114 = arith.constant 0 : index
    %c112 = arith.constant 112 : index
    %101 = vector.load %arg13[%c0_114, %c112] : memref<256x144xbf16, #tpu.memory_space<vmem>>, vector<256x16xbf16>
    tpu.vector_store %arg13[%c0_114, %c112], %100 {strides = array<i32>} : memref<256x144xbf16, #tpu.memory_space<vmem>>, vector<256x16xbf16>,
    %c2_115 = arith.constant 2 : index
    %c2_116 = arith.constant 2 : index
    %c0_117 = arith.constant 0 : index
    %102 = vector.load %arg11[%c2_115, %c2_116, %c0_117] : memref<18x18x16xbf16, #tpu.memory_space<vmem>>, vector<16x16x16xbf16>
    %103 = vector.shape_cast %102 : vector<16x16x16xbf16> to vector<256x16xbf16>
    %c0_118 = arith.constant 0 : index
    %c128 = arith.constant 128 : index
    %104 = vector.load %arg13[%c0_118, %c128] : memref<256x144xbf16, #tpu.memory_space<vmem>>, vector<256x16xbf16>
    tpu.vector_store %arg13[%c0_118, %c128], %103 {strides = array<i32>} : memref<256x144xbf16, #tpu.memory_space<vmem>>, vector<256x16xbf16>,
    %c0_119 = arith.constant 0 : index
    %c0_120 = arith.constant 0 : index
    %105 = vector.load %arg13[%c0_119, %c0_120] : memref<256x144xbf16, #tpu.memory_space<vmem>>, vector<256x144xbf16>
    %c0_121 = arith.constant 0 : index
    %c0_122 = arith.constant 0 : index
    %106 = vector.load %arg6[%c0_121, %c0_122] : memref<144x16xbf16, #tpu.memory_space<vmem>>, vector<144x16xbf16>
    %cst_123 = arith.constant dense<0.000000e+00> : vector<256x16xf32>
    %107 = tpu.matmul %105, %106, %cst_123 {dimension_numbers = #tpu.dot_dimension_numbers<[1], [0], [0], [1], [0, 0, 1, 1], [], []>} : vector<256x144xbf16>, vector<144x16xbf16>, vector<256x16xf32> -> vector<256x16xf32>
    %cst_124 = arith.constant dense<0.000000e+00> : vector<16xf32>
    %108 = vector.multi_reduction <add>, %107, %cst_124 [0] : vector<256x16xf32> to vector<16xf32>
    %109 = vector.shape_cast %108 : vector<16xf32> to vector<1x16xf32>
    %110 = arith.mulf %107, %107 : vector<256x16xf32>
    %cst_125 = arith.constant dense<0.000000e+00> : vector<16xf32>
    %111 = vector.multi_reduction <add>, %110, %cst_125 [0] : vector<256x16xf32> to vector<16xf32>
    %112 = vector.shape_cast %111 : vector<16xf32> to vector<1x16xf32>
    %c0_126 = arith.constant 0 : index
    %c0_127 = arith.constant 0 : index
    %113 = vector.load %arg7[%c0_126, %c0_127] : memref<16x16xf32, #tpu.memory_space<vmem>>, vector<16x16xf32>
    %cst_128 = arith.constant dense<0.000000e+00> : vector<1x16xf32>
    %114 = tpu.matmul %109, %113, %cst_128 {dimension_numbers = #tpu.dot_dimension_numbers<[1], [0], [0], [1], [0, 0, 1, 1], [], []>} : vector<1x16xf32>, vector<16x16xf32>, vector<1x16xf32> -> vector<1x16xf32>
    %c0_129 = arith.constant 0 : index
    %c0_130 = arith.constant 0 : index
    %115 = vector.load %arg7[%c0_129, %c0_130] : memref<16x16xf32, #tpu.memory_space<vmem>>, vector<16x16xf32>
    %cst_131 = arith.constant dense<0.000000e+00> : vector<1x16xf32>
    %116 = tpu.matmul %112, %115, %cst_131 {dimension_numbers = #tpu.dot_dimension_numbers<[1], [0], [0], [1], [0, 0, 1, 1], [], []>} : vector<1x16xf32>, vector<16x16xf32>, vector<1x16xf32> -> vector<1x16xf32>
    %117 = arith.mulf %114, %114 : vector<1x16xf32>
    %118 = arith.subf %116, %117 : vector<1x16xf32>
    %c0_132 = arith.constant 0 : index
    %c0_133 = arith.constant 0 : index
    %119 = vector.load %arg8[%c0_132, %c0_133] : memref<1x16xf32, #tpu.memory_space<vmem>>, vector<1x16xf32>
    %cst_134 = arith.constant 9.99999974E-6 : f32
    %120 = vector.broadcast %cst_134 : f32 to vector<1x16xf32>
    %121 = arith.addf %118, %120 : vector<1x16xf32>
    %122 = math.rsqrt %121 : vector<1x16xf32>
    %123 = arith.mulf %119, %122 : vector<1x16xf32>
    %c0_135 = arith.constant 0 : index
    %c0_136 = arith.constant 0 : index
    %124 = vector.load %arg9[%c0_135, %c0_136] : memref<1x16xf32, #tpu.memory_space<vmem>>, vector<1x16xf32>
    %125 = arith.mulf %114, %123 : vector<1x16xf32>
    %126 = arith.subf %124, %125 : vector<1x16xf32>
    %127 = vector.broadcast %123 : vector<1x16xf32> to vector<256x16xf32>
    %128 = arith.mulf %107, %127 : vector<256x16xf32>
    %129 = vector.broadcast %126 : vector<1x16xf32> to vector<256x16xf32>
    %130 = arith.addf %128, %129 : vector<256x16xf32>
    %cst_137 = arith.constant 0.000000e+00 : f32
    %131 = vector.broadcast %cst_137 : f32 to vector<256x16xf32>
    %132 = arith.cmpf ogt, %130, %131 : vector<256x16xf32>
    %cst_138 = arith.constant 0.00999999977 : f32
    %133 = vector.broadcast %cst_138 : f32 to vector<256x16xf32>
    %134 = arith.mulf %133, %130 : vector<256x16xf32>
    %135 = arith.select %132, %130, %134 : vector<256x16xi1>, vector<256x16xf32>
    %136 = vector.shape_cast %135 : vector<256x16xf32> to vector<16x16x16xf32>
    %c0_139 = arith.constant 0 : index
    %c0_140 = arith.constant 0 : index
    %c0_141 = arith.constant 0 : index
    %c0_142 = arith.constant 0 : index
    %137 = vector.load %arg10[%c0_139, %c0_140, %c0_141, %c0_142] : memref<1x16x16x16xf32, #tpu.memory_space<vmem>>, vector<1x16x16x16xf32>
    %138 = vector.shape_cast %137 : vector<1x16x16x16xf32> to vector<16x16x16xf32>
    %139 = vector.shape_cast %136 : vector<16x16x16xf32> to vector<1x16x16x16xf32>
    tpu.vector_store %arg10[%c0_139, %c0_140, %c0_141, %c0_142], %139 {strides = array<i32>} : memref<1x16x16x16xf32, #tpu.memory_space<vmem>>, vector<1x16x16x16xf32>,
    return
  }
  func.func @transform_0(%arg0: i32) -> (i32, i32, i32, i32) {
    %c0_i32 = arith.constant 0 : i32
    %c0_i32_0 = arith.constant 0 : i32
    %c0_i32_1 = arith.constant 0 : i32
    %c0_i32_2 = arith.constant 0 : i32
    return %arg0, %c0_i32, %c0_i32_0, %c0_i32_1 : i32, i32, i32, i32
  }
  func.func @transform_1(%arg0: i32) -> (i32, i32) {
    %c0_i32 = arith.constant 0 : i32
    %c0_i32_0 = arith.constant 0 : i32
    %c0_i32_1 = arith.constant 0 : i32
    return %c0_i32, %c0_i32_0 : i32, i32
  }
  func.func @transform_2(%arg0: i32) -> (i32, i32) {
    %c0_i32 = arith.constant 0 : i32
    %c0_i32_0 = arith.constant 0 : i32
    %c0_i32_1 = arith.constant 0 : i32
    return %c0_i32, %c0_i32_0 : i32, i32
  }
  func.func @transform_3(%arg0: i32) -> (i32, i32) {
    %c0_i32 = arith.constant 0 : i32
    %c0_i32_0 = arith.constant 0 : i32
    %c0_i32_1 = arith.constant 0 : i32
    return %c0_i32, %c0_i32_0 : i32, i32
  }
  func.func @transform_4(%arg0: i32) -> (i32, i32) {
    %c0_i32 = arith.constant 0 : i32
    %c0_i32_0 = arith.constant 0 : i32
    %c0_i32_1 = arith.constant 0 : i32
    return %c0_i32, %c0_i32_0 : i32, i32
  }
  func.func @transform_5(%arg0: i32) -> (i32, i32) {
    %c0_i32 = arith.constant 0 : i32
    %c0_i32_0 = arith.constant 0 : i32
    %c0_i32_1 = arith.constant 0 : i32
    return %c0_i32, %c0_i32_0 : i32, i32
  }
  func.func @transform_6(%arg0: i32) -> (i32, i32) {
    %c0_i32 = arith.constant 0 : i32
    %c0_i32_0 = arith.constant 0 : i32
    %c0_i32_1 = arith.constant 0 : i32
    return %c0_i32, %c0_i32_0 : i32, i32
  }
  func.func @transform_7(%arg0: i32) -> (i32, i32) {
    %c0_i32 = arith.constant 0 : i32
    %c0_i32_0 = arith.constant 0 : i32
    %c0_i32_1 = arith.constant 0 : i32
    return %c0_i32, %c0_i32_0 : i32, i32
  }
  func.func @transform_8(%arg0: i32) -> (i32, i32) {
    %c0_i32 = arith.constant 0 : i32
    %c0_i32_0 = arith.constant 0 : i32
    %c0_i32_1 = arith.constant 0 : i32
    return %c0_i32, %c0_i32_0 : i32, i32
  }
  func.func @transform_9(%arg0: i32) -> (i32, i32, i32, i32) {
    %c0_i32 = arith.constant 0 : i32
    %c0_i32_0 = arith.constant 0 : i32
    %c0_i32_1 = arith.constant 0 : i32
    %c0_i32_2 = arith.constant 0 : i32
    return %arg0, %c0_i32, %c0_i32_0, %c0_i32_1 : i32, i32, i32, i32
  }
}

</mosaic_0001>

<llo_original>
// kernel: _double_conv_impl.1
$region0: #{_double_conv_impl.1}
  #allocation0 [shape = 'u32[]', space=smem, size = 0x4, offset = 0x4, fixed_abs, tag = 'smem constant byte address 0x4 - core index']
  #allocation1 [shape = 'u32[144,128]{1,0:T(1,128)}', space=vmem, size = 0x12000, scoped, tag = 'internal scratch']
  #allocation2 [shape = 'bf16[18,18,16]{2,1,0:T(8,128)(2,1)}', space=vmem, size = 0x1b000, scoped, tag = 'scratch operand']
  #allocation3 [shape = 'bf16[256,36]{1,0:T(16,128)(2,1)}', space=vmem, size = 0x10000, scoped, tag = 'scratch operand']
  #allocation4 [shape = 'bf16[256,144]{1,0:T(16,128)(2,1)}', space=vmem, size = 0x20000, scoped, tag = 'scratch operand']
  %s0 = inlined_call_operand.vmem [shape: bf16[2,18,18,4], index: 0, kind: input, shape index: {}]
  %s1 = inlined_call_operand.vmem [shape: bf16[36,16], index: 1, kind: input, shape index: {}]
  %s2 = inlined_call_operand.vmem [shape: f32[16,16], index: 2, kind: input, shape index: {}, may-alias: {2,6}]
  %s3 = inlined_call_operand.vmem [shape: f32[1,16], index: 3, kind: input, shape index: {}]
  %s4 = inlined_call_operand.vmem [shape: f32[1,16], index: 4, kind: input, shape index: {}]
  %s5 = inlined_call_operand.vmem [shape: bf16[144,16], index: 5, kind: input, shape index: {}]
  %s6 = inlined_call_operand.vmem [shape: f32[16,16], index: 6, kind: input, shape index: {}, may-alias: {2,6}]
  %s7 = inlined_call_operand.vmem [shape: f32[1,16], index: 7, kind: input, shape index: {}]
  %s8 = inlined_call_operand.vmem [shape: f32[1,16], index: 8, kind: input, shape index: {}]
  %s9 = inlined_call_operand.vmem [shape: f32[2,16,16,16], index: 9, kind: output, shape index: {}]
  %s10 = sld [smem:[#allocation0]]
  $region69: #{_double_conv_impl.1} parent=0
    _
  %s12 = ssub.s32 1, %s10
  %s13 = scalar_select 0, %s12, %s10
  loop: start=0, step=1, limit=4
  $region2: #{_double_conv_impl.1} parent=0 // loop_pre_header
    _
  $region3: #{_double_conv_impl.1} parent=0 // loop_header
    %s15 = sphi 0, %s19
    %p16 = scmp.ge.s32.totalorder %s15, 4
    %s25 = sphi 0, %s27
    %s28 = sphi 0, %s25
    %s29 = sphi 0, %s28
    %s45 = sphi 0, %s29
    %s49 = sphi 0, %s49
    %s51 = sphi 0, %s49
    %s52 = sphi 0, %s51
    %s66 = sphi 0, %s52
    %s70 = sphi 0, %s70
    %s72 = sphi 0, %s70
    %s73 = sphi 0, %s72
    %s87 = sphi 0, %s73
    %s91 = sphi 0, %s91
    %s93 = sphi 0, %s91
    %s94 = sphi 0, %s93
    %s108 = sphi 0, %s94
    %s112 = sphi 0, %s112
    %s114 = sphi 0, %s112
    %s115 = sphi 0, %s114
    %s129 = sphi 0, %s115
    %s133 = sphi 0, %s133
    %s135 = sphi 0, %s133
    %s136 = sphi 0, %s135
    %s150 = sphi 0, %s136
    %s154 = sphi 0, %s154
    %s156 = sphi 0, %s154
    %s157 = sphi 0, %s156
    %s171 = sphi 0, %s157
    %s175 = sphi 0, %s175
    %s177 = sphi 0, %s175
    %s178 = sphi 0, %s177
    %s192 = sphi 0, %s178
    %s196 = sphi 0, %s196
    %s198 = sphi 0, %s196
    %s199 = sphi 0, %s198
    %s213 = sphi 0, %s199
    %s219 = sphi 0, %s221
    %s222 = sphi 0, %s219
    %s223 = sphi 0, %s222
    %s239 = sphi 0, %s223
  $region4: #{_double_conv_impl.1} parent=0 // loop_header_branch
    %18 = sbr.rel (%p16) target = $region8
  $region5: #{_double_conv_impl.1} parent=0 // loop_body
    %s20 = ssub.s32 %s15, 1
    %s21 = ssub.s32 %s15, 2
    %s22 = sadd.s32 %s15, 1
    %s23 = ssub.s32 %s15, %s22
    %p24 = scmp.eq.s32.totalorder %s23, 0
    %s26 = sadd.s32 %s25, 1
    %s27 = scalar_select %p24, %s25, %s26
    %p30 = pneg %p24
    %p31 = scmp.eq.s32.totalorder %s15, 1
    %p32 = por %p30, %p31
    %p33 = scmp.ne.s32.totalorder %s25, %s28
    %p34 = scmp.eq.s32.totalorder %s15, 0
    %p35 = por %p33, %p34
    %p36 = scmp.ne.s32.totalorder %s25, %s28
    %p37 = scmp.eq.s32.totalorder %s20, 1
    %p38 = por %p36, %p37
    %p39 = scmp.ne.s32.totalorder %s28, %s29
    %p40 = scmp.eq.s32.totalorder %s20, 0
    %p41 = por %p39, %p40
    %p42 = scmp.ne.s32.totalorder %s28, %s29
    %p43 = scmp.eq.s32.totalorder %s21, 1
    %p44 = por %p42, %p43
    %p46 = scmp.ne.s32.totalorder %s29, %s45
    %p47 = scmp.eq.s32.totalorder %s21, 0
    %p48 = por %p46, %p47
    %s50 = sadd.s32 %s49, 1
    %p53 = scmp.eq.s32.totalorder %s15, 1
    %p54 = scmp.ne.s32.totalorder %s49, %s51
    %p55 = scmp.eq.s32.totalorder %s15, 0
    %p56 = por %p54, %p55
    %p57 = scmp.ne.s32.totalorder %s49, %s51
    %p58 = scmp.eq.s32.totalorder %s20, 1
    %p59 = por %p57, %p58
    %p60 = scmp.ne.s32.totalorder %s51, %s52
    %p61 = scmp.eq.s32.totalorder %s20, 0
    %p62 = por %p60, %p61
    %p63 = scmp.ne.s32.totalorder %s51, %s52
    %p64 = scmp.eq.s32.totalorder %s21, 1
    %p65 = por %p63, %p64
    %p67 = scmp.ne.s32.totalorder %s52, %s66
    %p68 = scmp.eq.s32.totalorder %s21, 0
    %p69 = por %p67, %p68
    %s71 = sadd.s32 %s70, 1
    %p74 = scmp.eq.s32.totalorder %s15, 1
    %p75 = scmp.ne.s32.totalorder %s70, %s72
    %p76 = scmp.eq.s32.totalorder %s15, 0
    %p77 = por %p75, %p76
    %p78 = scmp.ne.s32.totalorder %s70, %s72
    %p79 = scmp.eq.s32.totalorder %s20, 1
    %p80 = por %p78, %p79
    %p81 = scmp.ne.s32.totalorder %s72, %s73
    %p82 = scmp.eq.s32.totalorder %s20, 0
    %p83 = por %p81, %p82
    %p84 = scmp.ne.s32.totalorder %s72, %s73
    %p85 = scmp.eq.s32.totalorder %s21, 1
    %p86 = por %p84, %p85
    %p88 = scmp.ne.s32.totalorder %s73, %s87
    %p89 = scmp.eq.s32.totalorder %s21, 0
    %p90 = por %p88, %p89
    %s92 = sadd.s32 %s91, 1
    %p95 = scmp.eq.s32.totalorder %s15, 1
    %p96 = scmp.ne.s32.totalorder %s91, %s93
    %p97 = scmp.eq.s32.totalorder %s15, 0
    %p98 = por %p96, %p97
    %p99 = scmp.ne.s32.totalorder %s91, %s93
    %p100 = scmp.eq.s32.totalorder %s20, 1
    %p101 = por %p99, %p100
    %p102 = scmp.ne.s32.totalorder %s93, %s94
    %p103 = scmp.eq.s32.totalorder %s20, 0
    %p104 = por %p102, %p103
    %p105 = scmp.ne.s32.totalorder %s93, %s94
    %p106 = scmp.eq.s32.totalorder %s21, 1
    %p107 = por %p105, %p106
    %p109 = scmp.ne.s32.totalorder %s94, %s108
    %p110 = scmp.eq.s32.totalorder %s21, 0
    %p111 = por %p109, %p110
    %s113 = sadd.s32 %s112, 1
    %p116 = scmp.eq.s32.totalorder %s15, 1
    %p117 = scmp.ne.s32.totalorder %s112, %s114
    %p118 = scmp.eq.s32.totalorder %s15, 0
    %p119 = por %p117, %p118
    %p120 = scmp.ne.s32.totalorder %s112, %s114
    %p121 = scmp.eq.s32.totalorder %s20, 1
    %p122 = por %p120, %p121
    %p123 = scmp.ne.s32.totalorder %s114, %s115
    %p124 = scmp.eq.s32.totalorder %s20, 0
    %p125 = por %p123, %p124
    %p126 = scmp.ne.s32.totalorder %s114, %s115
    %p127 = scmp.eq.s32.totalorder %s21, 1
    %p128 = por %p126, %p127
    %p130 = scmp.ne.s32.totalorder %s115, %s129
    %p131 = scmp.eq.s32.totalorder %s21, 0
    %p132 = por %p130, %p131
    %s134 = sadd.s32 %s133, 1
    %p137 = scmp.eq.s32.totalorder %s15, 1
    %p138 = scmp.ne.s32.totalorder %s133, %s135
    %p139 = scmp.eq.s32.totalorder %s15, 0
    %p140 = por %p138, %p139
    %p141 = scmp.ne.s32.totalorder %s133, %s135
    %p142 = scmp.eq.s32.totalorder %s20, 1
    %p143 = por %p141, %p142
    %p144 = scmp.ne.s32.totalorder %s135, %s136
    %p145 = scmp.eq.s32.totalorder %s20, 0
    %p146 = por %p144, %p145
    %p147 = scmp.ne.s32.totalorder %s135, %s136
    %p148 = scmp.eq.s32.totalorder %s21, 1
    %p149 = por %p147, %p148
    %p151 = scmp.ne.s32.totalorder %s136, %s150
    %p152 = scmp.eq.s32.totalorder %s21, 0
    %p153 = por %p151, %p152
    %s155 = sadd.s32 %s154, 1
    %p158 = scmp.eq.s32.totalorder %s15, 1
    %p159 = scmp.ne.s32.totalorder %s154, %s156
    %p160 = scmp.eq.s32.totalorder %s15, 0
    %p161 = por %p159, %p160
    %p162 = scmp.ne.s32.totalorder %s154, %s156
    %p163 = scmp.eq.s32.totalorder %s20, 1
    %p164 = por %p162, %p163
    %p165 = scmp.ne.s32.totalorder %s156, %s157
    %p166 = scmp.eq.s32.totalorder %s20, 0
    %p167 = por %p165, %p166
    %p168 = scmp.ne.s32.totalorder %s156, %s157
    %p169 = scmp.eq.s32.totalorder %s21, 1
    %p170 = por %p168, %p169
    %p172 = scmp.ne.s32.totalorder %s157, %s171
    %p173 = scmp.eq.s32.totalorder %s21, 0
    %p174 = por %p172, %p173
    %s176 = sadd.s32 %s175, 1
    %p179 = scmp.eq.s32.totalorder %s15, 1
    %p180 = scmp.ne.s32.totalorder %s175, %s177
    %p181 = scmp.eq.s32.totalorder %s15, 0
    %p182 = por %p180, %p181
    %p183 = scmp.ne.s32.totalorder %s175, %s177
    %p184 = scmp.eq.s32.totalorder %s20, 1
    %p185 = por %p183, %p184
    %p186 = scmp.ne.s32.totalorder %s177, %s178
    %p187 = scmp.eq.s32.totalorder %s20, 0
    %p188 = por %p186, %p187
    %p189 = scmp.ne.s32.totalorder %s177, %s178
    %p190 = scmp.eq.s32.totalorder %s21, 1
    %p191 = por %p189, %p190
    %p193 = scmp.ne.s32.totalorder %s178, %s192
    %p194 = scmp.eq.s32.totalorder %s21, 0
    %p195 = por %p193, %p194
    %s197 = sadd.s32 %s196, 1
    %p200 = scmp.eq.s32.totalorder %s15, 1
    %p201 = scmp.ne.s32.totalorder %s196, %s198
    %p202 = scmp.eq.s32.totalorder %s15, 0
    %p203 = por %p201, %p202
    %p204 = scmp.ne.s32.totalorder %s196, %s198
    %p205 = scmp.eq.s32.totalorder %s20, 1
    %p206 = por %p204, %p205
    %p207 = scmp.ne.s32.totalorder %s198, %s199
    %p208 = scmp.eq.s32.totalorder %s20, 0
    %p209 = por %p207, %p208
    %p210 = scmp.ne.s32.totalorder %s198, %s199
    %p211 = scmp.eq.s32.totalorder %s21, 1
    %p212 = por %p210, %p211
    %p214 = scmp.ne.s32.totalorder %s199, %s213
    %p215 = scmp.eq.s32.totalorder %s21, 0
    %p216 = por %p214, %p215
    %s217 = ssub.s32 %s15, %s22
    %p218 = scmp.eq.s32.totalorder %s217, 0
    %s220 = sadd.s32 %s219, 1
    %s221 = scalar_select %p218, %s219, %s220
    %p224 = pneg %p218
    %p225 = scmp.eq.s32.totalorder %s15, 1
    %p226 = por %p224, %p225
    %p227 = scmp.ne.s32.totalorder %s219, %s222
    %p228 = scmp.eq.s32.totalorder %s15, 0
    %p229 = por %p227, %p228
    %p230 = scmp.ne.s32.totalorder %s219, %s222
    %p231 = scmp.eq.s32.totalorder %s20, 1
    %p232 = por %p230, %p231
    %p233 = scmp.ne.s32.totalorder %s222, %s223
    %p234 = scmp.eq.s32.totalorder %s20, 0
    %p235 = por %p233, %p234
    %p236 = scmp.ne.s32.totalorder %s222, %s223
    %p237 = scmp.eq.s32.totalorder %s21, 1
    %p238 = por %p236, %p237
    %p240 = scmp.ne.s32.totalorder %s223, %s239
    %p241 = scmp.eq.s32.totalorder %s21, 0
    %p242 = por %p240, %p241
    %p243 = scmp.le.s32.totalorder 1, %s15
    %p244 = scmp.lt.s32.totalorder %s15, 3
    %p245 = pnand %p243, %p244
    %p246 = pneg %p245
    // Predicated region
    $region9: #{_double_conv_impl.1} parent=5 // pred_check
      _
    $region10: #{_double_conv_impl.1} parent=5 // pred_check_branch
      %248 = sbr.rel (%p245) target = $region12
    $region11: #{_double_conv_impl.1} parent=5 // pred_region
      %s249 = ssub.s32 %s15, 1
      // Predicated region
      $region13: #{_double_conv_impl.1} parent=11 // pred_check
        %p250 = pneg %p62
      $region14: #{_double_conv_impl.1} parent=11 // pred_check_branch
        %252 = sbr.rel (%p250) target = $region16
      $region15: #{_double_conv_impl.1} parent=11 // pred_region
        _
      $region16: #{_double_conv_impl.1} parent=11 // pred_fallthru
        _
      // Predicated region
      $region17: #{_double_conv_impl.1} parent=11 // pred_check
        %p253 = pneg %p83
      $region18: #{_double_conv_impl.1} parent=11 // pred_check_branch
        %255 = sbr.rel (%p253) target = $region20
      $region19: #{_double_conv_impl.1} parent=11 // pred_region
        _
      $region20: #{_double_conv_impl.1} parent=11 // pred_fallthru
        _
      // Predicated region
      $region21: #{_double_conv_impl.1} parent=11 // pred_check
        %p256 = pneg %p104
      $region22: #{_double_conv_impl.1} parent=11 // pred_check_branch
        %258 = sbr.rel (%p256) target = $region24
      $region23: #{_double_conv_impl.1} parent=11 // pred_region
        _
      $region24: #{_double_conv_impl.1} parent=11 // pred_fallthru
        _
      // Predicated region
      $region25: #{_double_conv_impl.1} parent=11 // pred_check
        %p259 = pneg %p125
      $region26: #{_double_conv_impl.1} parent=11 // pred_check_branch
        %261 = sbr.rel (%p259) target = $region28
      $region27: #{_double_conv_impl.1} parent=11 // pred_region
        _
      $region28: #{_double_conv_impl.1} parent=11 // pred_fallthru
        _
      // Predicated region
      $region29: #{_double_conv_impl.1} parent=11 // pred_check
        %p262 = pneg %p146
      $region30: #{_double_conv_impl.1} parent=11 // pred_check_branch
        %264 = sbr.rel (%p262) target = $region32
      $region31: #{_double_conv_impl.1} parent=11 // pred_region
        _
      $region32: #{_double_conv_impl.1} parent=11 // pred_fallthru
        _
      // Predicated region
      $region33: #{_double_conv_impl.1} parent=11 // pred_check
        %p265 = pneg %p167
      $region34: #{_double_conv_impl.1} parent=11 // pred_check_branch
        %267 = sbr.rel (%p265) target = $region36
      $region35: #{_double_conv_impl.1} parent=11 // pred_region
        _
      $region36: #{_double_conv_impl.1} parent=11 // pred_fallthru
        _
      // Predicated region
      $region37: #{_double_conv_impl.1} parent=11 // pred_check
        %p268 = pneg %p188
      $region38: #{_double_conv_impl.1} parent=11 // pred_check_branch
        %270 = sbr.rel (%p268) target = $region40
      $region39: #{_double_conv_impl.1} parent=11 // pred_region
        _
      $region40: #{_double_conv_impl.1} parent=11 // pred_fallthru
        _
      // Predicated region
      $region41: #{_double_conv_impl.1} parent=11 // pred_check
        %p271 = pneg %p209
      $region42: #{_double_conv_impl.1} parent=11 // pred_check_branch
        %273 = sbr.rel (%p271) target = $region44
      $region43: #{_double_conv_impl.1} parent=11 // pred_region
        _
      $region44: #{_double_conv_impl.1} parent=11 // pred_fallthru
        _
    $region12: #{_double_conv_impl.1} parent=5 // pred_fallthru
      _
    %p274 = scmp.lt.s32.totalorder %s15, 2
    // Predicated region
    $region45: #{_double_conv_impl.1} parent=5 // pred_check
      %p275 = pneg %p274
    $region46: #{_double_conv_impl.1} parent=5 // pred_check_branch
      %277 = sbr.rel (%p275) target = $region48
    $region47: #{_double_conv_impl.1} parent=5 // pred_region
      // Predicated region
      $region49: #{_double_conv_impl.1} parent=47 // pred_check
        %p278 = pneg %p35
      $region50: #{_double_conv_impl.1} parent=47 // pred_check_branch
        %280 = sbr.rel (%p278) target = $region52
      $region51: #{_double_conv_impl.1} parent=47 // pred_region
        %p281 = scmp.lt.s32.totalorder %s15, 1
        %s282 = scalar_select %p281, %s15, 1
        %s283 = smul.addr %s282, 54
        %s284 = smul.addr %s283, 4
        %s285 = scalar_lea.vmem %s0, %s284
      $region52: #{_double_conv_impl.1} parent=47 // pred_fallthru
        _
    $region48: #{_double_conv_impl.1} parent=5 // pred_fallthru
      _
    %p286 = scmp.le.s32.totalorder 1, %s15
    %p287 = scmp.lt.s32.totalorder %s15, 3
    %p288 = pnand %p286, %p287
    %p289 = pneg %p288
    // Predicated region
    $region53: #{_double_conv_impl.1} parent=5 // pred_check
      _
    $region54: #{_double_conv_impl.1} parent=5 // pred_check_branch
      %291 = sbr.rel (%p288) target = $region56
    $region55: #{_double_conv_impl.1} parent=5 // pred_region
      %s292 = ssub.s32 %s15, 1
      %p293 = scmp.lt.s32.totalorder %s20, 1
      %s294 = scalar_select %p293, %s20, 1
      %s295 = smul.addr %s294, 54
      %s296 = smul.addr %s295, 4
      %s297 = scalar_lea.vmem %s0, %s296
      %p298 = pneg %p41
      %p299 = pneg %p38
      %p300 = pneg %p62
      %p301 = pneg %p59
      %p302 = pneg %p83
      %p303 = pneg %p80
      %p304 = pneg %p104
      %p305 = pneg %p101
      %p306 = pneg %p125
      %p307 = pneg %p122
      %p308 = pneg %p146
      %p309 = pneg %p143
      %p310 = pneg %p167
      %p311 = pneg %p164
      %p312 = pneg %p188
      %p313 = pneg %p185
      %p314 = pneg %p209
      %p315 = pneg %p206
      %p316 = pneg %p235
      %p317 = pneg %p232
      %p318 = scmp.lt.s32.totalorder %s20, 1
      %s319 = scalar_select %p318, %s20, 1
      %s320 = smul.addr %s319, 32
      %s321 = smul.addr %s320, 8
      %s322 = scalar_lea.vmem %s9, %s321
      %p323 = scmp.lt.s32.totalorder %s20, 1
      %s324 = scalar_select %p323, %s20, 1
      %s325 = smul.addr %s324, 54
      %s326 = smul.addr %s325, 4
      %s327 = scalar_lea.vmem %s0, %s326
      %p328 = scmp.lt.s32.totalorder %s20, 1
      %s329 = scalar_select %p328, %s20, 1
      %s330 = smul.addr %s329, 32
      %s331 = smul.addr %s330, 8
      %s332 = scalar_lea.vmem %s9, %s331
      %vm334 = vcmask 125952
      %335 = vst.msk [vmem:[#allocation2] sm:$0xf] %vm334, 0
      %336 = vst.msk [vmem:[#allocation2 + $0x4] sm:$0xf] %vm334, 0
      %vm337 = vcmask 122880
      %338 = vst.msk [vmem:[#allocation2 + $0x8] sm:$0x1] %vm337, 0
      %s339 = scalar_lea.vmem [#allocation2], 204
      %340 = vst.msk [vmem:[%s339] sm:$0xf] %vm334, 0
      %341 = vst.msk [vmem:[%s339 + $0x4] sm:$0xf] %vm334, 0
      %342 = vst.msk [vmem:[%s339 + $0x8] sm:$0x1] %vm337, 0
      %vm343 = vcmask 122880
      %vm344 = vsmask.f32 256
      %vm345 = vmand %vm343, %vm344
      %v346 = vld [vmem:[#allocation2] sm:$0x1]
      %v347 = vsel %vm345, 0, %v346
      %348 = vst [vmem:[#allocation2] sm:$0x1] %v347
      %v349 = vld [vmem:[#allocation2 + $0xc] sm:$0x1]
      %v350 = vsel %vm345, 0, %v349
      %351 = vst [vmem:[#allocation2 + $0xc] sm:$0x1] %v350
      %v352 = vld [vmem:[#allocation2 + $0x18] sm:$0x1]
      %v353 = vsel %vm345, 0, %v352
      %354 = vst [vmem:[#allocation2 + $0x18] sm:$0x1] %v353
      %v355 = vld [vmem:[#allocation2 + $0x24] sm:$0x1]
      %v356 = vsel %vm345, 0, %v355
      %357 = vst [vmem:[#allocation2 + $0x24] sm:$0x1] %v356
      %v358 = vld [vmem:[#allocation2 + $0x30] sm:$0x1]
      %v359 = vsel %vm345, 0, %v358
      %360 = vst [vmem:[#allocation2 + $0x30] sm:$0x1] %v359
      %v361 = vld [vmem:[#allocation2 + $0x3c] sm:$0x1]
      %v362 = vsel %vm345, 0, %v361
      %363 = vst [vmem:[#allocation2 + $0x3c] sm:$0x1] %v362
      %v364 = vld [vmem:[#allocation2 + $0x48] sm:$0x1]
      %v365 = vsel %vm345, 0, %v364
      %366 = vst [vmem:[#allocation2 + $0x48] sm:$0x1] %v365
      %v367 = vld [vmem:[#allocation2 + $0x54] sm:$0x1]
      %v368 = vsel %vm345, 0, %v367
      %369 = vst [vmem:[#allocation2 + $0x54] sm:$0x1] %v368
      %v370 = vld [vmem:[#allocation2 + $0x60] sm:$0x1]
      %v371 = vsel %vm345, 0, %v370
      %372 = vst [vmem:[#allocation2 + $0x60] sm:$0x1] %v371
      %v373 = vld [vmem:[#allocation2 + $0x6c] sm:$0x1]
      %v374 = vsel %vm345, 0, %v373
      %375 = vst [vmem:[#allocation2 + $0x6c] sm:$0x1] %v374
      %v376 = vld [vmem:[#allocation2 + $0x78] sm:$0x1]
      %v377 = vsel %vm345, 0, %v376
      %378 = vst [vmem:[#allocation2 + $0x78] sm:$0x1] %v377
      %v379 = vld [vmem:[#allocation2 + $0x84] sm:$0x1]
      %v380 = vsel %vm345, 0, %v379
      %381 = vst [vmem:[#allocation2 + $0x84] sm:$0x1] %v380
      %v382 = vld [vmem:[#allocation2 + $0x90] sm:$0x1]
      %v383 = vsel %vm345, 0, %v382
      %384 = vst [vmem:[#allocation2 + $0x90] sm:$0x1] %v383
      %v385 = vld [vmem:[#allocation2 + $0x9c] sm:$0x1]
      %v386 = vsel %vm345, 0, %v385
      %387 = vst [vmem:[#allocation2 + $0x9c] sm:$0x1] %v386
      %v388 = vld [vmem:[#allocation2 + $0xa8] sm:$0x1]
      %v389 = vsel %vm345, 0, %v388
      %390 = vst [vmem:[#allocation2 + $0xa8] sm:$0x1] %v389
      %v391 = vld [vmem:[#allocation2 + $0xb4] sm:$0x1]
      %v392 = vsel %vm345, 0, %v391
      %393 = vst [vmem:[#allocation2 + $0xb4] sm:$0x1] %v392
      %v394 = vld [vmem:[#allocation2 + $0xc0] sm:$0x1]
      %v395 = vsel %vm345, 0, %v394
      %396 = vst [vmem:[#allocation2 + $0xc0] sm:$0x1] %v395
      %v397 = vld [vmem:[#allocation2 + $0xcc] sm:$0x1]
      %v398 = vsel %vm345, 0, %v397
      %399 = vst [vmem:[#allocation2 + $0xcc] sm:$0x1] %v398
      %vm400 = vsmask.f32 7938
      %vm401 = vmand %vm343, %vm400
      %v402 = vld [vmem:[#allocation2 + $0x8] sm:$0x1]
      %v403 = vsel %vm401, 0, %v402
      %404 = vst [vmem:[#allocation2 + $0x8] sm:$0x1] %v403
      %v405 = vld [vmem:[#allocation2 + $0x14] sm:$0x1]
      %v406 = vsel %vm401, 0, %v405
      %407 = vst [vmem:[#allocation2 + $0x14] sm:$0x1] %v406
      %v408 = vld [vmem:[#allocation2 + $0x20] sm:$0x1]
      %v409 = vsel %vm401, 0, %v408
      %410 = vst [vmem:[#allocation2 + $0x20] sm:$0x1] %v409
      %v411 = vld [vmem:[#allocation2 + $0x2c] sm:$0x1]
      %v412 = vsel %vm401, 0, %v411
      %413 = vst [vmem:[#allocation2 + $0x2c] sm:$0x1] %v412
      %v414 = vld [vmem:[#allocation2 + $0x38] sm:$0x1]
      %v415 = vsel %vm401, 0, %v414
      %416 = vst [vmem:[#allocation2 + $0x38] sm:$0x1] %v415
      %v417 = vld [vmem:[#allocation2 + $0x44] sm:$0x1]
      %v418 = vsel %vm401, 0, %v417
      %419 = vst [vmem:[#allocation2 + $0x44] sm:$0x1] %v418
      %v420 = vld [vmem:[#allocation2 + $0x50] sm:$0x1]
      %v421 = vsel %vm401, 0, %v420
      %422 = vst [vmem:[#allocation2 + $0x50] sm:$0x1] %v421
      %v423 = vld [vmem:[#allocation2 + $0x5c] sm:$0x1]
      %v424 = vsel %vm401, 0, %v423
      %425 = vst [vmem:[#allocation2 + $0x5c] sm:$0x1] %v424
      %v426 = vld [vmem:[#allocation2 + $0x68] sm:$0x1]
      %v427 = vsel %vm401, 0, %v426
      %428 = vst [vmem:[#allocation2 + $0x68] sm:$0x1] %v427
      %v429 = vld [vmem:[#allocation2 + $0x74] sm:$0x1]
      %v430 = vsel %vm401, 0, %v429
      %431 = vst [vmem:[#allocation2 + $0x74] sm:$0x1] %v430
      %v432 = vld [vmem:[#allocation2 + $0x80] sm:$0x1]
      %v433 = vsel %vm401, 0, %v432
      %434 = vst [vmem:[#allocation2 + $0x80] sm:$0x1] %v433
      %v435 = vld [vmem:[#allocation2 + $0x8c] sm:$0x1]
      %v436 = vsel %vm401, 0, %v435
      %437 = vst [vmem:[#allocation2 + $0x8c] sm:$0x1] %v436
      %v438 = vld [vmem:[#allocation2 + $0x98] sm:$0x1]
      %v439 = vsel %vm401, 0, %v438
      %440 = vst [vmem:[#allocation2 + $0x98] sm:$0x1] %v439
      %v441 = vld [vmem:[#allocation2 + $0xa4] sm:$0x1]
      %v442 = vsel %vm401, 0, %v441
      %443 = vst [vmem:[#allocation2 + $0xa4] sm:$0x1] %v442
      %v444 = vld [vmem:[#allocation2 + $0xb0] sm:$0x1]
      %v445 = vsel %vm401, 0, %v444
      %446 = vst [vmem:[#allocation2 + $0xb0] sm:$0x1] %v445
      %v447 = vld [vmem:[#allocation2 + $0xbc] sm:$0x1]
      %v448 = vsel %vm401, 0, %v447
      %449 = vst [vmem:[#allocation2 + $0xbc] sm:$0x1] %v448
      %v450 = vld [vmem:[#allocation2 + $0xc8] sm:$0x1]
      %v451 = vsel %vm401, 0, %v450
      %452 = vst [vmem:[#allocation2 + $0xc8] sm:$0x1] %v451
      %v453 = vld [vmem:[#allocation2 + $0xd4] sm:$0x1]
      %v454 = vsel %vm401, 0, %v453
      %455 = vst [vmem:[#allocation2 + $0xd4] sm:$0x1] %v454
      %v456 = vld [vmem:[%s327] sm:$0xf]
      %v457 = vld [vmem:[%s327 + $0x4] sm:$0xf]
      %v458 = vld [vmem:[%s327 + $0xc] sm:$0xf]
      %v459 = vld [vmem:[%s327 + $0x10] sm:$0xf]
      %v460 = vld [vmem:[%s327 + $0x18] sm:$0xf]
      %v461 = vld [vmem:[%s327 + $0x1c] sm:$0xf]
      %v462 = vld [vmem:[%s327 + $0x24] sm:$0xf]
      %v463 = vld [vmem:[%s327 + $0x28] sm:$0xf]
      %v464 = vld [vmem:[%s327 + $0x30] sm:$0xf]
      %v465 = vld [vmem:[%s327 + $0x34] sm:$0xf]
      %v466 = vld [vmem:[%s327 + $0x3c] sm:$0xf]
      %v467 = vld [vmem:[%s327 + $0x40] sm:$0xf]
      %v468 = vld [vmem:[%s327 + $0x48] sm:$0xf]
      %v469 = vld [vmem:[%s327 + $0x4c] sm:$0xf]
      %v470 = vld [vmem:[%s327 + $0x54] sm:$0xf]
      %v471 = vld [vmem:[%s327 + $0x58] sm:$0xf]
      %v472 = vld [vmem:[%s327 + $0x60] sm:$0xf]
      %v473 = vld [vmem:[%s327 + $0x64] sm:$0xf]
      %v474 = vld [vmem:[%s327 + $0x6c] sm:$0xf]
      %v475 = vld [vmem:[%s327 + $0x70] sm:$0xf]
      %v476 = vld [vmem:[%s327 + $0x78] sm:$0xf]
      %v477 = vld [vmem:[%s327 + $0x7c] sm:$0xf]
      %v478 = vld [vmem:[%s327 + $0x84] sm:$0xf]
      %v479 = vld [vmem:[%s327 + $0x88] sm:$0xf]
      %v480 = vld [vmem:[%s327 + $0x90] sm:$0xf]
      %v481 = vld [vmem:[%s327 + $0x94] sm:$0xf]
      %v482 = vld [vmem:[%s327 + $0x9c] sm:$0xf]
      %v483 = vld [vmem:[%s327 + $0xa0] sm:$0xf]
      %v484 = vld [vmem:[%s327 + $0xa8] sm:$0xf]
      %v485 = vld [vmem:[%s327 + $0xac] sm:$0xf]
      %v486 = vld [vmem:[%s327 + $0xb4] sm:$0xf]
      %v487 = vld [vmem:[%s327 + $0xb8] sm:$0xf]
      %v520 = vunpack.c.l.b16 %v456
      %v521 = vunpack.c.l.b16 %v457
      %v522 = vunpack.c.l.b16 %v458
      %v523 = vunpack.c.l.b16 %v459
      %v524 = vunpack.c.l.b16 %v460
      %v525 = vunpack.c.l.b16 %v461
      %v526 = vunpack.c.l.b16 %v462
      %v527 = vunpack.c.l.b16 %v463
      %v528 = vunpack.c.l.b16 %v464
      %v529 = vunpack.c.l.b16 %v465
      %v530 = vunpack.c.l.b16 %v466
      %v531 = vunpack.c.l.b16 %v467
      %v532 = vunpack.c.l.b16 %v468
      %v533 = vunpack.c.l.b16 %v469
      %v534 = vunpack.c.l.b16 %v470
      %v535 = vunpack.c.l.b16 %v471
      %v536 = vunpack.c.l.b16 %v472
      %v537 = vunpack.c.l.b16 %v473
      %v538 = vunpack.c.l.b16 %v474
      %v539 = vunpack.c.l.b16 %v475
      %v540 = vunpack.c.l.b16 %v476
      %v541 = vunpack.c.l.b16 %v477
      %v542 = vunpack.c.l.b16 %v478
      %v543 = vunpack.c.l.b16 %v479
      %v544 = vunpack.c.l.b16 %v480
      %v545 = vunpack.c.l.b16 %v481
      %v546 = vunpack.c.l.b16 %v482
      %v547 = vunpack.c.l.b16 %v483
      %v548 = vunpack.c.l.b16 %v484
      %v549 = vunpack.c.l.b16 %v485
      %v550 = vunpack.c.l.b16 %v486
      %v551 = vunpack.c.l.b16 %v487
      %v552 = vpack.c.b16 %v521, %v520
      %v553 = vpack.c.b16 %v523, %v522
      %v554 = vpack.c.b16 %v525, %v524
      %v555 = vpack.c.b16 %v527, %v526
      %v556 = vpack.c.b16 %v529, %v528
      %v557 = vpack.c.b16 %v531, %v530
      %v558 = vpack.c.b16 %v533, %v532
      %v559 = vpack.c.b16 %v535, %v534
      %v560 = vpack.c.b16 %v537, %v536
      %v561 = vpack.c.b16 %v539, %v538
      %v562 = vpack.c.b16 %v541, %v540
      %v563 = vpack.c.b16 %v543, %v542
      %v564 = vpack.c.b16 %v545, %v544
      %v565 = vpack.c.b16 %v547, %v546
      %v566 = vpack.c.b16 %v549, %v548
      %v567 = vpack.c.b16 %v551, %v550
      %vm584 = vcmask 31744
      %585 = vst.msk [vmem:[#allocation3] sm:$0xff] %vm584, %v552
      %586 = vst.msk [vmem:[#allocation3 + $0x8] sm:$0xff] %vm584, %v553
      %587 = vst.msk [vmem:[#allocation3 + $0x10] sm:$0xff] %vm584, %v554
      %588 = vst.msk [vmem:[#allocation3 + $0x18] sm:$0xff] %vm584, %v555
      %589 = vst.msk [vmem:[#allocation3 + $0x20] sm:$0xff] %vm584, %v556
      %590 = vst.msk [vmem:[#allocation3 + $0x28] sm:$0xff] %vm584, %v557
      %591 = vst.msk [vmem:[#allocation3 + $0x30] sm:$0xff] %vm584, %v558
      %592 = vst.msk [vmem:[#allocation3 + $0x38] sm:$0xff] %vm584, %v559
      %593 = vst.msk [vmem:[#allocation3 + $0x40] sm:$0xff] %vm584, %v560
      %594 = vst.msk [vmem:[#allocation3 + $0x48] sm:$0xff] %vm584, %v561
      %595 = vst.msk [vmem:[#allocation3 + $0x50] sm:$0xff] %vm584, %v562
      %596 = vst.msk [vmem:[#allocation3 + $0x58] sm:$0xff] %vm584, %v563
      %597 = vst.msk [vmem:[#allocation3 + $0x60] sm:$0xff] %vm584, %v564
      %598 = vst.msk [vmem:[#allocation3 + $0x68] sm:$0xff] %vm584, %v565
      %599 = vst.msk [vmem:[#allocation3 + $0x70] sm:$0xff] %vm584, %v566
      %600 = vst.msk [vmem:[#allocation3 + $0x78] sm:$0xff] %vm584, %v567
      %v601 = vld [vmem:[%s327] sm:$0xf]
      %v602 = vld [vmem:[%s327 + $0x4] sm:$0xf]
      %v603 = vld [vmem:[%s327 + $0x8] sm:$0x1]
      %v604 = vld [vmem:[%s327 + $0xc] sm:$0xf]
      %v605 = vld [vmem:[%s327 + $0x10] sm:$0xf]
      %v606 = vld [vmem:[%s327 + $0x14] sm:$0x1]
      %v607 = vld [vmem:[%s327 + $0x18] sm:$0xf]
      %v608 = vld [vmem:[%s327 + $0x1c] sm:$0xf]
      %v609 = vld [vmem:[%s327 + $0x20] sm:$0x1]
      %v610 = vld [vmem:[%s327 + $0x24] sm:$0xf]
      %v611 = vld [vmem:[%s327 + $0x28] sm:$0xf]
      %v612 = vld [vmem:[%s327 + $0x2c] sm:$0x1]
      %v613 = vld [vmem:[%s327 + $0x30] sm:$0xf]
      %v614 = vld [vmem:[%s327 + $0x34] sm:$0xf]
      %v615 = vld [vmem:[%s327 + $0x38] sm:$0x1]
      %v616 = vld [vmem:[%s327 + $0x3c] sm:$0xf]
      %v617 = vld [vmem:[%s327 + $0x40] sm:$0xf]
      %v618 = vld [vmem:[%s327 + $0x44] sm:$0x1]
      %v619 = vld [vmem:[%s327 + $0x48] sm:$0xf]
      %v620 = vld [vmem:[%s327 + $0x4c] sm:$0xf]
      %v621 = vld [vmem:[%s327 + $0x50] sm:$0x1]
      %v622 = vld [vmem:[%s327 + $0x54] sm:$0xf]
      %v623 = vld [vmem:[%s327 + $0x58] sm:$0xf]
      %v624 = vld [vmem:[%s327 + $0x5c] sm:$0x1]
      %v625 = vld [vmem:[%s327 + $0x60] sm:$0xf]
      %v626 = vld [vmem:[%s327 + $0x64] sm:$0xf]
      %v627 = vld [vmem:[%s327 + $0x68] sm:$0x1]
      %v628 = vld [vmem:[%s327 + $0x6c] sm:$0xf]
      %v629 = vld [vmem:[%s327 + $0x70] sm:$0xf]
      %v630 = vld [vmem:[%s327 + $0x74] sm:$0x1]
      %v631 = vld [vmem:[%s327 + $0x78] sm:$0xf]
      %v632 = vld [vmem:[%s327 + $0x7c] sm:$0xf]
      %v633 = vld [vmem:[%s327 + $0x80] sm:$0x1]
      %v634 = vld [vmem:[%s327 + $0x84] sm:$0xf]
      %v635 = vld [vmem:[%s327 + $0x88] sm:$0xf]
      %v636 = vld [vmem:[%s327 + $0x8c] sm:$0x1]
      %v637 = vld [vmem:[%s327 + $0x90] sm:$0xf]
      %v638 = vld [vmem:[%s327 + $0x94] sm:$0xf]
      %v639 = vld [vmem:[%s327 + $0x98] sm:$0x1]
      %v640 = vld [vmem:[%s327 + $0x9c] sm:$0xf]
      %v641 = vld [vmem:[%s327 + $0xa0] sm:$0xf]
      %v642 = vld [vmem:[%s327 + $0xa4] sm:$0x1]
      %v643 = vld [vmem:[%s327 + $0xa8] sm:$0xf]
      %v644 = vld [vmem:[%s327 + $0xac] sm:$0xf]
      %v645 = vld [vmem:[%s327 + $0xb0] sm:$0x1]
      %v646 = vld [vmem:[%s327 + $0xb4] sm:$0xf]
      %v647 = vld [vmem:[%s327 + $0xb8] sm:$0xf]
      %v648 = vld [vmem:[%s327 + $0xbc] sm:$0x1]
      %vm649 = vsmask.f32 3328
      %vm650 = vsmask.f32 7440
      %vm651 = vmor %vm649, %vm650
      %v653 = vshrl.u32 %v601, 16
      %v655 = vrot.slane %v653, 4
      %v656 = vshll.u32 %v601, 16
      %v658 = vrot.slane %v656, 5
      %v659 = vor.u32 %v655, %v658
      %v660 = vrot.slane %v659, 4
      %v662 = vshll.u32 %v602, 16
      %v664 = vrot.slane %v662, 5
      %v665 = vsel %vm651, %v660, %v664
      %v666 = vshrl.u32 %v602, 16
      %v668 = vrot.slane %v666, 4
      %v669 = vor.u32 %v668, %v664
      %v670 = vrot.slane %v669, 4
      %v672 = vshll.u32 %v603, 16
      %v674 = vrot.slane %v672, 5
      %v675 = vsel %vm651, %v670, %v674
      %v677 = vshrl.u32 %v604, 16
      %v679 = vrot.slane %v677, 4
      %v680 = vshll.u32 %v604, 16
      %v682 = vrot.slane %v680, 5
      %v683 = vor.u32 %v679, %v682
      %v684 = vrot.slane %v683, 4
      %v686 = vshll.u32 %v605, 16
      %v688 = vrot.slane %v686, 5
      %v689 = vsel %vm651, %v684, %v688
      %v690 = vshrl.u32 %v605, 16
      %v692 = vrot.slane %v690, 4
      %v693 = vor.u32 %v692, %v688
      %v694 = vrot.slane %v693, 4
      %v696 = vshll.u32 %v606, 16
      %v698 = vrot.slane %v696, 5
      %v699 = vsel %vm651, %v694, %v698
      %v701 = vshrl.u32 %v607, 16
      %v703 = vrot.slane %v701, 4
      %v704 = vshll.u32 %v607, 16
      %v706 = vrot.slane %v704, 5
      %v707 = vor.u32 %v703, %v706
      %v708 = vrot.slane %v707, 4
      %v710 = vshll.u32 %v608, 16
      %v712 = vrot.slane %v710, 5
      %v713 = vsel %vm651, %v708, %v712
      %v714 = vshrl.u32 %v608, 16
      %v716 = vrot.slane %v714, 4
      %v717 = vor.u32 %v716, %v712
      %v718 = vrot.slane %v717, 4
      %v720 = vshll.u32 %v609, 16
      %v722 = vrot.slane %v720, 5
      %v723 = vsel %vm651, %v718, %v722
      %v725 = vshrl.u32 %v610, 16
      %v727 = vrot.slane %v725, 4
      %v728 = vshll.u32 %v610, 16
      %v730 = vrot.slane %v728, 5
      %v731 = vor.u32 %v727, %v730
      %v732 = vrot.slane %v731, 4
      %v734 = vshll.u32 %v611, 16
      %v736 = vrot.slane %v734, 5
      %v737 = vsel %vm651, %v732, %v736
      %v738 = vshrl.u32 %v611, 16
      %v740 = vrot.slane %v738, 4
      %v741 = vor.u32 %v740, %v736
      %v742 = vrot.slane %v741, 4
      %v744 = vshll.u32 %v612, 16
      %v746 = vrot.slane %v744, 5
      %v747 = vsel %vm651, %v742, %v746
      %v749 = vshrl.u32 %v613, 16
      %v751 = vrot.slane %v749, 4
      %v752 = vshll.u32 %v613, 16
      %v754 = vrot.slane %v752, 5
      %v755 = vor.u32 %v751, %v754
      %v756 = vrot.slane %v755, 4
      %v758 = vshll.u32 %v614, 16
      %v760 = vrot.slane %v758, 5
      %v761 = vsel %vm651, %v756, %v760
      %v762 = vshrl.u32 %v614, 16
      %v764 = vrot.slane %v762, 4
      %v765 = vor.u32 %v764, %v760
      %v766 = vrot.slane %v765, 4
      %v768 = vshll.u32 %v615, 16
      %v770 = vrot.slane %v768, 5
      %v771 = vsel %vm651, %v766, %v770
      %v773 = vshrl.u32 %v616, 16
      %v775 = vrot.slane %v773, 4
      %v776 = vshll.u32 %v616, 16
      %v778 = vrot.slane %v776, 5
      %v779 = vor.u32 %v775, %v778
      %v780 = vrot.slane %v779, 4
      %v782 = vshll.u32 %v617, 16
      %v784 = vrot.slane %v782, 5
      %v785 = vsel %vm651, %v780, %v784
      %v786 = vshrl.u32 %v617, 16
      %v788 = vrot.slane %v786, 4
      %v789 = vor.u32 %v788, %v784
      %v790 = vrot.slane %v789, 4
      %v792 = vshll.u32 %v618, 16
      %v794 = vrot.slane %v792, 5
      %v795 = vsel %vm651, %v790, %v794
      %v797 = vshrl.u32 %v619, 16
      %v799 = vrot.slane %v797, 4
      %v800 = vshll.u32 %v619, 16
      %v802 = vrot.slane %v800, 5
      %v803 = vor.u32 %v799, %v802
      %v804 = vrot.slane %v803, 4
      %v806 = vshll.u32 %v620, 16
      %v808 = vrot.slane %v806, 5
      %v809 = vsel %vm651, %v804, %v808
      %v810 = vshrl.u32 %v620, 16
      %v812 = vrot.slane %v810, 4
      %v813 = vor.u32 %v812, %v808
      %v814 = vrot.slane %v813, 4
      %v816 = vshll.u32 %v621, 16
      %v818 = vrot.slane %v816, 5
      %v819 = vsel %vm651, %v814, %v818
      %v821 = vshrl.u32 %v622, 16
      %v823 = vrot.slane %v821, 4
      %v824 = vshll.u32 %v622, 16
      %v826 = vrot.slane %v824, 5
      %v827 = vor.u32 %v823, %v826
      %v828 = vrot.slane %v827, 4
      %v830 = vshll.u32 %v623, 16
      %v832 = vrot.slane %v830, 5
      %v833 = vsel %vm651, %v828, %v832
      %v834 = vshrl.u32 %v623, 16
      %v836 = vrot.slane %v834, 4
      %v837 = vor.u32 %v836, %v832
      %v838 = vrot.slane %v837, 4
      %v840 = vshll.u32 %v624, 16
      %v842 = vrot.slane %v840, 5
      %v843 = vsel %vm651, %v838, %v842
      %v845 = vshrl.u32 %v625, 16
      %v847 = vrot.slane %v845, 4
      %v848 = vshll.u32 %v625, 16
      %v850 = vrot.slane %v848, 5
      %v851 = vor.u32 %v847, %v850
      %v852 = vrot.slane %v851, 4
      %v854 = vshll.u32 %v626, 16
      %v856 = vrot.slane %v854, 5
      %v857 = vsel %vm651, %v852, %v856
      %v858 = vshrl.u32 %v626, 16
      %v860 = vrot.slane %v858, 4
      %v861 = vor.u32 %v860, %v856
      %v862 = vrot.slane %v861, 4
      %v864 = vshll.u32 %v627, 16
      %v866 = vrot.slane %v864, 5
      %v867 = vsel %vm651, %v862, %v866
      %v869 = vshrl.u32 %v628, 16
      %v871 = vrot.slane %v869, 4
      %v872 = vshll.u32 %v628, 16
      %v874 = vrot.slane %v872, 5
      %v875 = vor.u32 %v871, %v874
      %v876 = vrot.slane %v875, 4
      %v878 = vshll.u32 %v629, 16
      %v880 = vrot.slane %v878, 5
      %v881 = vsel %vm651, %v876, %v880
      %v882 = vshrl.u32 %v629, 16
      %v884 = vrot.slane %v882, 4
      %v885 = vor.u32 %v884, %v880
      %v886 = vrot.slane %v885, 4
      %v888 = vshll.u32 %v630, 16
      %v890 = vrot.slane %v888, 5
      %v891 = vsel %vm651, %v886, %v890
      %v893 = vshrl.u32 %v631, 16
      %v895 = vrot.slane %v893, 4
      %v896 = vshll.u32 %v631, 16
      %v898 = vrot.slane %v896, 5
      %v899 = vor.u32 %v895, %v898
      %v900 = vrot.slane %v899, 4
      %v902 = vshll.u32 %v632, 16
      %v904 = vrot.slane %v902, 5
      %v905 = vsel %vm651, %v900, %v904
      %v906 = vshrl.u32 %v632, 16
      %v908 = vrot.slane %v906, 4
      %v909 = vor.u32 %v908, %v904
      %v910 = vrot.slane %v909, 4
      %v912 = vshll.u32 %v633, 16
      %v914 = vrot.slane %v912, 5
      %v915 = vsel %vm651, %v910, %v914
      %v917 = vshrl.u32 %v634, 16
      %v919 = vrot.slane %v917, 4
      %v920 = vshll.u32 %v634, 16
      %v922 = vrot.slane %v920, 5
      %v923 = vor.u32 %v919, %v922
      %v924 = vrot.slane %v923, 4
      %v926 = vshll.u32 %v635, 16
      %v928 = vrot.slane %v926, 5
      %v929 = vsel %vm651, %v924, %v928
      %v930 = vshrl.u32 %v635, 16
      %v932 = vrot.slane %v930, 4
      %v933 = vor.u32 %v932, %v928
      %v934 = vrot.slane %v933, 4
      %v936 = vshll.u32 %v636, 16
      %v938 = vrot.slane %v936, 5
      %v939 = vsel %vm651, %v934, %v938
      %v941 = vshrl.u32 %v637, 16
      %v943 = vrot.slane %v941, 4
      %v944 = vshll.u32 %v637, 16
      %v946 = vrot.slane %v944, 5
      %v947 = vor.u32 %v943, %v946
      %v948 = vrot.slane %v947, 4
      %v950 = vshll.u32 %v638, 16
      %v952 = vrot.slane %v950, 5
      %v953 = vsel %vm651, %v948, %v952
      %v954 = vshrl.u32 %v638, 16
      %v956 = vrot.slane %v954, 4
      %v957 = vor.u32 %v956, %v952
      %v958 = vrot.slane %v957, 4
      %v960 = vshll.u32 %v639, 16
      %v962 = vrot.slane %v960, 5
      %v963 = vsel %vm651, %v958, %v962
      %v965 = vshrl.u32 %v640, 16
      %v967 = vrot.slane %v965, 4
      %v968 = vshll.u32 %v640, 16
      %v970 = vrot.slane %v968, 5
      %v971 = vor.u32 %v967, %v970
      %v972 = vrot.slane %v971, 4
      %v974 = vshll.u32 %v641, 16
      %v976 = vrot.slane %v974, 5
      %v977 = vsel %vm651, %v972, %v976
      %v978 = vshrl.u32 %v641, 16
      %v980 = vrot.slane %v978, 4
      %v981 = vor.u32 %v980, %v976
      %v982 = vrot.slane %v981, 4
      %v984 = vshll.u32 %v642, 16
      %v986 = vrot.slane %v984, 5
      %v987 = vsel %vm651, %v982, %v986
      %v989 = vshrl.u32 %v643, 16
      %v991 = vrot.slane %v989, 4
      %v992 = vshll.u32 %v643, 16
      %v994 = vrot.slane %v992, 5
      %v995 = vor.u32 %v991, %v994
      %v996 = vrot.slane %v995, 4
      %v998 = vshll.u32 %v644, 16
      %v1000 = vrot.slane %v998, 5
      %v1001 = vsel %vm651, %v996, %v1000
      %v1002 = vshrl.u32 %v644, 16
      %v1004 = vrot.slane %v1002, 4
      %v1005 = vor.u32 %v1004, %v1000
      %v1006 = vrot.slane %v1005, 4
      %v1008 = vshll.u32 %v645, 16
      %v1010 = vrot.slane %v1008, 5
      %v1011 = vsel %vm651, %v1006, %v1010
      %v1013 = vshrl.u32 %v646, 16
      %v1015 = vrot.slane %v1013, 4
      %v1016 = vshll.u32 %v646, 16
      %v1018 = vrot.slane %v1016, 5
      %v1019 = vor.u32 %v1015, %v1018
      %v1020 = vrot.slane %v1019, 4
      %v1022 = vshll.u32 %v647, 16
      %v1024 = vrot.slane %v1022, 5
      %v1025 = vsel %vm651, %v1020, %v1024
      %v1026 = vshrl.u32 %v647, 16
      %v1028 = vrot.slane %v1026, 4
      %v1029 = vor.u32 %v1028, %v1024
      %v1030 = vrot.slane %v1029, 4
      %v1032 = vshll.u32 %v648, 16
      %v1034 = vrot.slane %v1032, 5
      %v1035 = vsel %vm651, %v1030, %v1034
      %v1036 = vunpack.c.l.b16 %v665
      %v1037 = vunpack.c.l.b16 %v675
      %v1038 = vunpack.c.l.b16 %v689
      %v1039 = vunpack.c.l.b16 %v699
      %v1040 = vunpack.c.l.b16 %v713
      %v1041 = vunpack.c.l.b16 %v723
      %v1042 = vunpack.c.l.b16 %v737
      %v1043 = vunpack.c.l.b16 %v747
      %v1044 = vunpack.c.l.b16 %v761
      %v1045 = vunpack.c.l.b16 %v771
      %v1046 = vunpack.c.l.b16 %v785
      %v1047 = vunpack.c.l.b16 %v795
      %v1048 = vunpack.c.l.b16 %v809
      %v1049 = vunpack.c.l.b16 %v819
      %v1050 = vunpack.c.l.b16 %v833
      %v1051 = vunpack.c.l.b16 %v843
      %v1052 = vunpack.c.l.b16 %v857
      %v1053 = vunpack.c.l.b16 %v867
      %v1054 = vunpack.c.l.b16 %v881
      %v1055 = vunpack.c.l.b16 %v891
      %v1056 = vunpack.c.l.b16 %v905
      %v1057 = vunpack.c.l.b16 %v915
      %v1058 = vunpack.c.l.b16 %v929
      %v1059 = vunpack.c.l.b16 %v939
      %v1060 = vunpack.c.l.b16 %v953
      %v1061 = vunpack.c.l.b16 %v963
      %v1062 = vunpack.c.l.b16 %v977
      %v1063 = vunpack.c.l.b16 %v987
      %v1064 = vunpack.c.l.b16 %v1001
      %v1065 = vunpack.c.l.b16 %v1011
      %v1066 = vunpack.c.l.b16 %v1025
      %v1067 = vunpack.c.l.b16 %v1035
      %v1068 = vpack.c.b16 %v1037, %v1036
      %v1069 = vpack.c.b16 %v1039, %v1038
      %v1070 = vpack.c.b16 %v1041, %v1040
      %v1071 = vpack.c.b16 %v1043, %v1042
      %v1072 = vpack.c.b16 %v1045, %v1044
      %v1073 = vpack.c.b16 %v1047, %v1046
      %v1074 = vpack.c.b16 %v1049, %v1048
      %v1075 = vpack.c.b16 %v1051, %v1050
      %v1076 = vpack.c.b16 %v1053, %v1052
      %v1077 = vpack.c.b16 %v1055, %v1054
      %v1078 = vpack.c.b16 %v1057, %v1056
      %v1079 = vpack.c.b16 %v1059, %v1058
      %v1080 = vpack.c.b16 %v1061, %v1060
      %v1081 = vpack.c.b16 %v1063, %v1062
      %v1082 = vpack.c.b16 %v1065, %v1064
      %v1083 = vpack.c.b16 %v1067, %v1066
      %1084 = vrot.lane.b32.xlu0 %v1068, 4
      %v1085 = vpop.permute.xlu0 %1084
      %1086 = vrot.lane.b32.xlu0 %v1069, 4
      %v1087 = vpop.permute.xlu0 %1086
      %1088 = vrot.lane.b32.xlu0 %v1070, 4
      %v1089 = vpop.permute.xlu0 %1088
      %1090 = vrot.lane.b32.xlu0 %v1071, 4
      %v1091 = vpop.permute.xlu0 %1090
      %1092 = vrot.lane.b32.xlu0 %v1072, 4
      %v1093 = vpop.permute.xlu0 %1092
      %1094 = vrot.lane.b32.xlu0 %v1073, 4
      %v1095 = vpop.permute.xlu0 %1094
      %1096 = vrot.lane.b32.xlu0 %v1074, 4
      %v1097 = vpop.permute.xlu0 %1096
      %1098 = vrot.lane.b32.xlu0 %v1075, 4
      %v1099 = vpop.permute.xlu0 %1098
      %1100 = vrot.lane.b32.xlu0 %v1076, 4
      %v1101 = vpop.permute.xlu0 %1100
      %1102 = vrot.lane.b32.xlu0 %v1077, 4
      %v1103 = vpop.permute.xlu0 %1102
      %1104 = vrot.lane.b32.xlu0 %v1078, 4
      %v1105 = vpop.permute.xlu0 %1104
      %1106 = vrot.lane.b32.xlu0 %v1079, 4
      %v1107 = vpop.permute.xlu0 %1106
      %1108 = vrot.lane.b32.xlu0 %v1080, 4
      %v1109 = vpop.permute.xlu0 %1108
      %1110 = vrot.lane.b32.xlu0 %v1081, 4
      %v1111 = vpop.permute.xlu0 %1110
      %1112 = vrot.lane.b32.xlu0 %v1082, 4
      %v1113 = vpop.permute.xlu0 %1112
      %1114 = vrot.lane.b32.xlu0 %v1083, 4
      %v1115 = vpop.permute.xlu0 %1114
      %vm1132 = vcmask 64544
      %1133 = vst.msk [vmem:[#allocation3] sm:$0xff] %vm1132, %v1085
      %1134 = vst.msk [vmem:[#allocation3 + $0x8] sm:$0xff] %vm1132, %v1087
      %1135 = vst.msk [vmem:[#allocation3 + $0x10] sm:$0xff] %vm1132, %v1089
      %1136 = vst.msk [vmem:[#allocation3 + $0x18] sm:$0xff] %vm1132, %v1091
      %1137 = vst.msk [vmem:[#allocation3 + $0x20] sm:$0xff] %vm1132, %v1093
      %1138 = vst.msk [vmem:[#allocation3 + $0x28] sm:$0xff] %vm1132, %v1095
      %1139 = vst.msk [vmem:[#allocation3 + $0x30] sm:$0xff] %vm1132, %v1097
      %1140 = vst.msk [vmem:[#allocation3 + $0x38] sm:$0xff] %vm1132, %v1099
      %1141 = vst.msk [vmem:[#allocation3 + $0x40] sm:$0xff] %vm1132, %v1101
      %1142 = vst.msk [vmem:[#allocation3 + $0x48] sm:$0xff] %vm1132, %v1103
      %1143 = vst.msk [vmem:[#allocation3 + $0x50] sm:$0xff] %vm1132, %v1105
      %1144 = vst.msk [vmem:[#allocation3 + $0x58] sm:$0xff] %vm1132, %v1107
      %1145 = vst.msk [vmem:[#allocation3 + $0x60] sm:$0xff] %vm1132, %v1109
      %1146 = vst.msk [vmem:[#allocation3 + $0x68] sm:$0xff] %vm1132, %v1111
      %1147 = vst.msk [vmem:[#allocation3 + $0x70] sm:$0xff] %vm1132, %v1113
      %1148 = vst.msk [vmem:[#allocation3 + $0x78] sm:$0xff] %vm1132, %v1115
      %v1149 = vld [vmem:[%s327] sm:$0xe]
      %v1150 = vld [vmem:[%s327 + $0x4] sm:$0xf]
      %v1151 = vld [vmem:[%s327 + $0x8] sm:$0x1]
      %v1152 = vld [vmem:[%s327 + $0xc] sm:$0xe]
      %v1153 = vld [vmem:[%s327 + $0x10] sm:$0xf]
      %v1154 = vld [vmem:[%s327 + $0x14] sm:$0x1]
      %v1155 = vld [vmem:[%s327 + $0x18] sm:$0xe]
      %v1156 = vld [vmem:[%s327 + $0x1c] sm:$0xf]
      %v1157 = vld [vmem:[%s327 + $0x20] sm:$0x1]
      %v1158 = vld [vmem:[%s327 + $0x24] sm:$0xe]
      %v1159 = vld [vmem:[%s327 + $0x28] sm:$0xf]
      %v1160 = vld [vmem:[%s327 + $0x2c] sm:$0x1]
      %v1161 = vld [vmem:[%s327 + $0x30] sm:$0xe]
      %v1162 = vld [vmem:[%s327 + $0x34] sm:$0xf]
      %v1163 = vld [vmem:[%s327 + $0x38] sm:$0x1]
      %v1164 = vld [vmem:[%s327 + $0x3c] sm:$0xe]
      %v1165 = vld [vmem:[%s327 + $0x40] sm:$0xf]
      %v1166 = vld [vmem:[%s327 + $0x44] sm:$0x1]
      %v1167 = vld [vmem:[%s327 + $0x48] sm:$0xe]
      %v1168 = vld [vmem:[%s327 + $0x4c] sm:$0xf]
      %v1169 = vld [vmem:[%s327 + $0x50] sm:$0x1]
      %v1170 = vld [vmem:[%s327 + $0x54] sm:$0xe]
      %v1171 = vld [vmem:[%s327 + $0x58] sm:$0xf]
      %v1172 = vld [vmem:[%s327 + $0x5c] sm:$0x1]
      %v1173 = vld [vmem:[%s327 + $0x60] sm:$0xe]
      %v1174 = vld [vmem:[%s327 + $0x64] sm:$0xf]
      %v1175 = vld [vmem:[%s327 + $0x68] sm:$0x1]
      %v1176 = vld [vmem:[%s327 + $0x6c] sm:$0xe]
      %v1177 = vld [vmem:[%s327 + $0x70] sm:$0xf]
      %v1178 = vld [vmem:[%s327 + $0x74] sm:$0x1]
      %v1179 = vld [vmem:[%s327 + $0x78] sm:$0xe]
      %v1180 = vld [vmem:[%s327 + $0x7c] sm:$0xf]
      %v1181 = vld [vmem:[%s327 + $0x80] sm:$0x1]
      %v1182 = vld [vmem:[%s327 + $0x84] sm:$0xe]
      %v1183 = vld [vmem:[%s327 + $0x88] sm:$0xf]
      %v1184 = vld [vmem:[%s327 + $0x8c] sm:$0x1]
      %v1185 = vld [vmem:[%s327 + $0x90] sm:$0xe]
      %v1186 = vld [vmem:[%s327 + $0x94] sm:$0xf]
      %v1187 = vld [vmem:[%s327 + $0x98] sm:$0x1]
      %v1188 = vld [vmem:[%s327 + $0x9c] sm:$0xe]
      %v1189 = vld [vmem:[%s327 + $0xa0] sm:$0xf]
      %v1190 = vld [vmem:[%s327 + $0xa4] sm:$0x1]
      %v1191 = vld [vmem:[%s327 + $0xa8] sm:$0xe]
      %v1192 = vld [vmem:[%s327 + $0xac] sm:$0xf]
      %v1193 = vld [vmem:[%s327 + $0xb0] sm:$0x1]
      %v1194 = vld [vmem:[%s327 + $0xb4] sm:$0xe]
      %v1195 = vld [vmem:[%s327 + $0xb8] sm:$0xf]
      %v1196 = vld [vmem:[%s327 + $0xbc] sm:$0x1]
      %vm1245 = vcmask 1042432
      %vm1246 = vcmask 1046532
      %vm1247 = vmor %vm1245, %vm1246
      %v1248 = vrot.slane %v1149, 5
      %v1249 = vrot.slane %v1248, 4
      %v1250 = vrot.slane %v1150, 5
      %v1251 = vsel %vm1247, %v1249, %v1250
      %v1252 = vrot.slane %v1250, 4
      %v1253 = vrot.slane %v1151, 5
      %v1254 = vsel %vm1247, %v1252, %v1253
      %v1255 = vrot.slane %v1152, 5
      %v1256 = vrot.slane %v1255, 4
      %v1257 = vrot.slane %v1153, 5
      %v1258 = vsel %vm1247, %v1256, %v1257
      %v1259 = vrot.slane %v1257, 4
      %v1260 = vrot.slane %v1154, 5
      %v1261 = vsel %vm1247, %v1259, %v1260
      %v1262 = vrot.slane %v1155, 5
      %v1263 = vrot.slane %v1262, 4
      %v1264 = vrot.slane %v1156, 5
      %v1265 = vsel %vm1247, %v1263, %v1264
      %v1266 = vrot.slane %v1264, 4
      %v1267 = vrot.slane %v1157, 5
      %v1268 = vsel %vm1247, %v1266, %v1267
      %v1269 = vrot.slane %v1158, 5
      %v1270 = vrot.slane %v1269, 4
      %v1271 = vrot.slane %v1159, 5
      %v1272 = vsel %vm1247, %v1270, %v1271
      %v1273 = vrot.slane %v1271, 4
      %v1274 = vrot.slane %v1160, 5
      %v1275 = vsel %vm1247, %v1273, %v1274
      %v1276 = vrot.slane %v1161, 5
      %v1277 = vrot.slane %v1276, 4
      %v1278 = vrot.slane %v1162, 5
      %v1279 = vsel %vm1247, %v1277, %v1278
      %v1280 = vrot.slane %v1278, 4
      %v1281 = vrot.slane %v1163, 5
      %v1282 = vsel %vm1247, %v1280, %v1281
      %v1283 = vrot.slane %v1164, 5
      %v1284 = vrot.slane %v1283, 4
      %v1285 = vrot.slane %v1165, 5
      %v1286 = vsel %vm1247, %v1284, %v1285
      %v1287 = vrot.slane %v1285, 4
      %v1288 = vrot.slane %v1166, 5
      %v1289 = vsel %vm1247, %v1287, %v1288
      %v1290 = vrot.slane %v1167, 5
      %v1291 = vrot.slane %v1290, 4
      %v1292 = vrot.slane %v1168, 5
      %v1293 = vsel %vm1247, %v1291, %v1292
      %v1294 = vrot.slane %v1292, 4
      %v1295 = vrot.slane %v1169, 5
      %v1296 = vsel %vm1247, %v1294, %v1295
      %v1297 = vrot.slane %v1170, 5
      %v1298 = vrot.slane %v1297, 4
      %v1299 = vrot.slane %v1171, 5
      %v1300 = vsel %vm1247, %v1298, %v1299
      %v1301 = vrot.slane %v1299, 4
      %v1302 = vrot.slane %v1172, 5
      %v1303 = vsel %vm1247, %v1301, %v1302
      %v1304 = vrot.slane %v1173, 5
      %v1305 = vrot.slane %v1304, 4
      %v1306 = vrot.slane %v1174, 5
      %v1307 = vsel %vm1247, %v1305, %v1306
      %v1308 = vrot.slane %v1306, 4
      %v1309 = vrot.slane %v1175, 5
      %v1310 = vsel %vm1247, %v1308, %v1309
      %v1311 = vrot.slane %v1176, 5
      %v1312 = vrot.slane %v1311, 4
      %v1313 = vrot.slane %v1177, 5
      %v1314 = vsel %vm1247, %v1312, %v1313
      %v1315 = vrot.slane %v1313, 4
      %v1316 = vrot.slane %v1178, 5
      %v1317 = vsel %vm1247, %v1315, %v1316
      %v1318 = vrot.slane %v1179, 5
      %v1319 = vrot.slane %v1318, 4
      %v1320 = vrot.slane %v1180, 5
      %v1321 = vsel %vm1247, %v1319, %v1320
      %v1322 = vrot.slane %v1320, 4
      %v1323 = vrot.slane %v1181, 5
      %v1324 = vsel %vm1247, %v1322, %v1323
      %v1325 = vrot.slane %v1182, 5
      %v1326 = vrot.slane %v1325, 4
      %v1327 = vrot.slane %v1183, 5
      %v1328 = vsel %vm1247, %v1326, %v1327
      %v1329 = vrot.slane %v1327, 4
      %v1330 = vrot.slane %v1184, 5
      %v1331 = vsel %vm1247, %v1329, %v1330
      %v1332 = vrot.slane %v1185, 5
      %v1333 = vrot.slane %v1332, 4
      %v1334 = vrot.slane %v1186, 5
      %v1335 = vsel %vm1247, %v1333, %v1334
      %v1336 = vrot.slane %v1334, 4
      %v1337 = vrot.slane %v1187, 5
      %v1338 = vsel %vm1247, %v1336, %v1337
      %v1339 = vrot.slane %v1188, 5
      %v1340 = vrot.slane %v1339, 4
      %v1341 = vrot.slane %v1189, 5
      %v1342 = vsel %vm1247, %v1340, %v1341
      %v1343 = vrot.slane %v1341, 4
      %v1344 = vrot.slane %v1190, 5
      %v1345 = vsel %vm1247, %v1343, %v1344
      %v1346 = vrot.slane %v1191, 5
      %v1347 = vrot.slane %v1346, 4
      %v1348 = vrot.slane %v1192, 5
      %v1349 = vsel %vm1247, %v1347, %v1348
      %v1350 = vrot.slane %v1348, 4
      %v1351 = vrot.slane %v1193, 5
      %v1352 = vsel %vm1247, %v1350, %v1351
      %v1353 = vrot.slane %v1194, 5
      %v1354 = vrot.slane %v1353, 4
      %v1355 = vrot.slane %v1195, 5
      %v1356 = vsel %vm1247, %v1354, %v1355
      %v1357 = vrot.slane %v1355, 4
      %v1358 = vrot.slane %v1196, 5
      %v1359 = vsel %vm1247, %v1357, %v1358
      %v1360 = vunpack.c.l.b16 %v1251
      %v1361 = vunpack.c.l.b16 %v1254
      %v1362 = vunpack.c.l.b16 %v1258
      %v1363 = vunpack.c.l.b16 %v1261
      %v1364 = vunpack.c.l.b16 %v1265
      %v1365 = vunpack.c.l.b16 %v1268
      %v1366 = vunpack.c.l.b16 %v1272
      %v1367 = vunpack.c.l.b16 %v1275
      %v1368 = vunpack.c.l.b16 %v1279
      %v1369 = vunpack.c.l.b16 %v1282
      %v1370 = vunpack.c.l.b16 %v1286
      %v1371 = vunpack.c.l.b16 %v1289
      %v1372 = vunpack.c.l.b16 %v1293
      %v1373 = vunpack.c.l.b16 %v1296
      %v1374 = vunpack.c.l.b16 %v1300
      %v1375 = vunpack.c.l.b16 %v1303
      %v1376 = vunpack.c.l.b16 %v1307
      %v1377 = vunpack.c.l.b16 %v1310
      %v1378 = vunpack.c.l.b16 %v1314
      %v1379 = vunpack.c.l.b16 %v1317
      %v1380 = vunpack.c.l.b16 %v1321
      %v1381 = vunpack.c.l.b16 %v1324
      %v1382 = vunpack.c.l.b16 %v1328
      %v1383 = vunpack.c.l.b16 %v1331
      %v1384 = vunpack.c.l.b16 %v1335
      %v1385 = vunpack.c.l.b16 %v1338
      %v1386 = vunpack.c.l.b16 %v1342
      %v1387 = vunpack.c.l.b16 %v1345
      %v1388 = vunpack.c.l.b16 %v1349
      %v1389 = vunpack.c.l.b16 %v1352
      %v1390 = vunpack.c.l.b16 %v1356
      %v1391 = vunpack.c.l.b16 %v1359
      %v1392 = vpack.c.b16 %v1361, %v1360
      %v1393 = vpack.c.b16 %v1363, %v1362
      %v1394 = vpack.c.b16 %v1365, %v1364
      %v1395 = vpack.c.b16 %v1367, %v1366
      %v1396 = vpack.c.b16 %v1369, %v1368
      %v1397 = vpack.c.b16 %v1371, %v1370
      %v1398 = vpack.c.b16 %v1373, %v1372
      %v1399 = vpack.c.b16 %v1375, %v1374
      %v1400 = vpack.c.b16 %v1377, %v1376
      %v1401 = vpack.c.b16 %v1379, %v1378
      %v1402 = vpack.c.b16 %v1381, %v1380
      %v1403 = vpack.c.b16 %v1383, %v1382
      %v1404 = vpack.c.b16 %v1385, %v1384
      %v1405 = vpack.c.b16 %v1387, %v1386
      %v1406 = vpack.c.b16 %v1389, %v1388
      %v1407 = vpack.c.b16 %v1391, %v1390
      %1408 = vrot.lane.b32.xlu0 %v1392, 8
      %v1409 = vpop.permute.xlu0 %1408
      %1410 = vrot.lane.b32.xlu0 %v1393, 8
      %v1411 = vpop.permute.xlu0 %1410
      %1412 = vrot.lane.b32.xlu0 %v1394, 8
      %v1413 = vpop.permute.xlu0 %1412
      %1414 = vrot.lane.b32.xlu0 %v1395, 8
      %v1415 = vpop.permute.xlu0 %1414
      %1416 = vrot.lane.b32.xlu0 %v1396, 8
      %v1417 = vpop.permute.xlu0 %1416
      %1418 = vrot.lane.b32.xlu0 %v1397, 8
      %v1419 = vpop.permute.xlu0 %1418
      %1420 = vrot.lane.b32.xlu0 %v1398, 8
      %v1421 = vpop.permute.xlu0 %1420
      %1422 = vrot.lane.b32.xlu0 %v1399, 8
      %v1423 = vpop.permute.xlu0 %1422
      %1424 = vrot.lane.b32.xlu0 %v1400, 8
      %v1425 = vpop.permute.xlu0 %1424
      %1426 = vrot.lane.b32.xlu0 %v1401, 8
      %v1427 = vpop.permute.xlu0 %1426
      %1428 = vrot.lane.b32.xlu0 %v1402, 8
      %v1429 = vpop.permute.xlu0 %1428
      %1430 = vrot.lane.b32.xlu0 %v1403, 8
      %v1431 = vpop.permute.xlu0 %1430
      %1432 = vrot.lane.b32.xlu0 %v1404, 8
      %v1433 = vpop.permute.xlu0 %1432
      %1434 = vrot.lane.b32.xlu0 %v1405, 8
      %v1435 = vpop.permute.xlu0 %1434
      %1436 = vrot.lane.b32.xlu0 %v1406, 8
      %v1437 = vpop.permute.xlu0 %1436
      %1438 = vrot.lane.b32.xlu0 %v1407, 8
      %v1439 = vpop.permute.xlu0 %1438
      %vm1456 = vcmask 97344
      %1457 = vst.msk [vmem:[#allocation3] sm:$0xff] %vm1456, %v1409
      %1458 = vst.msk [vmem:[#allocation3 + $0x8] sm:$0xff] %vm1456, %v1411
      %1459 = vst.msk [vmem:[#allocation3 + $0x10] sm:$0xff] %vm1456, %v1413
      %1460 = vst.msk [vmem:[#allocation3 + $0x18] sm:$0xff] %vm1456, %v1415
      %1461 = vst.msk [vmem:[#allocation3 + $0x20] sm:$0xff] %vm1456, %v1417
      %1462 = vst.msk [vmem:[#allocation3 + $0x28] sm:$0xff] %vm1456, %v1419
      %1463 = vst.msk [vmem:[#allocation3 + $0x30] sm:$0xff] %vm1456, %v1421
      %1464 = vst.msk [vmem:[#allocation3 + $0x38] sm:$0xff] %vm1456, %v1423
      %1465 = vst.msk [vmem:[#allocation3 + $0x40] sm:$0xff] %vm1456, %v1425
      %1466 = vst.msk [vmem:[#allocation3 + $0x48] sm:$0xff] %vm1456, %v1427
      %1467 = vst.msk [vmem:[#allocation3 + $0x50] sm:$0xff] %vm1456, %v1429
      %1468 = vst.msk [vmem:[#allocation3 + $0x58] sm:$0xff] %vm1456, %v1431
      %1469 = vst.msk [vmem:[#allocation3 + $0x60] sm:$0xff] %vm1456, %v1433
      %1470 = vst.msk [vmem:[#allocation3 + $0x68] sm:$0xff] %vm1456, %v1435
      %1471 = vst.msk [vmem:[#allocation3 + $0x70] sm:$0xff] %vm1456, %v1437
      %1472 = vst.msk [vmem:[#allocation3 + $0x78] sm:$0xff] %vm1456, %v1439
      %s1473 = scalar_lea.vmem %s327, 12
      %v1474 = vld [vmem:[%s1473] sm:$0xf]
      %v1475 = vld [vmem:[%s1473 + $0x4] sm:$0xf]
      %v1476 = vld [vmem:[%s1473 + $0xc] sm:$0xf]
      %v1477 = vld [vmem:[%s1473 + $0x10] sm:$0xf]
      %v1478 = vld [vmem:[%s1473 + $0x18] sm:$0xf]
      %v1479 = vld [vmem:[%s1473 + $0x1c] sm:$0xf]
      %v1480 = vld [vmem:[%s1473 + $0x24] sm:$0xf]
      %v1481 = vld [vmem:[%s1473 + $0x28] sm:$0xf]
      %v1482 = vld [vmem:[%s1473 + $0x30] sm:$0xf]
      %v1483 = vld [vmem:[%s1473 + $0x34] sm:$0xf]
      %v1484 = vld [vmem:[%s1473 + $0x3c] sm:$0xf]
      %v1485 = vld [vmem:[%s1473 + $0x40] sm:$0xf]
      %v1486 = vld [vmem:[%s1473 + $0x48] sm:$0xf]
      %v1487 = vld [vmem:[%s1473 + $0x4c] sm:$0xf]
      %v1488 = vld [vmem:[%s1473 + $0x54] sm:$0xf]
      %v1489 = vld [vmem:[%s1473 + $0x58] sm:$0xf]
      %v1490 = vld [vmem:[%s1473 + $0x60] sm:$0xf]
      %v1491 = vld [vmem:[%s1473 + $0x64] sm:$0xf]
      %v1492 = vld [vmem:[%s1473 + $0x6c] sm:$0xf]
      %v1493 = vld [vmem:[%s1473 + $0x70] sm:$0xf]
      %v1494 = vld [vmem:[%s1473 + $0x78] sm:$0xf]
      %v1495 = vld [vmem:[%s1473 + $0x7c] sm:$0xf]
      %v1496 = vld [vmem:[%s1473 + $0x84] sm:$0xf]
      %v1497 = vld [vmem:[%s1473 + $0x88] sm:$0xf]
      %v1498 = vld [vmem:[%s1473 + $0x90] sm:$0xf]
      %v1499 = vld [vmem:[%s1473 + $0x94] sm:$0xf]
      %v1500 = vld [vmem:[%s1473 + $0x9c] sm:$0xf]
      %v1501 = vld [vmem:[%s1473 + $0xa0] sm:$0xf]
      %v1502 = vld [vmem:[%s1473 + $0xa8] sm:$0xf]
      %v1503 = vld [vmem:[%s1473 + $0xac] sm:$0xf]
      %v1504 = vld [vmem:[%s1473 + $0xb4] sm:$0xf]
      %v1505 = vld [vmem:[%s1473 + $0xb8] sm:$0xf]
      %v1538 = vunpack.c.l.b16 %v1474
      %v1539 = vunpack.c.l.b16 %v1475
      %v1540 = vunpack.c.l.b16 %v1476
      %v1541 = vunpack.c.l.b16 %v1477
      %v1542 = vunpack.c.l.b16 %v1478
      %v1543 = vunpack.c.l.b16 %v1479
      %v1544 = vunpack.c.l.b16 %v1480
      %v1545 = vunpack.c.l.b16 %v1481
      %v1546 = vunpack.c.l.b16 %v1482
      %v1547 = vunpack.c.l.b16 %v1483
      %v1548 = vunpack.c.l.b16 %v1484
      %v1549 = vunpack.c.l.b16 %v1485
      %v1550 = vunpack.c.l.b16 %v1486
      %v1551 = vunpack.c.l.b16 %v1487
      %v1552 = vunpack.c.l.b16 %v1488
      %v1553 = vunpack.c.l.b16 %v1489
      %v1554 = vunpack.c.l.b16 %v1490
      %v1555 = vunpack.c.l.b16 %v1491
      %v1556 = vunpack.c.l.b16 %v1492
      %v1557 = vunpack.c.l.b16 %v1493
      %v1558 = vunpack.c.l.b16 %v1494
      %v1559 = vunpack.c.l.b16 %v1495
      %v1560 = vunpack.c.l.b16 %v1496
      %v1561 = vunpack.c.l.b16 %v1497
      %v1562 = vunpack.c.l.b16 %v1498
      %v1563 = vunpack.c.l.b16 %v1499
      %v1564 = vunpack.c.l.b16 %v1500
      %v1565 = vunpack.c.l.b16 %v1501
      %v1566 = vunpack.c.l.b16 %v1502
      %v1567 = vunpack.c.l.b16 %v1503
      %v1568 = vunpack.c.l.b16 %v1504
      %v1569 = vunpack.c.l.b16 %v1505
      %v1570 = vpack.c.b16 %v1539, %v1538
      %v1571 = vpack.c.b16 %v1541, %v1540
      %v1572 = vpack.c.b16 %v1543, %v1542
      %v1573 = vpack.c.b16 %v1545, %v1544
      %v1574 = vpack.c.b16 %v1547, %v1546
      %v1575 = vpack.c.b16 %v1549, %v1548
      %v1576 = vpack.c.b16 %v1551, %v1550
      %v1577 = vpack.c.b16 %v1553, %v1552
      %v1578 = vpack.c.b16 %v1555, %v1554
      %v1579 = vpack.c.b16 %v1557, %v1556
      %v1580 = vpack.c.b16 %v1559, %v1558
      %v1581 = vpack.c.b16 %v1561, %v1560
      %v1582 = vpack.c.b16 %v1563, %v1562
      %v1583 = vpack.c.b16 %v1565, %v1564
      %v1584 = vpack.c.b16 %v1567, %v1566
      %v1585 = vpack.c.b16 %v1569, %v1568
      %1586 = vrot.lane.b32.xlu0 %v1570, 12
      %v1587 = vpop.permute.xlu0 %1586
      %1588 = vrot.lane.b32.xlu0 %v1571, 12
      %v1589 = vpop.permute.xlu0 %1588
      %1590 = vrot.lane.b32.xlu0 %v1572, 12
      %v1591 = vpop.permute.xlu0 %1590
      %1592 = vrot.lane.b32.xlu0 %v1573, 12
      %v1593 = vpop.permute.xlu0 %1592
      %1594 = vrot.lane.b32.xlu0 %v1574, 12
      %v1595 = vpop.permute.xlu0 %1594
      %1596 = vrot.lane.b32.xlu0 %v1575, 12
      %v1597 = vpop.permute.xlu0 %1596
      %1598 = vrot.lane.b32.xlu0 %v1576, 12
      %v1599 = vpop.permute.xlu0 %1598
      %1600 = vrot.lane.b32.xlu0 %v1577, 12
      %v1601 = vpop.permute.xlu0 %1600
      %1602 = vrot.lane.b32.xlu0 %v1578, 12
      %v1603 = vpop.permute.xlu0 %1602
      %1604 = vrot.lane.b32.xlu0 %v1579, 12
      %v1605 = vpop.permute.xlu0 %1604
      %1606 = vrot.lane.b32.xlu0 %v1580, 12
      %v1607 = vpop.permute.xlu0 %1606
      %1608 = vrot.lane.b32.xlu0 %v1581, 12
      %v1609 = vpop.permute.xlu0 %1608
      %1610 = vrot.lane.b32.xlu0 %v1582, 12
      %v1611 = vpop.permute.xlu0 %1610
      %1612 = vrot.lane.b32.xlu0 %v1583, 12
      %v1613 = vpop.permute.xlu0 %1612
      %1614 = vrot.lane.b32.xlu0 %v1584, 12
      %v1615 = vpop.permute.xlu0 %1614
      %1616 = vrot.lane.b32.xlu0 %v1585, 12
      %v1617 = vpop.permute.xlu0 %1616
      %vm1634 = vcmask 130144
      %1635 = vst.msk [vmem:[#allocation3] sm:$0xff] %vm1634, %v1587
      %1636 = vst.msk [vmem:[#allocation3 + $0x8] sm:$0xff] %vm1634, %v1589
      %1637 = vst.msk [vmem:[#allocation3 + $0x10] sm:$0xff] %vm1634, %v1591
      %1638 = vst.msk [vmem:[#allocation3 + $0x18] sm:$0xff] %vm1634, %v1593
      %1639 = vst.msk [vmem:[#allocation3 + $0x20] sm:$0xff] %vm1634, %v1595
      %1640 = vst.msk [vmem:[#allocation3 + $0x28] sm:$0xff] %vm1634, %v1597
      %1641 = vst.msk [vmem:[#allocation3 + $0x30] sm:$0xff] %vm1634, %v1599
      %1642 = vst.msk [vmem:[#allocation3 + $0x38] sm:$0xff] %vm1634, %v1601
      %1643 = vst.msk [vmem:[#allocation3 + $0x40] sm:$0xff] %vm1634, %v1603
      %1644 = vst.msk [vmem:[#allocation3 + $0x48] sm:$0xff] %vm1634, %v1605
      %1645 = vst.msk [vmem:[#allocation3 + $0x50] sm:$0xff] %vm1634, %v1607
      %1646 = vst.msk [vmem:[#allocation3 + $0x58] sm:$0xff] %vm1634, %v1609
      %1647 = vst.msk [vmem:[#allocation3 + $0x60] sm:$0xff] %vm1634, %v1611
      %1648 = vst.msk [vmem:[#allocation3 + $0x68] sm:$0xff] %vm1634, %v1613
      %1649 = vst.msk [vmem:[#allocation3 + $0x70] sm:$0xff] %vm1634, %v1615
      %1650 = vst.msk [vmem:[#allocation3 + $0x78] sm:$0xff] %vm1634, %v1617
      %v1651 = vld [vmem:[%s1473] sm:$0xf]
      %v1652 = vld [vmem:[%s1473 + $0x4] sm:$0xf]
      %v1653 = vld [vmem:[%s1473 + $0x8] sm:$0x1]
      %v1654 = vld [vmem:[%s1473 + $0xc] sm:$0xf]
      %v1655 = vld [vmem:[%s1473 + $0x10] sm:$0xf]
      %v1656 = vld [vmem:[%s1473 + $0x14] sm:$0x1]
      %v1657 = vld [vmem:[%s1473 + $0x18] sm:$0xf]
      %v1658 = vld [vmem:[%s1473 + $0x1c] sm:$0xf]
      %v1659 = vld [vmem:[%s1473 + $0x20] sm:$0x1]
      %v1660 = vld [vmem:[%s1473 + $0x24] sm:$0xf]
      %v1661 = vld [vmem:[%s1473 + $0x28] sm:$0xf]
      %v1662 = vld [vmem:[%s1473 + $0x2c] sm:$0x1]
      %v1663 = vld [vmem:[%s1473 + $0x30] sm:$0xf]
      %v1664 = vld [vmem:[%s1473 + $0x34] sm:$0xf]
      %v1665 = vld [vmem:[%s1473 + $0x38] sm:$0x1]
      %v1666 = vld [vmem:[%s1473 + $0x3c] sm:$0xf]
      %v1667 = vld [vmem:[%s1473 + $0x40] sm:$0xf]
      %v1668 = vld [vmem:[%s1473 + $0x44] sm:$0x1]
      %v1669 = vld [vmem:[%s1473 + $0x48] sm:$0xf]
      %v1670 = vld [vmem:[%s1473 + $0x4c] sm:$0xf]
      %v1671 = vld [vmem:[%s1473 + $0x50] sm:$0x1]
      %v1672 = vld [vmem:[%s1473 + $0x54] sm:$0xf]
      %v1673 = vld [vmem:[%s1473 + $0x58] sm:$0xf]
      %v1674 = vld [vmem:[%s1473 + $0x5c] sm:$0x1]
      %v1675 = vld [vmem:[%s1473 + $0x60] sm:$0xf]
      %v1676 = vld [vmem:[%s1473 + $0x64] sm:$0xf]
      %v1677 = vld [vmem:[%s1473 + $0x68] sm:$0x1]
      %v1678 = vld [vmem:[%s1473 + $0x6c] sm:$0xf]
      %v1679 = vld [vmem:[%s1473 + $0x70] sm:$0xf]
      %v1680 = vld [vmem:[%s1473 + $0x74] sm:$0x1]
      %v1681 = vld [vmem:[%s1473 + $0x78] sm:$0xf]
      %v1682 = vld [vmem:[%s1473 + $0x7c] sm:$0xf]
      %v1683 = vld [vmem:[%s1473 + $0x80] sm:$0x1]
      %v1684 = vld [vmem:[%s1473 + $0x84] sm:$0xf]
      %v1685 = vld [vmem:[%s1473 + $0x88] sm:$0xf]
      %v1686 = vld [vmem:[%s1473 + $0x8c] sm:$0x1]
      %v1687 = vld [vmem:[%s1473 + $0x90] sm:$0xf]
      %v1688 = vld [vmem:[%s1473 + $0x94] sm:$0xf]
      %v1689 = vld [vmem:[%s1473 + $0x98] sm:$0x1]
      %v1690 = vld [vmem:[%s1473 + $0x9c] sm:$0xf]
      %v1691 = vld [vmem:[%s1473 + $0xa0] sm:$0xf]
      %v1692 = vld [vmem:[%s1473 + $0xa4] sm:$0x1]
      %v1693 = vld [vmem:[%s1473 + $0xa8] sm:$0xf]
      %v1694 = vld [vmem:[%s1473 + $0xac] sm:$0xf]
      %v1695 = vld [vmem:[%s1473 + $0xb0] sm:$0x1]
      %v1696 = vld [vmem:[%s1473 + $0xb4] sm:$0xf]
      %v1697 = vld [vmem:[%s1473 + $0xb8] sm:$0xf]
      %v1698 = vld [vmem:[%s1473 + $0xbc] sm:$0x1]
      %v1700 = vshrl.u32 %v1651, 16
      %v1702 = vrot.slane %v1700, 4
      %v1703 = vshll.u32 %v1651, 16
      %v1705 = vrot.slane %v1703, 5
      %v1706 = vor.u32 %v1702, %v1705
      %v1707 = vrot.slane %v1706, 4
      %v1709 = vshll.u32 %v1652, 16
      %v1711 = vrot.slane %v1709, 5
      %v1712 = vsel %vm651, %v1707, %v1711
      %v1713 = vshrl.u32 %v1652, 16
      %v1715 = vrot.slane %v1713, 4
      %v1716 = vor.u32 %v1715, %v1711
      %v1717 = vrot.slane %v1716, 4
      %v1719 = vshll.u32 %v1653, 16
      %v1721 = vrot.slane %v1719, 5
      %v1722 = vsel %vm651, %v1717, %v1721
      %v1724 = vshrl.u32 %v1654, 16
      %v1726 = vrot.slane %v1724, 4
      %v1727 = vshll.u32 %v1654, 16
      %v1729 = vrot.slane %v1727, 5
      %v1730 = vor.u32 %v1726, %v1729
      %v1731 = vrot.slane %v1730, 4
      %v1733 = vshll.u32 %v1655, 16
      %v1735 = vrot.slane %v1733, 5
      %v1736 = vsel %vm651, %v1731, %v1735
      %v1737 = vshrl.u32 %v1655, 16
      %v1739 = vrot.slane %v1737, 4
      %v1740 = vor.u32 %v1739, %v1735
      %v1741 = vrot.slane %v1740, 4
      %v1743 = vshll.u32 %v1656, 16
      %v1745 = vrot.slane %v1743, 5
      %v1746 = vsel %vm651, %v1741, %v1745
      %v1748 = vshrl.u32 %v1657, 16
      %v1750 = vrot.slane %v1748, 4
      %v1751 = vshll.u32 %v1657, 16
      %v1753 = vrot.slane %v1751, 5
      %v1754 = vor.u32 %v1750, %v1753
      %v1755 = vrot.slane %v1754, 4
      %v1757 = vshll.u32 %v1658, 16
      %v1759 = vrot.slane %v1757, 5
      %v1760 = vsel %vm651, %v1755, %v1759
      %v1761 = vshrl.u32 %v1658, 16
      %v1763 = vrot.slane %v1761, 4
      %v1764 = vor.u32 %v1763, %v1759
      %v1765 = vrot.slane %v1764, 4
      %v1767 = vshll.u32 %v1659, 16
      %v1769 = vrot.slane %v1767, 5
      %v1770 = vsel %vm651, %v1765, %v1769
      %v1772 = vshrl.u32 %v1660, 16
      %v1774 = vrot.slane %v1772, 4
      %v1775 = vshll.u32 %v1660, 16
      %v1777 = vrot.slane %v1775, 5
      %v1778 = vor.u32 %v1774, %v1777
      %v1779 = vrot.slane %v1778, 4
      %v1781 = vshll.u32 %v1661, 16
      %v1783 = vrot.slane %v1781, 5
      %v1784 = vsel %vm651, %v1779, %v1783
      %v1785 = vshrl.u32 %v1661, 16
      %v1787 = vrot.slane %v1785, 4
      %v1788 = vor.u32 %v1787, %v1783
      %v1789 = vrot.slane %v1788, 4
      %v1791 = vshll.u32 %v1662, 16
      %v1793 = vrot.slane %v1791, 5
      %v1794 = vsel %vm651, %v1789, %v1793
      %v1796 = vshrl.u32 %v1663, 16
      %v1798 = vrot.slane %v1796, 4
      %v1799 = vshll.u32 %v1663, 16
      %v1801 = vrot.slane %v1799, 5
      %v1802 = vor.u32 %v1798, %v1801
      %v1803 = vrot.slane %v1802, 4
      %v1805 = vshll.u32 %v1664, 16
      %v1807 = vrot.slane %v1805, 5
      %v1808 = vsel %vm651, %v1803, %v1807
      %v1809 = vshrl.u32 %v1664, 16
      %v1811 = vrot.slane %v1809, 4
      %v1812 = vor.u32 %v1811, %v1807
      %v1813 = vrot.slane %v1812, 4
      %v1815 = vshll.u32 %v1665, 16
      %v1817 = vrot.slane %v1815, 5
      %v1818 = vsel %vm651, %v1813, %v1817
      %v1820 = vshrl.u32 %v1666, 16
      %v1822 = vrot.slane %v1820, 4
      %v1823 = vshll.u32 %v1666, 16
      %v1825 = vrot.slane %v1823, 5
      %v1826 = vor.u32 %v1822, %v1825
      %v1827 = vrot.slane %v1826, 4
      %v1829 = vshll.u32 %v1667, 16
      %v1831 = vrot.slane %v1829, 5
      %v1832 = vsel %vm651, %v1827, %v1831
      %v1833 = vshrl.u32 %v1667, 16
      %v1835 = vrot.slane %v1833, 4
      %v1836 = vor.u32 %v1835, %v1831
      %v1837 = vrot.slane %v1836, 4
      %v1839 = vshll.u32 %v1668, 16
      %v1841 = vrot.slane %v1839, 5
      %v1842 = vsel %vm651, %v1837, %v1841
      %v1844 = vshrl.u32 %v1669, 16
      %v1846 = vrot.slane %v1844, 4
      %v1847 = vshll.u32 %v1669, 16
      %v1849 = vrot.slane %v1847, 5
      %v1850 = vor.u32 %v1846, %v1849
      %v1851 = vrot.slane %v1850, 4
      %v1853 = vshll.u32 %v1670, 16
      %v1855 = vrot.slane %v1853, 5
      %v1856 = vsel %vm651, %v1851, %v1855
      %v1857 = vshrl.u32 %v1670, 16
      %v1859 = vrot.slane %v1857, 4
      %v1860 = vor.u32 %v1859, %v1855
      %v1861 = vrot.slane %v1860, 4
      %v1863 = vshll.u32 %v1671, 16
      %v1865 = vrot.slane %v1863, 5
      %v1866 = vsel %vm651, %v1861, %v1865
      %v1868 = vshrl.u32 %v1672, 16
      %v1870 = vrot.slane %v1868, 4
      %v1871 = vshll.u32 %v1672, 16
      %v1873 = vrot.slane %v1871, 5
      %v1874 = vor.u32 %v1870, %v1873
      %v1875 = vrot.slane %v1874, 4
      %v1877 = vshll.u32 %v1673, 16
      %v1879 = vrot.slane %v1877, 5
      %v1880 = vsel %vm651, %v1875, %v1879
      %v1881 = vshrl.u32 %v1673, 16
      %v1883 = vrot.slane %v1881, 4
      %v1884 = vor.u32 %v1883, %v1879
      %v1885 = vrot.slane %v1884, 4
      %v1887 = vshll.u32 %v1674, 16
      %v1889 = vrot.slane %v1887, 5
      %v1890 = vsel %vm651, %v1885, %v1889
      %v1892 = vshrl.u32 %v1675, 16
      %v1894 = vrot.slane %v1892, 4
      %v1895 = vshll.u32 %v1675, 16
      %v1897 = vrot.slane %v1895, 5
      %v1898 = vor.u32 %v1894, %v1897
      %v1899 = vrot.slane %v1898, 4
      %v1901 = vshll.u32 %v1676, 16
      %v1903 = vrot.slane %v1901, 5
      %v1904 = vsel %vm651, %v1899, %v1903
      %v1905 = vshrl.u32 %v1676, 16
      %v1907 = vrot.slane %v1905, 4
      %v1908 = vor.u32 %v1907, %v1903
      %v1909 = vrot.slane %v1908, 4
      %v1911 = vshll.u32 %v1677, 16
      %v1913 = vrot.slane %v1911, 5
      %v1914 = vsel %vm651, %v1909, %v1913
      %v1916 = vshrl.u32 %v1678, 16
      %v1918 = vrot.slane %v1916, 4
      %v1919 = vshll.u32 %v1678, 16
      %v1921 = vrot.slane %v1919, 5
      %v1922 = vor.u32 %v1918, %v1921
      %v1923 = vrot.slane %v1922, 4
      %v1925 = vshll.u32 %v1679, 16
      %v1927 = vrot.slane %v1925, 5
      %v1928 = vsel %vm651, %v1923, %v1927
      %v1929 = vshrl.u32 %v1679, 16
      %v1931 = vrot.slane %v1929, 4
      %v1932 = vor.u32 %v1931, %v1927
      %v1933 = vrot.slane %v1932, 4
      %v1935 = vshll.u32 %v1680, 16
      %v1937 = vrot.slane %v1935, 5
      %v1938 = vsel %vm651, %v1933, %v1937
      %v1940 = vshrl.u32 %v1681, 16
      %v1942 = vrot.slane %v1940, 4
      %v1943 = vshll.u32 %v1681, 16
      %v1945 = vrot.slane %v1943, 5
      %v1946 = vor.u32 %v1942, %v1945
      %v1947 = vrot.slane %v1946, 4
      %v1949 = vshll.u32 %v1682, 16
      %v1951 = vrot.slane %v1949, 5
      %v1952 = vsel %vm651, %v1947, %v1951
      %v1953 = vshrl.u32 %v1682, 16
      %v1955 = vrot.slane %v1953, 4
      %v1956 = vor.u32 %v1955, %v1951
      %v1957 = vrot.slane %v1956, 4
      %v1959 = vshll.u32 %v1683, 16
      %v1961 = vrot.slane %v1959, 5
      %v1962 = vsel %vm651, %v1957, %v1961
      %v1964 = vshrl.u32 %v1684, 16
      %v1966 = vrot.slane %v1964, 4
      %v1967 = vshll.u32 %v1684, 16
      %v1969 = vrot.slane %v1967, 5
      %v1970 = vor.u32 %v1966, %v1969
      %v1971 = vrot.slane %v1970, 4
      %v1973 = vshll.u32 %v1685, 16
      %v1975 = vrot.slane %v1973, 5
      %v1976 = vsel %vm651, %v1971, %v1975
      %v1977 = vshrl.u32 %v1685, 16
      %v1979 = vrot.slane %v1977, 4
      %v1980 = vor.u32 %v1979, %v1975
      %v1981 = vrot.slane %v1980, 4
      %v1983 = vshll.u32 %v1686, 16
      %v1985 = vrot.slane %v1983, 5
      %v1986 = vsel %vm651, %v1981, %v1985
      %v1988 = vshrl.u32 %v1687, 16
      %v1990 = vrot.slane %v1988, 4
      %v1991 = vshll.u32 %v1687, 16
      %v1993 = vrot.slane %v1991, 5
      %v1994 = vor.u32 %v1990, %v1993
      %v1995 = vrot.slane %v1994, 4
      %v1997 = vshll.u32 %v1688, 16
      %v1999 = vrot.slane %v1997, 5
      %v2000 = vsel %vm651, %v1995, %v1999
      %v2001 = vshrl.u32 %v1688, 16
      %v2003 = vrot.slane %v2001, 4
      %v2004 = vor.u32 %v2003, %v1999
      %v2005 = vrot.slane %v2004, 4
      %v2007 = vshll.u32 %v1689, 16
      %v2009 = vrot.slane %v2007, 5
      %v2010 = vsel %vm651, %v2005, %v2009
      %v2012 = vshrl.u32 %v1690, 16
      %v2014 = vrot.slane %v2012, 4
      %v2015 = vshll.u32 %v1690, 16
      %v2017 = vrot.slane %v2015, 5
      %v2018 = vor.u32 %v2014, %v2017
      %v2019 = vrot.slane %v2018, 4
      %v2021 = vshll.u32 %v1691, 16
      %v2023 = vrot.slane %v2021, 5
      %v2024 = vsel %vm651, %v2019, %v2023
      %v2025 = vshrl.u32 %v1691, 16
      %v2027 = vrot.slane %v2025, 4
      %v2028 = vor.u32 %v2027, %v2023
      %v2029 = vrot.slane %v2028, 4
      %v2031 = vshll.u32 %v1692, 16
      %v2033 = vrot.slane %v2031, 5
      %v2034 = vsel %vm651, %v2029, %v2033
      %v2036 = vshrl.u32 %v1693, 16
      %v2038 = vrot.slane %v2036, 4
      %v2039 = vshll.u32 %v1693, 16
      %v2041 = vrot.slane %v2039, 5
      %v2042 = vor.u32 %v2038, %v2041
      %v2043 = vrot.slane %v2042, 4
      %v2045 = vshll.u32 %v1694, 16
      %v2047 = vrot.slane %v2045, 5
      %v2048 = vsel %vm651, %v2043, %v2047
      %v2049 = vshrl.u32 %v1694, 16
      %v2051 = vrot.slane %v2049, 4
      %v2052 = vor.u32 %v2051, %v2047
      %v2053 = vrot.slane %v2052, 4
      %v2055 = vshll.u32 %v1695, 16
      %v2057 = vrot.slane %v2055, 5
      %v2058 = vsel %vm651, %v2053, %v2057
      %v2060 = vshrl.u32 %v1696, 16
      %v2062 = vrot.slane %v2060, 4
      %v2063 = vshll.u32 %v1696, 16
      %v2065 = vrot.slane %v2063, 5
      %v2066 = vor.u32 %v2062, %v2065
      %v2067 = vrot.slane %v2066, 4
      %v2069 = vshll.u32 %v1697, 16
      %v2071 = vrot.slane %v2069, 5
      %v2072 = vsel %vm651, %v2067, %v2071
      %v2073 = vshrl.u32 %v1697, 16
      %v2075 = vrot.slane %v2073, 4
      %v2076 = vor.u32 %v2075, %v2071
      %v2077 = vrot.slane %v2076, 4
      %v2079 = vshll.u32 %v1698, 16
      %v2081 = vrot.slane %v2079, 5
      %v2082 = vsel %vm651, %v2077, %v2081
      %v2083 = vunpack.c.l.b16 %v1712
      %v2084 = vunpack.c.l.b16 %v1722
      %v2085 = vunpack.c.l.b16 %v1736
      %v2086 = vunpack.c.l.b16 %v1746
      %v2087 = vunpack.c.l.b16 %v1760
      %v2088 = vunpack.c.l.b16 %v1770
      %v2089 = vunpack.c.l.b16 %v1784
      %v2090 = vunpack.c.l.b16 %v1794
      %v2091 = vunpack.c.l.b16 %v1808
      %v2092 = vunpack.c.l.b16 %v1818
      %v2093 = vunpack.c.l.b16 %v1832
      %v2094 = vunpack.c.l.b16 %v1842
      %v2095 = vunpack.c.l.b16 %v1856
      %v2096 = vunpack.c.l.b16 %v1866
      %v2097 = vunpack.c.l.b16 %v1880
      %v2098 = vunpack.c.l.b16 %v1890
      %v2099 = vunpack.c.l.b16 %v1904
      %v2100 = vunpack.c.l.b16 %v1914
      %v2101 = vunpack.c.l.b16 %v1928
      %v2102 = vunpack.c.l.b16 %v1938
      %v2103 = vunpack.c.l.b16 %v1952
      %v2104 = vunpack.c.l.b16 %v1962
      %v2105 = vunpack.c.l.b16 %v1976
      %v2106 = vunpack.c.l.b16 %v1986
      %v2107 = vunpack.c.l.b16 %v2000
      %v2108 = vunpack.c.l.b16 %v2010
      %v2109 = vunpack.c.l.b16 %v2024
      %v2110 = vunpack.c.l.b16 %v2034
      %v2111 = vunpack.c.l.b16 %v2048
      %v2112 = vunpack.c.l.b16 %v2058
      %v2113 = vunpack.c.l.b16 %v2072
      %v2114 = vunpack.c.l.b16 %v2082
      %v2115 = vpack.c.b16 %v2084, %v2083
      %v2116 = vpack.c.b16 %v2086, %v2085
      %v2117 = vpack.c.b16 %v2088, %v2087
      %v2118 = vpack.c.b16 %v2090, %v2089
      %v2119 = vpack.c.b16 %v2092, %v2091
      %v2120 = vpack.c.b16 %v2094, %v2093
      %v2121 = vpack.c.b16 %v2096, %v2095
      %v2122 = vpack.c.b16 %v2098, %v2097
      %v2123 = vpack.c.b16 %v2100, %v2099
      %v2124 = vpack.c.b16 %v2102, %v2101
      %v2125 = vpack.c.b16 %v2104, %v2103
      %v2126 = vpack.c.b16 %v2106, %v2105
      %v2127 = vpack.c.b16 %v2108, %v2107
      %v2128 = vpack.c.b16 %v2110, %v2109
      %v2129 = vpack.c.b16 %v2112, %v2111
      %v2130 = vpack.c.b16 %v2114, %v2113
      %2131 = vrot.lane.b32.xlu0 %v2115, 16
      %v2132 = vpop.permute.xlu0 %2131
      %2133 = vrot.lane.b32.xlu0 %v2116, 16
      %v2134 = vpop.permute.xlu0 %2133
      %2135 = vrot.lane.b32.xlu0 %v2117, 16
      %v2136 = vpop.permute.xlu0 %2135
      %2137 = vrot.lane.b32.xlu0 %v2118, 16
      %v2138 = vpop.permute.xlu0 %2137
      %2139 = vrot.lane.b32.xlu0 %v2119, 16
      %v2140 = vpop.permute.xlu0 %2139
      %2141 = vrot.lane.b32.xlu0 %v2120, 16
      %v2142 = vpop.permute.xlu0 %2141
      %2143 = vrot.lane.b32.xlu0 %v2121, 16
      %v2144 = vpop.permute.xlu0 %2143
      %2145 = vrot.lane.b32.xlu0 %v2122, 16
      %v2146 = vpop.permute.xlu0 %2145
      %2147 = vrot.lane.b32.xlu0 %v2123, 16
      %v2148 = vpop.permute.xlu0 %2147
      %2149 = vrot.lane.b32.xlu0 %v2124, 16
      %v2150 = vpop.permute.xlu0 %2149
      %2151 = vrot.lane.b32.xlu0 %v2125, 16
      %v2152 = vpop.permute.xlu0 %2151
      %2153 = vrot.lane.b32.xlu0 %v2126, 16
      %v2154 = vpop.permute.xlu0 %2153
      %2155 = vrot.lane.b32.xlu0 %v2127, 16
      %v2156 = vpop.permute.xlu0 %2155
      %2157 = vrot.lane.b32.xlu0 %v2128, 16
      %v2158 = vpop.permute.xlu0 %2157
      %2159 = vrot.lane.b32.xlu0 %v2129, 16
      %v2160 = vpop.permute.xlu0 %2159
      %2161 = vrot.lane.b32.xlu0 %v2130, 16
      %v2162 = vpop.permute.xlu0 %2161
      %vm2179 = vcmask 162944
      %2180 = vst.msk [vmem:[#allocation3] sm:$0xff] %vm2179, %v2132
      %2181 = vst.msk [vmem:[#allocation3 + $0x8] sm:$0xff] %vm2179, %v2134
      %2182 = vst.msk [vmem:[#allocation3 + $0x10] sm:$0xff] %vm2179, %v2136
      %2183 = vst.msk [vmem:[#allocation3 + $0x18] sm:$0xff] %vm2179, %v2138
      %2184 = vst.msk [vmem:[#allocation3 + $0x20] sm:$0xff] %vm2179, %v2140
      %2185 = vst.msk [vmem:[#allocation3 + $0x28] sm:$0xff] %vm2179, %v2142
      %2186 = vst.msk [vmem:[#allocation3 + $0x30] sm:$0xff] %vm2179, %v2144
      %2187 = vst.msk [vmem:[#allocation3 + $0x38] sm:$0xff] %vm2179, %v2146
      %2188 = vst.msk [vmem:[#allocation3 + $0x40] sm:$0xff] %vm2179, %v2148
      %2189 = vst.msk [vmem:[#allocation3 + $0x48] sm:$0xff] %vm2179, %v2150
      %2190 = vst.msk [vmem:[#allocation3 + $0x50] sm:$0xff] %vm2179, %v2152
      %2191 = vst.msk [vmem:[#allocation3 + $0x58] sm:$0xff] %vm2179, %v2154
      %2192 = vst.msk [vmem:[#allocation3 + $0x60] sm:$0xff] %vm2179, %v2156
      %2193 = vst.msk [vmem:[#allocation3 + $0x68] sm:$0xff] %vm2179, %v2158
      %2194 = vst.msk [vmem:[#allocation3 + $0x70] sm:$0xff] %vm2179, %v2160
      %2195 = vst.msk [vmem:[#allocation3 + $0x78] sm:$0xff] %vm2179, %v2162
      %v2196 = vld [vmem:[%s1473] sm:$0xe]
      %v2197 = vld [vmem:[%s1473 + $0x4] sm:$0xf]
      %v2198 = vld [vmem:[%s1473 + $0x8] sm:$0x1]
      %v2199 = vld [vmem:[%s1473 + $0xc] sm:$0xe]
      %v2200 = vld [vmem:[%s1473 + $0x10] sm:$0xf]
      %v2201 = vld [vmem:[%s1473 + $0x14] sm:$0x1]
      %v2202 = vld [vmem:[%s1473 + $0x18] sm:$0xe]
      %v2203 = vld [vmem:[%s1473 + $0x1c] sm:$0xf]
      %v2204 = vld [vmem:[%s1473 + $0x20] sm:$0x1]
      %v2205 = vld [vmem:[%s1473 + $0x24] sm:$0xe]
      %v2206 = vld [vmem:[%s1473 + $0x28] sm:$0xf]
      %v2207 = vld [vmem:[%s1473 + $0x2c] sm:$0x1]
      %v2208 = vld [vmem:[%s1473 + $0x30] sm:$0xe]
      %v2209 = vld [vmem:[%s1473 + $0x34] sm:$0xf]
      %v2210 = vld [vmem:[%s1473 + $0x38] sm:$0x1]
      %v2211 = vld [vmem:[%s1473 + $0x3c] sm:$0xe]
      %v2212 = vld [vmem:[%s1473 + $0x40] sm:$0xf]
      %v2213 = vld [vmem:[%s1473 + $0x44] sm:$0x1]
      %v2214 = vld [vmem:[%s1473 + $0x48] sm:$0xe]
      %v2215 = vld [vmem:[%s1473 + $0x4c] sm:$0xf]
      %v2216 = vld [vmem:[%s1473 + $0x50] sm:$0x1]
      %v2217 = vld [vmem:[%s1473 + $0x54] sm:$0xe]
      %v2218 = vld [vmem:[%s1473 + $0x58] sm:$0xf]
      %v2219 = vld [vmem:[%s1473 + $0x5c] sm:$0x1]
      %v2220 = vld [vmem:[%s1473 + $0x60] sm:$0xe]
      %v2221 = vld [vmem:[%s1473 + $0x64] sm:$0xf]
      %v2222 = vld [vmem:[%s1473 + $0x68] sm:$0x1]
      %v2223 = vld [vmem:[%s1473 + $0x6c] sm:$0xe]
      %v2224 = vld [vmem:[%s1473 + $0x70] sm:$0xf]
      %v2225 = vld [vmem:[%s1473 + $0x74] sm:$0x1]
      %v2226 = vld [vmem:[%s1473 + $0x78] sm:$0xe]
      %v2227 = vld [vmem:[%s1473 + $0x7c] sm:$0xf]
      %v2228 = vld [vmem:[%s1473 + $0x80] sm:$0x1]
      %v2229 = vld [vmem:[%s1473 + $0x84] sm:$0xe]
      %v2230 = vld [vmem:[%s1473 + $0x88] sm:$0xf]
      %v2231 = vld [vmem:[%s1473 + $0x8c] sm:$0x1]
      %v2232 = vld [vmem:[%s1473 + $0x90] sm:$0xe]
      %v2233 = vld [vmem:[%s1473 + $0x94] sm:$0xf]
      %v2234 = vld [vmem:[%s1473 + $0x98] sm:$0x1]
      %v2235 = vld [vmem:[%s1473 + $0x9c] sm:$0xe]
      %v2236 = vld [vmem:[%s1473 + $0xa0] sm:$0xf]
      %v2237 = vld [vmem:[%s1473 + $0xa4] sm:$0x1]
      %v2238 = vld [vmem:[%s1473 + $0xa8] sm:$0xe]
      %v2239 = vld [vmem:[%s1473 + $0xac] sm:$0xf]
      %v2240 = vld [vmem:[%s1473 + $0xb0] sm:$0x1]
      %v2241 = vld [vmem:[%s1473 + $0xb4] sm:$0xe]
      %v2242 = vld [vmem:[%s1473 + $0xb8] sm:$0xf]
      %v2243 = vld [vmem:[%s1473 + $0xbc] sm:$0x1]
      %v2292 = vrot.slane %v2196, 5
      %v2293 = vrot.slane %v2292, 4
      %v2294 = vrot.slane %v2197, 5
      %v2295 = vsel %vm1247, %v2293, %v2294
      %v2296 = vrot.slane %v2294, 4
      %v2297 = vrot.slane %v2198, 5
      %v2298 = vsel %vm1247, %v2296, %v2297
      %v2299 = vrot.slane %v2199, 5
      %v2300 = vrot.slane %v2299, 4
      %v2301 = vrot.slane %v2200, 5
      %v2302 = vsel %vm1247, %v2300, %v2301
      %v2303 = vrot.slane %v2301, 4
      %v2304 = vrot.slane %v2201, 5
      %v2305 = vsel %vm1247, %v2303, %v2304
      %v2306 = vrot.slane %v2202, 5
      %v2307 = vrot.slane %v2306, 4
      %v2308 = vrot.slane %v2203, 5
      %v2309 = vsel %vm1247, %v2307, %v2308
      %v2310 = vrot.slane %v2308, 4
      %v2311 = vrot.slane %v2204, 5
      %v2312 = vsel %vm1247, %v2310, %v2311
      %v2313 = vrot.slane %v2205, 5
      %v2314 = vrot.slane %v2313, 4
      %v2315 = vrot.slane %v2206, 5
      %v2316 = vsel %vm1247, %v2314, %v2315
      %v2317 = vrot.slane %v2315, 4
      %v2318 = vrot.slane %v2207, 5
      %v2319 = vsel %vm1247, %v2317, %v2318
      %v2320 = vrot.slane %v2208, 5
      %v2321 = vrot.slane %v2320, 4
      %v2322 = vrot.slane %v2209, 5
      %v2323 = vsel %vm1247, %v2321, %v2322
      %v2324 = vrot.slane %v2322, 4
      %v2325 = vrot.slane %v2210, 5
      %v2326 = vsel %vm1247, %v2324, %v2325
      %v2327 = vrot.slane %v2211, 5
      %v2328 = vrot.slane %v2327, 4
      %v2329 = vrot.slane %v2212, 5
      %v2330 = vsel %vm1247, %v2328, %v2329
      %v2331 = vrot.slane %v2329, 4
      %v2332 = vrot.slane %v2213, 5
      %v2333 = vsel %vm1247, %v2331, %v2332
      %v2334 = vrot.slane %v2214, 5
      %v2335 = vrot.slane %v2334, 4
      %v2336 = vrot.slane %v2215, 5
      %v2337 = vsel %vm1247, %v2335, %v2336
      %v2338 = vrot.slane %v2336, 4
      %v2339 = vrot.slane %v2216, 5
      %v2340 = vsel %vm1247, %v2338, %v2339
      %v2341 = vrot.slane %v2217, 5
      %v2342 = vrot.slane %v2341, 4
      %v2343 = vrot.slane %v2218, 5
      %v2344 = vsel %vm1247, %v2342, %v2343
      %v2345 = vrot.slane %v2343, 4
      %v2346 = vrot.slane %v2219, 5
      %v2347 = vsel %vm1247, %v2345, %v2346
      %v2348 = vrot.slane %v2220, 5
      %v2349 = vrot.slane %v2348, 4
      %v2350 = vrot.slane %v2221, 5
      %v2351 = vsel %vm1247, %v2349, %v2350
      %v2352 = vrot.slane %v2350, 4
      %v2353 = vrot.slane %v2222, 5
      %v2354 = vsel %vm1247, %v2352, %v2353
      %v2355 = vrot.slane %v2223, 5
      %v2356 = vrot.slane %v2355, 4
      %v2357 = vrot.slane %v2224, 5
      %v2358 = vsel %vm1247, %v2356, %v2357
      %v2359 = vrot.slane %v2357, 4
      %v2360 = vrot.slane %v2225, 5
      %v2361 = vsel %vm1247, %v2359, %v2360
      %v2362 = vrot.slane %v2226, 5
      %v2363 = vrot.slane %v2362, 4
      %v2364 = vrot.slane %v2227, 5
      %v2365 = vsel %vm1247, %v2363, %v2364
      %v2366 = vrot.slane %v2364, 4
      %v2367 = vrot.slane %v2228, 5
      %v2368 = vsel %vm1247, %v2366, %v2367
      %v2369 = vrot.slane %v2229, 5
      %v2370 = vrot.slane %v2369, 4
      %v2371 = vrot.slane %v2230, 5
      %v2372 = vsel %vm1247, %v2370, %v2371
      %v2373 = vrot.slane %v2371, 4
      %v2374 = vrot.slane %v2231, 5
      %v2375 = vsel %vm1247, %v2373, %v2374
      %v2376 = vrot.slane %v2232, 5
      %v2377 = vrot.slane %v2376, 4
      %v2378 = vrot.slane %v2233, 5
      %v2379 = vsel %vm1247, %v2377, %v2378
      %v2380 = vrot.slane %v2378, 4
      %v2381 = vrot.slane %v2234, 5
      %v2382 = vsel %vm1247, %v2380, %v2381
      %v2383 = vrot.slane %v2235, 5
      %v2384 = vrot.slane %v2383, 4
      %v2385 = vrot.slane %v2236, 5
      %v2386 = vsel %vm1247, %v2384, %v2385
      %v2387 = vrot.slane %v2385, 4
      %v2388 = vrot.slane %v2237, 5
      %v2389 = vsel %vm1247, %v2387, %v2388
      %v2390 = vrot.slane %v2238, 5
      %v2391 = vrot.slane %v2390, 4
      %v2392 = vrot.slane %v2239, 5
      %v2393 = vsel %vm1247, %v2391, %v2392
      %v2394 = vrot.slane %v2392, 4
      %v2395 = vrot.slane %v2240, 5
      %v2396 = vsel %vm1247, %v2394, %v2395
      %v2397 = vrot.slane %v2241, 5
      %v2398 = vrot.slane %v2397, 4
      %v2399 = vrot.slane %v2242, 5
      %v2400 = vsel %vm1247, %v2398, %v2399
      %v2401 = vrot.slane %v2399, 4
      %v2402 = vrot.slane %v2243, 5
      %v2403 = vsel %vm1247, %v2401, %v2402
      %v2404 = vunpack.c.l.b16 %v2295
      %v2405 = vunpack.c.l.b16 %v2298
      %v2406 = vunpack.c.l.b16 %v2302
      %v2407 = vunpack.c.l.b16 %v2305
      %v2408 = vunpack.c.l.b16 %v2309
      %v2409 = vunpack.c.l.b16 %v2312
      %v2410 = vunpack.c.l.b16 %v2316
      %v2411 = vunpack.c.l.b16 %v2319
      %v2412 = vunpack.c.l.b16 %v2323
      %v2413 = vunpack.c.l.b16 %v2326
      %v2414 = vunpack.c.l.b16 %v2330
      %v2415 = vunpack.c.l.b16 %v2333
      %v2416 = vunpack.c.l.b16 %v2337
      %v2417 = vunpack.c.l.b16 %v2340
      %v2418 = vunpack.c.l.b16 %v2344
      %v2419 = vunpack.c.l.b16 %v2347
      %v2420 = vunpack.c.l.b16 %v2351
      %v2421 = vunpack.c.l.b16 %v2354
      %v2422 = vunpack.c.l.b16 %v2358
      %v2423 = vunpack.c.l.b16 %v2361
      %v2424 = vunpack.c.l.b16 %v2365
      %v2425 = vunpack.c.l.b16 %v2368
      %v2426 = vunpack.c.l.b16 %v2372
      %v2427 = vunpack.c.l.b16 %v2375
      %v2428 = vunpack.c.l.b16 %v2379
      %v2429 = vunpack.c.l.b16 %v2382
      %v2430 = vunpack.c.l.b16 %v2386
      %v2431 = vunpack.c.l.b16 %v2389
      %v2432 = vunpack.c.l.b16 %v2393
      %v2433 = vunpack.c.l.b16 %v2396
      %v2434 = vunpack.c.l.b16 %v2400
      %v2435 = vunpack.c.l.b16 %v2403
      %v2436 = vpack.c.b16 %v2405, %v2404
      %v2437 = vpack.c.b16 %v2407, %v2406
      %v2438 = vpack.c.b16 %v2409, %v2408
      %v2439 = vpack.c.b16 %v2411, %v2410
      %v2440 = vpack.c.b16 %v2413, %v2412
      %v2441 = vpack.c.b16 %v2415, %v2414
      %v2442 = vpack.c.b16 %v2417, %v2416
      %v2443 = vpack.c.b16 %v2419, %v2418
      %v2444 = vpack.c.b16 %v2421, %v2420
      %v2445 = vpack.c.b16 %v2423, %v2422
      %v2446 = vpack.c.b16 %v2425, %v2424
      %v2447 = vpack.c.b16 %v2427, %v2426
      %v2448 = vpack.c.b16 %v2429, %v2428
      %v2449 = vpack.c.b16 %v2431, %v2430
      %v2450 = vpack.c.b16 %v2433, %v2432
      %v2451 = vpack.c.b16 %v2435, %v2434
      %2452 = vrot.lane.b32.xlu0 %v2436, 20
      %v2453 = vpop.permute.xlu0 %2452
      %2454 = vrot.lane.b32.xlu0 %v2437, 20
      %v2455 = vpop.permute.xlu0 %2454
      %2456 = vrot.lane.b32.xlu0 %v2438, 20
      %v2457 = vpop.permute.xlu0 %2456
      %2458 = vrot.lane.b32.xlu0 %v2439, 20
      %v2459 = vpop.permute.xlu0 %2458
      %2460 = vrot.lane.b32.xlu0 %v2440, 20
      %v2461 = vpop.permute.xlu0 %2460
      %2462 = vrot.lane.b32.xlu0 %v2441, 20
      %v2463 = vpop.permute.xlu0 %2462
      %2464 = vrot.lane.b32.xlu0 %v2442, 20
      %v2465 = vpop.permute.xlu0 %2464
      %2466 = vrot.lane.b32.xlu0 %v2443, 20
      %v2467 = vpop.permute.xlu0 %2466
      %2468 = vrot.lane.b32.xlu0 %v2444, 20
      %v2469 = vpop.permute.xlu0 %2468
      %2470 = vrot.lane.b32.xlu0 %v2445, 20
      %v2471 = vpop.permute.xlu0 %2470
      %2472 = vrot.lane.b32.xlu0 %v2446, 20
      %v2473 = vpop.permute.xlu0 %2472
      %2474 = vrot.lane.b32.xlu0 %v2447, 20
      %v2475 = vpop.permute.xlu0 %2474
      %2476 = vrot.lane.b32.xlu0 %v2448, 20
      %v2477 = vpop.permute.xlu0 %2476
      %2478 = vrot.lane.b32.xlu0 %v2449, 20
      %v2479 = vpop.permute.xlu0 %2478
      %2480 = vrot.lane.b32.xlu0 %v2450, 20
      %v2481 = vpop.permute.xlu0 %2480
      %2482 = vrot.lane.b32.xlu0 %v2451, 20
      %v2483 = vpop.permute.xlu0 %2482
      %vm2500 = vcmask 195744
      %2501 = vst.msk [vmem:[#allocation3] sm:$0xff] %vm2500, %v2453
      %2502 = vst.msk [vmem:[#allocation3 + $0x8] sm:$0xff] %vm2500, %v2455
      %2503 = vst.msk [vmem:[#allocation3 + $0x10] sm:$0xff] %vm2500, %v2457
      %2504 = vst.msk [vmem:[#allocation3 + $0x18] sm:$0xff] %vm2500, %v2459
      %2505 = vst.msk [vmem:[#allocation3 + $0x20] sm:$0xff] %vm2500, %v2461
      %2506 = vst.msk [vmem:[#allocation3 + $0x28] sm:$0xff] %vm2500, %v2463
      %2507 = vst.msk [vmem:[#allocation3 + $0x30] sm:$0xff] %vm2500, %v2465
      %2508 = vst.msk [vmem:[#allocation3 + $0x38] sm:$0xff] %vm2500, %v2467
      %2509 = vst.msk [vmem:[#allocation3 + $0x40] sm:$0xff] %vm2500, %v2469
      %2510 = vst.msk [vmem:[#allocation3 + $0x48] sm:$0xff] %vm2500, %v2471
      %2511 = vst.msk [vmem:[#allocation3 + $0x50] sm:$0xff] %vm2500, %v2473
      %2512 = vst.msk [vmem:[#allocation3 + $0x58] sm:$0xff] %vm2500, %v2475
      %2513 = vst.msk [vmem:[#allocation3 + $0x60] sm:$0xff] %vm2500, %v2477
      %2514 = vst.msk [vmem:[#allocation3 + $0x68] sm:$0xff] %vm2500, %v2479
      %2515 = vst.msk [vmem:[#allocation3 + $0x70] sm:$0xff] %vm2500, %v2481
      %2516 = vst.msk [vmem:[#allocation3 + $0x78] sm:$0xff] %vm2500, %v2483
      %s2517 = scalar_lea.vmem %s327, 24
      %v2518 = vld [vmem:[%s2517] sm:$0xf]
      %v2519 = vld [vmem:[%s2517 + $0x4] sm:$0xf]
      %v2520 = vld [vmem:[%s2517 + $0xc] sm:$0xf]
      %v2521 = vld [vmem:[%s2517 + $0x10] sm:$0xf]
      %v2522 = vld [vmem:[%s2517 + $0x18] sm:$0xf]
      %v2523 = vld [vmem:[%s2517 + $0x1c] sm:$0xf]
      %v2524 = vld [vmem:[%s2517 + $0x24] sm:$0xf]
      %v2525 = vld [vmem:[%s2517 + $0x28] sm:$0xf]
      %v2526 = vld [vmem:[%s2517 + $0x30] sm:$0xf]
      %v2527 = vld [vmem:[%s2517 + $0x34] sm:$0xf]
      %v2528 = vld [vmem:[%s2517 + $0x3c] sm:$0xf]
      %v2529 = vld [vmem:[%s2517 + $0x40] sm:$0xf]
      %v2530 = vld [vmem:[%s2517 + $0x48] sm:$0xf]
      %v2531 = vld [vmem:[%s2517 + $0x4c] sm:$0xf]
      %v2532 = vld [vmem:[%s2517 + $0x54] sm:$0xf]
      %v2533 = vld [vmem:[%s2517 + $0x58] sm:$0xf]
      %v2534 = vld [vmem:[%s2517 + $0x60] sm:$0xf]
      %v2535 = vld [vmem:[%s2517 + $0x64] sm:$0xf]
      %v2536 = vld [vmem:[%s2517 + $0x6c] sm:$0xf]
      %v2537 = vld [vmem:[%s2517 + $0x70] sm:$0xf]
      %v2538 = vld [vmem:[%s2517 + $0x78] sm:$0xf]
      %v2539 = vld [vmem:[%s2517 + $0x7c] sm:$0xf]
      %v2540 = vld [vmem:[%s2517 + $0x84] sm:$0xf]
      %v2541 = vld [vmem:[%s2517 + $0x88] sm:$0xf]
      %v2542 = vld [vmem:[%s2517 + $0x90] sm:$0xf]
      %v2543 = vld [vmem:[%s2517 + $0x94] sm:$0xf]
      %v2544 = vld [vmem:[%s2517 + $0x9c] sm:$0xf]
      %v2545 = vld [vmem:[%s2517 + $0xa0] sm:$0xf]
      %v2546 = vld [vmem:[%s2517 + $0xa8] sm:$0xf]
      %v2547 = vld [vmem:[%s2517 + $0xac] sm:$0xf]
      %v2548 = vld [vmem:[%s2517 + $0xb4] sm:$0xf]
      %v2549 = vld [vmem:[%s2517 + $0xb8] sm:$0xf]
      %v2582 = vunpack.c.l.b16 %v2518
      %v2583 = vunpack.c.l.b16 %v2519
      %v2584 = vunpack.c.l.b16 %v2520
      %v2585 = vunpack.c.l.b16 %v2521
      %v2586 = vunpack.c.l.b16 %v2522
      %v2587 = vunpack.c.l.b16 %v2523
      %v2588 = vunpack.c.l.b16 %v2524
      %v2589 = vunpack.c.l.b16 %v2525
      %v2590 = vunpack.c.l.b16 %v2526
      %v2591 = vunpack.c.l.b16 %v2527
      %v2592 = vunpack.c.l.b16 %v2528
      %v2593 = vunpack.c.l.b16 %v2529
      %v2594 = vunpack.c.l.b16 %v2530
      %v2595 = vunpack.c.l.b16 %v2531
      %v2596 = vunpack.c.l.b16 %v2532
      %v2597 = vunpack.c.l.b16 %v2533
      %v2598 = vunpack.c.l.b16 %v2534
      %v2599 = vunpack.c.l.b16 %v2535
      %v2600 = vunpack.c.l.b16 %v2536
      %v2601 = vunpack.c.l.b16 %v2537
      %v2602 = vunpack.c.l.b16 %v2538
      %v2603 = vunpack.c.l.b16 %v2539
      %v2604 = vunpack.c.l.b16 %v2540
      %v2605 = vunpack.c.l.b16 %v2541
      %v2606 = vunpack.c.l.b16 %v2542
      %v2607 = vunpack.c.l.b16 %v2543
      %v2608 = vunpack.c.l.b16 %v2544
      %v2609 = vunpack.c.l.b16 %v2545
      %v2610 = vunpack.c.l.b16 %v2546
      %v2611 = vunpack.c.l.b16 %v2547
      %v2612 = vunpack.c.l.b16 %v2548
      %v2613 = vunpack.c.l.b16 %v2549
      %v2614 = vpack.c.b16 %v2583, %v2582
      %v2615 = vpack.c.b16 %v2585, %v2584
      %v2616 = vpack.c.b16 %v2587, %v2586
      %v2617 = vpack.c.b16 %v2589, %v2588
      %v2618 = vpack.c.b16 %v2591, %v2590
      %v2619 = vpack.c.b16 %v2593, %v2592
      %v2620 = vpack.c.b16 %v2595, %v2594
      %v2621 = vpack.c.b16 %v2597, %v2596
      %v2622 = vpack.c.b16 %v2599, %v2598
      %v2623 = vpack.c.b16 %v2601, %v2600
      %v2624 = vpack.c.b16 %v2603, %v2602
      %v2625 = vpack.c.b16 %v2605, %v2604
      %v2626 = vpack.c.b16 %v2607, %v2606
      %v2627 = vpack.c.b16 %v2609, %v2608
      %v2628 = vpack.c.b16 %v2611, %v2610
      %v2629 = vpack.c.b16 %v2613, %v2612
      %2630 = vrot.lane.b32.xlu0 %v2614, 24
      %v2631 = vpop.permute.xlu0 %2630
      %2632 = vrot.lane.b32.xlu0 %v2615, 24
      %v2633 = vpop.permute.xlu0 %2632
      %2634 = vrot.lane.b32.xlu0 %v2616, 24
      %v2635 = vpop.permute.xlu0 %2634
      %2636 = vrot.lane.b32.xlu0 %v2617, 24
      %v2637 = vpop.permute.xlu0 %2636
      %2638 = vrot.lane.b32.xlu0 %v2618, 24
      %v2639 = vpop.permute.xlu0 %2638
      %2640 = vrot.lane.b32.xlu0 %v2619, 24
      %v2641 = vpop.permute.xlu0 %2640
      %2642 = vrot.lane.b32.xlu0 %v2620, 24
      %v2643 = vpop.permute.xlu0 %2642
      %2644 = vrot.lane.b32.xlu0 %v2621, 24
      %v2645 = vpop.permute.xlu0 %2644
      %2646 = vrot.lane.b32.xlu0 %v2622, 24
      %v2647 = vpop.permute.xlu0 %2646
      %2648 = vrot.lane.b32.xlu0 %v2623, 24
      %v2649 = vpop.permute.xlu0 %2648
      %2650 = vrot.lane.b32.xlu0 %v2624, 24
      %v2651 = vpop.permute.xlu0 %2650
      %2652 = vrot.lane.b32.xlu0 %v2625, 24
      %v2653 = vpop.permute.xlu0 %2652
      %2654 = vrot.lane.b32.xlu0 %v2626, 24
      %v2655 = vpop.permute.xlu0 %2654
      %2656 = vrot.lane.b32.xlu0 %v2627, 24
      %v2657 = vpop.permute.xlu0 %2656
      %2658 = vrot.lane.b32.xlu0 %v2628, 24
      %v2659 = vpop.permute.xlu0 %2658
      %2660 = vrot.lane.b32.xlu0 %v2629, 24
      %v2661 = vpop.permute.xlu0 %2660
      %vm2678 = vcmask 228544
      %2679 = vst.msk [vmem:[#allocation3] sm:$0xff] %vm2678, %v2631
      %2680 = vst.msk [vmem:[#allocation3 + $0x8] sm:$0xff] %vm2678, %v2633
      %2681 = vst.msk [vmem:[#allocation3 + $0x10] sm:$0xff] %vm2678, %v2635
      %2682 = vst.msk [vmem:[#allocation3 + $0x18] sm:$0xff] %vm2678, %v2637
      %2683 = vst.msk [vmem:[#allocation3 + $0x20] sm:$0xff] %vm2678, %v2639
      %2684 = vst.msk [vmem:[#allocation3 + $0x28] sm:$0xff] %vm2678, %v2641
      %2685 = vst.msk [vmem:[#allocation3 + $0x30] sm:$0xff] %vm2678, %v2643
      %2686 = vst.msk [vmem:[#allocation3 + $0x38] sm:$0xff] %vm2678, %v2645
      %2687 = vst.msk [vmem:[#allocation3 + $0x40] sm:$0xff] %vm2678, %v2647
      %2688 = vst.msk [vmem:[#allocation3 + $0x48] sm:$0xff] %vm2678, %v2649
      %2689 = vst.msk [vmem:[#allocation3 + $0x50] sm:$0xff] %vm2678, %v2651
      %2690 = vst.msk [vmem:[#allocation3 + $0x58] sm:$0xff] %vm2678, %v2653
      %2691 = vst.msk [vmem:[#allocation3 + $0x60] sm:$0xff] %vm2678, %v2655
      %2692 = vst.msk [vmem:[#allocation3 + $0x68] sm:$0xff] %vm2678, %v2657
      %2693 = vst.msk [vmem:[#allocation3 + $0x70] sm:$0xff] %vm2678, %v2659
      %2694 = vst.msk [vmem:[#allocation3 + $0x78] sm:$0xff] %vm2678, %v2661
      %v2695 = vld [vmem:[%s2517] sm:$0xf]
      %v2696 = vld [vmem:[%s2517 + $0x4] sm:$0xf]
      %v2697 = vld [vmem:[%s2517 + $0x8] sm:$0x1]
      %v2698 = vld [vmem:[%s2517 + $0xc] sm:$0xf]
      %v2699 = vld [vmem:[%s2517 + $0x10] sm:$0xf]
      %v2700 = vld [vmem:[%s2517 + $0x14] sm:$0x1]
      %v2701 = vld [vmem:[%s2517 + $0x18] sm:$0xf]
      %v2702 = vld [vmem:[%s2517 + $0x1c] sm:$0xf]
      %v2703 = vld [vmem:[%s2517 + $0x20] sm:$0x1]
      %v2704 = vld [vmem:[%s2517 + $0x24] sm:$0xf]
      %v2705 = vld [vmem:[%s2517 + $0x28] sm:$0xf]
      %v2706 = vld [vmem:[%s2517 + $0x2c] sm:$0x1]
      %v2707 = vld [vmem:[%s2517 + $0x30] sm:$0xf]
      %v2708 = vld [vmem:[%s2517 + $0x34] sm:$0xf]
      %v2709 = vld [vmem:[%s2517 + $0x38] sm:$0x1]
      %v2710 = vld [vmem:[%s2517 + $0x3c] sm:$0xf]
      %v2711 = vld [vmem:[%s2517 + $0x40] sm:$0xf]
      %v2712 = vld [vmem:[%s2517 + $0x44] sm:$0x1]
      %v2713 = vld [vmem:[%s2517 + $0x48] sm:$0xf]
      %v2714 = vld [vmem:[%s2517 + $0x4c] sm:$0xf]
      %v2715 = vld [vmem:[%s2517 + $0x50] sm:$0x1]
      %v2716 = vld [vmem:[%s2517 + $0x54] sm:$0xf]
      %v2717 = vld [vmem:[%s2517 + $0x58] sm:$0xf]
      %v2718 = vld [vmem:[%s2517 + $0x5c] sm:$0x1]
      %v2719 = vld [vmem:[%s2517 + $0x60] sm:$0xf]
      %v2720 = vld [vmem:[%s2517 + $0x64] sm:$0xf]
      %v2721 = vld [vmem:[%s2517 + $0x68] sm:$0x1]
      %v2722 = vld [vmem:[%s2517 + $0x6c] sm:$0xf]
      %v2723 = vld [vmem:[%s2517 + $0x70] sm:$0xf]
      %v2724 = vld [vmem:[%s2517 + $0x74] sm:$0x1]
      %v2725 = vld [vmem:[%s2517 + $0x78] sm:$0xf]
      %v2726 = vld [vmem:[%s2517 + $0x7c] sm:$0xf]
      %v2727 = vld [vmem:[%s2517 + $0x80] sm:$0x1]
      %v2728 = vld [vmem:[%s2517 + $0x84] sm:$0xf]
      %v2729 = vld [vmem:[%s2517 + $0x88] sm:$0xf]
      %v2730 = vld [vmem:[%s2517 + $0x8c] sm:$0x1]
      %v2731 = vld [vmem:[%s2517 + $0x90] sm:$0xf]
      %v2732 = vld [vmem:[%s2517 + $0x94] sm:$0xf]
      %v2733 = vld [vmem:[%s2517 + $0x98] sm:$0x1]
      %v2734 = vld [vmem:[%s2517 + $0x9c] sm:$0xf]
      %v2735 = vld [vmem:[%s2517 + $0xa0] sm:$0xf]
      %v2736 = vld [vmem:[%s2517 + $0xa4] sm:$0x1]
      %v2737 = vld [vmem:[%s2517 + $0xa8] sm:$0xf]
      %v2738 = vld [vmem:[%s2517 + $0xac] sm:$0xf]
      %v2739 = vld [vmem:[%s2517 + $0xb0] sm:$0x1]
      %v2740 = vld [vmem:[%s2517 + $0xb4] sm:$0xf]
      %v2741 = vld [vmem:[%s2517 + $0xb8] sm:$0xf]
      %v2742 = vld [vmem:[%s2517 + $0xbc] sm:$0x1]
      %v2744 = vshrl.u32 %v2695, 16
      %v2746 = vrot.slane %v2744, 4
      %v2747 = vshll.u32 %v2695, 16
      %v2749 = vrot.slane %v2747, 5
      %v2750 = vor.u32 %v2746, %v2749
      %v2751 = vrot.slane %v2750, 4
      %v2753 = vshll.u32 %v2696, 16
      %v2755 = vrot.slane %v2753, 5
      %v2756 = vsel %vm651, %v2751, %v2755
      %v2757 = vshrl.u32 %v2696, 16
      %v2759 = vrot.slane %v2757, 4
      %v2760 = vor.u32 %v2759, %v2755
      %v2761 = vrot.slane %v2760, 4
      %v2763 = vshll.u32 %v2697, 16
      %v2765 = vrot.slane %v2763, 5
      %v2766 = vsel %vm651, %v2761, %v2765
      %v2768 = vshrl.u32 %v2698, 16
      %v2770 = vrot.slane %v2768, 4
      %v2771 = vshll.u32 %v2698, 16
      %v2773 = vrot.slane %v2771, 5
      %v2774 = vor.u32 %v2770, %v2773
      %v2775 = vrot.slane %v2774, 4
      %v2777 = vshll.u32 %v2699, 16
      %v2779 = vrot.slane %v2777, 5
      %v2780 = vsel %vm651, %v2775, %v2779
      %v2781 = vshrl.u32 %v2699, 16
      %v2783 = vrot.slane %v2781, 4
      %v2784 = vor.u32 %v2783, %v2779
      %v2785 = vrot.slane %v2784, 4
      %v2787 = vshll.u32 %v2700, 16
      %v2789 = vrot.slane %v2787, 5
      %v2790 = vsel %vm651, %v2785, %v2789
      %v2792 = vshrl.u32 %v2701, 16
      %v2794 = vrot.slane %v2792, 4
      %v2795 = vshll.u32 %v2701, 16
      %v2797 = vrot.slane %v2795, 5
      %v2798 = vor.u32 %v2794, %v2797
      %v2799 = vrot.slane %v2798, 4
      %v2801 = vshll.u32 %v2702, 16
      %v2803 = vrot.slane %v2801, 5
      %v2804 = vsel %vm651, %v2799, %v2803
      %v2805 = vshrl.u32 %v2702, 16
      %v2807 = vrot.slane %v2805, 4
      %v2808 = vor.u32 %v2807, %v2803
      %v2809 = vrot.slane %v2808, 4
      %v2811 = vshll.u32 %v2703, 16
      %v2813 = vrot.slane %v2811, 5
      %v2814 = vsel %vm651, %v2809, %v2813
      %v2816 = vshrl.u32 %v2704, 16
      %v2818 = vrot.slane %v2816, 4
      %v2819 = vshll.u32 %v2704, 16
      %v2821 = vrot.slane %v2819, 5
      %v2822 = vor.u32 %v2818, %v2821
      %v2823 = vrot.slane %v2822, 4
      %v2825 = vshll.u32 %v2705, 16
      %v2827 = vrot.slane %v2825, 5
      %v2828 = vsel %vm651, %v2823, %v2827
      %v2829 = vshrl.u32 %v2705, 16
      %v2831 = vrot.slane %v2829, 4
      %v2832 = vor.u32 %v2831, %v2827
      %v2833 = vrot.slane %v2832, 4
      %v2835 = vshll.u32 %v2706, 16
      %v2837 = vrot.slane %v2835, 5
      %v2838 = vsel %vm651, %v2833, %v2837
      %v2840 = vshrl.u32 %v2707, 16
      %v2842 = vrot.slane %v2840, 4
      %v2843 = vshll.u32 %v2707, 16
      %v2845 = vrot.slane %v2843, 5
      %v2846 = vor.u32 %v2842, %v2845
      %v2847 = vrot.slane %v2846, 4
      %v2849 = vshll.u32 %v2708, 16
      %v2851 = vrot.slane %v2849, 5
      %v2852 = vsel %vm651, %v2847, %v2851
      %v2853 = vshrl.u32 %v2708, 16
      %v2855 = vrot.slane %v2853, 4
      %v2856 = vor.u32 %v2855, %v2851
      %v2857 = vrot.slane %v2856, 4
      %v2859 = vshll.u32 %v2709, 16
      %v2861 = vrot.slane %v2859, 5
      %v2862 = vsel %vm651, %v2857, %v2861
      %v2864 = vshrl.u32 %v2710, 16
      %v2866 = vrot.slane %v2864, 4
      %v2867 = vshll.u32 %v2710, 16
      %v2869 = vrot.slane %v2867, 5
      %v2870 = vor.u32 %v2866, %v2869
      %v2871 = vrot.slane %v2870, 4
      %v2873 = vshll.u32 %v2711, 16
      %v2875 = vrot.slane %v2873, 5
      %v2876 = vsel %vm651, %v2871, %v2875
      %v2877 = vshrl.u32 %v2711, 16
      %v2879 = vrot.slane %v2877, 4
      %v2880 = vor.u32 %v2879, %v2875
      %v2881 = vrot.slane %v2880, 4
      %v2883 = vshll.u32 %v2712, 16
      %v2885 = vrot.slane %v2883, 5
      %v2886 = vsel %vm651, %v2881, %v2885
      %v2888 = vshrl.u32 %v2713, 16
      %v2890 = vrot.slane %v2888, 4
      %v2891 = vshll.u32 %v2713, 16
      %v2893 = vrot.slane %v2891, 5
      %v2894 = vor.u32 %v2890, %v2893
      %v2895 = vrot.slane %v2894, 4
      %v2897 = vshll.u32 %v2714, 16
      %v2899 = vrot.slane %v2897, 5
      %v2900 = vsel %vm651, %v2895, %v2899
      %v2901 = vshrl.u32 %v2714, 16
      %v2903 = vrot.slane %v2901, 4
      %v2904 = vor.u32 %v2903, %v2899
      %v2905 = vrot.slane %v2904, 4
      %v2907 = vshll.u32 %v2715, 16
      %v2909 = vrot.slane %v2907, 5
      %v2910 = vsel %vm651, %v2905, %v2909
      %v2912 = vshrl.u32 %v2716, 16
      %v2914 = vrot.slane %v2912, 4
      %v2915 = vshll.u32 %v2716, 16
      %v2917 = vrot.slane %v2915, 5
      %v2918 = vor.u32 %v2914, %v2917
      %v2919 = vrot.slane %v2918, 4
      %v2921 = vshll.u32 %v2717, 16
      %v2923 = vrot.slane %v2921, 5
      %v2924 = vsel %vm651, %v2919, %v2923
      %v2925 = vshrl.u32 %v2717, 16
      %v2927 = vrot.slane %v2925, 4
      %v2928 = vor.u32 %v2927, %v2923
      %v2929 = vrot.slane %v2928, 4
      %v2931 = vshll.u32 %v2718, 16
      %v2933 = vrot.slane %v2931, 5
      %v2934 = vsel %vm651, %v2929, %v2933
      %v2936 = vshrl.u32 %v2719, 16
      %v2938 = vrot.slane %v2936, 4
      %v2939 = vshll.u32 %v2719, 16
      %v2941 = vrot.slane %v2939, 5
      %v2942 = vor.u32 %v2938, %v2941
      %v2943 = vrot.slane %v2942, 4
      %v2945 = vshll.u32 %v2720, 16
      %v2947 = vrot.slane %v2945, 5
      %v2948 = vsel %vm651, %v2943, %v2947
      %v2949 = vshrl.u32 %v2720, 16
      %v2951 = vrot.slane %v2949, 4
      %v2952 = vor.u32 %v2951, %v2947
      %v2953 = vrot.slane %v2952, 4
      %v2955 = vshll.u32 %v2721, 16
      %v2957 = vrot.slane %v2955, 5
      %v2958 = vsel %vm651, %v2953, %v2957
      %v2960 = vshrl.u32 %v2722, 16
      %v2962 = vrot.slane %v2960, 4
      %v2963 = vshll.u32 %v2722, 16
      %v2965 = vrot.slane %v2963, 5
      %v2966 = vor.u32 %v2962, %v2965
      %v2967 = vrot.slane %v2966, 4
      %v2969 = vshll.u32 %v2723, 16
      %v2971 = vrot.slane %v2969, 5
      %v2972 = vsel %vm651, %v2967, %v2971
      %v2973 = vshrl.u32 %v2723, 16
      %v2975 = vrot.slane %v2973, 4
      %v2976 = vor.u32 %v2975, %v2971
      %v2977 = vrot.slane %v2976, 4
      %v2979 = vshll.u32 %v2724, 16
      %v2981 = vrot.slane %v2979, 5
      %v2982 = vsel %vm651, %v2977, %v2981
      %v2984 = vshrl.u32 %v2725, 16
      %v2986 = vrot.slane %v2984, 4
      %v2987 = vshll.u32 %v2725, 16
      %v2989 = vrot.slane %v2987, 5
      %v2990 = vor.u32 %v2986, %v2989
      %v2991 = vrot.slane %v2990, 4
      %v2993 = vshll.u32 %v2726, 16
      %v2995 = vrot.slane %v2993, 5
      %v2996 = vsel %vm651, %v2991, %v2995
      %v2997 = vshrl.u32 %v2726, 16
      %v2999 = vrot.slane %v2997, 4
      %v3000 = vor.u32 %v2999, %v2995
      %v3001 = vrot.slane %v3000, 4
      %v3003 = vshll.u32 %v2727, 16
      %v3005 = vrot.slane %v3003, 5
      %v3006 = vsel %vm651, %v3001, %v3005
      %v3008 = vshrl.u32 %v2728, 16
      %v3010 = vrot.slane %v3008, 4
      %v3011 = vshll.u32 %v2728, 16
      %v3013 = vrot.slane %v3011, 5
      %v3014 = vor.u32 %v3010, %v3013
      %v3015 = vrot.slane %v3014, 4
      %v3017 = vshll.u32 %v2729, 16
      %v3019 = vrot.slane %v3017, 5
      %v3020 = vsel %vm651, %v3015, %v3019
      %v3021 = vshrl.u32 %v2729, 16
      %v3023 = vrot.slane %v3021, 4
      %v3024 = vor.u32 %v3023, %v3019
      %v3025 = vrot.slane %v3024, 4
      %v3027 = vshll.u32 %v2730, 16
      %v3029 = vrot.slane %v3027, 5
      %v3030 = vsel %vm651, %v3025, %v3029
      %v3032 = vshrl.u32 %v2731, 16
      %v3034 = vrot.slane %v3032, 4
      %v3035 = vshll.u32 %v2731, 16
      %v3037 = vrot.slane %v3035, 5
      %v3038 = vor.u32 %v3034, %v3037
      %v3039 = vrot.slane %v3038, 4
      %v3041 = vshll.u32 %v2732, 16
      %v3043 = vrot.slane %v3041, 5
      %v3044 = vsel %vm651, %v3039, %v3043
      %v3045 = vshrl.u32 %v2732, 16
      %v3047 = vrot.slane %v3045, 4
      %v3048 = vor.u32 %v3047, %v3043
      %v3049 = vrot.slane %v3048, 4
      %v3051 = vshll.u32 %v2733, 16
      %v3053 = vrot.slane %v3051, 5
      %v3054 = vsel %vm651, %v3049, %v3053
      %v3056 = vshrl.u32 %v2734, 16
      %v3058 = vrot.slane %v3056, 4
      %v3059 = vshll.u32 %v2734, 16
      %v3061 = vrot.slane %v3059, 5
      %v3062 = vor.u32 %v3058, %v3061
      %v3063 = vrot.slane %v3062, 4
      %v3065 = vshll.u32 %v2735, 16
      %v3067 = vrot.slane %v3065, 5
      %v3068 = vsel %vm651, %v3063, %v3067
      %v3069 = vshrl.u32 %v2735, 16
      %v3071 = vrot.slane %v3069, 4
      %v3072 = vor.u32 %v3071, %v3067
      %v3073 = vrot.slane %v3072, 4
      %v3075 = vshll.u32 %v2736, 16
      %v3077 = vrot.slane %v3075, 5
      %v3078 = vsel %vm651, %v3073, %v3077
      %v3080 = vshrl.u32 %v2737, 16
      %v3082 = vrot.slane %v3080, 4
      %v3083 = vshll.u32 %v2737, 16
      %v3085 = vrot.slane %v3083, 5
      %v3086 = vor.u32 %v3082, %v3085
      %v3087 = vrot.slane %v3086, 4
      %v3089 = vshll.u32 %v2738, 16
      %v3091 = vrot.slane %v3089, 5
      %v3092 = vsel %vm651, %v3087, %v3091
      %v3093 = vshrl.u32 %v2738, 16
      %v3095 = vrot.slane %v3093, 4
      %v3096 = vor.u32 %v3095, %v3091
      %v3097 = vrot.slane %v3096, 4
      %v3099 = vshll.u32 %v2739, 16
      %v3101 = vrot.slane %v3099, 5
      %v3102 = vsel %vm651, %v3097, %v3101
      %v3104 = vshrl.u32 %v2740, 16
      %v3106 = vrot.slane %v3104, 4
      %v3107 = vshll.u32 %v2740, 16
      %v3109 = vrot.slane %v3107, 5
      %v3110 = vor.u32 %v3106, %v3109
      %v3111 = vrot.slane %v3110, 4
      %v3113 = vshll.u32 %v2741, 16
      %v3115 = vrot.slane %v3113, 5
      %v3116 = vsel %vm651, %v3111, %v3115
      %v3117 = vshrl.u32 %v2741, 16
      %v3119 = vrot.slane %v3117, 4
      %v3120 = vor.u32 %v3119, %v3115
      %v3121 = vrot.slane %v3120, 4
      %v3123 = vshll.u32 %v2742, 16
      %v3125 = vrot.slane %v3123, 5
      %v3126 = vsel %vm651, %v3121, %v3125
      %v3127 = vunpack.c.l.b16 %v2756
      %v3128 = vunpack.c.l.b16 %v2766
      %v3129 = vunpack.c.l.b16 %v2780
      %v3130 = vunpack.c.l.b16 %v2790
      %v3131 = vunpack.c.l.b16 %v2804
      %v3132 = vunpack.c.l.b16 %v2814
      %v3133 = vunpack.c.l.b16 %v2828
      %v3134 = vunpack.c.l.b16 %v2838
      %v3135 = vunpack.c.l.b16 %v2852
      %v3136 = vunpack.c.l.b16 %v2862
      %v3137 = vunpack.c.l.b16 %v2876
      %v3138 = vunpack.c.l.b16 %v2886
      %v3139 = vunpack.c.l.b16 %v2900
      %v3140 = vunpack.c.l.b16 %v2910
      %v3141 = vunpack.c.l.b16 %v2924
      %v3142 = vunpack.c.l.b16 %v2934
      %v3143 = vunpack.c.l.b16 %v2948
      %v3144 = vunpack.c.l.b16 %v2958
      %v3145 = vunpack.c.l.b16 %v2972
      %v3146 = vunpack.c.l.b16 %v2982
      %v3147 = vunpack.c.l.b16 %v2996
      %v3148 = vunpack.c.l.b16 %v3006
      %v3149 = vunpack.c.l.b16 %v3020
      %v3150 = vunpack.c.l.b16 %v3030
      %v3151 = vunpack.c.l.b16 %v3044
      %v3152 = vunpack.c.l.b16 %v3054
      %v3153 = vunpack.c.l.b16 %v3068
      %v3154 = vunpack.c.l.b16 %v3078
      %v3155 = vunpack.c.l.b16 %v3092
      %v3156 = vunpack.c.l.b16 %v3102
      %v3157 = vunpack.c.l.b16 %v3116
      %v3158 = vunpack.c.l.b16 %v3126
      %v3159 = vpack.c.b16 %v3128, %v3127
      %v3160 = vpack.c.b16 %v3130, %v3129
      %v3161 = vpack.c.b16 %v3132, %v3131
      %v3162 = vpack.c.b16 %v3134, %v3133
      %v3163 = vpack.c.b16 %v3136, %v3135
      %v3164 = vpack.c.b16 %v3138, %v3137
      %v3165 = vpack.c.b16 %v3140, %v3139
      %v3166 = vpack.c.b16 %v3142, %v3141
      %v3167 = vpack.c.b16 %v3144, %v3143
      %v3168 = vpack.c.b16 %v3146, %v3145
      %v3169 = vpack.c.b16 %v3148, %v3147
      %v3170 = vpack.c.b16 %v3150, %v3149
      %v3171 = vpack.c.b16 %v3152, %v3151
      %v3172 = vpack.c.b16 %v3154, %v3153
      %v3173 = vpack.c.b16 %v3156, %v3155
      %v3174 = vpack.c.b16 %v3158, %v3157
      %3175 = vrot.lane.b32.xlu0 %v3159, 28
      %v3176 = vpop.permute.xlu0 %3175
      %3177 = vrot.lane.b32.xlu0 %v3160, 28
      %v3178 = vpop.permute.xlu0 %3177
      %3179 = vrot.lane.b32.xlu0 %v3161, 28
      %v3180 = vpop.permute.xlu0 %3179
      %3181 = vrot.lane.b32.xlu0 %v3162, 28
      %v3182 = vpop.permute.xlu0 %3181
      %3183 = vrot.lane.b32.xlu0 %v3163, 28
      %v3184 = vpop.permute.xlu0 %3183
      %3185 = vrot.lane.b32.xlu0 %v3164, 28
      %v3186 = vpop.permute.xlu0 %3185
      %3187 = vrot.lane.b32.xlu0 %v3165, 28
      %v3188 = vpop.permute.xlu0 %3187
      %3189 = vrot.lane.b32.xlu0 %v3166, 28
      %v3190 = vpop.permute.xlu0 %3189
      %3191 = vrot.lane.b32.xlu0 %v3167, 28
      %v3192 = vpop.permute.xlu0 %3191
      %3193 = vrot.lane.b32.xlu0 %v3168, 28
      %v3194 = vpop.permute.xlu0 %3193
      %3195 = vrot.lane.b32.xlu0 %v3169, 28
      %v3196 = vpop.permute.xlu0 %3195
      %3197 = vrot.lane.b32.xlu0 %v3170, 28
      %v3198 = vpop.permute.xlu0 %3197
      %3199 = vrot.lane.b32.xlu0 %v3171, 28
      %v3200 = vpop.permute.xlu0 %3199
      %3201 = vrot.lane.b32.xlu0 %v3172, 28
      %v3202 = vpop.permute.xlu0 %3201
      %3203 = vrot.lane.b32.xlu0 %v3173, 28
      %v3204 = vpop.permute.xlu0 %3203
      %3205 = vrot.lane.b32.xlu0 %v3174, 28
      %v3206 = vpop.permute.xlu0 %3205
      %vm3223 = vcmask 261344
      %3224 = vst.msk [vmem:[#allocation3] sm:$0xff] %vm3223, %v3176
      %3225 = vst.msk [vmem:[#allocation3 + $0x8] sm:$0xff] %vm3223, %v3178
      %3226 = vst.msk [vmem:[#allocation3 + $0x10] sm:$0xff] %vm3223, %v3180
      %3227 = vst.msk [vmem:[#allocation3 + $0x18] sm:$0xff] %vm3223, %v3182
      %3228 = vst.msk [vmem:[#allocation3 + $0x20] sm:$0xff] %vm3223, %v3184
      %3229 = vst.msk [vmem:[#allocation3 + $0x28] sm:$0xff] %vm3223, %v3186
      %3230 = vst.msk [vmem:[#allocation3 + $0x30] sm:$0xff] %vm3223, %v3188
      %3231 = vst.msk [vmem:[#allocation3 + $0x38] sm:$0xff] %vm3223, %v3190
      %3232 = vst.msk [vmem:[#allocation3 + $0x40] sm:$0xff] %vm3223, %v3192
      %3233 = vst.msk [vmem:[#allocation3 + $0x48] sm:$0xff] %vm3223, %v3194
      %3234 = vst.msk [vmem:[#allocation3 + $0x50] sm:$0xff] %vm3223, %v3196
      %3235 = vst.msk [vmem:[#allocation3 + $0x58] sm:$0xff] %vm3223, %v3198
      %3236 = vst.msk [vmem:[#allocation3 + $0x60] sm:$0xff] %vm3223, %v3200
      %3237 = vst.msk [vmem:[#allocation3 + $0x68] sm:$0xff] %vm3223, %v3202
      %3238 = vst.msk [vmem:[#allocation3 + $0x70] sm:$0xff] %vm3223, %v3204
      %3239 = vst.msk [vmem:[#allocation3 + $0x78] sm:$0xff] %vm3223, %v3206
      %v3240 = vld [vmem:[%s2517] sm:$0xe]
      %v3241 = vld [vmem:[%s2517 + $0x4] sm:$0xf]
      %v3242 = vld [vmem:[%s2517 + $0x8] sm:$0x1]
      %v3243 = vld [vmem:[%s2517 + $0xc] sm:$0xe]
      %v3244 = vld [vmem:[%s2517 + $0x10] sm:$0xf]
      %v3245 = vld [vmem:[%s2517 + $0x14] sm:$0x1]
      %v3246 = vld [vmem:[%s2517 + $0x18] sm:$0xe]
      %v3247 = vld [vmem:[%s2517 + $0x1c] sm:$0xf]
      %v3248 = vld [vmem:[%s2517 + $0x20] sm:$0x1]
      %v3249 = vld [vmem:[%s2517 + $0x24] sm:$0xe]
      %v3250 = vld [vmem:[%s2517 + $0x28] sm:$0xf]
      %v3251 = vld [vmem:[%s2517 + $0x2c] sm:$0x1]
      %v3252 = vld [vmem:[%s2517 + $0x30] sm:$0xe]
      %v3253 = vld [vmem:[%s2517 + $0x34] sm:$0xf]
      %v3254 = vld [vmem:[%s2517 + $0x38] sm:$0x1]
      %v3255 = vld [vmem:[%s2517 + $0x3c] sm:$0xe]
      %v3256 = vld [vmem:[%s2517 + $0x40] sm:$0xf]
      %v3257 = vld [vmem:[%s2517 + $0x44] sm:$0x1]
      %v3258 = vld [vmem:[%s2517 + $0x48] sm:$0xe]
      %v3259 = vld [vmem:[%s2517 + $0x4c] sm:$0xf]
      %v3260 = vld [vmem:[%s2517 + $0x50] sm:$0x1]
      %v3261 = vld [vmem:[%s2517 + $0x54] sm:$0xe]
      %v3262 = vld [vmem:[%s2517 + $0x58] sm:$0xf]
      %v3263 = vld [vmem:[%s2517 + $0x5c] sm:$0x1]
      %v3264 = vld [vmem:[%s2517 + $0x60] sm:$0xe]
      %v3265 = vld [vmem:[%s2517 + $0x64] sm:$0xf]
      %v3266 = vld [vmem:[%s2517 + $0x68] sm:$0x1]
      %v3267 = vld [vmem:[%s2517 + $0x6c] sm:$0xe]
      %v3268 = vld [vmem:[%s2517 + $0x70] sm:$0xf]
      %v3269 = vld [vmem:[%s2517 + $0x74] sm:$0x1]
      %v3270 = vld [vmem:[%s2517 + $0x78] sm:$0xe]
      %v3271 = vld [vmem:[%s2517 + $0x7c] sm:$0xf]
      %v3272 = vld [vmem:[%s2517 + $0x80] sm:$0x1]
      %v3273 = vld [vmem:[%s2517 + $0x84] sm:$0xe]
      %v3274 = vld [vmem:[%s2517 + $0x88] sm:$0xf]
      %v3275 = vld [vmem:[%s2517 + $0x8c] sm:$0x1]
      %v3276 = vld [vmem:[%s2517 + $0x90] sm:$0xe]
      %v3277 = vld [vmem:[%s2517 + $0x94] sm:$0xf]
      %v3278 = vld [vmem:[%s2517 + $0x98] sm:$0x1]
      %v3279 = vld [vmem:[%s2517 + $0x9c] sm:$0xe]
      %v3280 = vld [vmem:[%s2517 + $0xa0] sm:$0xf]
      %v3281 = vld [vmem:[%s2517 + $0xa4] sm:$0x1]
      %v3282 = vld [vmem:[%s2517 + $0xa8] sm:$0xe]
      %v3283 = vld [vmem:[%s2517 + $0xac] sm:$0xf]
      %v3284 = vld [vmem:[%s2517 + $0xb0] sm:$0x1]
      %v3285 = vld [vmem:[%s2517 + $0xb4] sm:$0xe]
      %v3286 = vld [vmem:[%s2517 + $0xb8] sm:$0xf]
      %v3287 = vld [vmem:[%s2517 + $0xbc] sm:$0x1]
      %v3336 = vrot.slane %v3240, 5
      %v3337 = vrot.slane %v3336, 4
      %v3338 = vrot.slane %v3241, 5
      %v3339 = vsel %vm1247, %v3337, %v3338
      %v3340 = vrot.slane %v3338, 4
      %v3341 = vrot.slane %v3242, 5
      %v3342 = vsel %vm1247, %v3340, %v3341
      %v3343 = vrot.slane %v3243, 5
      %v3344 = vrot.slane %v3343, 4
      %v3345 = vrot.slane %v3244, 5
      %v3346 = vsel %vm1247, %v3344, %v3345
      %v3347 = vrot.slane %v3345, 4
      %v3348 = vrot.slane %v3245, 5
      %v3349 = vsel %vm1247, %v3347, %v3348
      %v3350 = vrot.slane %v3246, 5
      %v3351 = vrot.slane %v3350, 4
      %v3352 = vrot.slane %v3247, 5
      %v3353 = vsel %vm1247, %v3351, %v3352
      %v3354 = vrot.slane %v3352, 4
      %v3355 = vrot.slane %v3248, 5
      %v3356 = vsel %vm1247, %v3354, %v3355
      %v3357 = vrot.slane %v3249, 5
      %v3358 = vrot.slane %v3357, 4
      %v3359 = vrot.slane %v3250, 5
      %v3360 = vsel %vm1247, %v3358, %v3359
      %v3361 = vrot.slane %v3359, 4
      %v3362 = vrot.slane %v3251, 5
      %v3363 = vsel %vm1247, %v3361, %v3362
      %v3364 = vrot.slane %v3252, 5
      %v3365 = vrot.slane %v3364, 4
      %v3366 = vrot.slane %v3253, 5
      %v3367 = vsel %vm1247, %v3365, %v3366
      %v3368 = vrot.slane %v3366, 4
      %v3369 = vrot.slane %v3254, 5
      %v3370 = vsel %vm1247, %v3368, %v3369
      %v3371 = vrot.slane %v3255, 5
      %v3372 = vrot.slane %v3371, 4
      %v3373 = vrot.slane %v3256, 5
      %v3374 = vsel %vm1247, %v3372, %v3373
      %v3375 = vrot.slane %v3373, 4
      %v3376 = vrot.slane %v3257, 5
      %v3377 = vsel %vm1247, %v3375, %v3376
      %v3378 = vrot.slane %v3258, 5
      %v3379 = vrot.slane %v3378, 4
      %v3380 = vrot.slane %v3259, 5
      %v3381 = vsel %vm1247, %v3379, %v3380
      %v3382 = vrot.slane %v3380, 4
      %v3383 = vrot.slane %v3260, 5
      %v3384 = vsel %vm1247, %v3382, %v3383
      %v3385 = vrot.slane %v3261, 5
      %v3386 = vrot.slane %v3385, 4
      %v3387 = vrot.slane %v3262, 5
      %v3388 = vsel %vm1247, %v3386, %v3387
      %v3389 = vrot.slane %v3387, 4
      %v3390 = vrot.slane %v3263, 5
      %v3391 = vsel %vm1247, %v3389, %v3390
      %v3392 = vrot.slane %v3264, 5
      %v3393 = vrot.slane %v3392, 4
      %v3394 = vrot.slane %v3265, 5
      %v3395 = vsel %vm1247, %v3393, %v3394
      %v3396 = vrot.slane %v3394, 4
      %v3397 = vrot.slane %v3266, 5
      %v3398 = vsel %vm1247, %v3396, %v3397
      %v3399 = vrot.slane %v3267, 5
      %v3400 = vrot.slane %v3399, 4
      %v3401 = vrot.slane %v3268, 5
      %v3402 = vsel %vm1247, %v3400, %v3401
      %v3403 = vrot.slane %v3401, 4
      %v3404 = vrot.slane %v3269, 5
      %v3405 = vsel %vm1247, %v3403, %v3404
      %v3406 = vrot.slane %v3270, 5
      %v3407 = vrot.slane %v3406, 4
      %v3408 = vrot.slane %v3271, 5
      %v3409 = vsel %vm1247, %v3407, %v3408
      %v3410 = vrot.slane %v3408, 4
      %v3411 = vrot.slane %v3272, 5
      %v3412 = vsel %vm1247, %v3410, %v3411
      %v3413 = vrot.slane %v3273, 5
      %v3414 = vrot.slane %v3413, 4
      %v3415 = vrot.slane %v3274, 5
      %v3416 = vsel %vm1247, %v3414, %v3415
      %v3417 = vrot.slane %v3415, 4
      %v3418 = vrot.slane %v3275, 5
      %v3419 = vsel %vm1247, %v3417, %v3418
      %v3420 = vrot.slane %v3276, 5
      %v3421 = vrot.slane %v3420, 4
      %v3422 = vrot.slane %v3277, 5
      %v3423 = vsel %vm1247, %v3421, %v3422
      %v3424 = vrot.slane %v3422, 4
      %v3425 = vrot.slane %v3278, 5
      %v3426 = vsel %vm1247, %v3424, %v3425
      %v3427 = vrot.slane %v3279, 5
      %v3428 = vrot.slane %v3427, 4
      %v3429 = vrot.slane %v3280, 5
      %v3430 = vsel %vm1247, %v3428, %v3429
      %v3431 = vrot.slane %v3429, 4
      %v3432 = vrot.slane %v3281, 5
      %v3433 = vsel %vm1247, %v3431, %v3432
      %v3434 = vrot.slane %v3282, 5
      %v3435 = vrot.slane %v3434, 4
      %v3436 = vrot.slane %v3283, 5
      %v3437 = vsel %vm1247, %v3435, %v3436
      %v3438 = vrot.slane %v3436, 4
      %v3439 = vrot.slane %v3284, 5
      %v3440 = vsel %vm1247, %v3438, %v3439
      %v3441 = vrot.slane %v3285, 5
      %v3442 = vrot.slane %v3441, 4
      %v3443 = vrot.slane %v3286, 5
      %v3444 = vsel %vm1247, %v3442, %v3443
      %v3445 = vrot.slane %v3443, 4
      %v3446 = vrot.slane %v3287, 5
      %v3447 = vsel %vm1247, %v3445, %v3446
      %v3448 = vunpack.c.l.b16 %v3339
      %v3449 = vunpack.c.l.b16 %v3342
      %v3450 = vunpack.c.l.b16 %v3346
      %v3451 = vunpack.c.l.b16 %v3349
      %v3452 = vunpack.c.l.b16 %v3353
      %v3453 = vunpack.c.l.b16 %v3356
      %v3454 = vunpack.c.l.b16 %v3360
      %v3455 = vunpack.c.l.b16 %v3363
      %v3456 = vunpack.c.l.b16 %v3367
      %v3457 = vunpack.c.l.b16 %v3370
      %v3458 = vunpack.c.l.b16 %v3374
      %v3459 = vunpack.c.l.b16 %v3377
      %v3460 = vunpack.c.l.b16 %v3381
      %v3461 = vunpack.c.l.b16 %v3384
      %v3462 = vunpack.c.l.b16 %v3388
      %v3463 = vunpack.c.l.b16 %v3391
      %v3464 = vunpack.c.l.b16 %v3395
      %v3465 = vunpack.c.l.b16 %v3398
      %v3466 = vunpack.c.l.b16 %v3402
      %v3467 = vunpack.c.l.b16 %v3405
      %v3468 = vunpack.c.l.b16 %v3409
      %v3469 = vunpack.c.l.b16 %v3412
      %v3470 = vunpack.c.l.b16 %v3416
      %v3471 = vunpack.c.l.b16 %v3419
      %v3472 = vunpack.c.l.b16 %v3423
      %v3473 = vunpack.c.l.b16 %v3426
      %v3474 = vunpack.c.l.b16 %v3430
      %v3475 = vunpack.c.l.b16 %v3433
      %v3476 = vunpack.c.l.b16 %v3437
      %v3477 = vunpack.c.l.b16 %v3440
      %v3478 = vunpack.c.l.b16 %v3444
      %v3479 = vunpack.c.l.b16 %v3447
      %v3480 = vpack.c.b16 %v3449, %v3448
      %v3481 = vpack.c.b16 %v3451, %v3450
      %v3482 = vpack.c.b16 %v3453, %v3452
      %v3483 = vpack.c.b16 %v3455, %v3454
      %v3484 = vpack.c.b16 %v3457, %v3456
      %v3485 = vpack.c.b16 %v3459, %v3458
      %v3486 = vpack.c.b16 %v3461, %v3460
      %v3487 = vpack.c.b16 %v3463, %v3462
      %v3488 = vpack.c.b16 %v3465, %v3464
      %v3489 = vpack.c.b16 %v3467, %v3466
      %v3490 = vpack.c.b16 %v3469, %v3468
      %v3491 = vpack.c.b16 %v3471, %v3470
      %v3492 = vpack.c.b16 %v3473, %v3472
      %v3493 = vpack.c.b16 %v3475, %v3474
      %v3494 = vpack.c.b16 %v3477, %v3476
      %v3495 = vpack.c.b16 %v3479, %v3478
      %3496 = vrot.lane.b32.xlu0 %v3480, 32
      %v3497 = vpop.permute.xlu0 %3496
      %3498 = vrot.lane.b32.xlu0 %v3481, 32
      %v3499 = vpop.permute.xlu0 %3498
      %3500 = vrot.lane.b32.xlu0 %v3482, 32
      %v3501 = vpop.permute.xlu0 %3500
      %3502 = vrot.lane.b32.xlu0 %v3483, 32
      %v3503 = vpop.permute.xlu0 %3502
      %3504 = vrot.lane.b32.xlu0 %v3484, 32
      %v3505 = vpop.permute.xlu0 %3504
      %3506 = vrot.lane.b32.xlu0 %v3485, 32
      %v3507 = vpop.permute.xlu0 %3506
      %3508 = vrot.lane.b32.xlu0 %v3486, 32
      %v3509 = vpop.permute.xlu0 %3508
      %3510 = vrot.lane.b32.xlu0 %v3487, 32
      %v3511 = vpop.permute.xlu0 %3510
      %3512 = vrot.lane.b32.xlu0 %v3488, 32
      %v3513 = vpop.permute.xlu0 %3512
      %3514 = vrot.lane.b32.xlu0 %v3489, 32
      %v3515 = vpop.permute.xlu0 %3514
      %3516 = vrot.lane.b32.xlu0 %v3490, 32
      %v3517 = vpop.permute.xlu0 %3516
      %3518 = vrot.lane.b32.xlu0 %v3491, 32
      %v3519 = vpop.permute.xlu0 %3518
      %3520 = vrot.lane.b32.xlu0 %v3492, 32
      %v3521 = vpop.permute.xlu0 %3520
      %3522 = vrot.lane.b32.xlu0 %v3493, 32
      %v3523 = vpop.permute.xlu0 %3522
      %3524 = vrot.lane.b32.xlu0 %v3494, 32
      %v3525 = vpop.permute.xlu0 %3524
      %3526 = vrot.lane.b32.xlu0 %v3495, 32
      %v3527 = vpop.permute.xlu0 %3526
      %vm3544 = vcmask 294144
      %3545 = vst.msk [vmem:[#allocation3] sm:$0xff] %vm3544, %v3497
      %3546 = vst.msk [vmem:[#allocation3 + $0x8] sm:$0xff] %vm3544, %v3499
      %3547 = vst.msk [vmem:[#allocation3 + $0x10] sm:$0xff] %vm3544, %v3501
      %3548 = vst.msk [vmem:[#allocation3 + $0x18] sm:$0xff] %vm3544, %v3503
      %3549 = vst.msk [vmem:[#allocation3 + $0x20] sm:$0xff] %vm3544, %v3505
      %3550 = vst.msk [vmem:[#allocation3 + $0x28] sm:$0xff] %vm3544, %v3507
      %3551 = vst.msk [vmem:[#allocation3 + $0x30] sm:$0xff] %vm3544, %v3509
      %3552 = vst.msk [vmem:[#allocation3 + $0x38] sm:$0xff] %vm3544, %v3511
      %3553 = vst.msk [vmem:[#allocation3 + $0x40] sm:$0xff] %vm3544, %v3513
      %3554 = vst.msk [vmem:[#allocation3 + $0x48] sm:$0xff] %vm3544, %v3515
      %3555 = vst.msk [vmem:[#allocation3 + $0x50] sm:$0xff] %vm3544, %v3517
      %3556 = vst.msk [vmem:[#allocation3 + $0x58] sm:$0xff] %vm3544, %v3519
      %3557 = vst.msk [vmem:[#allocation3 + $0x60] sm:$0xff] %vm3544, %v3521
      %3558 = vst.msk [vmem:[#allocation3 + $0x68] sm:$0xff] %vm3544, %v3523
      %3559 = vst.msk [vmem:[#allocation3 + $0x70] sm:$0xff] %vm3544, %v3525
      %3560 = vst.msk [vmem:[#allocation3 + $0x78] sm:$0xff] %vm3544, %v3527
      %v3561 = vld [vmem:[#allocation3] sm:$0xff]
      %v3562 = vld [vmem:[#allocation3 + $0x8] sm:$0xff]
      %v3563 = vld [vmem:[#allocation3 + $0x10] sm:$0xff]
      %v3564 = vld [vmem:[#allocation3 + $0x18] sm:$0xff]
      %v3565 = vld [vmem:[#allocation3 + $0x20] sm:$0xff]
      %v3566 = vld [vmem:[#allocation3 + $0x28] sm:$0xff]
      %v3567 = vld [vmem:[#allocation3 + $0x30] sm:$0xff]
      %v3568 = vld [vmem:[#allocation3 + $0x38] sm:$0xff]
      %v3569 = vld [vmem:[#allocation3 + $0x40] sm:$0xff]
      %v3570 = vld [vmem:[#allocation3 + $0x48] sm:$0xff]
      %v3571 = vld [vmem:[#allocation3 + $0x50] sm:$0xff]
      %v3572 = vld [vmem:[#allocation3 + $0x58] sm:$0xff]
      %v3573 = vld [vmem:[#allocation3 + $0x60] sm:$0xff]
      %v3574 = vld [vmem:[#allocation3 + $0x68] sm:$0xff]
      %v3575 = vld [vmem:[#allocation3 + $0x70] sm:$0xff]
      %v3576 = vld [vmem:[#allocation3 + $0x78] sm:$0xff]
      %v3577 = vld [vmem:[%s1] sm:$0xf]
      %v3578 = vld [vmem:[%s1 + $0x4] sm:$0xf]
      %v3579 = vld [vmem:[%s1 + $0x8] sm:$0xf]
      %v3580 = vld [vmem:[%s1 + $0xc] sm:$0xf]
      %v3581 = vld [vmem:[%s1 + $0x10] sm:$0x3]
      %v3587 = vunpack.c.l.b16 %v3577
      %v3588 = vunpack.c.l.b16 %v3578
      %v3589 = vunpack.c.l.b16 %v3579
      %v3590 = vunpack.c.l.b16 %v3580
      %v3591 = vunpack.c.l.b16 %v3581
      %v3592 = vpack.c.b16 %v3588, %v3587
      %v3593 = vpack.c.b16 %v3590, %v3589
      %v3594 = vpack.c.b16 %v3591, %v3591
      %vm3597 = vcmask 293888
      %v3599 = vsel %vm3597, %v3561, 0
      %v3602 = vsel %vm3597, %v3562, 0
      %v3605 = vsel %vm3597, %v3563, 0
      %v3608 = vsel %vm3597, %v3564, 0
      %v3611 = vsel %vm3597, %v3565, 0
      %v3614 = vsel %vm3597, %v3566, 0
      %v3617 = vsel %vm3597, %v3567, 0
      %v3620 = vsel %vm3597, %v3568, 0
      %v3623 = vsel %vm3597, %v3569, 0
      %v3626 = vsel %vm3597, %v3570, 0
      %v3629 = vsel %vm3597, %v3571, 0
      %v3632 = vsel %vm3597, %v3572, 0
      %v3635 = vsel %vm3597, %v3573, 0
      %v3638 = vsel %vm3597, %v3574, 0
      %v3641 = vsel %vm3597, %v3575, 0
      %v3644 = vsel %vm3597, %v3576, 0
      %vm3646 = vcmask 1041408
      %v3648 = vsel %vm3646, %v3594, 0
      %3650 = vmatprep.subr.bf16.mxu0 0
      %3651 = vmatpush1.bf16.msra.mxu0 %v3592
      %3652 = vmatprep.subr.bf16.mxu0 0
      %3653 = vmatpush1.bf16.msra.mxu0 %v3593
      %3654 = vmatprep.subr.bf16.mxu0 0
      %3655 = vmatpush1.bf16.msra.mxu0 %v3648
      %3656 = vmatprep.subr.bf16.mxu0 0
      %3657 = vmatpush1.bf16.msra.mxu0 0
      %3658 = vmatprep.subr.bf16.mxu0 0
      %3659 = vmatpush1.bf16.msra.mxu0 0
      %3660 = vmatprep.subr.bf16.mxu0 0
      %3661 = vmatpush1.bf16.msra.mxu0 0
      %3662 = vmatprep.subr.bf16.mxu0 0
      %3663 = vmatpush1.bf16.msra.mxu0 0
      %3664 = vmatprep.subr.bf16.mxu0 0
      %3665 = vmatpush1.bf16.msra.mxu0 0
      %3666 = vmatprep.subr.bf16.mxu0 0
      %3667 = vmatpush1.bf16.msra.mxu0 0
      %3668 = vmatprep.subr.bf16.mxu0 0
      %3669 = vmatpush1.bf16.msra.mxu0 0
      %3670 = vmatprep.subr.bf16.mxu0 0
      %3671 = vmatpush1.bf16.msra.mxu0 0
      %3672 = vmatprep.subr.bf16.mxu0 0
      %3673 = vmatpush1.bf16.msra.mxu0 0
      %3674 = vmatprep.subr.bf16.mxu0 0
      %3675 = vmatpush1.bf16.msra.mxu0 0
      %3676 = vmatprep.subr.bf16.mxu0 0
      %3677 = vmatpush1.bf16.msra.mxu0 0
      %3678 = vmatprep.subr.bf16.mxu0 0
      %3679 = vmatpush1.bf16.msra.mxu0 0
      %3680 = vmatprep.subr.bf16.mxu0 0
      %3681 = vmatpush1.bf16.msra.mxu0 0
      %3682 = vmatprep.mubr.bf16.mxu0 0
      %3683 = vmatmul.mubr.bf16.gmra.mrb[0].mxu0 %v3599
      %v3684 = vpop.f32.mrb[0].mxu0
      %v3685 = vadd.f32 0.0, %v3684
      %v3686 = vpop.f32.mrb[0].mxu0
      %v3687 = vpop.f32.mrb[0].mxu0
      %v3688 = vadd.f32 0.0, %v3687
      %v3689 = vpop.f32.mrb[0].mxu0
      %3690 = vmatprep.mubr.bf16.mxu0 0
      %3691 = vmatmul.mubr.bf16.gmra.mrb[0].mxu0 %v3602
      %v3692 = vpop.f32.mrb[0].mxu0
      %v3693 = vadd.f32 0.0, %v3692
      %v3694 = vpop.f32.mrb[0].mxu0
      %v3695 = vpop.f32.mrb[0].mxu0
      %v3696 = vadd.f32 0.0, %v3695
      %v3697 = vpop.f32.mrb[0].mxu0
      %3698 = vmatprep.mubr.bf16.mxu0 0
      %3699 = vmatmul.mubr.bf16.gmra.mrb[0].mxu0 %v3605
      %v3700 = vpop.f32.mrb[0].mxu0
      %v3701 = vadd.f32 0.0, %v3700
      %v3702 = vpop.f32.mrb[0].mxu0
      %v3703 = vpop.f32.mrb[0].mxu0
      %v3704 = vadd.f32 0.0, %v3703
      %v3705 = vpop.f32.mrb[0].mxu0
      %3706 = vmatprep.mubr.bf16.mxu0 0
      %3707 = vmatmul.mubr.bf16.gmra.mrb[0].mxu0 %v3608
      %v3708 = vpop.f32.mrb[0].mxu0
      %v3709 = vadd.f32 0.0, %v3708
      %v3710 = vpop.f32.mrb[0].mxu0
      %v3711 = vpop.f32.mrb[0].mxu0
      %v3712 = vadd.f32 0.0, %v3711
      %v3713 = vpop.f32.mrb[0].mxu0
      %3714 = vmatprep.mubr.bf16.mxu0 0
      %3715 = vmatmul.mubr.bf16.gmra.mrb[0].mxu0 %v3611
      %v3716 = vpop.f32.mrb[0].mxu0
      %v3717 = vadd.f32 0.0, %v3716
      %v3718 = vpop.f32.mrb[0].mxu0
      %v3719 = vpop.f32.mrb[0].mxu0
      %v3720 = vadd.f32 0.0, %v3719
      %v3721 = vpop.f32.mrb[0].mxu0
      %3722 = vmatprep.mubr.bf16.mxu0 0
      %3723 = vmatmul.mubr.bf16.gmra.mrb[0].mxu0 %v3614
      %v3724 = vpop.f32.mrb[0].mxu0
      %v3725 = vadd.f32 0.0, %v3724
      %v3726 = vpop.f32.mrb[0].mxu0
      %v3727 = vpop.f32.mrb[0].mxu0
      %v3728 = vadd.f32 0.0, %v3727
      %v3729 = vpop.f32.mrb[0].mxu0
      %3730 = vmatprep.mubr.bf16.mxu0 0
      %3731 = vmatmul.mubr.bf16.gmra.mrb[0].mxu0 %v3617
      %v3732 = vpop.f32.mrb[0].mxu0
      %v3733 = vadd.f32 0.0, %v3732
      %v3734 = vpop.f32.mrb[0].mxu0
      %v3735 = vpop.f32.mrb[0].mxu0
      %v3736 = vadd.f32 0.0, %v3735
      %v3737 = vpop.f32.mrb[0].mxu0
      %3738 = vmatprep.mubr.bf16.mxu0 0
      %3739 = vmatmul.mubr.bf16.gmra.mrb[0].mxu0 %v3620
      %v3740 = vpop.f32.mrb[0].mxu0
      %v3741 = vadd.f32 0.0, %v3740
      %v3742 = vpop.f32.mrb[0].mxu0
      %v3743 = vpop.f32.mrb[0].mxu0
      %v3744 = vadd.f32 0.0, %v3743
      %v3745 = vpop.f32.mrb[0].mxu0
      %3746 = vmatprep.mubr.bf16.mxu0 0
      %3747 = vmatmul.mubr.bf16.gmra.mrb[0].mxu0 %v3623
      %v3748 = vpop.f32.mrb[0].mxu0
      %v3749 = vadd.f32 0.0, %v3748
      %v3750 = vpop.f32.mrb[0].mxu0
      %v3751 = vpop.f32.mrb[0].mxu0
      %v3752 = vadd.f32 0.0, %v3751
      %v3753 = vpop.f32.mrb[0].mxu0
      %3754 = vmatprep.mubr.bf16.mxu0 0
      %3755 = vmatmul.mubr.bf16.gmra.mrb[0].mxu0 %v3626
      %v3756 = vpop.f32.mrb[0].mxu0
      %v3757 = vadd.f32 0.0, %v3756
      %v3758 = vpop.f32.mrb[0].mxu0
      %v3759 = vpop.f32.mrb[0].mxu0
      %v3760 = vadd.f32 0.0, %v3759
      %v3761 = vpop.f32.mrb[0].mxu0
      %3762 = vmatprep.mubr.bf16.mxu0 0
      %3763 = vmatmul.mubr.bf16.gmra.mrb[0].mxu0 %v3629
      %v3764 = vpop.f32.mrb[0].mxu0
      %v3765 = vadd.f32 0.0, %v3764
      %v3766 = vpop.f32.mrb[0].mxu0
      %v3767 = vpop.f32.mrb[0].mxu0
      %v3768 = vadd.f32 0.0, %v3767
      %v3769 = vpop.f32.mrb[0].mxu0
      %3770 = vmatprep.mubr.bf16.mxu0 0
      %3771 = vmatmul.mubr.bf16.gmra.mrb[0].mxu0 %v3632
      %v3772 = vpop.f32.mrb[0].mxu0
      %v3773 = vadd.f32 0.0, %v3772
      %v3774 = vpop.f32.mrb[0].mxu0
      %v3775 = vpop.f32.mrb[0].mxu0
      %v3776 = vadd.f32 0.0, %v3775
      %v3777 = vpop.f32.mrb[0].mxu0
      %3778 = vmatprep.mubr.bf16.mxu0 0
      %3779 = vmatmul.mubr.bf16.gmra.mrb[0].mxu0 %v3635
      %v3780 = vpop.f32.mrb[0].mxu0
      %v3781 = vadd.f32 0.0, %v3780
      %v3782 = vpop.f32.mrb[0].mxu0
      %v3783 = vpop.f32.mrb[0].mxu0
      %v3784 = vadd.f32 0.0, %v3783
      %v3785 = vpop.f32.mrb[0].mxu0
      %3786 = vmatprep.mubr.bf16.mxu0 0
      %3787 = vmatmul.mubr.bf16.gmra.mrb[0].mxu0 %v3638
      %v3788 = vpop.f32.mrb[0].mxu0
      %v3789 = vadd.f32 0.0, %v3788
      %v3790 = vpop.f32.mrb[0].mxu0
      %v3791 = vpop.f32.mrb[0].mxu0
      %v3792 = vadd.f32 0.0, %v3791
      %v3793 = vpop.f32.mrb[0].mxu0
      %3794 = vmatprep.mubr.bf16.mxu0 0
      %3795 = vmatmul.mubr.bf16.gmra.mrb[0].mxu0 %v3641
      %v3796 = vpop.f32.mrb[0].mxu0
      %v3797 = vadd.f32 0.0, %v3796
      %v3798 = vpop.f32.mrb[0].mxu0
      %v3799 = vpop.f32.mrb[0].mxu0
      %v3800 = vadd.f32 0.0, %v3799
      %v3801 = vpop.f32.mrb[0].mxu0
      %3802 = vmatprep.mubr.bf16.mxu0 0
      %3803 = vmatmul.mubr.bf16.gmra.mrb[0].mxu0 %v3644
      %v3804 = vpop.f32.mrb[0].mxu0
      %v3805 = vadd.f32 0.0, %v3804
      %v3806 = vpop.f32.mrb[0].mxu0
      %v3807 = vpop.f32.mrb[0].mxu0
      %v3808 = vadd.f32 0.0, %v3807
      %v3809 = vpop.f32.mrb[0].mxu0
      %3810 = vdwg.mxu0
      %vm3811 = vcmask 130048
      %v3812 = vsel %vm3811, %v3685, 0.0
      %v3813 = vsel %vm3811, %v3688, 0.0
      %v3814 = vadd.f32 %v3812, %v3813
      %v3815 = vsel %vm3811, %v3693, 0.0
      %v3816 = vadd.f32 %v3814, %v3815
      %v3817 = vsel %vm3811, %v3696, 0.0
      %v3818 = vadd.f32 %v3816, %v3817
      %v3819 = vsel %vm3811, %v3701, 0.0
      %v3820 = vadd.f32 %v3818, %v3819
      %v3821 = vsel %vm3811, %v3704, 0.0
      %v3822 = vadd.f32 %v3820, %v3821
      %v3823 = vsel %vm3811, %v3709, 0.0
      %v3824 = vadd.f32 %v3822, %v3823
      %v3825 = vsel %vm3811, %v3712, 0.0
      %v3826 = vadd.f32 %v3824, %v3825
      %v3827 = vsel %vm3811, %v3717, 0.0
      %v3828 = vadd.f32 %v3826, %v3827
      %v3829 = vsel %vm3811, %v3720, 0.0
      %v3830 = vadd.f32 %v3828, %v3829
      %v3831 = vsel %vm3811, %v3725, 0.0
      %v3832 = vadd.f32 %v3830, %v3831
      %v3833 = vsel %vm3811, %v3728, 0.0
      %v3834 = vadd.f32 %v3832, %v3833
      %v3835 = vsel %vm3811, %v3733, 0.0
      %v3836 = vadd.f32 %v3834, %v3835
      %v3837 = vsel %vm3811, %v3736, 0.0
      %v3838 = vadd.f32 %v3836, %v3837
      %v3839 = vsel %vm3811, %v3741, 0.0
      %v3840 = vadd.f32 %v3838, %v3839
      %v3841 = vsel %vm3811, %v3744, 0.0
      %v3842 = vadd.f32 %v3840, %v3841
      %v3843 = vsel %vm3811, %v3749, 0.0
      %v3844 = vadd.f32 %v3842, %v3843
      %v3845 = vsel %vm3811, %v3752, 0.0
      %v3846 = vadd.f32 %v3844, %v3845
      %v3847 = vsel %vm3811, %v3757, 0.0
      %v3848 = vadd.f32 %v3846, %v3847
      %v3849 = vsel %vm3811, %v3760, 0.0
      %v3850 = vadd.f32 %v3848, %v3849
      %v3851 = vsel %vm3811, %v3765, 0.0
      %v3852 = vadd.f32 %v3850, %v3851
      %v3853 = vsel %vm3811, %v3768, 0.0
      %v3854 = vadd.f32 %v3852, %v3853
      %v3855 = vsel %vm3811, %v3773, 0.0
      %v3856 = vadd.f32 %v3854, %v3855
      %v3857 = vsel %vm3811, %v3776, 0.0
      %v3858 = vadd.f32 %v3856, %v3857
      %v3859 = vsel %vm3811, %v3781, 0.0
      %v3860 = vadd.f32 %v3858, %v3859
      %v3861 = vsel %vm3811, %v3784, 0.0
      %v3862 = vadd.f32 %v3860, %v3861
      %v3863 = vsel %vm3811, %v3789, 0.0
      %v3864 = vadd.f32 %v3862, %v3863
      %v3865 = vsel %vm3811, %v3792, 0.0
      %v3866 = vadd.f32 %v3864, %v3865
      %v3867 = vsel %vm3811, %v3797, 0.0
      %v3868 = vadd.f32 %v3866, %v3867
      %v3869 = vsel %vm3811, %v3800, 0.0
      %v3870 = vadd.f32 %v3868, %v3869
      %v3871 = vsel %vm3811, %v3805, 0.0
      %v3872 = vadd.f32 %v3870, %v3871
      %v3873 = vsel %vm3811, %v3808, 0.0
      %v3874 = vadd.f32 %v3872, %v3873
      %v3875 = vrot.slane %v3874, 4
      %v3876 = vadd.f32 %v3874, %v3875
      %v3877 = vrot.slane %v3876, 2
      %v3878 = vadd.f32 %v3876, %v3877
      %v3879 = vrot.slane %v3878, 1
      %v3880 = vadd.f32 %v3878, %v3879
      %v3881 = vmul.f32 %v3685, %v3685
      %v3882 = vmul.f32 %v3688, %v3688
      %v3883 = vmul.f32 %v3693, %v3693
      %v3884 = vmul.f32 %v3696, %v3696
      %v3885 = vmul.f32 %v3701, %v3701
      %v3886 = vmul.f32 %v3704, %v3704
      %v3887 = vmul.f32 %v3709, %v3709
      %v3888 = vmul.f32 %v3712, %v3712
      %v3889 = vmul.f32 %v3717, %v3717
      %v3890 = vmul.f32 %v3720, %v3720
      %v3891 = vmul.f32 %v3725, %v3725
      %v3892 = vmul.f32 %v3728, %v3728
      %v3893 = vmul.f32 %v3733, %v3733
      %v3894 = vmul.f32 %v3736, %v3736
      %v3895 = vmul.f32 %v3741, %v3741
      %v3896 = vmul.f32 %v3744, %v3744
      %v3897 = vmul.f32 %v3749, %v3749
      %v3898 = vmul.f32 %v3752, %v3752
      %v3899 = vmul.f32 %v3757, %v3757
      %v3900 = vmul.f32 %v3760, %v3760
      %v3901 = vmul.f32 %v3765, %v3765
      %v3902 = vmul.f32 %v3768, %v3768
      %v3903 = vmul.f32 %v3773, %v3773
      %v3904 = vmul.f32 %v3776, %v3776
      %v3905 = vmul.f32 %v3781, %v3781
      %v3906 = vmul.f32 %v3784, %v3784
      %v3907 = vmul.f32 %v3789, %v3789
      %v3908 = vmul.f32 %v3792, %v3792
      %v3909 = vmul.f32 %v3797, %v3797
      %v3910 = vmul.f32 %v3800, %v3800
      %v3911 = vmul.f32 %v3805, %v3805
      %v3912 = vmul.f32 %v3808, %v3808
      %v3913 = vsel %vm3811, %v3881, 0.0
      %v3914 = vsel %vm3811, %v3882, 0.0
      %v3915 = vadd.f32 %v3913, %v3914
      %v3916 = vsel %vm3811, %v3883, 0.0
      %v3917 = vadd.f32 %v3915, %v3916
      %v3918 = vsel %vm3811, %v3884, 0.0
      %v3919 = vadd.f32 %v3917, %v3918
      %v3920 = vsel %vm3811, %v3885, 0.0
      %v3921 = vadd.f32 %v3919, %v3920
      %v3922 = vsel %vm3811, %v3886, 0.0
      %v3923 = vadd.f32 %v3921, %v3922
      %v3924 = vsel %vm3811, %v3887, 0.0
      %v3925 = vadd.f32 %v3923, %v3924
      %v3926 = vsel %vm3811, %v3888, 0.0
      %v3927 = vadd.f32 %v3925, %v3926
      %v3928 = vsel %vm3811, %v3889, 0.0
      %v3929 = vadd.f32 %v3927, %v3928
      %v3930 = vsel %vm3811, %v3890, 0.0
      %v3931 = vadd.f32 %v3929, %v3930
      %v3932 = vsel %vm3811, %v3891, 0.0
      %v3933 = vadd.f32 %v3931, %v3932
      %v3934 = vsel %vm3811, %v3892, 0.0
      %v3935 = vadd.f32 %v3933, %v3934
      %v3936 = vsel %vm3811, %v3893, 0.0
      %v3937 = vadd.f32 %v3935, %v3936
      %v3938 = vsel %vm3811, %v3894, 0.0
      %v3939 = vadd.f32 %v3937, %v3938
      %v3940 = vsel %vm3811, %v3895, 0.0
      %v3941 = vadd.f32 %v3939, %v3940
      %v3942 = vsel %vm3811, %v3896, 0.0
      %v3943 = vadd.f32 %v3941, %v3942
      %v3944 = vsel %vm3811, %v3897, 0.0
      %v3945 = vadd.f32 %v3943, %v3944
      %v3946 = vsel %vm3811, %v3898, 0.0
      %v3947 = vadd.f32 %v3945, %v3946
      %v3948 = vsel %vm3811, %v3899, 0.0
      %v3949 = vadd.f32 %v3947, %v3948
      %v3950 = vsel %vm3811, %v3900, 0.0
      %v3951 = vadd.f32 %v3949, %v3950
      %v3952 = vsel %vm3811, %v3901, 0.0
      %v3953 = vadd.f32 %v3951, %v3952
      %v3954 = vsel %vm3811, %v3902, 0.0
      %v3955 = vadd.f32 %v3953, %v3954
      %v3956 = vsel %vm3811, %v3903, 0.0
      %v3957 = vadd.f32 %v3955, %v3956
      %v3958 = vsel %vm3811, %v3904, 0.0
      %v3959 = vadd.f32 %v3957, %v3958
      %v3960 = vsel %vm3811, %v3905, 0.0
      %v3961 = vadd.f32 %v3959, %v3960
      %v3962 = vsel %vm3811, %v3906, 0.0
      %v3963 = vadd.f32 %v3961, %v3962
      %v3964 = vsel %vm3811, %v3907, 0.0
      %v3965 = vadd.f32 %v3963, %v3964
      %v3966 = vsel %vm3811, %v3908, 0.0
      %v3967 = vadd.f32 %v3965, %v3966
      %v3968 = vsel %vm3811, %v3909, 0.0
      %v3969 = vadd.f32 %v3967, %v3968
      %v3970 = vsel %vm3811, %v3910, 0.0
      %v3971 = vadd.f32 %v3969, %v3970
      %v3972 = vsel %vm3811, %v3911, 0.0
      %v3973 = vadd.f32 %v3971, %v3972
      %v3974 = vsel %vm3811, %v3912, 0.0
      %v3975 = vadd.f32 %v3973, %v3974
      %v3976 = vrot.slane %v3975, 4
      %v3977 = vadd.f32 %v3975, %v3976
      %v3978 = vrot.slane %v3977, 2
      %v3979 = vadd.f32 %v3977, %v3978
      %v3980 = vrot.slane %v3979, 1
      %v3981 = vadd.f32 %v3979, %v3980
      %v3982 = vld [vmem:[%s2] sm:$0xff]
      %v3983 = vld [vmem:[%s2 + $0x8] sm:$0xff]
      %v3985 = vsel %vm3811, %v3880, 0
      %3987 = vmatprep.subr.mxu0 0.0
      %3988 = vmatpush1.msra.mxu0 %v3982
      %3989 = vmatprep.subr.mxu0 0.0
      %3990 = vmatpush1.msra.mxu0 %v3983
      %3991 = vmatprep.subr.mxu0 0.0
      %3992 = vmatpush1.msra.mxu0 0.0
      %3993 = vmatprep.subr.mxu0 0.0
      %3994 = vmatpush1.msra.mxu0 0.0
      %3995 = vmatprep.subr.mxu0 0.0
      %3996 = vmatpush1.msra.mxu0 0.0
      %3997 = vmatprep.subr.mxu0 0.0
      %3998 = vmatpush1.msra.mxu0 0.0
      %3999 = vmatprep.subr.mxu0 0.0
      %4000 = vmatpush1.msra.mxu0 0.0
      %4001 = vmatprep.subr.mxu0 0.0
      %4002 = vmatpush1.msra.mxu0 0.0
      %4003 = vmatprep.subr.mxu0 0.0
      %4004 = vmatpush1.msra.mxu0 0.0
      %4005 = vmatprep.subr.mxu0 0.0
      %4006 = vmatpush1.msra.mxu0 0.0
      %4007 = vmatprep.subr.mxu0 0.0
      %4008 = vmatpush1.msra.mxu0 0.0
      %4009 = vmatprep.subr.mxu0 0.0
      %4010 = vmatpush1.msra.mxu0 0.0
      %4011 = vmatprep.subr.mxu0 0.0
      %4012 = vmatpush1.msra.mxu0 0.0
      %4013 = vmatprep.subr.mxu0 0.0
      %4014 = vmatpush1.msra.mxu0 0.0
      %4015 = vmatprep.subr.mxu0 0.0
      %4016 = vmatpush1.msra.mxu0 0.0
      %4017 = vmatprep.subr.mxu0 0.0
      %4018 = vmatpush1.msra.mxu0 0.0
      %4019 = vmatprep.subr.mxu0 0.0
      %4020 = vmatpush1.msra.mxu0 0.0
      %4021 = vmatprep.subr.mxu0 0.0
      %4022 = vmatpush1.msra.mxu0 0.0
      %4023 = vmatprep.subr.mxu0 0.0
      %4024 = vmatpush1.msra.mxu0 0.0
      %4025 = vmatprep.subr.mxu0 0.0
      %4026 = vmatpush1.msra.mxu0 0.0
      %4027 = vmatprep.subr.mxu0 0.0
      %4028 = vmatpush1.msra.mxu0 0.0
      %4029 = vmatprep.subr.mxu0 0.0
      %4030 = vmatpush1.msra.mxu0 0.0
      %4031 = vmatprep.subr.mxu0 0.0
      %4032 = vmatpush1.msra.mxu0 0.0
      %4033 = vmatprep.subr.mxu0 0.0
      %4034 = vmatpush1.msra.mxu0 0.0
      %4035 = vmatprep.subr.mxu0 0.0
      %4036 = vmatpush1.msra.mxu0 0.0
      %4037 = vmatprep.subr.mxu0 0.0
      %4038 = vmatpush1.msra.mxu0 0.0
      %4039 = vmatprep.subr.mxu0 0.0
      %4040 = vmatpush1.msra.mxu0 0.0
      %4041 = vmatprep.subr.mxu0 0.0
      %4042 = vmatpush1.msra.mxu0 0.0
      %4043 = vmatprep.subr.mxu0 0.0
      %4044 = vmatpush1.msra.mxu0 0.0
      %4045 = vmatprep.subr.mxu0 0.0
      %4046 = vmatpush1.msra.mxu0 0.0
      %4047 = vmatprep.subr.mxu0 0.0
      %4048 = vmatpush1.msra.mxu0 0.0
      %4049 = vmatprep.subr.mxu0 0.0
      %4050 = vmatpush1.msra.mxu0 0.0
      %4051 = vmatprep.mubr.f32.mxu0 0.0
      %4052 = vmatmul.mubr.f32.gmra.mrb[0].mxu0 %v3985
      %v4053 = vpop.f32.mrb[0].mxu0
      %v4054 = vadd.f32 0.0, %v4053
      %v4055 = vpop.f32.mrb[0].mxu0
      %4056 = vdwg.mxu0
      %v4058 = vsel %vm3811, %v3981, 0
      %4060 = vmatprep.subr.mxu0 0.0
      %4061 = vmatpush1.msra.mxu0 %v3982
      %4062 = vmatprep.subr.mxu0 0.0
      %4063 = vmatpush1.msra.mxu0 %v3983
      %4064 = vmatprep.subr.mxu0 0.0
      %4065 = vmatpush1.msra.mxu0 0.0
      %4066 = vmatprep.subr.mxu0 0.0
      %4067 = vmatpush1.msra.mxu0 0.0
      %4068 = vmatprep.subr.mxu0 0.0
      %4069 = vmatpush1.msra.mxu0 0.0
      %4070 = vmatprep.subr.mxu0 0.0
      %4071 = vmatpush1.msra.mxu0 0.0
      %4072 = vmatprep.subr.mxu0 0.0
      %4073 = vmatpush1.msra.mxu0 0.0
      %4074 = vmatprep.subr.mxu0 0.0
      %4075 = vmatpush1.msra.mxu0 0.0
      %4076 = vmatprep.subr.mxu0 0.0
      %4077 = vmatpush1.msra.mxu0 0.0
      %4078 = vmatprep.subr.mxu0 0.0
      %4079 = vmatpush1.msra.mxu0 0.0
      %4080 = vmatprep.subr.mxu0 0.0
      %4081 = vmatpush1.msra.mxu0 0.0
      %4082 = vmatprep.subr.mxu0 0.0
      %4083 = vmatpush1.msra.mxu0 0.0
      %4084 = vmatprep.subr.mxu0 0.0
      %4085 = vmatpush1.msra.mxu0 0.0
      %4086 = vmatprep.subr.mxu0 0.0
      %4087 = vmatpush1.msra.mxu0 0.0
      %4088 = vmatprep.subr.mxu0 0.0
      %4089 = vmatpush1.msra.mxu0 0.0
      %4090 = vmatprep.subr.mxu0 0.0
      %4091 = vmatpush1.msra.mxu0 0.0
      %4092 = vmatprep.subr.mxu0 0.0
      %4093 = vmatpush1.msra.mxu0 0.0
      %4094 = vmatprep.subr.mxu0 0.0
      %4095 = vmatpush1.msra.mxu0 0.0
      %4096 = vmatprep.subr.mxu0 0.0
      %4097 = vmatpush1.msra.mxu0 0.0
      %4098 = vmatprep.subr.mxu0 0.0
      %4099 = vmatpush1.msra.mxu0 0.0
      %4100 = vmatprep.subr.mxu0 0.0
      %4101 = vmatpush1.msra.mxu0 0.0
      %4102 = vmatprep.subr.mxu0 0.0
      %4103 = vmatpush1.msra.mxu0 0.0
      %4104 = vmatprep.subr.mxu0 0.0
      %4105 = vmatpush1.msra.mxu0 0.0
      %4106 = vmatprep.subr.mxu0 0.0
      %4107 = vmatpush1.msra.mxu0 0.0
      %4108 = vmatprep.subr.mxu0 0.0
      %4109 = vmatpush1.msra.mxu0 0.0
      %4110 = vmatprep.subr.mxu0 0.0
      %4111 = vmatpush1.msra.mxu0 0.0
      %4112 = vmatprep.subr.mxu0 0.0
      %4113 = vmatpush1.msra.mxu0 0.0
      %4114 = vmatprep.subr.mxu0 0.0
      %4115 = vmatpush1.msra.mxu0 0.0
      %4116 = vmatprep.subr.mxu0 0.0
      %4117 = vmatpush1.msra.mxu0 0.0
      %4118 = vmatprep.subr.mxu0 0.0
      %4119 = vmatpush1.msra.mxu0 0.0
      %4120 = vmatprep.subr.mxu0 0.0
      %4121 = vmatpush1.msra.mxu0 0.0
      %4122 = vmatprep.subr.mxu0 0.0
      %4123 = vmatpush1.msra.mxu0 0.0
      %4124 = vmatprep.mubr.f32.mxu0 0.0
      %4125 = vmatmul.mubr.f32.gmra.mrb[0].mxu0 %v4058
      %v4126 = vpop.f32.mrb[0].mxu0
      %v4127 = vadd.f32 0.0, %v4126
      %v4128 = vpop.f32.mrb[0].mxu0
      %4129 = vdwg.mxu0
      %v4130 = vmul.f32 %v4054, %v4054
      %v4131 = vsub.f32 %v4127, %v4130
      %v4132 = vld [vmem:[%s3] sm:$0x1]
      %v4133 = vadd.f32 %v4131, 1e-05
      %v4134 = vrsqrt.pop %v4133
      %v4135 = vmul.f32 %v4132, %v4134
      %v4136 = vld [vmem:[%s4] sm:$0x1]
      %v4137 = vmul.f32 %v4054, %v4135
      %v4138 = vsub.f32 %v4136, %v4137
      %v4140 = vlaneseq
      %v4141 = vshrl.u32 %v4140, 7
      %v4142 = vsub.s32 0, %v4141
      %v4143 = vrot.slane %v4135, %v4142
      %v4145 = vmul.f32 %v3685, %v4143
      %v4146 = vmul.f32 %v3688, %v4143
      %v4147 = vmul.f32 %v3693, %v4143
      %v4148 = vmul.f32 %v3696, %v4143
      %v4149 = vmul.f32 %v3701, %v4143
      %v4150 = vmul.f32 %v3704, %v4143
      %v4151 = vmul.f32 %v3709, %v4143
      %v4152 = vmul.f32 %v3712, %v4143
      %v4153 = vmul.f32 %v3717, %v4143
      %v4154 = vmul.f32 %v3720, %v4143
      %v4155 = vmul.f32 %v3725, %v4143
      %v4156 = vmul.f32 %v3728, %v4143
      %v4157 = vmul.f32 %v3733, %v4143
      %v4158 = vmul.f32 %v3736, %v4143
      %v4159 = vmul.f32 %v3741, %v4143
      %v4160 = vmul.f32 %v3744, %v4143
      %v4161 = vmul.f32 %v3749, %v4143
      %v4162 = vmul.f32 %v3752, %v4143
      %v4163 = vmul.f32 %v3757, %v4143
      %v4164 = vmul.f32 %v3760, %v4143
      %v4165 = vmul.f32 %v3765, %v4143
      %v4166 = vmul.f32 %v3768, %v4143
      %v4167 = vmul.f32 %v3773, %v4143
      %v4168 = vmul.f32 %v3776, %v4143
      %v4169 = vmul.f32 %v3781, %v4143
      %v4170 = vmul.f32 %v3784, %v4143
      %v4171 = vmul.f32 %v3789, %v4143
      %v4172 = vmul.f32 %v3792, %v4143
      %v4173 = vmul.f32 %v3797, %v4143
      %v4174 = vmul.f32 %v3800, %v4143
      %v4175 = vmul.f32 %v3805, %v4143
      %v4176 = vmul.f32 %v3808, %v4143
      %v4178 = vlaneseq
      %v4179 = vshrl.u32 %v4178, 7
      %v4180 = vsub.s32 0, %v4179
      %v4181 = vrot.slane %v4138, %v4180
      %v4183 = vadd.f32 %v4145, %v4181
      %v4184 = vadd.f32 %v4146, %v4181
      %v4185 = vadd.f32 %v4147, %v4181
      %v4186 = vadd.f32 %v4148, %v4181
      %v4187 = vadd.f32 %v4149, %v4181
      %v4188 = vadd.f32 %v4150, %v4181
      %v4189 = vadd.f32 %v4151, %v4181
      %v4190 = vadd.f32 %v4152, %v4181
      %v4191 = vadd.f32 %v4153, %v4181
      %v4192 = vadd.f32 %v4154, %v4181
      %v4193 = vadd.f32 %v4155, %v4181
      %v4194 = vadd.f32 %v4156, %v4181
      %v4195 = vadd.f32 %v4157, %v4181
      %v4196 = vadd.f32 %v4158, %v4181
      %v4197 = vadd.f32 %v4159, %v4181
      %v4198 = vadd.f32 %v4160, %v4181
      %v4199 = vadd.f32 %v4161, %v4181
      %v4200 = vadd.f32 %v4162, %v4181
      %v4201 = vadd.f32 %v4163, %v4181
      %v4202 = vadd.f32 %v4164, %v4181
      %v4203 = vadd.f32 %v4165, %v4181
      %v4204 = vadd.f32 %v4166, %v4181
      %v4205 = vadd.f32 %v4167, %v4181
      %v4206 = vadd.f32 %v4168, %v4181
      %v4207 = vadd.f32 %v4169, %v4181
      %v4208 = vadd.f32 %v4170, %v4181
      %v4209 = vadd.f32 %v4171, %v4181
      %v4210 = vadd.f32 %v4172, %v4181
      %v4211 = vadd.f32 %v4173, %v4181
      %v4212 = vadd.f32 %v4174, %v4181
      %v4213 = vadd.f32 %v4175, %v4181
      %v4214 = vadd.f32 %v4176, %v4181
      %vm4215 = vcmp.gt.f32.partialorder %v4183, 0.0
      %vm4216 = vcmp.gt.f32.partialorder %v4184, 0.0
      %vm4217 = vcmp.gt.f32.partialorder %v4185, 0.0
      %vm4218 = vcmp.gt.f32.partialorder %v4186, 0.0
      %vm4219 = vcmp.gt.f32.partialorder %v4187, 0.0
      %vm4220 = vcmp.gt.f32.partialorder %v4188, 0.0
      %vm4221 = vcmp.gt.f32.partialorder %v4189, 0.0
      %vm4222 = vcmp.gt.f32.partialorder %v4190, 0.0
      %vm4223 = vcmp.gt.f32.partialorder %v4191, 0.0
      %vm4224 = vcmp.gt.f32.partialorder %v4192, 0.0
      %vm4225 = vcmp.gt.f32.partialorder %v4193, 0.0
      %vm4226 = vcmp.gt.f32.partialorder %v4194, 0.0
      %vm4227 = vcmp.gt.f32.partialorder %v4195, 0.0
      %vm4228 = vcmp.gt.f32.partialorder %v4196, 0.0
      %vm4229 = vcmp.gt.f32.partialorder %v4197, 0.0
      %vm4230 = vcmp.gt.f32.partialorder %v4198, 0.0
      %vm4231 = vcmp.gt.f32.partialorder %v4199, 0.0
      %vm4232 = vcmp.gt.f32.partialorder %v4200, 0.0
      %vm4233 = vcmp.gt.f32.partialorder %v4201, 0.0
      %vm4234 = vcmp.gt.f32.partialorder %v4202, 0.0
      %vm4235 = vcmp.gt.f32.partialorder %v4203, 0.0
      %vm4236 = vcmp.gt.f32.partialorder %v4204, 0.0
      %vm4237 = vcmp.gt.f32.partialorder %v4205, 0.0
      %vm4238 = vcmp.gt.f32.partialorder %v4206, 0.0
      %vm4239 = vcmp.gt.f32.partialorder %v4207, 0.0
      %vm4240 = vcmp.gt.f32.partialorder %v4208, 0.0
      %vm4241 = vcmp.gt.f32.partialorder %v4209, 0.0
      %vm4242 = vcmp.gt.f32.partialorder %v4210, 0.0
      %vm4243 = vcmp.gt.f32.partialorder %v4211, 0.0
      %vm4244 = vcmp.gt.f32.partialorder %v4212, 0.0
      %vm4245 = vcmp.gt.f32.partialorder %v4213, 0.0
      %vm4246 = vcmp.gt.f32.partialorder %v4214, 0.0
      %v4247 = vmul.f32 %v4183, 0.01
      %v4248 = vmul.f32 %v4184, 0.01
      %v4249 = vmul.f32 %v4185, 0.01
      %v4250 = vmul.f32 %v4186, 0.01
      %v4251 = vmul.f32 %v4187, 0.01
      %v4252 = vmul.f32 %v4188, 0.01
      %v4253 = vmul.f32 %v4189, 0.01
      %v4254 = vmul.f32 %v4190, 0.01
      %v4255 = vmul.f32 %v4191, 0.01
      %v4256 = vmul.f32 %v4192, 0.01
      %v4257 = vmul.f32 %v4193, 0.01
      %v4258 = vmul.f32 %v4194, 0.01
      %v4259 = vmul.f32 %v4195, 0.01
      %v4260 = vmul.f32 %v4196, 0.01
      %v4261 = vmul.f32 %v4197, 0.01
      %v4262 = vmul.f32 %v4198, 0.01
      %v4263 = vmul.f32 %v4199, 0.01
      %v4264 = vmul.f32 %v4200, 0.01
      %v4265 = vmul.f32 %v4201, 0.01
      %v4266 = vmul.f32 %v4202, 0.01
      %v4267 = vmul.f32 %v4203, 0.01
      %v4268 = vmul.f32 %v4204, 0.01
      %v4269 = vmul.f32 %v4205, 0.01
      %v4270 = vmul.f32 %v4206, 0.01
      %v4271 = vmul.f32 %v4207, 0.01
      %v4272 = vmul.f32 %v4208, 0.01
      %v4273 = vmul.f32 %v4209, 0.01
      %v4274 = vmul.f32 %v4210, 0.01
      %v4275 = vmul.f32 %v4211, 0.01
      %v4276 = vmul.f32 %v4212, 0.01
      %v4277 = vmul.f32 %v4213, 0.01
      %v4278 = vmul.f32 %v4214, 0.01
      %v4279 = vsel %vm4215, %v4183, %v4247
      %v4280 = vsel %vm4216, %v4184, %v4248
      %v4281 = vsel %vm4217, %v4185, %v4249
      %v4282 = vsel %vm4218, %v4186, %v4250
      %v4283 = vsel %vm4219, %v4187, %v4251
      %v4284 = vsel %vm4220, %v4188, %v4252
      %v4285 = vsel %vm4221, %v4189, %v4253
      %v4286 = vsel %vm4222, %v4190, %v4254
      %v4287 = vsel %vm4223, %v4191, %v4255
      %v4288 = vsel %vm4224, %v4192, %v4256
      %v4289 = vsel %vm4225, %v4193, %v4257
      %v4290 = vsel %vm4226, %v4194, %v4258
      %v4291 = vsel %vm4227, %v4195, %v4259
      %v4292 = vsel %vm4228, %v4196, %v4260
      %v4293 = vsel %vm4229, %v4197, %v4261
      %v4294 = vsel %vm4230, %v4198, %v4262
      %v4295 = vsel %vm4231, %v4199, %v4263
      %v4296 = vsel %vm4232, %v4200, %v4264
      %v4297 = vsel %vm4233, %v4201, %v4265
      %v4298 = vsel %vm4234, %v4202, %v4266
      %v4299 = vsel %vm4235, %v4203, %v4267
      %v4300 = vsel %vm4236, %v4204, %v4268
      %v4301 = vsel %vm4237, %v4205, %v4269
      %v4302 = vsel %vm4238, %v4206, %v4270
      %v4303 = vsel %vm4239, %v4207, %v4271
      %v4304 = vsel %vm4240, %v4208, %v4272
      %v4305 = vsel %vm4241, %v4209, %v4273
      %v4306 = vsel %vm4242, %v4210, %v4274
      %v4307 = vsel %vm4243, %v4211, %v4275
      %v4308 = vsel %vm4244, %v4212, %v4276
      %v4309 = vsel %vm4245, %v4213, %v4277
      %v4310 = vsel %vm4246, %v4214, %v4278
      %v4311 = vpack.c.bf16 %v4280, %v4279
      %v4312 = vpack.c.bf16 %v4282, %v4281
      %v4313 = vpack.c.bf16 %v4284, %v4283
      %v4314 = vpack.c.bf16 %v4286, %v4285
      %v4315 = vpack.c.bf16 %v4288, %v4287
      %v4316 = vpack.c.bf16 %v4290, %v4289
      %v4317 = vpack.c.bf16 %v4292, %v4291
      %v4318 = vpack.c.bf16 %v4294, %v4293
      %v4319 = vpack.c.bf16 %v4296, %v4295
      %v4320 = vpack.c.bf16 %v4298, %v4297
      %v4321 = vpack.c.bf16 %v4300, %v4299
      %v4322 = vpack.c.bf16 %v4302, %v4301
      %v4323 = vpack.c.bf16 %v4304, %v4303
      %v4324 = vpack.c.bf16 %v4306, %v4305
      %v4325 = vpack.c.bf16 %v4308, %v4307
      %v4326 = vpack.c.bf16 %v4310, %v4309
      %v4343 = vunpack.c.l.b16 %v4311
      %v4344 = vunpack.c.h.b16 %v4311
      %v4345 = vunpack.c.l.b16 %v4312
      %v4346 = vunpack.c.h.b16 %v4312
      %v4347 = vunpack.c.l.b16 %v4313
      %v4348 = vunpack.c.h.b16 %v4313
      %v4349 = vunpack.c.l.b16 %v4314
      %v4350 = vunpack.c.h.b16 %v4314
      %v4351 = vunpack.c.l.b16 %v4315
      %v4352 = vunpack.c.h.b16 %v4315
      %v4353 = vunpack.c.l.b16 %v4316
      %v4354 = vunpack.c.h.b16 %v4316
      %v4355 = vunpack.c.l.b16 %v4317
      %v4356 = vunpack.c.h.b16 %v4317
      %v4357 = vunpack.c.l.b16 %v4318
      %v4358 = vunpack.c.h.b16 %v4318
      %v4359 = vunpack.c.l.b16 %v4319
      %v4360 = vunpack.c.h.b16 %v4319
      %v4361 = vunpack.c.l.b16 %v4320
      %v4362 = vunpack.c.h.b16 %v4320
      %v4363 = vunpack.c.l.b16 %v4321
      %v4364 = vunpack.c.h.b16 %v4321
      %v4365 = vunpack.c.l.b16 %v4322
      %v4366 = vunpack.c.h.b16 %v4322
      %v4367 = vunpack.c.l.b16 %v4323
      %v4368 = vunpack.c.h.b16 %v4323
      %v4369 = vunpack.c.l.b16 %v4324
      %v4370 = vunpack.c.h.b16 %v4324
      %v4371 = vunpack.c.l.b16 %v4325
      %v4372 = vunpack.c.h.b16 %v4325
      %v4373 = vunpack.c.l.b16 %v4326
      %v4374 = vunpack.c.h.b16 %v4326
      %v4375 = vpack.c.b16 %v4343, %v4343
      %v4376 = vpack.c.b16 %v4344, %v4344
      %v4377 = vpack.c.b16 %v4345, %v4345
      %v4378 = vpack.c.b16 %v4346, %v4346
      %v4379 = vpack.c.b16 %v4347, %v4347
      %v4380 = vpack.c.b16 %v4348, %v4348
      %v4381 = vpack.c.b16 %v4349, %v4349
      %v4382 = vpack.c.b16 %v4350, %v4350
      %v4383 = vpack.c.b16 %v4351, %v4351
      %v4384 = vpack.c.b16 %v4352, %v4352
      %v4385 = vpack.c.b16 %v4353, %v4353
      %v4386 = vpack.c.b16 %v4354, %v4354
      %v4387 = vpack.c.b16 %v4355, %v4355
      %v4388 = vpack.c.b16 %v4356, %v4356
      %v4389 = vpack.c.b16 %v4357, %v4357
      %v4390 = vpack.c.b16 %v4358, %v4358
      %v4391 = vpack.c.b16 %v4359, %v4359
      %v4392 = vpack.c.b16 %v4360, %v4360
      %v4393 = vpack.c.b16 %v4361, %v4361
      %v4394 = vpack.c.b16 %v4362, %v4362
      %v4395 = vpack.c.b16 %v4363, %v4363
      %v4396 = vpack.c.b16 %v4364, %v4364
      %v4397 = vpack.c.b16 %v4365, %v4365
      %v4398 = vpack.c.b16 %v4366, %v4366
      %v4399 = vpack.c.b16 %v4367, %v4367
      %v4400 = vpack.c.b16 %v4368, %v4368
      %v4401 = vpack.c.b16 %v4369, %v4369
      %v4402 = vpack.c.b16 %v4370, %v4370
      %v4403 = vpack.c.b16 %v4371, %v4371
      %v4404 = vpack.c.b16 %v4372, %v4372
      %v4405 = vpack.c.b16 %v4373, %v4373
      %v4406 = vpack.c.b16 %v4374, %v4374
      %vm4407 = vsmask.f32 4368
      %vm4408 = vmor %vm344, %vm4407
      %v4410 = vshrl.u32 %v4375, 16
      %v4412 = vrot.slane %v4410, 7
      %v4413 = vshll.u32 %v4375, 16
      %v4415 = vor.u32 %v4412, %v4413
      %v4416 = vrot.slane %v4412, 4
      %v4418 = vshrl.u32 %v4376, 16
      %v4420 = vrot.slane %v4418, 7
      %v4421 = vshll.u32 %v4376, 16
      %v4423 = vor.u32 %v4420, %v4421
      %v4424 = vsel %vm4408, %v4416, %v4423
      %v4425 = vrot.slane %v4420, 4
      %v4427 = vshrl.u32 %v4377, 16
      %v4429 = vrot.slane %v4427, 7
      %v4430 = vshll.u32 %v4377, 16
      %v4432 = vor.u32 %v4429, %v4430
      %v4433 = vrot.slane %v4429, 4
      %v4435 = vshrl.u32 %v4378, 16
      %v4437 = vrot.slane %v4435, 7
      %v4438 = vshll.u32 %v4378, 16
      %v4440 = vor.u32 %v4437, %v4438
      %v4441 = vsel %vm4408, %v4433, %v4440
      %v4442 = vrot.slane %v4437, 4
      %v4444 = vshrl.u32 %v4379, 16
      %v4446 = vrot.slane %v4444, 7
      %v4447 = vshll.u32 %v4379, 16
      %v4449 = vor.u32 %v4446, %v4447
      %v4450 = vrot.slane %v4446, 4
      %v4452 = vshrl.u32 %v4380, 16
      %v4454 = vrot.slane %v4452, 7
      %v4455 = vshll.u32 %v4380, 16
      %v4457 = vor.u32 %v4454, %v4455
      %v4458 = vsel %vm4408, %v4450, %v4457
      %v4459 = vrot.slane %v4454, 4
      %v4461 = vshrl.u32 %v4381, 16
      %v4463 = vrot.slane %v4461, 7
      %v4464 = vshll.u32 %v4381, 16
      %v4466 = vor.u32 %v4463, %v4464
      %v4467 = vrot.slane %v4463, 4
      %v4469 = vshrl.u32 %v4382, 16
      %v4471 = vrot.slane %v4469, 7
      %v4472 = vshll.u32 %v4382, 16
      %v4474 = vor.u32 %v4471, %v4472
      %v4475 = vsel %vm4408, %v4467, %v4474
      %v4476 = vrot.slane %v4471, 4
      %v4478 = vshrl.u32 %v4383, 16
      %v4480 = vrot.slane %v4478, 7
      %v4481 = vshll.u32 %v4383, 16
      %v4483 = vor.u32 %v4480, %v4481
      %v4484 = vrot.slane %v4480, 4
      %v4486 = vshrl.u32 %v4384, 16
      %v4488 = vrot.slane %v4486, 7
      %v4489 = vshll.u32 %v4384, 16
      %v4491 = vor.u32 %v4488, %v4489
      %v4492 = vsel %vm4408, %v4484, %v4491
      %v4493 = vrot.slane %v4488, 4
      %v4495 = vshrl.u32 %v4385, 16
      %v4497 = vrot.slane %v4495, 7
      %v4498 = vshll.u32 %v4385, 16
      %v4500 = vor.u32 %v4497, %v4498
      %v4501 = vrot.slane %v4497, 4
      %v4503 = vshrl.u32 %v4386, 16
      %v4505 = vrot.slane %v4503, 7
      %v4506 = vshll.u32 %v4386, 16
      %v4508 = vor.u32 %v4505, %v4506
      %v4509 = vsel %vm4408, %v4501, %v4508
      %v4510 = vrot.slane %v4505, 4
      %v4512 = vshrl.u32 %v4387, 16
      %v4514 = vrot.slane %v4512, 7
      %v4515 = vshll.u32 %v4387, 16
      %v4517 = vor.u32 %v4514, %v4515
      %v4518 = vrot.slane %v4514, 4
      %v4520 = vshrl.u32 %v4388, 16
      %v4522 = vrot.slane %v4520, 7
      %v4523 = vshll.u32 %v4388, 16
      %v4525 = vor.u32 %v4522, %v4523
      %v4526 = vsel %vm4408, %v4518, %v4525
      %v4527 = vrot.slane %v4522, 4
      %v4529 = vshrl.u32 %v4389, 16
      %v4531 = vrot.slane %v4529, 7
      %v4532 = vshll.u32 %v4389, 16
      %v4534 = vor.u32 %v4531, %v4532
      %v4535 = vrot.slane %v4531, 4
      %v4537 = vshrl.u32 %v4390, 16
      %v4539 = vrot.slane %v4537, 7
      %v4540 = vshll.u32 %v4390, 16
      %v4542 = vor.u32 %v4539, %v4540
      %v4543 = vsel %vm4408, %v4535, %v4542
      %v4544 = vrot.slane %v4539, 4
      %v4546 = vshrl.u32 %v4391, 16
      %v4548 = vrot.slane %v4546, 7
      %v4549 = vshll.u32 %v4391, 16
      %v4551 = vor.u32 %v4548, %v4549
      %v4552 = vrot.slane %v4548, 4
      %v4554 = vshrl.u32 %v4392, 16
      %v4556 = vrot.slane %v4554, 7
      %v4557 = vshll.u32 %v4392, 16
      %v4559 = vor.u32 %v4556, %v4557
      %v4560 = vsel %vm4408, %v4552, %v4559
      %v4561 = vrot.slane %v4556, 4
      %v4563 = vshrl.u32 %v4393, 16
      %v4565 = vrot.slane %v4563, 7
      %v4566 = vshll.u32 %v4393, 16
      %v4568 = vor.u32 %v4565, %v4566
      %v4569 = vrot.slane %v4565, 4
      %v4571 = vshrl.u32 %v4394, 16
      %v4573 = vrot.slane %v4571, 7
      %v4574 = vshll.u32 %v4394, 16
      %v4576 = vor.u32 %v4573, %v4574
      %v4577 = vsel %vm4408, %v4569, %v4576
      %v4578 = vrot.slane %v4573, 4
      %v4580 = vshrl.u32 %v4395, 16
      %v4582 = vrot.slane %v4580, 7
      %v4583 = vshll.u32 %v4395, 16
      %v4585 = vor.u32 %v4582, %v4583
      %v4586 = vrot.slane %v4582, 4
      %v4588 = vshrl.u32 %v4396, 16
      %v4590 = vrot.slane %v4588, 7
      %v4591 = vshll.u32 %v4396, 16
      %v4593 = vor.u32 %v4590, %v4591
      %v4594 = vsel %vm4408, %v4586, %v4593
      %v4595 = vrot.slane %v4590, 4
      %v4597 = vshrl.u32 %v4397, 16
      %v4599 = vrot.slane %v4597, 7
      %v4600 = vshll.u32 %v4397, 16
      %v4602 = vor.u32 %v4599, %v4600
      %v4603 = vrot.slane %v4599, 4
      %v4605 = vshrl.u32 %v4398, 16
      %v4607 = vrot.slane %v4605, 7
      %v4608 = vshll.u32 %v4398, 16
      %v4610 = vor.u32 %v4607, %v4608
      %v4611 = vsel %vm4408, %v4603, %v4610
      %v4612 = vrot.slane %v4607, 4
      %v4614 = vshrl.u32 %v4399, 16
      %v4616 = vrot.slane %v4614, 7
      %v4617 = vshll.u32 %v4399, 16
      %v4619 = vor.u32 %v4616, %v4617
      %v4620 = vrot.slane %v4616, 4
      %v4622 = vshrl.u32 %v4400, 16
      %v4624 = vrot.slane %v4622, 7
      %v4625 = vshll.u32 %v4400, 16
      %v4627 = vor.u32 %v4624, %v4625
      %v4628 = vsel %vm4408, %v4620, %v4627
      %v4629 = vrot.slane %v4624, 4
      %v4631 = vshrl.u32 %v4401, 16
      %v4633 = vrot.slane %v4631, 7
      %v4634 = vshll.u32 %v4401, 16
      %v4636 = vor.u32 %v4633, %v4634
      %v4637 = vrot.slane %v4633, 4
      %v4639 = vshrl.u32 %v4402, 16
      %v4641 = vrot.slane %v4639, 7
      %v4642 = vshll.u32 %v4402, 16
      %v4644 = vor.u32 %v4641, %v4642
      %v4645 = vsel %vm4408, %v4637, %v4644
      %v4646 = vrot.slane %v4641, 4
      %v4648 = vshrl.u32 %v4403, 16
      %v4650 = vrot.slane %v4648, 7
      %v4651 = vshll.u32 %v4403, 16
      %v4653 = vor.u32 %v4650, %v4651
      %v4654 = vrot.slane %v4650, 4
      %v4656 = vshrl.u32 %v4404, 16
      %v4658 = vrot.slane %v4656, 7
      %v4659 = vshll.u32 %v4404, 16
      %v4661 = vor.u32 %v4658, %v4659
      %v4662 = vsel %vm4408, %v4654, %v4661
      %v4663 = vrot.slane %v4658, 4
      %v4665 = vshrl.u32 %v4405, 16
      %v4667 = vrot.slane %v4665, 7
      %v4668 = vshll.u32 %v4405, 16
      %v4670 = vor.u32 %v4667, %v4668
      %v4671 = vrot.slane %v4667, 4
      %v4673 = vshrl.u32 %v4406, 16
      %v4675 = vrot.slane %v4673, 7
      %v4676 = vshll.u32 %v4406, 16
      %v4678 = vor.u32 %v4675, %v4676
      %v4679 = vsel %vm4408, %v4671, %v4678
      %v4680 = vrot.slane %v4675, 4
      %s4729 = scalar_lea.vmem [#allocation2], 12
      %vm4730 = vcmask 125952
      %vm4731 = vmand %vm4730, %vm400
      %v4732 = vld [vmem:[%s4729] sm:$0xf]
      %v4733 = vsel %vm4731, %v4415, %v4732
      %4734 = vst [vmem:[%s4729] sm:$0xf] %v4733
      %4735 = vst.msk [vmem:[%s4729 + $0x4] sm:$0xf] %vm334, %v4424
      %v4736 = vld [vmem:[%s4729 + $0x8] sm:$0x1]
      %v4737 = vsel %vm345, %v4425, %v4736
      %4738 = vst [vmem:[%s4729 + $0x8] sm:$0x1] %v4737
      %v4739 = vld [vmem:[%s4729 + $0xc] sm:$0xf]
      %v4740 = vsel %vm4731, %v4432, %v4739
      %4741 = vst [vmem:[%s4729 + $0xc] sm:$0xf] %v4740
      %4742 = vst.msk [vmem:[%s4729 + $0x10] sm:$0xf] %vm334, %v4441
      %v4743 = vld [vmem:[%s4729 + $0x14] sm:$0x1]
      %v4744 = vsel %vm345, %v4442, %v4743
      %4745 = vst [vmem:[%s4729 + $0x14] sm:$0x1] %v4744
      %v4746 = vld [vmem:[%s4729 + $0x18] sm:$0xf]
      %v4747 = vsel %vm4731, %v4449, %v4746
      %4748 = vst [vmem:[%s4729 + $0x18] sm:$0xf] %v4747
      %4749 = vst.msk [vmem:[%s4729 + $0x1c] sm:$0xf] %vm334, %v4458
      %v4750 = vld [vmem:[%s4729 + $0x20] sm:$0x1]
      %v4751 = vsel %vm345, %v4459, %v4750
      %4752 = vst [vmem:[%s4729 + $0x20] sm:$0x1] %v4751
      %v4753 = vld [vmem:[%s4729 + $0x24] sm:$0xf]
      %v4754 = vsel %vm4731, %v4466, %v4753
      %4755 = vst [vmem:[%s4729 + $0x24] sm:$0xf] %v4754
      %4756 = vst.msk [vmem:[%s4729 + $0x28] sm:$0xf] %vm334, %v4475
      %v4757 = vld [vmem:[%s4729 + $0x2c] sm:$0x1]
      %v4758 = vsel %vm345, %v4476, %v4757
      %4759 = vst [vmem:[%s4729 + $0x2c] sm:$0x1] %v4758
      %v4760 = vld [vmem:[%s4729 + $0x30] sm:$0xf]
      %v4761 = vsel %vm4731, %v4483, %v4760
      %4762 = vst [vmem:[%s4729 + $0x30] sm:$0xf] %v4761
      %4763 = vst.msk [vmem:[%s4729 + $0x34] sm:$0xf] %vm334, %v4492
      %v4764 = vld [vmem:[%s4729 + $0x38] sm:$0x1]
      %v4765 = vsel %vm345, %v4493, %v4764
      %4766 = vst [vmem:[%s4729 + $0x38] sm:$0x1] %v4765
      %v4767 = vld [vmem:[%s4729 + $0x3c] sm:$0xf]
      %v4768 = vsel %vm4731, %v4500, %v4767
      %4769 = vst [vmem:[%s4729 + $0x3c] sm:$0xf] %v4768
      %4770 = vst.msk [vmem:[%s4729 + $0x40] sm:$0xf] %vm334, %v4509
      %v4771 = vld [vmem:[%s4729 + $0x44] sm:$0x1]
      %v4772 = vsel %vm345, %v4510, %v4771
      %4773 = vst [vmem:[%s4729 + $0x44] sm:$0x1] %v4772
      %v4774 = vld [vmem:[%s4729 + $0x48] sm:$0xf]
      %v4775 = vsel %vm4731, %v4517, %v4774
      %4776 = vst [vmem:[%s4729 + $0x48] sm:$0xf] %v4775
      %4777 = vst.msk [vmem:[%s4729 + $0x4c] sm:$0xf] %vm334, %v4526
      %v4778 = vld [vmem:[%s4729 + $0x50] sm:$0x1]
      %v4779 = vsel %vm345, %v4527, %v4778
      %4780 = vst [vmem:[%s4729 + $0x50] sm:$0x1] %v4779
      %v4781 = vld [vmem:[%s4729 + $0x54] sm:$0xf]
      %v4782 = vsel %vm4731, %v4534, %v4781
      %4783 = vst [vmem:[%s4729 + $0x54] sm:$0xf] %v4782
      %4784 = vst.msk [vmem:[%s4729 + $0x58] sm:$0xf] %vm334, %v4543
      %v4785 = vld [vmem:[%s4729 + $0x5c] sm:$0x1]
      %v4786 = vsel %vm345, %v4544, %v4785
      %4787 = vst [vmem:[%s4729 + $0x5c] sm:$0x1] %v4786
      %v4788 = vld [vmem:[%s4729 + $0x60] sm:$0xf]
      %v4789 = vsel %vm4731, %v4551, %v4788
      %4790 = vst [vmem:[%s4729 + $0x60] sm:$0xf] %v4789
      %4791 = vst.msk [vmem:[%s4729 + $0x64] sm:$0xf] %vm334, %v4560
      %v4792 = vld [vmem:[%s4729 + $0x68] sm:$0x1]
      %v4793 = vsel %vm345, %v4561, %v4792
      %4794 = vst [vmem:[%s4729 + $0x68] sm:$0x1] %v4793
      %v4795 = vld [vmem:[%s4729 + $0x6c] sm:$0xf]
      %v4796 = vsel %vm4731, %v4568, %v4795
      %4797 = vst [vmem:[%s4729 + $0x6c] sm:$0xf] %v4796
      %4798 = vst.msk [vmem:[%s4729 + $0x70] sm:$0xf] %vm334, %v4577
      %v4799 = vld [vmem:[%s4729 + $0x74] sm:$0x1]
      %v4800 = vsel %vm345, %v4578, %v4799
      %4801 = vst [vmem:[%s4729 + $0x74] sm:$0x1] %v4800
      %v4802 = vld [vmem:[%s4729 + $0x78] sm:$0xf]
      %v4803 = vsel %vm4731, %v4585, %v4802
      %4804 = vst [vmem:[%s4729 + $0x78] sm:$0xf] %v4803
      %4805 = vst.msk [vmem:[%s4729 + $0x7c] sm:$0xf] %vm334, %v4594
      %v4806 = vld [vmem:[%s4729 + $0x80] sm:$0x1]
      %v4807 = vsel %vm345, %v4595, %v4806
      %4808 = vst [vmem:[%s4729 + $0x80] sm:$0x1] %v4807
      %v4809 = vld [vmem:[%s4729 + $0x84] sm:$0xf]
      %v4810 = vsel %vm4731, %v4602, %v4809
      %4811 = vst [vmem:[%s4729 + $0x84] sm:$0xf] %v4810
      %4812 = vst.msk [vmem:[%s4729 + $0x88] sm:$0xf] %vm334, %v4611
      %v4813 = vld [vmem:[%s4729 + $0x8c] sm:$0x1]
      %v4814 = vsel %vm345, %v4612, %v4813
      %4815 = vst [vmem:[%s4729 + $0x8c] sm:$0x1] %v4814
      %v4816 = vld [vmem:[%s4729 + $0x90] sm:$0xf]
      %v4817 = vsel %vm4731, %v4619, %v4816
      %4818 = vst [vmem:[%s4729 + $0x90] sm:$0xf] %v4817
      %4819 = vst.msk [vmem:[%s4729 + $0x94] sm:$0xf] %vm334, %v4628
      %v4820 = vld [vmem:[%s4729 + $0x98] sm:$0x1]
      %v4821 = vsel %vm345, %v4629, %v4820
      %4822 = vst [vmem:[%s4729 + $0x98] sm:$0x1] %v4821
      %v4823 = vld [vmem:[%s4729 + $0x9c] sm:$0xf]
      %v4824 = vsel %vm4731, %v4636, %v4823
      %4825 = vst [vmem:[%s4729 + $0x9c] sm:$0xf] %v4824
      %4826 = vst.msk [vmem:[%s4729 + $0xa0] sm:$0xf] %vm334, %v4645
      %v4827 = vld [vmem:[%s4729 + $0xa4] sm:$0x1]
      %v4828 = vsel %vm345, %v4646, %v4827
      %4829 = vst [vmem:[%s4729 + $0xa4] sm:$0x1] %v4828
      %v4830 = vld [vmem:[%s4729 + $0xa8] sm:$0xf]
      %v4831 = vsel %vm4731, %v4653, %v4830
      %4832 = vst [vmem:[%s4729 + $0xa8] sm:$0xf] %v4831
      %4833 = vst.msk [vmem:[%s4729 + $0xac] sm:$0xf] %vm334, %v4662
      %v4834 = vld [vmem:[%s4729 + $0xb0] sm:$0x1]
      %v4835 = vsel %vm345, %v4663, %v4834
      %4836 = vst [vmem:[%s4729 + $0xb0] sm:$0x1] %v4835
      %v4837 = vld [vmem:[%s4729 + $0xb4] sm:$0xf]
      %v4838 = vsel %vm4731, %v4670, %v4837
      %4839 = vst [vmem:[%s4729 + $0xb4] sm:$0xf] %v4838
      %4840 = vst.msk [vmem:[%s4729 + $0xb8] sm:$0xf] %vm334, %v4679
      %v4841 = vld [vmem:[%s4729 + $0xbc] sm:$0x1]
      %v4842 = vsel %vm345, %v4680, %v4841
      %4843 = vst [vmem:[%s4729 + $0xbc] sm:$0x1] %v4842
      %v4844 = vld [vmem:[#allocation2] sm:$0xf]
      %v4845 = vld [vmem:[#allocation2 + $0x4] sm:$0xf]
      %v4846 = vld [vmem:[#allocation2 + $0xc] sm:$0xf]
      %v4847 = vld [vmem:[#allocation2 + $0x10] sm:$0xf]
      %v4848 = vld [vmem:[#allocation2 + $0x18] sm:$0xf]
      %v4849 = vld [vmem:[#allocation2 + $0x1c] sm:$0xf]
      %v4850 = vld [vmem:[#allocation2 + $0x24] sm:$0xf]
      %v4851 = vld [vmem:[#allocation2 + $0x28] sm:$0xf]
      %v4852 = vld [vmem:[#allocation2 + $0x30] sm:$0xf]
      %v4853 = vld [vmem:[#allocation2 + $0x34] sm:$0xf]
      %v4854 = vld [vmem:[#allocation2 + $0x3c] sm:$0xf]
      %v4855 = vld [vmem:[#allocation2 + $0x40] sm:$0xf]
      %v4856 = vld [vmem:[#allocation2 + $0x48] sm:$0xf]
      %v4857 = vld [vmem:[#allocation2 + $0x4c] sm:$0xf]
      %v4858 = vld [vmem:[#allocation2 + $0x54] sm:$0xf]
      %v4859 = vld [vmem:[#allocation2 + $0x58] sm:$0xf]
      %v4860 = vld [vmem:[#allocation2 + $0x60] sm:$0xf]
      %v4861 = vld [vmem:[#allocation2 + $0x64] sm:$0xf]
      %v4862 = vld [vmem:[#allocation2 + $0x6c] sm:$0xf]
      %v4863 = vld [vmem:[#allocation2 + $0x70] sm:$0xf]
      %v4864 = vld [vmem:[#allocation2 + $0x78] sm:$0xf]
      %v4865 = vld [vmem:[#allocation2 + $0x7c] sm:$0xf]
      %v4866 = vld [vmem:[#allocation2 + $0x84] sm:$0xf]
      %v4867 = vld [vmem:[#allocation2 + $0x88] sm:$0xf]
      %v4868 = vld [vmem:[#allocation2 + $0x90] sm:$0xf]
      %v4869 = vld [vmem:[#allocation2 + $0x94] sm:$0xf]
      %v4870 = vld [vmem:[#allocation2 + $0x9c] sm:$0xf]
      %v4871 = vld [vmem:[#allocation2 + $0xa0] sm:$0xf]
      %v4872 = vld [vmem:[#allocation2 + $0xa8] sm:$0xf]
      %v4873 = vld [vmem:[#allocation2 + $0xac] sm:$0xf]
      %v4874 = vld [vmem:[#allocation2 + $0xb4] sm:$0xf]
      %v4875 = vld [vmem:[#allocation2 + $0xb8] sm:$0xf]
      %v4908 = vunpack.c.l.b16 %v4844
      %v4909 = vunpack.c.l.b16 %v4845
      %v4910 = vunpack.c.l.b16 %v4846
      %v4911 = vunpack.c.l.b16 %v4847
      %v4912 = vunpack.c.l.b16 %v4848
      %v4913 = vunpack.c.l.b16 %v4849
      %v4914 = vunpack.c.l.b16 %v4850
      %v4915 = vunpack.c.l.b16 %v4851
      %v4916 = vunpack.c.l.b16 %v4852
      %v4917 = vunpack.c.l.b16 %v4853
      %v4918 = vunpack.c.l.b16 %v4854
      %v4919 = vunpack.c.l.b16 %v4855
      %v4920 = vunpack.c.l.b16 %v4856
      %v4921 = vunpack.c.l.b16 %v4857
      %v4922 = vunpack.c.l.b16 %v4858
      %v4923 = vunpack.c.l.b16 %v4859
      %v4924 = vunpack.c.l.b16 %v4860
      %v4925 = vunpack.c.l.b16 %v4861
      %v4926 = vunpack.c.l.b16 %v4862
      %v4927 = vunpack.c.l.b16 %v4863
      %v4928 = vunpack.c.l.b16 %v4864
      %v4929 = vunpack.c.l.b16 %v4865
      %v4930 = vunpack.c.l.b16 %v4866
      %v4931 = vunpack.c.l.b16 %v4867
      %v4932 = vunpack.c.l.b16 %v4868
      %v4933 = vunpack.c.l.b16 %v4869
      %v4934 = vunpack.c.l.b16 %v4870
      %v4935 = vunpack.c.l.b16 %v4871
      %v4936 = vunpack.c.l.b16 %v4872
      %v4937 = vunpack.c.l.b16 %v4873
      %v4938 = vunpack.c.l.b16 %v4874
      %v4939 = vunpack.c.l.b16 %v4875
      %v4940 = vpack.c.b16 %v4909, %v4908
      %v4941 = vpack.c.b16 %v4911, %v4910
      %v4942 = vpack.c.b16 %v4913, %v4912
      %v4943 = vpack.c.b16 %v4915, %v4914
      %v4944 = vpack.c.b16 %v4917, %v4916
      %v4945 = vpack.c.b16 %v4919, %v4918
      %v4946 = vpack.c.b16 %v4921, %v4920
      %v4947 = vpack.c.b16 %v4923, %v4922
      %v4948 = vpack.c.b16 %v4925, %v4924
      %v4949 = vpack.c.b16 %v4927, %v4926
      %v4950 = vpack.c.b16 %v4929, %v4928
      %v4951 = vpack.c.b16 %v4931, %v4930
      %v4952 = vpack.c.b16 %v4933, %v4932
      %v4953 = vpack.c.b16 %v4935, %v4934
      %v4954 = vpack.c.b16 %v4937, %v4936
      %v4955 = vpack.c.b16 %v4939, %v4938
      %4972 = vst.msk [vmem:[#allocation4] sm:$0xff] %vm3811, %v4940
      %4973 = vst.msk [vmem:[#allocation4 + $0x10] sm:$0xff] %vm3811, %v4941
      %4974 = vst.msk [vmem:[#allocation4 + $0x20] sm:$0xff] %vm3811, %v4942
      %4975 = vst.msk [vmem:[#allocation4 + $0x30] sm:$0xff] %vm3811, %v4943
      %4976 = vst.msk [vmem:[#allocation4 + $0x40] sm:$0xff] %vm3811, %v4944
      %4977 = vst.msk [vmem:[#allocation4 + $0x50] sm:$0xff] %vm3811, %v4945
      %4978 = vst.msk [vmem:[#allocation4 + $0x60] sm:$0xff] %vm3811, %v4946
      %4979 = vst.msk [vmem:[#allocation4 + $0x70] sm:$0xff] %vm3811, %v4947
      %4980 = vst.msk [vmem:[#allocation4 + $0x80] sm:$0xff] %vm3811, %v4948
      %4981 = vst.msk [vmem:[#allocation4 + $0x90] sm:$0xff] %vm3811, %v4949
      %4982 = vst.msk [vmem:[#allocation4 + $0xa0] sm:$0xff] %vm3811, %v4950
      %4983 = vst.msk [vmem:[#allocation4 + $0xb0] sm:$0xff] %vm3811, %v4951
      %4984 = vst.msk [vmem:[#allocation4 + $0xc0] sm:$0xff] %vm3811, %v4952
      %4985 = vst.msk [vmem:[#allocation4 + $0xd0] sm:$0xff] %vm3811, %v4953
      %4986 = vst.msk [vmem:[#allocation4 + $0xe0] sm:$0xff] %vm3811, %v4954
      %4987 = vst.msk [vmem:[#allocation4 + $0xf0] sm:$0xff] %vm3811, %v4955
      %v4988 = vld [vmem:[#allocation2] sm:$0xf]
      %v4989 = vld [vmem:[#allocation2 + $0x4] sm:$0xf]
      %v4990 = vld [vmem:[#allocation2 + $0x8] sm:$0x1]
      %v4991 = vld [vmem:[#allocation2 + $0xc] sm:$0xf]
      %v4992 = vld [vmem:[#allocation2 + $0x10] sm:$0xf]
      %v4993 = vld [vmem:[#allocation2 + $0x14] sm:$0x1]
      %v4994 = vld [vmem:[#allocation2 + $0x18] sm:$0xf]
      %v4995 = vld [vmem:[#allocation2 + $0x1c] sm:$0xf]
      %v4996 = vld [vmem:[#allocation2 + $0x20] sm:$0x1]
      %v4997 = vld [vmem:[#allocation2 + $0x24] sm:$0xf]
      %v4998 = vld [vmem:[#allocation2 + $0x28] sm:$0xf]
      %v4999 = vld [vmem:[#allocation2 + $0x2c] sm:$0x1]
      %v5000 = vld [vmem:[#allocation2 + $0x30] sm:$0xf]
      %v5001 = vld [vmem:[#allocation2 + $0x34] sm:$0xf]
      %v5002 = vld [vmem:[#allocation2 + $0x38] sm:$0x1]
      %v5003 = vld [vmem:[#allocation2 + $0x3c] sm:$0xf]
      %v5004 = vld [vmem:[#allocation2 + $0x40] sm:$0xf]
      %v5005 = vld [vmem:[#allocation2 + $0x44] sm:$0x1]
      %v5006 = vld [vmem:[#allocation2 + $0x48] sm:$0xf]
      %v5007 = vld [vmem:[#allocation2 + $0x4c] sm:$0xf]
      %v5008 = vld [vmem:[#allocation2 + $0x50] sm:$0x1]
      %v5009 = vld [vmem:[#allocation2 + $0x54] sm:$0xf]
      %v5010 = vld [vmem:[#allocation2 + $0x58] sm:$0xf]
      %v5011 = vld [vmem:[#allocation2 + $0x5c] sm:$0x1]
      %v5012 = vld [vmem:[#allocation2 + $0x60] sm:$0xf]
      %v5013 = vld [vmem:[#allocation2 + $0x64] sm:$0xf]
      %v5014 = vld [vmem:[#allocation2 + $0x68] sm:$0x1]
      %v5015 = vld [vmem:[#allocation2 + $0x6c] sm:$0xf]
      %v5016 = vld [vmem:[#allocation2 + $0x70] sm:$0xf]
      %v5017 = vld [vmem:[#allocation2 + $0x74] sm:$0x1]
      %v5018 = vld [vmem:[#allocation2 + $0x78] sm:$0xf]
      %v5019 = vld [vmem:[#allocation2 + $0x7c] sm:$0xf]
      %v5020 = vld [vmem:[#allocation2 + $0x80] sm:$0x1]
      %v5021 = vld [vmem:[#allocation2 + $0x84] sm:$0xf]
      %v5022 = vld [vmem:[#allocation2 + $0x88] sm:$0xf]
      %v5023 = vld [vmem:[#allocation2 + $0x8c] sm:$0x1]
      %v5024 = vld [vmem:[#allocation2 + $0x90] sm:$0xf]
      %v5025 = vld [vmem:[#allocation2 + $0x94] sm:$0xf]
      %v5026 = vld [vmem:[#allocation2 + $0x98] sm:$0x1]
      %v5027 = vld [vmem:[#allocation2 + $0x9c] sm:$0xf]
      %v5028 = vld [vmem:[#allocation2 + $0xa0] sm:$0xf]
      %v5029 = vld [vmem:[#allocation2 + $0xa4] sm:$0x1]
      %v5030 = vld [vmem:[#allocation2 + $0xa8] sm:$0xf]
      %v5031 = vld [vmem:[#allocation2 + $0xac] sm:$0xf]
      %v5032 = vld [vmem:[#allocation2 + $0xb0] sm:$0x1]
      %v5033 = vld [vmem:[#allocation2 + $0xb4] sm:$0xf]
      %v5034 = vld [vmem:[#allocation2 + $0xb8] sm:$0xf]
      %v5035 = vld [vmem:[#allocation2 + $0xbc] sm:$0x1]
      %v5037 = vshrl.u32 %v4988, 16
      %v5039 = vrot.slane %v5037, 4
      %v5040 = vshll.u32 %v4988, 16
      %v5042 = vrot.slane %v5040, 5
      %v5043 = vor.u32 %v5039, %v5042
      %v5044 = vrot.slane %v5043, 4
      %v5046 = vshll.u32 %v4989, 16
      %v5048 = vrot.slane %v5046, 5
      %v5049 = vsel %vm651, %v5044, %v5048
      %v5050 = vshrl.u32 %v4989, 16
      %v5052 = vrot.slane %v5050, 4
      %v5053 = vor.u32 %v5052, %v5048
      %v5054 = vrot.slane %v5053, 4
      %v5056 = vshll.u32 %v4990, 16
      %v5058 = vrot.slane %v5056, 5
      %v5059 = vsel %vm651, %v5054, %v5058
      %v5061 = vshrl.u32 %v4991, 16
      %v5063 = vrot.slane %v5061, 4
      %v5064 = vshll.u32 %v4991, 16
      %v5066 = vrot.slane %v5064, 5
      %v5067 = vor.u32 %v5063, %v5066
      %v5068 = vrot.slane %v5067, 4
      %v5070 = vshll.u32 %v4992, 16
      %v5072 = vrot.slane %v5070, 5
      %v5073 = vsel %vm651, %v5068, %v5072
      %v5074 = vshrl.u32 %v4992, 16
      %v5076 = vrot.slane %v5074, 4
      %v5077 = vor.u32 %v5076, %v5072
      %v5078 = vrot.slane %v5077, 4
      %v5080 = vshll.u32 %v4993, 16
      %v5082 = vrot.slane %v5080, 5
      %v5083 = vsel %vm651, %v5078, %v5082
      %v5085 = vshrl.u32 %v4994, 16
      %v5087 = vrot.slane %v5085, 4
      %v5088 = vshll.u32 %v4994, 16
      %v5090 = vrot.slane %v5088, 5
      %v5091 = vor.u32 %v5087, %v5090
      %v5092 = vrot.slane %v5091, 4
      %v5094 = vshll.u32 %v4995, 16
      %v5096 = vrot.slane %v5094, 5
      %v5097 = vsel %vm651, %v5092, %v5096
      %v5098 = vshrl.u32 %v4995, 16
      %v5100 = vrot.slane %v5098, 4
      %v5101 = vor.u32 %v5100, %v5096
      %v5102 = vrot.slane %v5101, 4
      %v5104 = vshll.u32 %v4996, 16
      %v5106 = vrot.slane %v5104, 5
      %v5107 = vsel %vm651, %v5102, %v5106
      %v5109 = vshrl.u32 %v4997, 16
      %v5111 = vrot.slane %v5109, 4
      %v5112 = vshll.u32 %v4997, 16
      %v5114 = vrot.slane %v5112, 5
      %v5115 = vor.u32 %v5111, %v5114
      %v5116 = vrot.slane %v5115, 4
      %v5118 = vshll.u32 %v4998, 16
      %v5120 = vrot.slane %v5118, 5
      %v5121 = vsel %vm651, %v5116, %v5120
      %v5122 = vshrl.u32 %v4998, 16
      %v5124 = vrot.slane %v5122, 4
      %v5125 = vor.u32 %v5124, %v5120
      %v5126 = vrot.slane %v5125, 4
      %v5128 = vshll.u32 %v4999, 16
      %v5130 = vrot.slane %v5128, 5
      %v5131 = vsel %vm651, %v5126, %v5130
      %v5133 = vshrl.u32 %v5000, 16
      %v5135 = vrot.slane %v5133, 4
      %v5136 = vshll.u32 %v5000, 16
      %v5138 = vrot.slane %v5136, 5
      %v5139 = vor.u32 %v5135, %v5138
      %v5140 = vrot.slane %v5139, 4
      %v5142 = vshll.u32 %v5001, 16
      %v5144 = vrot.slane %v5142, 5
      %v5145 = vsel %vm651, %v5140, %v5144
      %v5146 = vshrl.u32 %v5001, 16
      %v5148 = vrot.slane %v5146, 4
      %v5149 = vor.u32 %v5148, %v5144
      %v5150 = vrot.slane %v5149, 4
      %v5152 = vshll.u32 %v5002, 16
      %v5154 = vrot.slane %v5152, 5
      %v5155 = vsel %vm651, %v5150, %v5154
      %v5157 = vshrl.u32 %v5003, 16
      %v5159 = vrot.slane %v5157, 4
      %v5160 = vshll.u32 %v5003, 16
      %v5162 = vrot.slane %v5160, 5
      %v5163 = vor.u32 %v5159, %v5162
      %v5164 = vrot.slane %v5163, 4
      %v5166 = vshll.u32 %v5004, 16
      %v5168 = vrot.slane %v5166, 5
      %v5169 = vsel %vm651, %v5164, %v5168
      %v5170 = vshrl.u32 %v5004, 16
      %v5172 = vrot.slane %v5170, 4
      %v5173 = vor.u32 %v5172, %v5168
      %v5174 = vrot.slane %v5173, 4
      %v5176 = vshll.u32 %v5005, 16
      %v5178 = vrot.slane %v5176, 5
      %v5179 = vsel %vm651, %v5174, %v5178
      %v5181 = vshrl.u32 %v5006, 16
      %v5183 = vrot.slane %v5181, 4
      %v5184 = vshll.u32 %v5006, 16
      %v5186 = vrot.slane %v5184, 5
      %v5187 = vor.u32 %v5183, %v5186
      %v5188 = vrot.slane %v5187, 4
      %v5190 = vshll.u32 %v5007, 16
      %v5192 = vrot.slane %v5190, 5
      %v5193 = vsel %vm651, %v5188, %v5192
      %v5194 = vshrl.u32 %v5007, 16
      %v5196 = vrot.slane %v5194, 4
      %v5197 = vor.u32 %v5196, %v5192
      %v5198 = vrot.slane %v5197, 4
      %v5200 = vshll.u32 %v5008, 16
      %v5202 = vrot.slane %v5200, 5
      %v5203 = vsel %vm651, %v5198, %v5202
      %v5205 = vshrl.u32 %v5009, 16
      %v5207 = vrot.slane %v5205, 4
      %v5208 = vshll.u32 %v5009, 16
      %v5210 = vrot.slane %v5208, 5
      %v5211 = vor.u32 %v5207, %v5210
      %v5212 = vrot.slane %v5211, 4
      %v5214 = vshll.u32 %v5010, 16
      %v5216 = vrot.slane %v5214, 5
      %v5217 = vsel %vm651, %v5212, %v5216
      %v5218 = vshrl.u32 %v5010, 16
      %v5220 = vrot.slane %v5218, 4
      %v5221 = vor.u32 %v5220, %v5216
      %v5222 = vrot.slane %v5221, 4
      %v5224 = vshll.u32 %v5011, 16
      %v5226 = vrot.slane %v5224, 5
      %v5227 = vsel %vm651, %v5222, %v5226
      %v5229 = vshrl.u32 %v5012, 16
      %v5231 = vrot.slane %v5229, 4
      %v5232 = vshll.u32 %v5012, 16
      %v5234 = vrot.slane %v5232, 5
      %v5235 = vor.u32 %v5231, %v5234
      %v5236 = vrot.slane %v5235, 4
      %v5238 = vshll.u32 %v5013, 16
      %v5240 = vrot.slane %v5238, 5
      %v5241 = vsel %vm651, %v5236, %v5240
      %v5242 = vshrl.u32 %v5013, 16
      %v5244 = vrot.slane %v5242, 4
      %v5245 = vor.u32 %v5244, %v5240
      %v5246 = vrot.slane %v5245, 4
      %v5248 = vshll.u32 %v5014, 16
      %v5250 = vrot.slane %v5248, 5
      %v5251 = vsel %vm651, %v5246, %v5250
      %v5253 = vshrl.u32 %v5015, 16
      %v5255 = vrot.slane %v5253, 4
      %v5256 = vshll.u32 %v5015, 16
      %v5258 = vrot.slane %v5256, 5
      %v5259 = vor.u32 %v5255, %v5258
      %v5260 = vrot.slane %v5259, 4
      %v5262 = vshll.u32 %v5016, 16
      %v5264 = vrot.slane %v5262, 5
      %v5265 = vsel %vm651, %v5260, %v5264
      %v5266 = vshrl.u32 %v5016, 16
      %v5268 = vrot.slane %v5266, 4
      %v5269 = vor.u32 %v5268, %v5264
      %v5270 = vrot.slane %v5269, 4
      %v5272 = vshll.u32 %v5017, 16
      %v5274 = vrot.slane %v5272, 5
      %v5275 = vsel %vm651, %v5270, %v5274
      %v5277 = vshrl.u32 %v5018, 16
      %v5279 = vrot.slane %v5277, 4
      %v5280 = vshll.u32 %v5018, 16
      %v5282 = vrot.slane %v5280, 5
      %v5283 = vor.u32 %v5279, %v5282
      %v5284 = vrot.slane %v5283, 4
      %v5286 = vshll.u32 %v5019, 16
      %v5288 = vrot.slane %v5286, 5
      %v5289 = vsel %vm651, %v5284, %v5288
      %v5290 = vshrl.u32 %v5019, 16
      %v5292 = vrot.slane %v5290, 4
      %v5293 = vor.u32 %v5292, %v5288
      %v5294 = vrot.slane %v5293, 4
      %v5296 = vshll.u32 %v5020, 16
      %v5298 = vrot.slane %v5296, 5
      %v5299 = vsel %vm651, %v5294, %v5298
      %v5301 = vshrl.u32 %v5021, 16
      %v5303 = vrot.slane %v5301, 4
      %v5304 = vshll.u32 %v5021, 16
      %v5306 = vrot.slane %v5304, 5
      %v5307 = vor.u32 %v5303, %v5306
      %v5308 = vrot.slane %v5307, 4
      %v5310 = vshll.u32 %v5022, 16
      %v5312 = vrot.slane %v5310, 5
      %v5313 = vsel %vm651, %v5308, %v5312
      %v5314 = vshrl.u32 %v5022, 16
      %v5316 = vrot.slane %v5314, 4
      %v5317 = vor.u32 %v5316, %v5312
      %v5318 = vrot.slane %v5317, 4
      %v5320 = vshll.u32 %v5023, 16
      %v5322 = vrot.slane %v5320, 5
      %v5323 = vsel %vm651, %v5318, %v5322
      %v5325 = vshrl.u32 %v5024, 16
      %v5327 = vrot.slane %v5325, 4
      %v5328 = vshll.u32 %v5024, 16
      %v5330 = vrot.slane %v5328, 5
      %v5331 = vor.u32 %v5327, %v5330
      %v5332 = vrot.slane %v5331, 4
      %v5334 = vshll.u32 %v5025, 16
      %v5336 = vrot.slane %v5334, 5
      %v5337 = vsel %vm651, %v5332, %v5336
      %v5338 = vshrl.u32 %v5025, 16
      %v5340 = vrot.slane %v5338, 4
      %v5341 = vor.u32 %v5340, %v5336
      %v5342 = vrot.slane %v5341, 4
      %v5344 = vshll.u32 %v5026, 16
      %v5346 = vrot.slane %v5344, 5
      %v5347 = vsel %vm651, %v5342, %v5346
      %v5349 = vshrl.u32 %v5027, 16
      %v5351 = vrot.slane %v5349, 4
      %v5352 = vshll.u32 %v5027, 16
      %v5354 = vrot.slane %v5352, 5
      %v5355 = vor.u32 %v5351, %v5354
      %v5356 = vrot.slane %v5355, 4
      %v5358 = vshll.u32 %v5028, 16
      %v5360 = vrot.slane %v5358, 5
      %v5361 = vsel %vm651, %v5356, %v5360
      %v5362 = vshrl.u32 %v5028, 16
      %v5364 = vrot.slane %v5362, 4
      %v5365 = vor.u32 %v5364, %v5360
      %v5366 = vrot.slane %v5365, 4
      %v5368 = vshll.u32 %v5029, 16
      %v5370 = vrot.slane %v5368, 5
      %v5371 = vsel %vm651, %v5366, %v5370
      %v5373 = vshrl.u32 %v5030, 16
      %v5375 = vrot.slane %v5373, 4
      %v5376 = vshll.u32 %v5030, 16
      %v5378 = vrot.slane %v5376, 5
      %v5379 = vor.u32 %v5375, %v5378
      %v5380 = vrot.slane %v5379, 4
      %v5382 = vshll.u32 %v5031, 16
      %v5384 = vrot.slane %v5382, 5
      %v5385 = vsel %vm651, %v5380, %v5384
      %v5386 = vshrl.u32 %v5031, 16
      %v5388 = vrot.slane %v5386, 4
      %v5389 = vor.u32 %v5388, %v5384
      %v5390 = vrot.slane %v5389, 4
      %v5392 = vshll.u32 %v5032, 16
      %v5394 = vrot.slane %v5392, 5
      %v5395 = vsel %vm651, %v5390, %v5394
      %v5397 = vshrl.u32 %v5033, 16
      %v5399 = vrot.slane %v5397, 4
      %v5400 = vshll.u32 %v5033, 16
      %v5402 = vrot.slane %v5400, 5
      %v5403 = vor.u32 %v5399, %v5402
      %v5404 = vrot.slane %v5403, 4
      %v5406 = vshll.u32 %v5034, 16
      %v5408 = vrot.slane %v5406, 5
      %v5409 = vsel %vm651, %v5404, %v5408
      %v5410 = vshrl.u32 %v5034, 16
      %v5412 = vrot.slane %v5410, 4
      %v5413 = vor.u32 %v5412, %v5408
      %v5414 = vrot.slane %v5413, 4
      %v5416 = vshll.u32 %v5035, 16
      %v5418 = vrot.slane %v5416, 5
      %v5419 = vsel %vm651, %v5414, %v5418
      %v5420 = vunpack.c.l.b16 %v5049
      %v5421 = vunpack.c.l.b16 %v5059
      %v5422 = vunpack.c.l.b16 %v5073
      %v5423 = vunpack.c.l.b16 %v5083
      %v5424 = vunpack.c.l.b16 %v5097
      %v5425 = vunpack.c.l.b16 %v5107
      %v5426 = vunpack.c.l.b16 %v5121
      %v5427 = vunpack.c.l.b16 %v5131
      %v5428 = vunpack.c.l.b16 %v5145
      %v5429 = vunpack.c.l.b16 %v5155
      %v5430 = vunpack.c.l.b16 %v5169
      %v5431 = vunpack.c.l.b16 %v5179
      %v5432 = vunpack.c.l.b16 %v5193
      %v5433 = vunpack.c.l.b16 %v5203
      %v5434 = vunpack.c.l.b16 %v5217
      %v5435 = vunpack.c.l.b16 %v5227
      %v5436 = vunpack.c.l.b16 %v5241
      %v5437 = vunpack.c.l.b16 %v5251
      %v5438 = vunpack.c.l.b16 %v5265
      %v5439 = vunpack.c.l.b16 %v5275
      %v5440 = vunpack.c.l.b16 %v5289
      %v5441 = vunpack.c.l.b16 %v5299
      %v5442 = vunpack.c.l.b16 %v5313
      %v5443 = vunpack.c.l.b16 %v5323
      %v5444 = vunpack.c.l.b16 %v5337
      %v5445 = vunpack.c.l.b16 %v5347
      %v5446 = vunpack.c.l.b16 %v5361
      %v5447 = vunpack.c.l.b16 %v5371
      %v5448 = vunpack.c.l.b16 %v5385
      %v5449 = vunpack.c.l.b16 %v5395
      %v5450 = vunpack.c.l.b16 %v5409
      %v5451 = vunpack.c.l.b16 %v5419
      %v5452 = vpack.c.b16 %v5421, %v5420
      %v5453 = vpack.c.b16 %v5423, %v5422
      %v5454 = vpack.c.b16 %v5425, %v5424
      %v5455 = vpack.c.b16 %v5427, %v5426
      %v5456 = vpack.c.b16 %v5429, %v5428
      %v5457 = vpack.c.b16 %v5431, %v5430
      %v5458 = vpack.c.b16 %v5433, %v5432
      %v5459 = vpack.c.b16 %v5435, %v5434
      %v5460 = vpack.c.b16 %v5437, %v5436
      %v5461 = vpack.c.b16 %v5439, %v5438
      %v5462 = vpack.c.b16 %v5441, %v5440
      %v5463 = vpack.c.b16 %v5443, %v5442
      %v5464 = vpack.c.b16 %v5445, %v5444
      %v5465 = vpack.c.b16 %v5447, %v5446
      %v5466 = vpack.c.b16 %v5449, %v5448
      %v5467 = vpack.c.b16 %v5451, %v5450
      %5468 = vrot.lane.b32.xlu0 %v5452, 16
      %v5469 = vpop.permute.xlu0 %5468
      %5470 = vrot.lane.b32.xlu0 %v5453, 16
      %v5471 = vpop.permute.xlu0 %5470
      %5472 = vrot.lane.b32.xlu0 %v5454, 16
      %v5473 = vpop.permute.xlu0 %5472
      %5474 = vrot.lane.b32.xlu0 %v5455, 16
      %v5475 = vpop.permute.xlu0 %5474
      %5476 = vrot.lane.b32.xlu0 %v5456, 16
      %v5477 = vpop.permute.xlu0 %5476
      %5478 = vrot.lane.b32.xlu0 %v5457, 16
      %v5479 = vpop.permute.xlu0 %5478
      %5480 = vrot.lane.b32.xlu0 %v5458, 16
      %v5481 = vpop.permute.xlu0 %5480
      %5482 = vrot.lane.b32.xlu0 %v5459, 16
      %v5483 = vpop.permute.xlu0 %5482
      %5484 = vrot.lane.b32.xlu0 %v5460, 16
      %v5485 = vpop.permute.xlu0 %5484
      %5486 = vrot.lane.b32.xlu0 %v5461, 16
      %v5487 = vpop.permute.xlu0 %5486
      %5488 = vrot.lane.b32.xlu0 %v5462, 16
      %v5489 = vpop.permute.xlu0 %5488
      %5490 = vrot.lane.b32.xlu0 %v5463, 16
      %v5491 = vpop.permute.xlu0 %5490
      %5492 = vrot.lane.b32.xlu0 %v5464, 16
      %v5493 = vpop.permute.xlu0 %5492
      %5494 = vrot.lane.b32.xlu0 %v5465, 16
      %v5495 = vpop.permute.xlu0 %5494
      %5496 = vrot.lane.b32.xlu0 %v5466, 16
      %v5497 = vpop.permute.xlu0 %5496
      %5498 = vrot.lane.b32.xlu0 %v5467, 16
      %v5499 = vpop.permute.xlu0 %5498
      %vm5516 = vcmask 261248
      %5517 = vst.msk [vmem:[#allocation4] sm:$0xff] %vm5516, %v5469
      %5518 = vst.msk [vmem:[#allocation4 + $0x10] sm:$0xff] %vm5516, %v5471
      %5519 = vst.msk [vmem:[#allocation4 + $0x20] sm:$0xff] %vm5516, %v5473
      %5520 = vst.msk [vmem:[#allocation4 + $0x30] sm:$0xff] %vm5516, %v5475
      %5521 = vst.msk [vmem:[#allocation4 + $0x40] sm:$0xff] %vm5516, %v5477
      %5522 = vst.msk [vmem:[#allocation4 + $0x50] sm:$0xff] %vm5516, %v5479
      %5523 = vst.msk [vmem:[#allocation4 + $0x60] sm:$0xff] %vm5516, %v5481
      %5524 = vst.msk [vmem:[#allocation4 + $0x70] sm:$0xff] %vm5516, %v5483
      %5525 = vst.msk [vmem:[#allocation4 + $0x80] sm:$0xff] %vm5516, %v5485
      %5526 = vst.msk [vmem:[#allocation4 + $0x90] sm:$0xff] %vm5516, %v5487
      %5527 = vst.msk [vmem:[#allocation4 + $0xa0] sm:$0xff] %vm5516, %v5489
      %5528 = vst.msk [vmem:[#allocation4 + $0xb0] sm:$0xff] %vm5516, %v5491
      %5529 = vst.msk [vmem:[#allocation4 + $0xc0] sm:$0xff] %vm5516, %v5493
      %5530 = vst.msk [vmem:[#allocation4 + $0xd0] sm:$0xff] %vm5516, %v5495
      %5531 = vst.msk [vmem:[#allocation4 + $0xe0] sm:$0xff] %vm5516, %v5497
      %5532 = vst.msk [vmem:[#allocation4 + $0xf0] sm:$0xff] %vm5516, %v5499
      %v5533 = vld [vmem:[#allocation2] sm:$0xe]
      %v5534 = vld [vmem:[#allocation2 + $0x4] sm:$0xf]
      %v5535 = vld [vmem:[#allocation2 + $0x8] sm:$0x1]
      %v5536 = vld [vmem:[#allocation2 + $0xc] sm:$0xe]
      %v5537 = vld [vmem:[#allocation2 + $0x10] sm:$0xf]
      %v5538 = vld [vmem:[#allocation2 + $0x14] sm:$0x1]
      %v5539 = vld [vmem:[#allocation2 + $0x18] sm:$0xe]
      %v5540 = vld [vmem:[#allocation2 + $0x1c] sm:$0xf]
      %v5541 = vld [vmem:[#allocation2 + $0x20] sm:$0x1]
      %v5542 = vld [vmem:[#allocation2 + $0x24] sm:$0xe]
      %v5543 = vld [vmem:[#allocation2 + $0x28] sm:$0xf]
      %v5544 = vld [vmem:[#allocation2 + $0x2c] sm:$0x1]
      %v5545 = vld [vmem:[#allocation2 + $0x30] sm:$0xe]
      %v5546 = vld [vmem:[#allocation2 + $0x34] sm:$0xf]
      %v5547 = vld [vmem:[#allocation2 + $0x38] sm:$0x1]
      %v5548 = vld [vmem:[#allocation2 + $0x3c] sm:$0xe]
      %v5549 = vld [vmem:[#allocation2 + $0x40] sm:$0xf]
      %v5550 = vld [vmem:[#allocation2 + $0x44] sm:$0x1]
      %v5551 = vld [vmem:[#allocation2 + $0x48] sm:$0xe]
      %v5552 = vld [vmem:[#allocation2 + $0x4c] sm:$0xf]
      %v5553 = vld [vmem:[#allocation2 + $0x50] sm:$0x1]
      %v5554 = vld [vmem:[#allocation2 + $0x54] sm:$0xe]
      %v5555 = vld [vmem:[#allocation2 + $0x58] sm:$0xf]
      %v5556 = vld [vmem:[#allocation2 + $0x5c] sm:$0x1]
      %v5557 = vld [vmem:[#allocation2 + $0x60] sm:$0xe]
      %v5558 = vld [vmem:[#allocation2 + $0x64] sm:$0xf]
      %v5559 = vld [vmem:[#allocation2 + $0x68] sm:$0x1]
      %v5560 = vld [vmem:[#allocation2 + $0x6c] sm:$0xe]
      %v5561 = vld [vmem:[#allocation2 + $0x70] sm:$0xf]
      %v5562 = vld [vmem:[#allocation2 + $0x74] sm:$0x1]
      %v5563 = vld [vmem:[#allocation2 + $0x78] sm:$0xe]
      %v5564 = vld [vmem:[#allocation2 + $0x7c] sm:$0xf]
      %v5565 = vld [vmem:[#allocation2 + $0x80] sm:$0x1]
      %v5566 = vld [vmem:[#allocation2 + $0x84] sm:$0xe]
      %v5567 = vld [vmem:[#allocation2 + $0x88] sm:$0xf]
      %v5568 = vld [vmem:[#allocation2 + $0x8c] sm:$0x1]
      %v5569 = vld [vmem:[#allocation2 + $0x90] sm:$0xe]
      %v5570 = vld [vmem:[#allocation2 + $0x94] sm:$0xf]
      %v5571 = vld [vmem:[#allocation2 + $0x98] sm:$0x1]
      %v5572 = vld [vmem:[#allocation2 + $0x9c] sm:$0xe]
      %v5573 = vld [vmem:[#allocation2 + $0xa0] sm:$0xf]
      %v5574 = vld [vmem:[#allocation2 + $0xa4] sm:$0x1]
      %v5575 = vld [vmem:[#allocation2 + $0xa8] sm:$0xe]
      %v5576 = vld [vmem:[#allocation2 + $0xac] sm:$0xf]
      %v5577 = vld [vmem:[#allocation2 + $0xb0] sm:$0x1]
      %v5578 = vld [vmem:[#allocation2 + $0xb4] sm:$0xe]
      %v5579 = vld [vmem:[#allocation2 + $0xb8] sm:$0xf]
      %v5580 = vld [vmem:[#allocation2 + $0xbc] sm:$0x1]
      %v5629 = vrot.slane %v5533, 5
      %v5630 = vrot.slane %v5629, 4
      %v5631 = vrot.slane %v5534, 5
      %v5632 = vsel %vm1247, %v5630, %v5631
      %v5633 = vrot.slane %v5631, 4
      %v5634 = vrot.slane %v5535, 5
      %v5635 = vsel %vm1247, %v5633, %v5634
      %v5636 = vrot.slane %v5536, 5
      %v5637 = vrot.slane %v5636, 4
      %v5638 = vrot.slane %v5537, 5
      %v5639 = vsel %vm1247, %v5637, %v5638
      %v5640 = vrot.slane %v5638, 4
      %v5641 = vrot.slane %v5538, 5
      %v5642 = vsel %vm1247, %v5640, %v5641
      %v5643 = vrot.slane %v5539, 5
      %v5644 = vrot.slane %v5643, 4
      %v5645 = vrot.slane %v5540, 5
      %v5646 = vsel %vm1247, %v5644, %v5645
      %v5647 = vrot.slane %v5645, 4
      %v5648 = vrot.slane %v5541, 5
      %v5649 = vsel %vm1247, %v5647, %v5648
      %v5650 = vrot.slane %v5542, 5
      %v5651 = vrot.slane %v5650, 4
      %v5652 = vrot.slane %v5543, 5
      %v5653 = vsel %vm1247, %v5651, %v5652
      %v5654 = vrot.slane %v5652, 4
      %v5655 = vrot.slane %v5544, 5
      %v5656 = vsel %vm1247, %v5654, %v5655
      %v5657 = vrot.slane %v5545, 5
      %v5658 = vrot.slane %v5657, 4
      %v5659 = vrot.slane %v5546, 5
      %v5660 = vsel %vm1247, %v5658, %v5659
      %v5661 = vrot.slane %v5659, 4
      %v5662 = vrot.slane %v5547, 5
      %v5663 = vsel %vm1247, %v5661, %v5662
      %v5664 = vrot.slane %v5548, 5
      %v5665 = vrot.slane %v5664, 4
      %v5666 = vrot.slane %v5549, 5
      %v5667 = vsel %vm1247, %v5665, %v5666
      %v5668 = vrot.slane %v5666, 4
      %v5669 = vrot.slane %v5550, 5
      %v5670 = vsel %vm1247, %v5668, %v5669
      %v5671 = vrot.slane %v5551, 5
      %v5672 = vrot.slane %v5671, 4
      %v5673 = vrot.slane %v5552, 5
      %v5674 = vsel %vm1247, %v5672, %v5673
      %v5675 = vrot.slane %v5673, 4
      %v5676 = vrot.slane %v5553, 5
      %v5677 = vsel %vm1247, %v5675, %v5676
      %v5678 = vrot.slane %v5554, 5
      %v5679 = vrot.slane %v5678, 4
      %v5680 = vrot.slane %v5555, 5
      %v5681 = vsel %vm1247, %v5679, %v5680
      %v5682 = vrot.slane %v5680, 4
      %v5683 = vrot.slane %v5556, 5
      %v5684 = vsel %vm1247, %v5682, %v5683
      %v5685 = vrot.slane %v5557, 5
      %v5686 = vrot.slane %v5685, 4
      %v5687 = vrot.slane %v5558, 5
      %v5688 = vsel %vm1247, %v5686, %v5687
      %v5689 = vrot.slane %v5687, 4
      %v5690 = vrot.slane %v5559, 5
      %v5691 = vsel %vm1247, %v5689, %v5690
      %v5692 = vrot.slane %v5560, 5
      %v5693 = vrot.slane %v5692, 4
      %v5694 = vrot.slane %v5561, 5
      %v5695 = vsel %vm1247, %v5693, %v5694
      %v5696 = vrot.slane %v5694, 4
      %v5697 = vrot.slane %v5562, 5
      %v5698 = vsel %vm1247, %v5696, %v5697
      %v5699 = vrot.slane %v5563, 5
      %v5700 = vrot.slane %v5699, 4
      %v5701 = vrot.slane %v5564, 5
      %v5702 = vsel %vm1247, %v5700, %v5701
      %v5703 = vrot.slane %v5701, 4
      %v5704 = vrot.slane %v5565, 5
      %v5705 = vsel %vm1247, %v5703, %v5704
      %v5706 = vrot.slane %v5566, 5
      %v5707 = vrot.slane %v5706, 4
      %v5708 = vrot.slane %v5567, 5
      %v5709 = vsel %vm1247, %v5707, %v5708
      %v5710 = vrot.slane %v5708, 4
      %v5711 = vrot.slane %v5568, 5
      %v5712 = vsel %vm1247, %v5710, %v5711
      %v5713 = vrot.slane %v5569, 5
      %v5714 = vrot.slane %v5713, 4
      %v5715 = vrot.slane %v5570, 5
      %v5716 = vsel %vm1247, %v5714, %v5715
      %v5717 = vrot.slane %v5715, 4
      %v5718 = vrot.slane %v5571, 5
      %v5719 = vsel %vm1247, %v5717, %v5718
      %v5720 = vrot.slane %v5572, 5
      %v5721 = vrot.slane %v5720, 4
      %v5722 = vrot.slane %v5573, 5
      %v5723 = vsel %vm1247, %v5721, %v5722
      %v5724 = vrot.slane %v5722, 4
      %v5725 = vrot.slane %v5574, 5
      %v5726 = vsel %vm1247, %v5724, %v5725
      %v5727 = vrot.slane %v5575, 5
      %v5728 = vrot.slane %v5727, 4
      %v5729 = vrot.slane %v5576, 5
      %v5730 = vsel %vm1247, %v5728, %v5729
      %v5731 = vrot.slane %v5729, 4
      %v5732 = vrot.slane %v5577, 5
      %v5733 = vsel %vm1247, %v5731, %v5732
      %v5734 = vrot.slane %v5578, 5
      %v5735 = vrot.slane %v5734, 4
      %v5736 = vrot.slane %v5579, 5
      %v5737 = vsel %vm1247, %v5735, %v5736
      %v5738 = vrot.slane %v5736, 4
      %v5739 = vrot.slane %v5580, 5
      %v5740 = vsel %vm1247, %v5738, %v5739
      %v5741 = vunpack.c.l.b16 %v5632
      %v5742 = vunpack.c.l.b16 %v5635
      %v5743 = vunpack.c.l.b16 %v5639
      %v5744 = vunpack.c.l.b16 %v5642
      %v5745 = vunpack.c.l.b16 %v5646
      %v5746 = vunpack.c.l.b16 %v5649
      %v5747 = vunpack.c.l.b16 %v5653
      %v5748 = vunpack.c.l.b16 %v5656
      %v5749 = vunpack.c.l.b16 %v5660
      %v5750 = vunpack.c.l.b16 %v5663
      %v5751 = vunpack.c.l.b16 %v5667
      %v5752 = vunpack.c.l.b16 %v5670
      %v5753 = vunpack.c.l.b16 %v5674
      %v5754 = vunpack.c.l.b16 %v5677
      %v5755 = vunpack.c.l.b16 %v5681
      %v5756 = vunpack.c.l.b16 %v5684
      %v5757 = vunpack.c.l.b16 %v5688
      %v5758 = vunpack.c.l.b16 %v5691
      %v5759 = vunpack.c.l.b16 %v5695
      %v5760 = vunpack.c.l.b16 %v5698
      %v5761 = vunpack.c.l.b16 %v5702
      %v5762 = vunpack.c.l.b16 %v5705
      %v5763 = vunpack.c.l.b16 %v5709
      %v5764 = vunpack.c.l.b16 %v5712
      %v5765 = vunpack.c.l.b16 %v5716
      %v5766 = vunpack.c.l.b16 %v5719
      %v5767 = vunpack.c.l.b16 %v5723
      %v5768 = vunpack.c.l.b16 %v5726
      %v5769 = vunpack.c.l.b16 %v5730
      %v5770 = vunpack.c.l.b16 %v5733
      %v5771 = vunpack.c.l.b16 %v5737
      %v5772 = vunpack.c.l.b16 %v5740
      %v5773 = vpack.c.b16 %v5742, %v5741
      %v5774 = vpack.c.b16 %v5744, %v5743
      %v5775 = vpack.c.b16 %v5746, %v5745
      %v5776 = vpack.c.b16 %v5748, %v5747
      %v5777 = vpack.c.b16 %v5750, %v5749
      %v5778 = vpack.c.b16 %v5752, %v5751
      %v5779 = vpack.c.b16 %v5754, %v5753
      %v5780 = vpack.c.b16 %v5756, %v5755
      %v5781 = vpack.c.b16 %v5758, %v5757
      %v5782 = vpack.c.b16 %v5760, %v5759
      %v5783 = vpack.c.b16 %v5762, %v5761
      %v5784 = vpack.c.b16 %v5764, %v5763
      %v5785 = vpack.c.b16 %v5766, %v5765
      %v5786 = vpack.c.b16 %v5768, %v5767
      %v5787 = vpack.c.b16 %v5770, %v5769
      %v5788 = vpack.c.b16 %v5772, %v5771
      %5789 = vrot.lane.b32.xlu0 %v5773, 32
      %v5790 = vpop.permute.xlu0 %5789
      %5791 = vrot.lane.b32.xlu0 %v5774, 32
      %v5792 = vpop.permute.xlu0 %5791
      %5793 = vrot.lane.b32.xlu0 %v5775, 32
      %v5794 = vpop.permute.xlu0 %5793
      %5795 = vrot.lane.b32.xlu0 %v5776, 32
      %v5796 = vpop.permute.xlu0 %5795
      %5797 = vrot.lane.b32.xlu0 %v5777, 32
      %v5798 = vpop.permute.xlu0 %5797
      %5799 = vrot.lane.b32.xlu0 %v5778, 32
      %v5800 = vpop.permute.xlu0 %5799
      %5801 = vrot.lane.b32.xlu0 %v5779, 32
      %v5802 = vpop.permute.xlu0 %5801
      %5803 = vrot.lane.b32.xlu0 %v5780, 32
      %v5804 = vpop.permute.xlu0 %5803
      %5805 = vrot.lane.b32.xlu0 %v5781, 32
      %v5806 = vpop.permute.xlu0 %5805
      %5807 = vrot.lane.b32.xlu0 %v5782, 32
      %v5808 = vpop.permute.xlu0 %5807
      %5809 = vrot.lane.b32.xlu0 %v5783, 32
      %v5810 = vpop.permute.xlu0 %5809
      %5811 = vrot.lane.b32.xlu0 %v5784, 32
      %v5812 = vpop.permute.xlu0 %5811
      %5813 = vrot.lane.b32.xlu0 %v5785, 32
      %v5814 = vpop.permute.xlu0 %5813
      %5815 = vrot.lane.b32.xlu0 %v5786, 32
      %v5816 = vpop.permute.xlu0 %5815
      %5817 = vrot.lane.b32.xlu0 %v5787, 32
      %v5818 = vpop.permute.xlu0 %5817
      %5819 = vrot.lane.b32.xlu0 %v5788, 32
      %v5820 = vpop.permute.xlu0 %5819
      %vm5837 = vcmask 392448
      %5838 = vst.msk [vmem:[#allocation4] sm:$0xff] %vm5837, %v5790
      %5839 = vst.msk [vmem:[#allocation4 + $0x10] sm:$0xff] %vm5837, %v5792
      %5840 = vst.msk [vmem:[#allocation4 + $0x20] sm:$0xff] %vm5837, %v5794
      %5841 = vst.msk [vmem:[#allocation4 + $0x30] sm:$0xff] %vm5837, %v5796
      %5842 = vst.msk [vmem:[#allocation4 + $0x40] sm:$0xff] %vm5837, %v5798
      %5843 = vst.msk [vmem:[#allocation4 + $0x50] sm:$0xff] %vm5837, %v5800
      %5844 = vst.msk [vmem:[#allocation4 + $0x60] sm:$0xff] %vm5837, %v5802
      %5845 = vst.msk [vmem:[#allocation4 + $0x70] sm:$0xff] %vm5837, %v5804
      %5846 = vst.msk [vmem:[#allocation4 + $0x80] sm:$0xff] %vm5837, %v5806
      %5847 = vst.msk [vmem:[#allocation4 + $0x90] sm:$0xff] %vm5837, %v5808
      %5848 = vst.msk [vmem:[#allocation4 + $0xa0] sm:$0xff] %vm5837, %v5810
      %5849 = vst.msk [vmem:[#allocation4 + $0xb0] sm:$0xff] %vm5837, %v5812
      %5850 = vst.msk [vmem:[#allocation4 + $0xc0] sm:$0xff] %vm5837, %v5814
      %5851 = vst.msk [vmem:[#allocation4 + $0xd0] sm:$0xff] %vm5837, %v5816
      %5852 = vst.msk [vmem:[#allocation4 + $0xe0] sm:$0xff] %vm5837, %v5818
      %5853 = vst.msk [vmem:[#allocation4 + $0xf0] sm:$0xff] %vm5837, %v5820
      %v5854 = vld [vmem:[%s4729] sm:$0xf]
      %v5855 = vld [vmem:[%s4729 + $0x4] sm:$0xf]
      %v5856 = vld [vmem:[%s4729 + $0xc] sm:$0xf]
      %v5857 = vld [vmem:[%s4729 + $0x10] sm:$0xf]
      %v5858 = vld [vmem:[%s4729 + $0x18] sm:$0xf]
      %v5859 = vld [vmem:[%s4729 + $0x1c] sm:$0xf]
      %v5860 = vld [vmem:[%s4729 + $0x24] sm:$0xf]
      %v5861 = vld [vmem:[%s4729 + $0x28] sm:$0xf]
      %v5862 = vld [vmem:[%s4729 + $0x30] sm:$0xf]
      %v5863 = vld [vmem:[%s4729 + $0x34] sm:$0xf]
      %v5864 = vld [vmem:[%s4729 + $0x3c] sm:$0xf]
      %v5865 = vld [vmem:[%s4729 + $0x40] sm:$0xf]
      %v5866 = vld [vmem:[%s4729 + $0x48] sm:$0xf]
      %v5867 = vld [vmem:[%s4729 + $0x4c] sm:$0xf]
      %v5868 = vld [vmem:[%s4729 + $0x54] sm:$0xf]
      %v5869 = vld [vmem:[%s4729 + $0x58] sm:$0xf]
      %v5870 = vld [vmem:[%s4729 + $0x60] sm:$0xf]
      %v5871 = vld [vmem:[%s4729 + $0x64] sm:$0xf]
      %v5872 = vld [vmem:[%s4729 + $0x6c] sm:$0xf]
      %v5873 = vld [vmem:[%s4729 + $0x70] sm:$0xf]
      %v5874 = vld [vmem:[%s4729 + $0x78] sm:$0xf]
      %v5875 = vld [vmem:[%s4729 + $0x7c] sm:$0xf]
      %v5876 = vld [vmem:[%s4729 + $0x84] sm:$0xf]
      %v5877 = vld [vmem:[%s4729 + $0x88] sm:$0xf]
      %v5878 = vld [vmem:[%s4729 + $0x90] sm:$0xf]
      %v5879 = vld [vmem:[%s4729 + $0x94] sm:$0xf]
      %v5880 = vld [vmem:[%s4729 + $0x9c] sm:$0xf]
      %v5881 = vld [vmem:[%s4729 + $0xa0] sm:$0xf]
      %v5882 = vld [vmem:[%s4729 + $0xa8] sm:$0xf]
      %v5883 = vld [vmem:[%s4729 + $0xac] sm:$0xf]
      %v5884 = vld [vmem:[%s4729 + $0xb4] sm:$0xf]
      %v5885 = vld [vmem:[%s4729 + $0xb8] sm:$0xf]
      %v5918 = vunpack.c.l.b16 %v5854
      %v5919 = vunpack.c.l.b16 %v5855
      %v5920 = vunpack.c.l.b16 %v5856
      %v5921 = vunpack.c.l.b16 %v5857
      %v5922 = vunpack.c.l.b16 %v5858
      %v5923 = vunpack.c.l.b16 %v5859
      %v5924 = vunpack.c.l.b16 %v5860
      %v5925 = vunpack.c.l.b16 %v5861
      %v5926 = vunpack.c.l.b16 %v5862
      %v5927 = vunpack.c.l.b16 %v5863
      %v5928 = vunpack.c.l.b16 %v5864
      %v5929 = vunpack.c.l.b16 %v5865
      %v5930 = vunpack.c.l.b16 %v5866
      %v5931 = vunpack.c.l.b16 %v5867
      %v5932 = vunpack.c.l.b16 %v5868
      %v5933 = vunpack.c.l.b16 %v5869
      %v5934 = vunpack.c.l.b16 %v5870
      %v5935 = vunpack.c.l.b16 %v5871
      %v5936 = vunpack.c.l.b16 %v5872
      %v5937 = vunpack.c.l.b16 %v5873
      %v5938 = vunpack.c.l.b16 %v5874
      %v5939 = vunpack.c.l.b16 %v5875
      %v5940 = vunpack.c.l.b16 %v5876
      %v5941 = vunpack.c.l.b16 %v5877
      %v5942 = vunpack.c.l.b16 %v5878
      %v5943 = vunpack.c.l.b16 %v5879
      %v5944 = vunpack.c.l.b16 %v5880
      %v5945 = vunpack.c.l.b16 %v5881
      %v5946 = vunpack.c.l.b16 %v5882
      %v5947 = vunpack.c.l.b16 %v5883
      %v5948 = vunpack.c.l.b16 %v5884
      %v5949 = vunpack.c.l.b16 %v5885
      %v5950 = vpack.c.b16 %v5919, %v5918
      %v5951 = vpack.c.b16 %v5921, %v5920
      %v5952 = vpack.c.b16 %v5923, %v5922
      %v5953 = vpack.c.b16 %v5925, %v5924
      %v5954 = vpack.c.b16 %v5927, %v5926
      %v5955 = vpack.c.b16 %v5929, %v5928
      %v5956 = vpack.c.b16 %v5931, %v5930
      %v5957 = vpack.c.b16 %v5933, %v5932
      %v5958 = vpack.c.b16 %v5935, %v5934
      %v5959 = vpack.c.b16 %v5937, %v5936
      %v5960 = vpack.c.b16 %v5939, %v5938
      %v5961 = vpack.c.b16 %v5941, %v5940
      %v5962 = vpack.c.b16 %v5943, %v5942
      %v5963 = vpack.c.b16 %v5945, %v5944
      %v5964 = vpack.c.b16 %v5947, %v5946
      %v5965 = vpack.c.b16 %v5949, %v5948
      %5966 = vrot.lane.b32.xlu0 %v5950, 48
      %v5967 = vpop.permute.xlu0 %5966
      %5968 = vrot.lane.b32.xlu0 %v5951, 48
      %v5969 = vpop.permute.xlu0 %5968
      %5970 = vrot.lane.b32.xlu0 %v5952, 48
      %v5971 = vpop.permute.xlu0 %5970
      %5972 = vrot.lane.b32.xlu0 %v5953, 48
      %v5973 = vpop.permute.xlu0 %5972
      %5974 = vrot.lane.b32.xlu0 %v5954, 48
      %v5975 = vpop.permute.xlu0 %5974
      %5976 = vrot.lane.b32.xlu0 %v5955, 48
      %v5977 = vpop.permute.xlu0 %5976
      %5978 = vrot.lane.b32.xlu0 %v5956, 48
      %v5979 = vpop.permute.xlu0 %5978
      %5980 = vrot.lane.b32.xlu0 %v5957, 48
      %v5981 = vpop.permute.xlu0 %5980
      %5982 = vrot.lane.b32.xlu0 %v5958, 48
      %v5983 = vpop.permute.xlu0 %5982
      %5984 = vrot.lane.b32.xlu0 %v5959, 48
      %v5985 = vpop.permute.xlu0 %5984
      %5986 = vrot.lane.b32.xlu0 %v5960, 48
      %v5987 = vpop.permute.xlu0 %5986
      %5988 = vrot.lane.b32.xlu0 %v5961, 48
      %v5989 = vpop.permute.xlu0 %5988
      %5990 = vrot.lane.b32.xlu0 %v5962, 48
      %v5991 = vpop.permute.xlu0 %5990
      %5992 = vrot.lane.b32.xlu0 %v5963, 48
      %v5993 = vpop.permute.xlu0 %5992
      %5994 = vrot.lane.b32.xlu0 %v5964, 48
      %v5995 = vpop.permute.xlu0 %5994
      %5996 = vrot.lane.b32.xlu0 %v5965, 48
      %v5997 = vpop.permute.xlu0 %5996
      %vm6014 = vcmask 523648
      %6015 = vst.msk [vmem:[#allocation4] sm:$0xff] %vm6014, %v5967
      %6016 = vst.msk [vmem:[#allocation4 + $0x10] sm:$0xff] %vm6014, %v5969
      %6017 = vst.msk [vmem:[#allocation4 + $0x20] sm:$0xff] %vm6014, %v5971
      %6018 = vst.msk [vmem:[#allocation4 + $0x30] sm:$0xff] %vm6014, %v5973
      %6019 = vst.msk [vmem:[#allocation4 + $0x40] sm:$0xff] %vm6014, %v5975
      %6020 = vst.msk [vmem:[#allocation4 + $0x50] sm:$0xff] %vm6014, %v5977
      %6021 = vst.msk [vmem:[#allocation4 + $0x60] sm:$0xff] %vm6014, %v5979
      %6022 = vst.msk [vmem:[#allocation4 + $0x70] sm:$0xff] %vm6014, %v5981
      %6023 = vst.msk [vmem:[#allocation4 + $0x80] sm:$0xff] %vm6014, %v5983
      %6024 = vst.msk [vmem:[#allocation4 + $0x90] sm:$0xff] %vm6014, %v5985
      %6025 = vst.msk [vmem:[#allocation4 + $0xa0] sm:$0xff] %vm6014, %v5987
      %6026 = vst.msk [vmem:[#allocation4 + $0xb0] sm:$0xff] %vm6014, %v5989
      %6027 = vst.msk [vmem:[#allocation4 + $0xc0] sm:$0xff] %vm6014, %v5991
      %6028 = vst.msk [vmem:[#allocation4 + $0xd0] sm:$0xff] %vm6014, %v5993
      %6029 = vst.msk [vmem:[#allocation4 + $0xe0] sm:$0xff] %vm6014, %v5995
      %6030 = vst.msk [vmem:[#allocation4 + $0xf0] sm:$0xff] %vm6014, %v5997
      %v6031 = vld [vmem:[%s4729] sm:$0xf]
      %v6032 = vld [vmem:[%s4729 + $0x4] sm:$0xf]
      %v6033 = vld [vmem:[%s4729 + $0x8] sm:$0x1]
      %v6034 = vld [vmem:[%s4729 + $0xc] sm:$0xf]
      %v6035 = vld [vmem:[%s4729 + $0x10] sm:$0xf]
      %v6036 = vld [vmem:[%s4729 + $0x14] sm:$0x1]
      %v6037 = vld [vmem:[%s4729 + $0x18] sm:$0xf]
      %v6038 = vld [vmem:[%s4729 + $0x1c] sm:$0xf]
      %v6039 = vld [vmem:[%s4729 + $0x20] sm:$0x1]
      %v6040 = vld [vmem:[%s4729 + $0x24] sm:$0xf]
      %v6041 = vld [vmem:[%s4729 + $0x28] sm:$0xf]
      %v6042 = vld [vmem:[%s4729 + $0x2c] sm:$0x1]
      %v6043 = vld [vmem:[%s4729 + $0x30] sm:$0xf]
      %v6044 = vld [vmem:[%s4729 + $0x34] sm:$0xf]
      %v6045 = vld [vmem:[%s4729 + $0x38] sm:$0x1]
      %v6046 = vld [vmem:[%s4729 + $0x3c] sm:$0xf]
      %v6047 = vld [vmem:[%s4729 + $0x40] sm:$0xf]
      %v6048 = vld [vmem:[%s4729 + $0x44] sm:$0x1]
      %v6049 = vld [vmem:[%s4729 + $0x48] sm:$0xf]
      %v6050 = vld [vmem:[%s4729 + $0x4c] sm:$0xf]
      %v6051 = vld [vmem:[%s4729 + $0x50] sm:$0x1]
      %v6052 = vld [vmem:[%s4729 + $0x54] sm:$0xf]
      %v6053 = vld [vmem:[%s4729 + $0x58] sm:$0xf]
      %v6054 = vld [vmem:[%s4729 + $0x5c] sm:$0x1]
      %v6055 = vld [vmem:[%s4729 + $0x60] sm:$0xf]
      %v6056 = vld [vmem:[%s4729 + $0x64] sm:$0xf]
      %v6057 = vld [vmem:[%s4729 + $0x68] sm:$0x1]
      %v6058 = vld [vmem:[%s4729 + $0x6c] sm:$0xf]
      %v6059 = vld [vmem:[%s4729 + $0x70] sm:$0xf]
      %v6060 = vld [vmem:[%s4729 + $0x74] sm:$0x1]
      %v6061 = vld [vmem:[%s4729 + $0x78] sm:$0xf]
      %v6062 = vld [vmem:[%s4729 + $0x7c] sm:$0xf]
      %v6063 = vld [vmem:[%s4729 + $0x80] sm:$0x1]
      %v6064 = vld [vmem:[%s4729 + $0x84] sm:$0xf]
      %v6065 = vld [vmem:[%s4729 + $0x88] sm:$0xf]
      %v6066 = vld [vmem:[%s4729 + $0x8c] sm:$0x1]
      %v6067 = vld [vmem:[%s4729 + $0x90] sm:$0xf]
      %v6068 = vld [vmem:[%s4729 + $0x94] sm:$0xf]
      %v6069 = vld [vmem:[%s4729 + $0x98] sm:$0x1]
      %v6070 = vld [vmem:[%s4729 + $0x9c] sm:$0xf]
      %v6071 = vld [vmem:[%s4729 + $0xa0] sm:$0xf]
      %v6072 = vld [vmem:[%s4729 + $0xa4] sm:$0x1]
      %v6073 = vld [vmem:[%s4729 + $0xa8] sm:$0xf]
      %v6074 = vld [vmem:[%s4729 + $0xac] sm:$0xf]
      %v6075 = vld [vmem:[%s4729 + $0xb0] sm:$0x1]
      %v6076 = vld [vmem:[%s4729 + $0xb4] sm:$0xf]
      %v6077 = vld [vmem:[%s4729 + $0xb8] sm:$0xf]
      %v6078 = vld [vmem:[%s4729 + $0xbc] sm:$0x1]
      %v6080 = vshrl.u32 %v6031, 16
      %v6082 = vrot.slane %v6080, 4
      %v6083 = vshll.u32 %v6031, 16
      %v6085 = vrot.slane %v6083, 5
      %v6086 = vor.u32 %v6082, %v6085
      %v6087 = vrot.slane %v6086, 4
      %v6089 = vshll.u32 %v6032, 16
      %v6091 = vrot.slane %v6089, 5
      %v6092 = vsel %vm651, %v6087, %v6091
      %v6093 = vshrl.u32 %v6032, 16
      %v6095 = vrot.slane %v6093, 4
      %v6096 = vor.u32 %v6095, %v6091
      %v6097 = vrot.slane %v6096, 4
      %v6099 = vshll.u32 %v6033, 16
      %v6101 = vrot.slane %v6099, 5
      %v6102 = vsel %vm651, %v6097, %v6101
      %v6104 = vshrl.u32 %v6034, 16
      %v6106 = vrot.slane %v6104, 4
      %v6107 = vshll.u32 %v6034, 16
      %v6109 = vrot.slane %v6107, 5
      %v6110 = vor.u32 %v6106, %v6109
      %v6111 = vrot.slane %v6110, 4
      %v6113 = vshll.u32 %v6035, 16
      %v6115 = vrot.slane %v6113, 5
      %v6116 = vsel %vm651, %v6111, %v6115
      %v6117 = vshrl.u32 %v6035, 16
      %v6119 = vrot.slane %v6117, 4
      %v6120 = vor.u32 %v6119, %v6115
      %v6121 = vrot.slane %v6120, 4
      %v6123 = vshll.u32 %v6036, 16
      %v6125 = vrot.slane %v6123, 5
      %v6126 = vsel %vm651, %v6121, %v6125
      %v6128 = vshrl.u32 %v6037, 16
      %v6130 = vrot.slane %v6128, 4
      %v6131 = vshll.u32 %v6037, 16
      %v6133 = vrot.slane %v6131, 5
      %v6134 = vor.u32 %v6130, %v6133
      %v6135 = vrot.slane %v6134, 4
      %v6137 = vshll.u32 %v6038, 16
      %v6139 = vrot.slane %v6137, 5
      %v6140 = vsel %vm651, %v6135, %v6139
      %v6141 = vshrl.u32 %v6038, 16
      %v6143 = vrot.slane %v6141, 4
      %v6144 = vor.u32 %v6143, %v6139
      %v6145 = vrot.slane %v6144, 4
      %v6147 = vshll.u32 %v6039, 16
      %v6149 = vrot.slane %v6147, 5
      %v6150 = vsel %vm651, %v6145, %v6149
      %v6152 = vshrl.u32 %v6040, 16
      %v6154 = vrot.slane %v6152, 4
      %v6155 = vshll.u32 %v6040, 16
      %v6157 = vrot.slane %v6155, 5
      %v6158 = vor.u32 %v6154, %v6157
      %v6159 = vrot.slane %v6158, 4
      %v6161 = vshll.u32 %v6041, 16
      %v6163 = vrot.slane %v6161, 5
      %v6164 = vsel %vm651, %v6159, %v6163
      %v6165 = vshrl.u32 %v6041, 16
      %v6167 = vrot.slane %v6165, 4
      %v6168 = vor.u32 %v6167, %v6163
      %v6169 = vrot.slane %v6168, 4
      %v6171 = vshll.u32 %v6042, 16
      %v6173 = vrot.slane %v6171, 5
      %v6174 = vsel %vm651, %v6169, %v6173
      %v6176 = vshrl.u32 %v6043, 16
      %v6178 = vrot.slane %v6176, 4
      %v6179 = vshll.u32 %v6043, 16
      %v6181 = vrot.slane %v6179, 5
      %v6182 = vor.u32 %v6178, %v6181
      %v6183 = vrot.slane %v6182, 4
      %v6185 = vshll.u32 %v6044, 16
      %v6187 = vrot.slane %v6185, 5
      %v6188 = vsel %vm651, %v6183, %v6187
      %v6189 = vshrl.u32 %v6044, 16
      %v6191 = vrot.slane %v6189, 4
      %v6192 = vor.u32 %v6191, %v6187
      %v6193 = vrot.slane %v6192, 4
      %v6195 = vshll.u32 %v6045, 16
      %v6197 = vrot.slane %v6195, 5
      %v6198 = vsel %vm651, %v6193, %v6197
      %v6200 = vshrl.u32 %v6046, 16
      %v6202 = vrot.slane %v6200, 4
      %v6203 = vshll.u32 %v6046, 16
      %v6205 = vrot.slane %v6203, 5
      %v6206 = vor.u32 %v6202, %v6205
      %v6207 = vrot.slane %v6206, 4
      %v6209 = vshll.u32 %v6047, 16
      %v6211 = vrot.slane %v6209, 5
      %v6212 = vsel %vm651, %v6207, %v6211
      %v6213 = vshrl.u32 %v6047, 16
      %v6215 = vrot.slane %v6213, 4
      %v6216 = vor.u32 %v6215, %v6211
      %v6217 = vrot.slane %v6216, 4
      %v6219 = vshll.u32 %v6048, 16
      %v6221 = vrot.slane %v6219, 5
      %v6222 = vsel %vm651, %v6217, %v6221
      %v6224 = vshrl.u32 %v6049, 16
      %v6226 = vrot.slane %v6224, 4
      %v6227 = vshll.u32 %v6049, 16
      %v6229 = vrot.slane %v6227, 5
      %v6230 = vor.u32 %v6226, %v6229
      %v6231 = vrot.slane %v6230, 4
      %v6233 = vshll.u32 %v6050, 16
      %v6235 = vrot.slane %v6233, 5
      %v6236 = vsel %vm651, %v6231, %v6235
      %v6237 = vshrl.u32 %v6050, 16
      %v6239 = vrot.slane %v6237, 4
      %v6240 = vor.u32 %v6239, %v6235
      %v6241 = vrot.slane %v6240, 4
      %v6243 = vshll.u32 %v6051, 16
      %v6245 = vrot.slane %v6243, 5
      %v6246 = vsel %vm651, %v6241, %v6245
      %v6248 = vshrl.u32 %v6052, 16
      %v6250 = vrot.slane %v6248, 4
      %v6251 = vshll.u32 %v6052, 16
      %v6253 = vrot.slane %v6251, 5
      %v6254 = vor.u32 %v6250, %v6253
      %v6255 = vrot.slane %v6254, 4
      %v6257 = vshll.u32 %v6053, 16
      %v6259 = vrot.slane %v6257, 5
      %v6260 = vsel %vm651, %v6255, %v6259
      %v6261 = vshrl.u32 %v6053, 16
      %v6263 = vrot.slane %v6261, 4
      %v6264 = vor.u32 %v6263, %v6259
      %v6265 = vrot.slane %v6264, 4
      %v6267 = vshll.u32 %v6054, 16
      %v6269 = vrot.slane %v6267, 5
      %v6270 = vsel %vm651, %v6265, %v6269
      %v6272 = vshrl.u32 %v6055, 16
      %v6274 = vrot.slane %v6272, 4
      %v6275 = vshll.u32 %v6055, 16
      %v6277 = vrot.slane %v6275, 5
      %v6278 = vor.u32 %v6274, %v6277
      %v6279 = vrot.slane %v6278, 4
      %v6281 = vshll.u32 %v6056, 16
      %v6283 = vrot.slane %v6281, 5
      %v6284 = vsel %vm651, %v6279, %v6283
      %v6285 = vshrl.u32 %v6056, 16
      %v6287 = vrot.slane %v6285, 4
      %v6288 = vor.u32 %v6287, %v6283
      %v6289 = vrot.slane %v6288, 4
      %v6291 = vshll.u32 %v6057, 16
      %v6293 = vrot.slane %v6291, 5
      %v6294 = vsel %vm651, %v6289, %v6293
      %v6296 = vshrl.u32 %v6058, 16
      %v6298 = vrot.slane %v6296, 4
      %v6299 = vshll.u32 %v6058, 16
      %v6301 = vrot.slane %v6299, 5
      %v6302 = vor.u32 %v6298, %v6301
      %v6303 = vrot.slane %v6302, 4
      %v6305 = vshll.u32 %v6059, 16
      %v6307 = vrot.slane %v6305, 5
      %v6308 = vsel %vm651, %v6303, %v6307
      %v6309 = vshrl.u32 %v6059, 16
      %v6311 = vrot.slane %v6309, 4
      %v6312 = vor.u32 %v6311, %v6307
      %v6313 = vrot.slane %v6312, 4
      %v6315 = vshll.u32 %v6060, 16
      %v6317 = vrot.slane %v6315, 5
      %v6318 = vsel %vm651, %v6313, %v6317
      %v6320 = vshrl.u32 %v6061, 16
      %v6322 = vrot.slane %v6320, 4
      %v6323 = vshll.u32 %v6061, 16
      %v6325 = vrot.slane %v6323, 5
      %v6326 = vor.u32 %v6322, %v6325
      %v6327 = vrot.slane %v6326, 4
      %v6329 = vshll.u32 %v6062, 16
      %v6331 = vrot.slane %v6329, 5
      %v6332 = vsel %vm651, %v6327, %v6331
      %v6333 = vshrl.u32 %v6062, 16
      %v6335 = vrot.slane %v6333, 4
      %v6336 = vor.u32 %v6335, %v6331
      %v6337 = vrot.slane %v6336, 4
      %v6339 = vshll.u32 %v6063, 16
      %v6341 = vrot.slane %v6339, 5
      %v6342 = vsel %vm651, %v6337, %v6341
      %v6344 = vshrl.u32 %v6064, 16
      %v6346 = vrot.slane %v6344, 4
      %v6347 = vshll.u32 %v6064, 16
      %v6349 = vrot.slane %v6347, 5
      %v6350 = vor.u32 %v6346, %v6349
      %v6351 = vrot.slane %v6350, 4
      %v6353 = vshll.u32 %v6065, 16
      %v6355 = vrot.slane %v6353, 5
      %v6356 = vsel %vm651, %v6351, %v6355
      %v6357 = vshrl.u32 %v6065, 16
      %v6359 = vrot.slane %v6357, 4
      %v6360 = vor.u32 %v6359, %v6355
      %v6361 = vrot.slane %v6360, 4
      %v6363 = vshll.u32 %v6066, 16
      %v6365 = vrot.slane %v6363, 5
      %v6366 = vsel %vm651, %v6361, %v6365
      %v6368 = vshrl.u32 %v6067, 16
      %v6370 = vrot.slane %v6368, 4
      %v6371 = vshll.u32 %v6067, 16
      %v6373 = vrot.slane %v6371, 5
      %v6374 = vor.u32 %v6370, %v6373
      %v6375 = vrot.slane %v6374, 4
      %v6377 = vshll.u32 %v6068, 16
      %v6379 = vrot.slane %v6377, 5
      %v6380 = vsel %vm651, %v6375, %v6379
      %v6381 = vshrl.u32 %v6068, 16
      %v6383 = vrot.slane %v6381, 4
      %v6384 = vor.u32 %v6383, %v6379
      %v6385 = vrot.slane %v6384, 4
      %v6387 = vshll.u32 %v6069, 16
      %v6389 = vrot.slane %v6387, 5
      %v6390 = vsel %vm651, %v6385, %v6389
      %v6392 = vshrl.u32 %v6070, 16
      %v6394 = vrot.slane %v6392, 4
      %v6395 = vshll.u32 %v6070, 16
      %v6397 = vrot.slane %v6395, 5
      %v6398 = vor.u32 %v6394, %v6397
      %v6399 = vrot.slane %v6398, 4
      %v6401 = vshll.u32 %v6071, 16
      %v6403 = vrot.slane %v6401, 5
      %v6404 = vsel %vm651, %v6399, %v6403
      %v6405 = vshrl.u32 %v6071, 16
      %v6407 = vrot.slane %v6405, 4
      %v6408 = vor.u32 %v6407, %v6403
      %v6409 = vrot.slane %v6408, 4
      %v6411 = vshll.u32 %v6072, 16
      %v6413 = vrot.slane %v6411, 5
      %v6414 = vsel %vm651, %v6409, %v6413
      %v6416 = vshrl.u32 %v6073, 16
      %v6418 = vrot.slane %v6416, 4
      %v6419 = vshll.u32 %v6073, 16
      %v6421 = vrot.slane %v6419, 5
      %v6422 = vor.u32 %v6418, %v6421
      %v6423 = vrot.slane %v6422, 4
      %v6425 = vshll.u32 %v6074, 16
      %v6427 = vrot.slane %v6425, 5
      %v6428 = vsel %vm651, %v6423, %v6427
      %v6429 = vshrl.u32 %v6074, 16
      %v6431 = vrot.slane %v6429, 4
      %v6432 = vor.u32 %v6431, %v6427
      %v6433 = vrot.slane %v6432, 4
      %v6435 = vshll.u32 %v6075, 16
      %v6437 = vrot.slane %v6435, 5
      %v6438 = vsel %vm651, %v6433, %v6437
      %v6440 = vshrl.u32 %v6076, 16
      %v6442 = vrot.slane %v6440, 4
      %v6443 = vshll.u32 %v6076, 16
      %v6445 = vrot.slane %v6443, 5
      %v6446 = vor.u32 %v6442, %v6445
      %v6447 = vrot.slane %v6446, 4
      %v6449 = vshll.u32 %v6077, 16
      %v6451 = vrot.slane %v6449, 5
      %v6452 = vsel %vm651, %v6447, %v6451
      %v6453 = vshrl.u32 %v6077, 16
      %v6455 = vrot.slane %v6453, 4
      %v6456 = vor.u32 %v6455, %v6451
      %v6457 = vrot.slane %v6456, 4
      %v6459 = vshll.u32 %v6078, 16
      %v6461 = vrot.slane %v6459, 5
      %v6462 = vsel %vm651, %v6457, %v6461
      %v6463 = vunpack.c.l.b16 %v6092
      %v6464 = vunpack.c.l.b16 %v6102
      %v6465 = vunpack.c.l.b16 %v6116
      %v6466 = vunpack.c.l.b16 %v6126
      %v6467 = vunpack.c.l.b16 %v6140
      %v6468 = vunpack.c.l.b16 %v6150
      %v6469 = vunpack.c.l.b16 %v6164
      %v6470 = vunpack.c.l.b16 %v6174
      %v6471 = vunpack.c.l.b16 %v6188
      %v6472 = vunpack.c.l.b16 %v6198
      %v6473 = vunpack.c.l.b16 %v6212
      %v6474 = vunpack.c.l.b16 %v6222
      %v6475 = vunpack.c.l.b16 %v6236
      %v6476 = vunpack.c.l.b16 %v6246
      %v6477 = vunpack.c.l.b16 %v6260
      %v6478 = vunpack.c.l.b16 %v6270
      %v6479 = vunpack.c.l.b16 %v6284
      %v6480 = vunpack.c.l.b16 %v6294
      %v6481 = vunpack.c.l.b16 %v6308
      %v6482 = vunpack.c.l.b16 %v6318
      %v6483 = vunpack.c.l.b16 %v6332
      %v6484 = vunpack.c.l.b16 %v6342
      %v6485 = vunpack.c.l.b16 %v6356
      %v6486 = vunpack.c.l.b16 %v6366
      %v6487 = vunpack.c.l.b16 %v6380
      %v6488 = vunpack.c.l.b16 %v6390
      %v6489 = vunpack.c.l.b16 %v6404
      %v6490 = vunpack.c.l.b16 %v6414
      %v6491 = vunpack.c.l.b16 %v6428
      %v6492 = vunpack.c.l.b16 %v6438
      %v6493 = vunpack.c.l.b16 %v6452
      %v6494 = vunpack.c.l.b16 %v6462
      %v6495 = vpack.c.b16 %v6464, %v6463
      %v6496 = vpack.c.b16 %v6466, %v6465
      %v6497 = vpack.c.b16 %v6468, %v6467
      %v6498 = vpack.c.b16 %v6470, %v6469
      %v6499 = vpack.c.b16 %v6472, %v6471
      %v6500 = vpack.c.b16 %v6474, %v6473
      %v6501 = vpack.c.b16 %v6476, %v6475
      %v6502 = vpack.c.b16 %v6478, %v6477
      %v6503 = vpack.c.b16 %v6480, %v6479
      %v6504 = vpack.c.b16 %v6482, %v6481
      %v6505 = vpack.c.b16 %v6484, %v6483
      %v6506 = vpack.c.b16 %v6486, %v6485
      %v6507 = vpack.c.b16 %v6488, %v6487
      %v6508 = vpack.c.b16 %v6490, %v6489
      %v6509 = vpack.c.b16 %v6492, %v6491
      %v6510 = vpack.c.b16 %v6494, %v6493
      %6511 = vrot.lane.b32.xlu0 %v6495, 64
      %v6512 = vpop.permute.xlu0 %6511
      %6513 = vrot.lane.b32.xlu0 %v6496, 64
      %v6514 = vpop.permute.xlu0 %6513
      %6515 = vrot.lane.b32.xlu0 %v6497, 64
      %v6516 = vpop.permute.xlu0 %6515
      %6517 = vrot.lane.b32.xlu0 %v6498, 64
      %v6518 = vpop.permute.xlu0 %6517
      %6519 = vrot.lane.b32.xlu0 %v6499, 64
      %v6520 = vpop.permute.xlu0 %6519
      %6521 = vrot.lane.b32.xlu0 %v6500, 64
      %v6522 = vpop.permute.xlu0 %6521
      %6523 = vrot.lane.b32.xlu0 %v6501, 64
      %v6524 = vpop.permute.xlu0 %6523
      %6525 = vrot.lane.b32.xlu0 %v6502, 64
      %v6526 = vpop.permute.xlu0 %6525
      %6527 = vrot.lane.b32.xlu0 %v6503, 64
      %v6528 = vpop.permute.xlu0 %6527
      %6529 = vrot.lane.b32.xlu0 %v6504, 64
      %v6530 = vpop.permute.xlu0 %6529
      %6531 = vrot.lane.b32.xlu0 %v6505, 64
      %v6532 = vpop.permute.xlu0 %6531
      %6533 = vrot.lane.b32.xlu0 %v6506, 64
      %v6534 = vpop.permute.xlu0 %6533
      %6535 = vrot.lane.b32.xlu0 %v6507, 64
      %v6536 = vpop.permute.xlu0 %6535
      %6537 = vrot.lane.b32.xlu0 %v6508, 64
      %v6538 = vpop.permute.xlu0 %6537
      %6539 = vrot.lane.b32.xlu0 %v6509, 64
      %v6540 = vpop.permute.xlu0 %6539
      %6541 = vrot.lane.b32.xlu0 %v6510, 64
      %v6542 = vpop.permute.xlu0 %6541
      %vm6559 = vcmask 654848
      %6560 = vst.msk [vmem:[#allocation4] sm:$0xff] %vm6559, %v6512
      %6561 = vst.msk [vmem:[#allocation4 + $0x10] sm:$0xff] %vm6559, %v6514
      %6562 = vst.msk [vmem:[#allocation4 + $0x20] sm:$0xff] %vm6559, %v6516
      %6563 = vst.msk [vmem:[#allocation4 + $0x30] sm:$0xff] %vm6559, %v6518
      %6564 = vst.msk [vmem:[#allocation4 + $0x40] sm:$0xff] %vm6559, %v6520
      %6565 = vst.msk [vmem:[#allocation4 + $0x50] sm:$0xff] %vm6559, %v6522
      %6566 = vst.msk [vmem:[#allocation4 + $0x60] sm:$0xff] %vm6559, %v6524
      %6567 = vst.msk [vmem:[#allocation4 + $0x70] sm:$0xff] %vm6559, %v6526
      %6568 = vst.msk [vmem:[#allocation4 + $0x80] sm:$0xff] %vm6559, %v6528
      %6569 = vst.msk [vmem:[#allocation4 + $0x90] sm:$0xff] %vm6559, %v6530
      %6570 = vst.msk [vmem:[#allocation4 + $0xa0] sm:$0xff] %vm6559, %v6532
      %6571 = vst.msk [vmem:[#allocation4 + $0xb0] sm:$0xff] %vm6559, %v6534
      %6572 = vst.msk [vmem:[#allocation4 + $0xc0] sm:$0xff] %vm6559, %v6536
      %6573 = vst.msk [vmem:[#allocation4 + $0xd0] sm:$0xff] %vm6559, %v6538
      %6574 = vst.msk [vmem:[#allocation4 + $0xe0] sm:$0xff] %vm6559, %v6540
      %6575 = vst.msk [vmem:[#allocation4 + $0xf0] sm:$0xff] %vm6559, %v6542
      %v6576 = vld [vmem:[%s4729] sm:$0xe]
      %v6577 = vld [vmem:[%s4729 + $0x4] sm:$0xf]
      %v6578 = vld [vmem:[%s4729 + $0x8] sm:$0x1]
      %v6579 = vld [vmem:[%s4729 + $0xc] sm:$0xe]
      %v6580 = vld [vmem:[%s4729 + $0x10] sm:$0xf]
      %v6581 = vld [vmem:[%s4729 + $0x14] sm:$0x1]
      %v6582 = vld [vmem:[%s4729 + $0x18] sm:$0xe]
      %v6583 = vld [vmem:[%s4729 + $0x1c] sm:$0xf]
      %v6584 = vld [vmem:[%s4729 + $0x20] sm:$0x1]
      %v6585 = vld [vmem:[%s4729 + $0x24] sm:$0xe]
      %v6586 = vld [vmem:[%s4729 + $0x28] sm:$0xf]
      %v6587 = vld [vmem:[%s4729 + $0x2c] sm:$0x1]
      %v6588 = vld [vmem:[%s4729 + $0x30] sm:$0xe]
      %v6589 = vld [vmem:[%s4729 + $0x34] sm:$0xf]
      %v6590 = vld [vmem:[%s4729 + $0x38] sm:$0x1]
      %v6591 = vld [vmem:[%s4729 + $0x3c] sm:$0xe]
      %v6592 = vld [vmem:[%s4729 + $0x40] sm:$0xf]
      %v6593 = vld [vmem:[%s4729 + $0x44] sm:$0x1]
      %v6594 = vld [vmem:[%s4729 + $0x48] sm:$0xe]
      %v6595 = vld [vmem:[%s4729 + $0x4c] sm:$0xf]
      %v6596 = vld [vmem:[%s4729 + $0x50] sm:$0x1]
      %v6597 = vld [vmem:[%s4729 + $0x54] sm:$0xe]
      %v6598 = vld [vmem:[%s4729 + $0x58] sm:$0xf]
      %v6599 = vld [vmem:[%s4729 + $0x5c] sm:$0x1]
      %v6600 = vld [vmem:[%s4729 + $0x60] sm:$0xe]
      %v6601 = vld [vmem:[%s4729 + $0x64] sm:$0xf]
      %v6602 = vld [vmem:[%s4729 + $0x68] sm:$0x1]
      %v6603 = vld [vmem:[%s4729 + $0x6c] sm:$0xe]
      %v6604 = vld [vmem:[%s4729 + $0x70] sm:$0xf]
      %v6605 = vld [vmem:[%s4729 + $0x74] sm:$0x1]
      %v6606 = vld [vmem:[%s4729 + $0x78] sm:$0xe]
      %v6607 = vld [vmem:[%s4729 + $0x7c] sm:$0xf]
      %v6608 = vld [vmem:[%s4729 + $0x80] sm:$0x1]
      %v6609 = vld [vmem:[%s4729 + $0x84] sm:$0xe]
      %v6610 = vld [vmem:[%s4729 + $0x88] sm:$0xf]
      %v6611 = vld [vmem:[%s4729 + $0x8c] sm:$0x1]
      %v6612 = vld [vmem:[%s4729 + $0x90] sm:$0xe]
      %v6613 = vld [vmem:[%s4729 + $0x94] sm:$0xf]
      %v6614 = vld [vmem:[%s4729 + $0x98] sm:$0x1]
      %v6615 = vld [vmem:[%s4729 + $0x9c] sm:$0xe]
      %v6616 = vld [vmem:[%s4729 + $0xa0] sm:$0xf]
      %v6617 = vld [vmem:[%s4729 + $0xa4] sm:$0x1]
      %v6618 = vld [vmem:[%s4729 + $0xa8] sm:$0xe]
      %v6619 = vld [vmem:[%s4729 + $0xac] sm:$0xf]
      %v6620 = vld [vmem:[%s4729 + $0xb0] sm:$0x1]
      %v6621 = vld [vmem:[%s4729 + $0xb4] sm:$0xe]
      %v6622 = vld [vmem:[%s4729 + $0xb8] sm:$0xf]
      %v6623 = vld [vmem:[%s4729 + $0xbc] sm:$0x1]
      %v6672 = vrot.slane %v6576, 5
      %v6673 = vrot.slane %v6672, 4
      %v6674 = vrot.slane %v6577, 5
      %v6675 = vsel %vm1247, %v6673, %v6674
      %v6676 = vrot.slane %v6674, 4
      %v6677 = vrot.slane %v6578, 5
      %v6678 = vsel %vm1247, %v6676, %v6677
      %v6679 = vrot.slane %v6579, 5
      %v6680 = vrot.slane %v6679, 4
      %v6681 = vrot.slane %v6580, 5
      %v6682 = vsel %vm1247, %v6680, %v6681
      %v6683 = vrot.slane %v6681, 4
      %v6684 = vrot.slane %v6581, 5
      %v6685 = vsel %vm1247, %v6683, %v6684
      %v6686 = vrot.slane %v6582, 5
      %v6687 = vrot.slane %v6686, 4
      %v6688 = vrot.slane %v6583, 5
      %v6689 = vsel %vm1247, %v6687, %v6688
      %v6690 = vrot.slane %v6688, 4
      %v6691 = vrot.slane %v6584, 5
      %v6692 = vsel %vm1247, %v6690, %v6691
      %v6693 = vrot.slane %v6585, 5
      %v6694 = vrot.slane %v6693, 4
      %v6695 = vrot.slane %v6586, 5
      %v6696 = vsel %vm1247, %v6694, %v6695
      %v6697 = vrot.slane %v6695, 4
      %v6698 = vrot.slane %v6587, 5
      %v6699 = vsel %vm1247, %v6697, %v6698
      %v6700 = vrot.slane %v6588, 5
      %v6701 = vrot.slane %v6700, 4
      %v6702 = vrot.slane %v6589, 5
      %v6703 = vsel %vm1247, %v6701, %v6702
      %v6704 = vrot.slane %v6702, 4
      %v6705 = vrot.slane %v6590, 5
      %v6706 = vsel %vm1247, %v6704, %v6705
      %v6707 = vrot.slane %v6591, 5
      %v6708 = vrot.slane %v6707, 4
      %v6709 = vrot.slane %v6592, 5
      %v6710 = vsel %vm1247, %v6708, %v6709
      %v6711 = vrot.slane %v6709, 4
      %v6712 = vrot.slane %v6593, 5
      %v6713 = vsel %vm1247, %v6711, %v6712
      %v6714 = vrot.slane %v6594, 5
      %v6715 = vrot.slane %v6714, 4
      %v6716 = vrot.slane %v6595, 5
      %v6717 = vsel %vm1247, %v6715, %v6716
      %v6718 = vrot.slane %v6716, 4
      %v6719 = vrot.slane %v6596, 5
      %v6720 = vsel %vm1247, %v6718, %v6719
      %v6721 = vrot.slane %v6597, 5
      %v6722 = vrot.slane %v6721, 4
      %v6723 = vrot.slane %v6598, 5
      %v6724 = vsel %vm1247, %v6722, %v6723
      %v6725 = vrot.slane %v6723, 4
      %v6726 = vrot.slane %v6599, 5
      %v6727 = vsel %vm1247, %v6725, %v6726
      %v6728 = vrot.slane %v6600, 5
      %v6729 = vrot.slane %v6728, 4
      %v6730 = vrot.slane %v6601, 5
      %v6731 = vsel %vm1247, %v6729, %v6730
      %v6732 = vrot.slane %v6730, 4
      %v6733 = vrot.slane %v6602, 5
      %v6734 = vsel %vm1247, %v6732, %v6733
      %v6735 = vrot.slane %v6603, 5
      %v6736 = vrot.slane %v6735, 4
      %v6737 = vrot.slane %v6604, 5
      %v6738 = vsel %vm1247, %v6736, %v6737
      %v6739 = vrot.slane %v6737, 4
      %v6740 = vrot.slane %v6605, 5
      %v6741 = vsel %vm1247, %v6739, %v6740
      %v6742 = vrot.slane %v6606, 5
      %v6743 = vrot.slane %v6742, 4
      %v6744 = vrot.slane %v6607, 5
      %v6745 = vsel %vm1247, %v6743, %v6744
      %v6746 = vrot.slane %v6744, 4
      %v6747 = vrot.slane %v6608, 5
      %v6748 = vsel %vm1247, %v6746, %v6747
      %v6749 = vrot.slane %v6609, 5
      %v6750 = vrot.slane %v6749, 4
      %v6751 = vrot.slane %v6610, 5
      %v6752 = vsel %vm1247, %v6750, %v6751
      %v6753 = vrot.slane %v6751, 4
      %v6754 = vrot.slane %v6611, 5
      %v6755 = vsel %vm1247, %v6753, %v6754
      %v6756 = vrot.slane %v6612, 5
      %v6757 = vrot.slane %v6756, 4
      %v6758 = vrot.slane %v6613, 5
      %v6759 = vsel %vm1247, %v6757, %v6758
      %v6760 = vrot.slane %v6758, 4
      %v6761 = vrot.slane %v6614, 5
      %v6762 = vsel %vm1247, %v6760, %v6761
      %v6763 = vrot.slane %v6615, 5
      %v6764 = vrot.slane %v6763, 4
      %v6765 = vrot.slane %v6616, 5
      %v6766 = vsel %vm1247, %v6764, %v6765
      %v6767 = vrot.slane %v6765, 4
      %v6768 = vrot.slane %v6617, 5
      %v6769 = vsel %vm1247, %v6767, %v6768
      %v6770 = vrot.slane %v6618, 5
      %v6771 = vrot.slane %v6770, 4
      %v6772 = vrot.slane %v6619, 5
      %v6773 = vsel %vm1247, %v6771, %v6772
      %v6774 = vrot.slane %v6772, 4
      %v6775 = vrot.slane %v6620, 5
      %v6776 = vsel %vm1247, %v6774, %v6775
      %v6777 = vrot.slane %v6621, 5
      %v6778 = vrot.slane %v6777, 4
      %v6779 = vrot.slane %v6622, 5
      %v6780 = vsel %vm1247, %v6778, %v6779
      %v6781 = vrot.slane %v6779, 4
      %v6782 = vrot.slane %v6623, 5
      %v6783 = vsel %vm1247, %v6781, %v6782
      %v6784 = vunpack.c.l.b16 %v6675
      %v6785 = vunpack.c.l.b16 %v6678
      %v6786 = vunpack.c.l.b16 %v6682
      %v6787 = vunpack.c.l.b16 %v6685
      %v6788 = vunpack.c.l.b16 %v6689
      %v6789 = vunpack.c.l.b16 %v6692
      %v6790 = vunpack.c.l.b16 %v6696
      %v6791 = vunpack.c.l.b16 %v6699
      %v6792 = vunpack.c.l.b16 %v6703
      %v6793 = vunpack.c.l.b16 %v6706
      %v6794 = vunpack.c.l.b16 %v6710
      %v6795 = vunpack.c.l.b16 %v6713
      %v6796 = vunpack.c.l.b16 %v6717
      %v6797 = vunpack.c.l.b16 %v6720
      %v6798 = vunpack.c.l.b16 %v6724
      %v6799 = vunpack.c.l.b16 %v6727
      %v6800 = vunpack.c.l.b16 %v6731
      %v6801 = vunpack.c.l.b16 %v6734
      %v6802 = vunpack.c.l.b16 %v6738
      %v6803 = vunpack.c.l.b16 %v6741
      %v6804 = vunpack.c.l.b16 %v6745
      %v6805 = vunpack.c.l.b16 %v6748
      %v6806 = vunpack.c.l.b16 %v6752
      %v6807 = vunpack.c.l.b16 %v6755
      %v6808 = vunpack.c.l.b16 %v6759
      %v6809 = vunpack.c.l.b16 %v6762
      %v6810 = vunpack.c.l.b16 %v6766
      %v6811 = vunpack.c.l.b16 %v6769
      %v6812 = vunpack.c.l.b16 %v6773
      %v6813 = vunpack.c.l.b16 %v6776
      %v6814 = vunpack.c.l.b16 %v6780
      %v6815 = vunpack.c.l.b16 %v6783
      %v6816 = vpack.c.b16 %v6785, %v6784
      %v6817 = vpack.c.b16 %v6787, %v6786
      %v6818 = vpack.c.b16 %v6789, %v6788
      %v6819 = vpack.c.b16 %v6791, %v6790
      %v6820 = vpack.c.b16 %v6793, %v6792
      %v6821 = vpack.c.b16 %v6795, %v6794
      %v6822 = vpack.c.b16 %v6797, %v6796
      %v6823 = vpack.c.b16 %v6799, %v6798
      %v6824 = vpack.c.b16 %v6801, %v6800
      %v6825 = vpack.c.b16 %v6803, %v6802
      %v6826 = vpack.c.b16 %v6805, %v6804
      %v6827 = vpack.c.b16 %v6807, %v6806
      %v6828 = vpack.c.b16 %v6809, %v6808
      %v6829 = vpack.c.b16 %v6811, %v6810
      %v6830 = vpack.c.b16 %v6813, %v6812
      %v6831 = vpack.c.b16 %v6815, %v6814
      %6832 = vrot.lane.b32.xlu0 %v6816, 80
      %v6833 = vpop.permute.xlu0 %6832
      %6834 = vrot.lane.b32.xlu0 %v6817, 80
      %v6835 = vpop.permute.xlu0 %6834
      %6836 = vrot.lane.b32.xlu0 %v6818, 80
      %v6837 = vpop.permute.xlu0 %6836
      %6838 = vrot.lane.b32.xlu0 %v6819, 80
      %v6839 = vpop.permute.xlu0 %6838
      %6840 = vrot.lane.b32.xlu0 %v6820, 80
      %v6841 = vpop.permute.xlu0 %6840
      %6842 = vrot.lane.b32.xlu0 %v6821, 80
      %v6843 = vpop.permute.xlu0 %6842
      %6844 = vrot.lane.b32.xlu0 %v6822, 80
      %v6845 = vpop.permute.xlu0 %6844
      %6846 = vrot.lane.b32.xlu0 %v6823, 80
      %v6847 = vpop.permute.xlu0 %6846
      %6848 = vrot.lane.b32.xlu0 %v6824, 80
      %v6849 = vpop.permute.xlu0 %6848
      %6850 = vrot.lane.b32.xlu0 %v6825, 80
      %v6851 = vpop.permute.xlu0 %6850
      %6852 = vrot.lane.b32.xlu0 %v6826, 80
      %v6853 = vpop.permute.xlu0 %6852
      %6854 = vrot.lane.b32.xlu0 %v6827, 80
      %v6855 = vpop.permute.xlu0 %6854
      %6856 = vrot.lane.b32.xlu0 %v6828, 80
      %v6857 = vpop.permute.xlu0 %6856
      %6858 = vrot.lane.b32.xlu0 %v6829, 80
      %v6859 = vpop.permute.xlu0 %6858
      %6860 = vrot.lane.b32.xlu0 %v6830, 80
      %v6861 = vpop.permute.xlu0 %6860
      %6862 = vrot.lane.b32.xlu0 %v6831, 80
      %v6863 = vpop.permute.xlu0 %6862
      %vm6880 = vcmask 786048
      %6881 = vst.msk [vmem:[#allocation4] sm:$0xff] %vm6880, %v6833
      %6882 = vst.msk [vmem:[#allocation4 + $0x10] sm:$0xff] %vm6880, %v6835
      %6883 = vst.msk [vmem:[#allocation4 + $0x20] sm:$0xff] %vm6880, %v6837
      %6884 = vst.msk [vmem:[#allocation4 + $0x30] sm:$0xff] %vm6880, %v6839
      %6885 = vst.msk [vmem:[#allocation4 + $0x40] sm:$0xff] %vm6880, %v6841
      %6886 = vst.msk [vmem:[#allocation4 + $0x50] sm:$0xff] %vm6880, %v6843
      %6887 = vst.msk [vmem:[#allocation4 + $0x60] sm:$0xff] %vm6880, %v6845
      %6888 = vst.msk [vmem:[#allocation4 + $0x70] sm:$0xff] %vm6880, %v6847
      %6889 = vst.msk [vmem:[#allocation4 + $0x80] sm:$0xff] %vm6880, %v6849
      %6890 = vst.msk [vmem:[#allocation4 + $0x90] sm:$0xff] %vm6880, %v6851
      %6891 = vst.msk [vmem:[#allocation4 + $0xa0] sm:$0xff] %vm6880, %v6853
      %6892 = vst.msk [vmem:[#allocation4 + $0xb0] sm:$0xff] %vm6880, %v6855
      %6893 = vst.msk [vmem:[#allocation4 + $0xc0] sm:$0xff] %vm6880, %v6857
      %6894 = vst.msk [vmem:[#allocation4 + $0xd0] sm:$0xff] %vm6880, %v6859
      %6895 = vst.msk [vmem:[#allocation4 + $0xe0] sm:$0xff] %vm6880, %v6861
      %6896 = vst.msk [vmem:[#allocation4 + $0xf0] sm:$0xff] %vm6880, %v6863
      %s6897 = scalar_lea.vmem [#allocation2], 24
      %v6898 = vld [vmem:[%s6897] sm:$0xf]
      %v6899 = vld [vmem:[%s6897 + $0x4] sm:$0xf]
      %v6900 = vld [vmem:[%s6897 + $0xc] sm:$0xf]
      %v6901 = vld [vmem:[%s6897 + $0x10] sm:$0xf]
      %v6902 = vld [vmem:[%s6897 + $0x18] sm:$0xf]
      %v6903 = vld [vmem:[%s6897 + $0x1c] sm:$0xf]
      %v6904 = vld [vmem:[%s6897 + $0x24] sm:$0xf]
      %v6905 = vld [vmem:[%s6897 + $0x28] sm:$0xf]
      %v6906 = vld [vmem:[%s6897 + $0x30] sm:$0xf]
      %v6907 = vld [vmem:[%s6897 + $0x34] sm:$0xf]
      %v6908 = vld [vmem:[%s6897 + $0x3c] sm:$0xf]
      %v6909 = vld [vmem:[%s6897 + $0x40] sm:$0xf]
      %v6910 = vld [vmem:[%s6897 + $0x48] sm:$0xf]
      %v6911 = vld [vmem:[%s6897 + $0x4c] sm:$0xf]
      %v6912 = vld [vmem:[%s6897 + $0x54] sm:$0xf]
      %v6913 = vld [vmem:[%s6897 + $0x58] sm:$0xf]
      %v6914 = vld [vmem:[%s6897 + $0x60] sm:$0xf]
      %v6915 = vld [vmem:[%s6897 + $0x64] sm:$0xf]
      %v6916 = vld [vmem:[%s6897 + $0x6c] sm:$0xf]
      %v6917 = vld [vmem:[%s6897 + $0x70] sm:$0xf]
      %v6918 = vld [vmem:[%s6897 + $0x78] sm:$0xf]
      %v6919 = vld [vmem:[%s6897 + $0x7c] sm:$0xf]
      %v6920 = vld [vmem:[%s6897 + $0x84] sm:$0xf]
      %v6921 = vld [vmem:[%s6897 + $0x88] sm:$0xf]
      %v6922 = vld [vmem:[%s6897 + $0x90] sm:$0xf]
      %v6923 = vld [vmem:[%s6897 + $0x94] sm:$0xf]
      %v6924 = vld [vmem:[%s6897 + $0x9c] sm:$0xf]
      %v6925 = vld [vmem:[%s6897 + $0xa0] sm:$0xf]
      %v6926 = vld [vmem:[%s6897 + $0xa8] sm:$0xf]
      %v6927 = vld [vmem:[%s6897 + $0xac] sm:$0xf]
      %v6928 = vld [vmem:[%s6897 + $0xb4] sm:$0xf]
      %v6929 = vld [vmem:[%s6897 + $0xb8] sm:$0xf]
      %v6962 = vunpack.c.l.b16 %v6898
      %v6963 = vunpack.c.l.b16 %v6899
      %v6964 = vunpack.c.l.b16 %v6900
      %v6965 = vunpack.c.l.b16 %v6901
      %v6966 = vunpack.c.l.b16 %v6902
      %v6967 = vunpack.c.l.b16 %v6903
      %v6968 = vunpack.c.l.b16 %v6904
      %v6969 = vunpack.c.l.b16 %v6905
      %v6970 = vunpack.c.l.b16 %v6906
      %v6971 = vunpack.c.l.b16 %v6907
      %v6972 = vunpack.c.l.b16 %v6908
      %v6973 = vunpack.c.l.b16 %v6909
      %v6974 = vunpack.c.l.b16 %v6910
      %v6975 = vunpack.c.l.b16 %v6911
      %v6976 = vunpack.c.l.b16 %v6912
      %v6977 = vunpack.c.l.b16 %v6913
      %v6978 = vunpack.c.l.b16 %v6914
      %v6979 = vunpack.c.l.b16 %v6915
      %v6980 = vunpack.c.l.b16 %v6916
      %v6981 = vunpack.c.l.b16 %v6917
      %v6982 = vunpack.c.l.b16 %v6918
      %v6983 = vunpack.c.l.b16 %v6919
      %v6984 = vunpack.c.l.b16 %v6920
      %v6985 = vunpack.c.l.b16 %v6921
      %v6986 = vunpack.c.l.b16 %v6922
      %v6987 = vunpack.c.l.b16 %v6923
      %v6988 = vunpack.c.l.b16 %v6924
      %v6989 = vunpack.c.l.b16 %v6925
      %v6990 = vunpack.c.l.b16 %v6926
      %v6991 = vunpack.c.l.b16 %v6927
      %v6992 = vunpack.c.l.b16 %v6928
      %v6993 = vunpack.c.l.b16 %v6929
      %v6994 = vpack.c.b16 %v6963, %v6962
      %v6995 = vpack.c.b16 %v6965, %v6964
      %v6996 = vpack.c.b16 %v6967, %v6966
      %v6997 = vpack.c.b16 %v6969, %v6968
      %v6998 = vpack.c.b16 %v6971, %v6970
      %v6999 = vpack.c.b16 %v6973, %v6972
      %v7000 = vpack.c.b16 %v6975, %v6974
      %v7001 = vpack.c.b16 %v6977, %v6976
      %v7002 = vpack.c.b16 %v6979, %v6978
      %v7003 = vpack.c.b16 %v6981, %v6980
      %v7004 = vpack.c.b16 %v6983, %v6982
      %v7005 = vpack.c.b16 %v6985, %v6984
      %v7006 = vpack.c.b16 %v6987, %v6986
      %v7007 = vpack.c.b16 %v6989, %v6988
      %v7008 = vpack.c.b16 %v6991, %v6990
      %v7009 = vpack.c.b16 %v6993, %v6992
      %7010 = vrot.lane.b32.xlu0 %v6994, 96
      %v7011 = vpop.permute.xlu0 %7010
      %7012 = vrot.lane.b32.xlu0 %v6995, 96
      %v7013 = vpop.permute.xlu0 %7012
      %7014 = vrot.lane.b32.xlu0 %v6996, 96
      %v7015 = vpop.permute.xlu0 %7014
      %7016 = vrot.lane.b32.xlu0 %v6997, 96
      %v7017 = vpop.permute.xlu0 %7016
      %7018 = vrot.lane.b32.xlu0 %v6998, 96
      %v7019 = vpop.permute.xlu0 %7018
      %7020 = vrot.lane.b32.xlu0 %v6999, 96
      %v7021 = vpop.permute.xlu0 %7020
      %7022 = vrot.lane.b32.xlu0 %v7000, 96
      %v7023 = vpop.permute.xlu0 %7022
      %7024 = vrot.lane.b32.xlu0 %v7001, 96
      %v7025 = vpop.permute.xlu0 %7024
      %7026 = vrot.lane.b32.xlu0 %v7002, 96
      %v7027 = vpop.permute.xlu0 %7026
      %7028 = vrot.lane.b32.xlu0 %v7003, 96
      %v7029 = vpop.permute.xlu0 %7028
      %7030 = vrot.lane.b32.xlu0 %v7004, 96
      %v7031 = vpop.permute.xlu0 %7030
      %7032 = vrot.lane.b32.xlu0 %v7005, 96
      %v7033 = vpop.permute.xlu0 %7032
      %7034 = vrot.lane.b32.xlu0 %v7006, 96
      %v7035 = vpop.permute.xlu0 %7034
      %7036 = vrot.lane.b32.xlu0 %v7007, 96
      %v7037 = vpop.permute.xlu0 %7036
      %7038 = vrot.lane.b32.xlu0 %v7008, 96
      %v7039 = vpop.permute.xlu0 %7038
      %7040 = vrot.lane.b32.xlu0 %v7009, 96
      %v7041 = vpop.permute.xlu0 %7040
      %vm7058 = vcmask 917248
      %7059 = vst.msk [vmem:[#allocation4] sm:$0xff] %vm7058, %v7011
      %7060 = vst.msk [vmem:[#allocation4 + $0x10] sm:$0xff] %vm7058, %v7013
      %7061 = vst.msk [vmem:[#allocation4 + $0x20] sm:$0xff] %vm7058, %v7015
      %7062 = vst.msk [vmem:[#allocation4 + $0x30] sm:$0xff] %vm7058, %v7017
      %7063 = vst.msk [vmem:[#allocation4 + $0x40] sm:$0xff] %vm7058, %v7019
      %7064 = vst.msk [vmem:[#allocation4 + $0x50] sm:$0xff] %vm7058, %v7021
      %7065 = vst.msk [vmem:[#allocation4 + $0x60] sm:$0xff] %vm7058, %v7023
      %7066 = vst.msk [vmem:[#allocation4 + $0x70] sm:$0xff] %vm7058, %v7025
      %7067 = vst.msk [vmem:[#allocation4 + $0x80] sm:$0xff] %vm7058, %v7027
      %7068 = vst.msk [vmem:[#allocation4 + $0x90] sm:$0xff] %vm7058, %v7029
      %7069 = vst.msk [vmem:[#allocation4 + $0xa0] sm:$0xff] %vm7058, %v7031
      %7070 = vst.msk [vmem:[#allocation4 + $0xb0] sm:$0xff] %vm7058, %v7033
      %7071 = vst.msk [vmem:[#allocation4 + $0xc0] sm:$0xff] %vm7058, %v7035
      %7072 = vst.msk [vmem:[#allocation4 + $0xd0] sm:$0xff] %vm7058, %v7037
      %7073 = vst.msk [vmem:[#allocation4 + $0xe0] sm:$0xff] %vm7058, %v7039
      %7074 = vst.msk [vmem:[#allocation4 + $0xf0] sm:$0xff] %vm7058, %v7041
      %v7075 = vld [vmem:[%s6897] sm:$0xf]
      %v7076 = vld [vmem:[%s6897 + $0x4] sm:$0xf]
      %v7077 = vld [vmem:[%s6897 + $0x8] sm:$0x1]
      %v7078 = vld [vmem:[%s6897 + $0xc] sm:$0xf]
      %v7079 = vld [vmem:[%s6897 + $0x10] sm:$0xf]
      %v7080 = vld [vmem:[%s6897 + $0x14] sm:$0x1]
      %v7081 = vld [vmem:[%s6897 + $0x18] sm:$0xf]
      %v7082 = vld [vmem:[%s6897 + $0x1c] sm:$0xf]
      %v7083 = vld [vmem:[%s6897 + $0x20] sm:$0x1]
      %v7084 = vld [vmem:[%s6897 + $0x24] sm:$0xf]
      %v7085 = vld [vmem:[%s6897 + $0x28] sm:$0xf]
      %v7086 = vld [vmem:[%s6897 + $0x2c] sm:$0x1]
      %v7087 = vld [vmem:[%s6897 + $0x30] sm:$0xf]
      %v7088 = vld [vmem:[%s6897 + $0x34] sm:$0xf]
      %v7089 = vld [vmem:[%s6897 + $0x38] sm:$0x1]
      %v7090 = vld [vmem:[%s6897 + $0x3c] sm:$0xf]
      %v7091 = vld [vmem:[%s6897 + $0x40] sm:$0xf]
      %v7092 = vld [vmem:[%s6897 + $0x44] sm:$0x1]
      %v7093 = vld [vmem:[%s6897 + $0x48] sm:$0xf]
      %v7094 = vld [vmem:[%s6897 + $0x4c] sm:$0xf]
      %v7095 = vld [vmem:[%s6897 + $0x50] sm:$0x1]
      %v7096 = vld [vmem:[%s6897 + $0x54] sm:$0xf]
      %v7097 = vld [vmem:[%s6897 + $0x58] sm:$0xf]
      %v7098 = vld [vmem:[%s6897 + $0x5c] sm:$0x1]
      %v7099 = vld [vmem:[%s6897 + $0x60] sm:$0xf]
      %v7100 = vld [vmem:[%s6897 + $0x64] sm:$0xf]
      %v7101 = vld [vmem:[%s6897 + $0x68] sm:$0x1]
      %v7102 = vld [vmem:[%s6897 + $0x6c] sm:$0xf]
      %v7103 = vld [vmem:[%s6897 + $0x70] sm:$0xf]
      %v7104 = vld [vmem:[%s6897 + $0x74] sm:$0x1]
      %v7105 = vld [vmem:[%s6897 + $0x78] sm:$0xf]
      %v7106 = vld [vmem:[%s6897 + $0x7c] sm:$0xf]
      %v7107 = vld [vmem:[%s6897 + $0x80] sm:$0x1]
      %v7108 = vld [vmem:[%s6897 + $0x84] sm:$0xf]
      %v7109 = vld [vmem:[%s6897 + $0x88] sm:$0xf]
      %v7110 = vld [vmem:[%s6897 + $0x8c] sm:$0x1]
      %v7111 = vld [vmem:[%s6897 + $0x90] sm:$0xf]
      %v7112 = vld [vmem:[%s6897 + $0x94] sm:$0xf]
      %v7113 = vld [vmem:[%s6897 + $0x98] sm:$0x1]
      %v7114 = vld [vmem:[%s6897 + $0x9c] sm:$0xf]
      %v7115 = vld [vmem:[%s6897 + $0xa0] sm:$0xf]
      %v7116 = vld [vmem:[%s6897 + $0xa4] sm:$0x1]
      %v7117 = vld [vmem:[%s6897 + $0xa8] sm:$0xf]
      %v7118 = vld [vmem:[%s6897 + $0xac] sm:$0xf]
      %v7119 = vld [vmem:[%s6897 + $0xb0] sm:$0x1]
      %v7120 = vld [vmem:[%s6897 + $0xb4] sm:$0xf]
      %v7121 = vld [vmem:[%s6897 + $0xb8] sm:$0xf]
      %v7122 = vld [vmem:[%s6897 + $0xbc] sm:$0x1]
      %v7124 = vshrl.u32 %v7075, 16
      %v7126 = vrot.slane %v7124, 4
      %v7127 = vshll.u32 %v7075, 16
      %v7129 = vrot.slane %v7127, 5
      %v7130 = vor.u32 %v7126, %v7129
      %v7131 = vrot.slane %v7130, 4
      %v7133 = vshll.u32 %v7076, 16
      %v7135 = vrot.slane %v7133, 5
      %v7136 = vsel %vm651, %v7131, %v7135
      %v7137 = vshrl.u32 %v7076, 16
      %v7139 = vrot.slane %v7137, 4
      %v7140 = vor.u32 %v7139, %v7135
      %v7141 = vrot.slane %v7140, 4
      %v7143 = vshll.u32 %v7077, 16
      %v7145 = vrot.slane %v7143, 5
      %v7146 = vsel %vm651, %v7141, %v7145
      %v7148 = vshrl.u32 %v7078, 16
      %v7150 = vrot.slane %v7148, 4
      %v7151 = vshll.u32 %v7078, 16
      %v7153 = vrot.slane %v7151, 5
      %v7154 = vor.u32 %v7150, %v7153
      %v7155 = vrot.slane %v7154, 4
      %v7157 = vshll.u32 %v7079, 16
      %v7159 = vrot.slane %v7157, 5
      %v7160 = vsel %vm651, %v7155, %v7159
      %v7161 = vshrl.u32 %v7079, 16
      %v7163 = vrot.slane %v7161, 4
      %v7164 = vor.u32 %v7163, %v7159
      %v7165 = vrot.slane %v7164, 4
      %v7167 = vshll.u32 %v7080, 16
      %v7169 = vrot.slane %v7167, 5
      %v7170 = vsel %vm651, %v7165, %v7169
      %v7172 = vshrl.u32 %v7081, 16
      %v7174 = vrot.slane %v7172, 4
      %v7175 = vshll.u32 %v7081, 16
      %v7177 = vrot.slane %v7175, 5
      %v7178 = vor.u32 %v7174, %v7177
      %v7179 = vrot.slane %v7178, 4
      %v7181 = vshll.u32 %v7082, 16
      %v7183 = vrot.slane %v7181, 5
      %v7184 = vsel %vm651, %v7179, %v7183
      %v7185 = vshrl.u32 %v7082, 16
      %v7187 = vrot.slane %v7185, 4
      %v7188 = vor.u32 %v7187, %v7183
      %v7189 = vrot.slane %v7188, 4
      %v7191 = vshll.u32 %v7083, 16
      %v7193 = vrot.slane %v7191, 5
      %v7194 = vsel %vm651, %v7189, %v7193
      %v7196 = vshrl.u32 %v7084, 16
      %v7198 = vrot.slane %v7196, 4
      %v7199 = vshll.u32 %v7084, 16
      %v7201 = vrot.slane %v7199, 5
      %v7202 = vor.u32 %v7198, %v7201
      %v7203 = vrot.slane %v7202, 4
      %v7205 = vshll.u32 %v7085, 16
      %v7207 = vrot.slane %v7205, 5
      %v7208 = vsel %vm651, %v7203, %v7207
      %v7209 = vshrl.u32 %v7085, 16
      %v7211 = vrot.slane %v7209, 4
      %v7212 = vor.u32 %v7211, %v7207
      %v7213 = vrot.slane %v7212, 4
      %v7215 = vshll.u32 %v7086, 16
      %v7217 = vrot.slane %v7215, 5
      %v7218 = vsel %vm651, %v7213, %v7217
      %v7220 = vshrl.u32 %v7087, 16
      %v7222 = vrot.slane %v7220, 4
      %v7223 = vshll.u32 %v7087, 16
      %v7225 = vrot.slane %v7223, 5
      %v7226 = vor.u32 %v7222, %v7225
      %v7227 = vrot.slane %v7226, 4
      %v7229 = vshll.u32 %v7088, 16
      %v7231 = vrot.slane %v7229, 5
      %v7232 = vsel %vm651, %v7227, %v7231
      %v7233 = vshrl.u32 %v7088, 16
      %v7235 = vrot.slane %v7233, 4
      %v7236 = vor.u32 %v7235, %v7231
      %v7237 = vrot.slane %v7236, 4
      %v7239 = vshll.u32 %v7089, 16
      %v7241 = vrot.slane %v7239, 5
      %v7242 = vsel %vm651, %v7237, %v7241
      %v7244 = vshrl.u32 %v7090, 16
      %v7246 = vrot.slane %v7244, 4
      %v7247 = vshll.u32 %v7090, 16
      %v7249 = vrot.slane %v7247, 5
      %v7250 = vor.u32 %v7246, %v7249
      %v7251 = vrot.slane %v7250, 4
      %v7253 = vshll.u32 %v7091, 16
      %v7255 = vrot.slane %v7253, 5
      %v7256 = vsel %vm651, %v7251, %v7255
      %v7257 = vshrl.u32 %v7091, 16
      %v7259 = vrot.slane %v7257, 4
      %v7260 = vor.u32 %v7259, %v7255
      %v7261 = vrot.slane %v7260, 4
      %v7263 = vshll.u32 %v7092, 16
      %v7265 = vrot.slane %v7263, 5
      %v7266 = vsel %vm651, %v7261, %v7265
      %v7268 = vshrl.u32 %v7093, 16
      %v7270 = vrot.slane %v7268, 4
      %v7271 = vshll.u32 %v7093, 16
      %v7273 = vrot.slane %v7271, 5
      %v7274 = vor.u32 %v7270, %v7273
      %v7275 = vrot.slane %v7274, 4
      %v7277 = vshll.u32 %v7094, 16
      %v7279 = vrot.slane %v7277, 5
      %v7280 = vsel %vm651, %v7275, %v7279
      %v7281 = vshrl.u32 %v7094, 16
      %v7283 = vrot.slane %v7281, 4
      %v7284 = vor.u32 %v7283, %v7279
      %v7285 = vrot.slane %v7284, 4
      %v7287 = vshll.u32 %v7095, 16
      %v7289 = vrot.slane %v7287, 5
      %v7290 = vsel %vm651, %v7285, %v7289
      %v7292 = vshrl.u32 %v7096, 16
      %v7294 = vrot.slane %v7292, 4
      %v7295 = vshll.u32 %v7096, 16
      %v7297 = vrot.slane %v7295, 5
      %v7298 = vor.u32 %v7294, %v7297
      %v7299 = vrot.slane %v7298, 4
      %v7301 = vshll.u32 %v7097, 16
      %v7303 = vrot.slane %v7301, 5
      %v7304 = vsel %vm651, %v7299, %v7303
      %v7305 = vshrl.u32 %v7097, 16
      %v7307 = vrot.slane %v7305, 4
      %v7308 = vor.u32 %v7307, %v7303
      %v7309 = vrot.slane %v7308, 4
      %v7311 = vshll.u32 %v7098, 16
      %v7313 = vrot.slane %v7311, 5
      %v7314 = vsel %vm651, %v7309, %v7313
      %v7316 = vshrl.u32 %v7099, 16
      %v7318 = vrot.slane %v7316, 4
      %v7319 = vshll.u32 %v7099, 16
      %v7321 = vrot.slane %v7319, 5
      %v7322 = vor.u32 %v7318, %v7321
      %v7323 = vrot.slane %v7322, 4
      %v7325 = vshll.u32 %v7100, 16
      %v7327 = vrot.slane %v7325, 5
      %v7328 = vsel %vm651, %v7323, %v7327
      %v7329 = vshrl.u32 %v7100, 16
      %v7331 = vrot.slane %v7329, 4
      %v7332 = vor.u32 %v7331, %v7327
      %v7333 = vrot.slane %v7332, 4
      %v7335 = vshll.u32 %v7101, 16
      %v7337 = vrot.slane %v7335, 5
      %v7338 = vsel %vm651, %v7333, %v7337
      %v7340 = vshrl.u32 %v7102, 16
      %v7342 = vrot.slane %v7340, 4
      %v7343 = vshll.u32 %v7102, 16
      %v7345 = vrot.slane %v7343, 5
      %v7346 = vor.u32 %v7342, %v7345
      %v7347 = vrot.slane %v7346, 4
      %v7349 = vshll.u32 %v7103, 16
      %v7351 = vrot.slane %v7349, 5
      %v7352 = vsel %vm651, %v7347, %v7351
      %v7353 = vshrl.u32 %v7103, 16
      %v7355 = vrot.slane %v7353, 4
      %v7356 = vor.u32 %v7355, %v7351
      %v7357 = vrot.slane %v7356, 4
      %v7359 = vshll.u32 %v7104, 16
      %v7361 = vrot.slane %v7359, 5
      %v7362 = vsel %vm651, %v7357, %v7361
      %v7364 = vshrl.u32 %v7105, 16
      %v7366 = vrot.slane %v7364, 4
      %v7367 = vshll.u32 %v7105, 16
      %v7369 = vrot.slane %v7367, 5
      %v7370 = vor.u32 %v7366, %v7369
      %v7371 = vrot.slane %v7370, 4
      %v7373 = vshll.u32 %v7106, 16
      %v7375 = vrot.slane %v7373, 5
      %v7376 = vsel %vm651, %v7371, %v7375
      %v7377 = vshrl.u32 %v7106, 16
      %v7379 = vrot.slane %v7377, 4
      %v7380 = vor.u32 %v7379, %v7375
      %v7381 = vrot.slane %v7380, 4
      %v7383 = vshll.u32 %v7107, 16
      %v7385 = vrot.slane %v7383, 5
      %v7386 = vsel %vm651, %v7381, %v7385
      %v7388 = vshrl.u32 %v7108, 16
      %v7390 = vrot.slane %v7388, 4
      %v7391 = vshll.u32 %v7108, 16
      %v7393 = vrot.slane %v7391, 5
      %v7394 = vor.u32 %v7390, %v7393
      %v7395 = vrot.slane %v7394, 4
      %v7397 = vshll.u32 %v7109, 16
      %v7399 = vrot.slane %v7397, 5
      %v7400 = vsel %vm651, %v7395, %v7399
      %v7401 = vshrl.u32 %v7109, 16
      %v7403 = vrot.slane %v7401, 4
      %v7404 = vor.u32 %v7403, %v7399
      %v7405 = vrot.slane %v7404, 4
      %v7407 = vshll.u32 %v7110, 16
      %v7409 = vrot.slane %v7407, 5
      %v7410 = vsel %vm651, %v7405, %v7409
      %v7412 = vshrl.u32 %v7111, 16
      %v7414 = vrot.slane %v7412, 4
      %v7415 = vshll.u32 %v7111, 16
      %v7417 = vrot.slane %v7415, 5
      %v7418 = vor.u32 %v7414, %v7417
      %v7419 = vrot.slane %v7418, 4
      %v7421 = vshll.u32 %v7112, 16
      %v7423 = vrot.slane %v7421, 5
      %v7424 = vsel %vm651, %v7419, %v7423
      %v7425 = vshrl.u32 %v7112, 16
      %v7427 = vrot.slane %v7425, 4
      %v7428 = vor.u32 %v7427, %v7423
      %v7429 = vrot.slane %v7428, 4
      %v7431 = vshll.u32 %v7113, 16
      %v7433 = vrot.slane %v7431, 5
      %v7434 = vsel %vm651, %v7429, %v7433
      %v7436 = vshrl.u32 %v7114, 16
      %v7438 = vrot.slane %v7436, 4
      %v7439 = vshll.u32 %v7114, 16
      %v7441 = vrot.slane %v7439, 5
      %v7442 = vor.u32 %v7438, %v7441
      %v7443 = vrot.slane %v7442, 4
      %v7445 = vshll.u32 %v7115, 16
      %v7447 = vrot.slane %v7445, 5
      %v7448 = vsel %vm651, %v7443, %v7447
      %v7449 = vshrl.u32 %v7115, 16
      %v7451 = vrot.slane %v7449, 4
      %v7452 = vor.u32 %v7451, %v7447
      %v7453 = vrot.slane %v7452, 4
      %v7455 = vshll.u32 %v7116, 16
      %v7457 = vrot.slane %v7455, 5
      %v7458 = vsel %vm651, %v7453, %v7457
      %v7460 = vshrl.u32 %v7117, 16
      %v7462 = vrot.slane %v7460, 4
      %v7463 = vshll.u32 %v7117, 16
      %v7465 = vrot.slane %v7463, 5
      %v7466 = vor.u32 %v7462, %v7465
      %v7467 = vrot.slane %v7466, 4
      %v7469 = vshll.u32 %v7118, 16
      %v7471 = vrot.slane %v7469, 5
      %v7472 = vsel %vm651, %v7467, %v7471
      %v7473 = vshrl.u32 %v7118, 16
      %v7475 = vrot.slane %v7473, 4
      %v7476 = vor.u32 %v7475, %v7471
      %v7477 = vrot.slane %v7476, 4
      %v7479 = vshll.u32 %v7119, 16
      %v7481 = vrot.slane %v7479, 5
      %v7482 = vsel %vm651, %v7477, %v7481
      %v7484 = vshrl.u32 %v7120, 16
      %v7486 = vrot.slane %v7484, 4
      %v7487 = vshll.u32 %v7120, 16
      %v7489 = vrot.slane %v7487, 5
      %v7490 = vor.u32 %v7486, %v7489
      %v7491 = vrot.slane %v7490, 4
      %v7493 = vshll.u32 %v7121, 16
      %v7495 = vrot.slane %v7493, 5
      %v7496 = vsel %vm651, %v7491, %v7495
      %v7497 = vshrl.u32 %v7121, 16
      %v7499 = vrot.slane %v7497, 4
      %v7500 = vor.u32 %v7499, %v7495
      %v7501 = vrot.slane %v7500, 4
      %v7503 = vshll.u32 %v7122, 16
      %v7505 = vrot.slane %v7503, 5
      %v7506 = vsel %vm651, %v7501, %v7505
      %v7507 = vunpack.c.l.b16 %v7136
      %v7508 = vunpack.c.l.b16 %v7146
      %v7509 = vunpack.c.l.b16 %v7160
      %v7510 = vunpack.c.l.b16 %v7170
      %v7511 = vunpack.c.l.b16 %v7184
      %v7512 = vunpack.c.l.b16 %v7194
      %v7513 = vunpack.c.l.b16 %v7208
      %v7514 = vunpack.c.l.b16 %v7218
      %v7515 = vunpack.c.l.b16 %v7232
      %v7516 = vunpack.c.l.b16 %v7242
      %v7517 = vunpack.c.l.b16 %v7256
      %v7518 = vunpack.c.l.b16 %v7266
      %v7519 = vunpack.c.l.b16 %v7280
      %v7520 = vunpack.c.l.b16 %v7290
      %v7521 = vunpack.c.l.b16 %v7304
      %v7522 = vunpack.c.l.b16 %v7314
      %v7523 = vunpack.c.l.b16 %v7328
      %v7524 = vunpack.c.l.b16 %v7338
      %v7525 = vunpack.c.l.b16 %v7352
      %v7526 = vunpack.c.l.b16 %v7362
      %v7527 = vunpack.c.l.b16 %v7376
      %v7528 = vunpack.c.l.b16 %v7386
      %v7529 = vunpack.c.l.b16 %v7400
      %v7530 = vunpack.c.l.b16 %v7410
      %v7531 = vunpack.c.l.b16 %v7424
      %v7532 = vunpack.c.l.b16 %v7434
      %v7533 = vunpack.c.l.b16 %v7448
      %v7534 = vunpack.c.l.b16 %v7458
      %v7535 = vunpack.c.l.b16 %v7472
      %v7536 = vunpack.c.l.b16 %v7482
      %v7537 = vunpack.c.l.b16 %v7496
      %v7538 = vunpack.c.l.b16 %v7506
      %v7539 = vpack.c.b16 %v7508, %v7507
      %v7540 = vpack.c.b16 %v7510, %v7509
      %v7541 = vpack.c.b16 %v7512, %v7511
      %v7542 = vpack.c.b16 %v7514, %v7513
      %v7543 = vpack.c.b16 %v7516, %v7515
      %v7544 = vpack.c.b16 %v7518, %v7517
      %v7545 = vpack.c.b16 %v7520, %v7519
      %v7546 = vpack.c.b16 %v7522, %v7521
      %v7547 = vpack.c.b16 %v7524, %v7523
      %v7548 = vpack.c.b16 %v7526, %v7525
      %v7549 = vpack.c.b16 %v7528, %v7527
      %v7550 = vpack.c.b16 %v7530, %v7529
      %v7551 = vpack.c.b16 %v7532, %v7531
      %v7552 = vpack.c.b16 %v7534, %v7533
      %v7553 = vpack.c.b16 %v7536, %v7535
      %v7554 = vpack.c.b16 %v7538, %v7537
      %7555 = vrot.lane.b32.xlu0 %v7539, 112
      %v7556 = vpop.permute.xlu0 %7555
      %7557 = vrot.lane.b32.xlu0 %v7540, 112
      %v7558 = vpop.permute.xlu0 %7557
      %7559 = vrot.lane.b32.xlu0 %v7541, 112
      %v7560 = vpop.permute.xlu0 %7559
      %7561 = vrot.lane.b32.xlu0 %v7542, 112
      %v7562 = vpop.permute.xlu0 %7561
      %7563 = vrot.lane.b32.xlu0 %v7543, 112
      %v7564 = vpop.permute.xlu0 %7563
      %7565 = vrot.lane.b32.xlu0 %v7544, 112
      %v7566 = vpop.permute.xlu0 %7565
      %7567 = vrot.lane.b32.xlu0 %v7545, 112
      %v7568 = vpop.permute.xlu0 %7567
      %7569 = vrot.lane.b32.xlu0 %v7546, 112
      %v7570 = vpop.permute.xlu0 %7569
      %7571 = vrot.lane.b32.xlu0 %v7547, 112
      %v7572 = vpop.permute.xlu0 %7571
      %7573 = vrot.lane.b32.xlu0 %v7548, 112
      %v7574 = vpop.permute.xlu0 %7573
      %7575 = vrot.lane.b32.xlu0 %v7549, 112
      %v7576 = vpop.permute.xlu0 %7575
      %7577 = vrot.lane.b32.xlu0 %v7550, 112
      %v7578 = vpop.permute.xlu0 %7577
      %7579 = vrot.lane.b32.xlu0 %v7551, 112
      %v7580 = vpop.permute.xlu0 %7579
      %7581 = vrot.lane.b32.xlu0 %v7552, 112
      %v7582 = vpop.permute.xlu0 %7581
      %7583 = vrot.lane.b32.xlu0 %v7553, 112
      %v7584 = vpop.permute.xlu0 %7583
      %7585 = vrot.lane.b32.xlu0 %v7554, 112
      %v7586 = vpop.permute.xlu0 %7585
      %vm7603 = vcmask 1048448
      %7604 = vst.msk [vmem:[#allocation4] sm:$0xff] %vm7603, %v7556
      %7605 = vst.msk [vmem:[#allocation4 + $0x10] sm:$0xff] %vm7603, %v7558
      %7606 = vst.msk [vmem:[#allocation4 + $0x20] sm:$0xff] %vm7603, %v7560
      %7607 = vst.msk [vmem:[#allocation4 + $0x30] sm:$0xff] %vm7603, %v7562
      %7608 = vst.msk [vmem:[#allocation4 + $0x40] sm:$0xff] %vm7603, %v7564
      %7609 = vst.msk [vmem:[#allocation4 + $0x50] sm:$0xff] %vm7603, %v7566
      %7610 = vst.msk [vmem:[#allocation4 + $0x60] sm:$0xff] %vm7603, %v7568
      %7611 = vst.msk [vmem:[#allocation4 + $0x70] sm:$0xff] %vm7603, %v7570
      %7612 = vst.msk [vmem:[#allocation4 + $0x80] sm:$0xff] %vm7603, %v7572
      %7613 = vst.msk [vmem:[#allocation4 + $0x90] sm:$0xff] %vm7603, %v7574
      %7614 = vst.msk [vmem:[#allocation4 + $0xa0] sm:$0xff] %vm7603, %v7576
      %7615 = vst.msk [vmem:[#allocation4 + $0xb0] sm:$0xff] %vm7603, %v7578
      %7616 = vst.msk [vmem:[#allocation4 + $0xc0] sm:$0xff] %vm7603, %v7580
      %7617 = vst.msk [vmem:[#allocation4 + $0xd0] sm:$0xff] %vm7603, %v7582
      %7618 = vst.msk [vmem:[#allocation4 + $0xe0] sm:$0xff] %vm7603, %v7584
      %7619 = vst.msk [vmem:[#allocation4 + $0xf0] sm:$0xff] %vm7603, %v7586
      %v7620 = vld [vmem:[%s6897] sm:$0xe]
      %v7621 = vld [vmem:[%s6897 + $0x4] sm:$0xf]
      %v7622 = vld [vmem:[%s6897 + $0x8] sm:$0x1]
      %v7623 = vld [vmem:[%s6897 + $0xc] sm:$0xe]
      %v7624 = vld [vmem:[%s6897 + $0x10] sm:$0xf]
      %v7625 = vld [vmem:[%s6897 + $0x14] sm:$0x1]
      %v7626 = vld [vmem:[%s6897 + $0x18] sm:$0xe]
      %v7627 = vld [vmem:[%s6897 + $0x1c] sm:$0xf]
      %v7628 = vld [vmem:[%s6897 + $0x20] sm:$0x1]
      %v7629 = vld [vmem:[%s6897 + $0x24] sm:$0xe]
      %v7630 = vld [vmem:[%s6897 + $0x28] sm:$0xf]
      %v7631 = vld [vmem:[%s6897 + $0x2c] sm:$0x1]
      %v7632 = vld [vmem:[%s6897 + $0x30] sm:$0xe]
      %v7633 = vld [vmem:[%s6897 + $0x34] sm:$0xf]
      %v7634 = vld [vmem:[%s6897 + $0x38] sm:$0x1]
      %v7635 = vld [vmem:[%s6897 + $0x3c] sm:$0xe]
      %v7636 = vld [vmem:[%s6897 + $0x40] sm:$0xf]
      %v7637 = vld [vmem:[%s6897 + $0x44] sm:$0x1]
      %v7638 = vld [vmem:[%s6897 + $0x48] sm:$0xe]
      %v7639 = vld [vmem:[%s6897 + $0x4c] sm:$0xf]
      %v7640 = vld [vmem:[%s6897 + $0x50] sm:$0x1]
      %v7641 = vld [vmem:[%s6897 + $0x54] sm:$0xe]
      %v7642 = vld [vmem:[%s6897 + $0x58] sm:$0xf]
      %v7643 = vld [vmem:[%s6897 + $0x5c] sm:$0x1]
      %v7644 = vld [vmem:[%s6897 + $0x60] sm:$0xe]
      %v7645 = vld [vmem:[%s6897 + $0x64] sm:$0xf]
      %v7646 = vld [vmem:[%s6897 + $0x68] sm:$0x1]
      %v7647 = vld [vmem:[%s6897 + $0x6c] sm:$0xe]
      %v7648 = vld [vmem:[%s6897 + $0x70] sm:$0xf]
      %v7649 = vld [vmem:[%s6897 + $0x74] sm:$0x1]
      %v7650 = vld [vmem:[%s6897 + $0x78] sm:$0xe]
      %v7651 = vld [vmem:[%s6897 + $0x7c] sm:$0xf]
      %v7652 = vld [vmem:[%s6897 + $0x80] sm:$0x1]
      %v7653 = vld [vmem:[%s6897 + $0x84] sm:$0xe]
      %v7654 = vld [vmem:[%s6897 + $0x88] sm:$0xf]
      %v7655 = vld [vmem:[%s6897 + $0x8c] sm:$0x1]
      %v7656 = vld [vmem:[%s6897 + $0x90] sm:$0xe]
      %v7657 = vld [vmem:[%s6897 + $0x94] sm:$0xf]
      %v7658 = vld [vmem:[%s6897 + $0x98] sm:$0x1]
      %v7659 = vld [vmem:[%s6897 + $0x9c] sm:$0xe]
      %v7660 = vld [vmem:[%s6897 + $0xa0] sm:$0xf]
      %v7661 = vld [vmem:[%s6897 + $0xa4] sm:$0x1]
      %v7662 = vld [vmem:[%s6897 + $0xa8] sm:$0xe]
      %v7663 = vld [vmem:[%s6897 + $0xac] sm:$0xf]
      %v7664 = vld [vmem:[%s6897 + $0xb0] sm:$0x1]
      %v7665 = vld [vmem:[%s6897 + $0xb4] sm:$0xe]
      %v7666 = vld [vmem:[%s6897 + $0xb8] sm:$0xf]
      %v7667 = vld [vmem:[%s6897 + $0xbc] sm:$0x1]
      %v7716 = vrot.slane %v7620, 5
      %v7717 = vrot.slane %v7716, 4
      %v7718 = vrot.slane %v7621, 5
      %v7719 = vsel %vm1247, %v7717, %v7718
      %v7720 = vrot.slane %v7718, 4
      %v7721 = vrot.slane %v7622, 5
      %v7722 = vsel %vm1247, %v7720, %v7721
      %v7723 = vrot.slane %v7623, 5
      %v7724 = vrot.slane %v7723, 4
      %v7725 = vrot.slane %v7624, 5
      %v7726 = vsel %vm1247, %v7724, %v7725
      %v7727 = vrot.slane %v7725, 4
      %v7728 = vrot.slane %v7625, 5
      %v7729 = vsel %vm1247, %v7727, %v7728
      %v7730 = vrot.slane %v7626, 5
      %v7731 = vrot.slane %v7730, 4
      %v7732 = vrot.slane %v7627, 5
      %v7733 = vsel %vm1247, %v7731, %v7732
      %v7734 = vrot.slane %v7732, 4
      %v7735 = vrot.slane %v7628, 5
      %v7736 = vsel %vm1247, %v7734, %v7735
      %v7737 = vrot.slane %v7629, 5
      %v7738 = vrot.slane %v7737, 4
      %v7739 = vrot.slane %v7630, 5
      %v7740 = vsel %vm1247, %v7738, %v7739
      %v7741 = vrot.slane %v7739, 4
      %v7742 = vrot.slane %v7631, 5
      %v7743 = vsel %vm1247, %v7741, %v7742
      %v7744 = vrot.slane %v7632, 5
      %v7745 = vrot.slane %v7744, 4
      %v7746 = vrot.slane %v7633, 5
      %v7747 = vsel %vm1247, %v7745, %v7746
      %v7748 = vrot.slane %v7746, 4
      %v7749 = vrot.slane %v7634, 5
      %v7750 = vsel %vm1247, %v7748, %v7749
      %v7751 = vrot.slane %v7635, 5
      %v7752 = vrot.slane %v7751, 4
      %v7753 = vrot.slane %v7636, 5
      %v7754 = vsel %vm1247, %v7752, %v7753
      %v7755 = vrot.slane %v7753, 4
      %v7756 = vrot.slane %v7637, 5
      %v7757 = vsel %vm1247, %v7755, %v7756
      %v7758 = vrot.slane %v7638, 5
      %v7759 = vrot.slane %v7758, 4
      %v7760 = vrot.slane %v7639, 5
      %v7761 = vsel %vm1247, %v7759, %v7760
      %v7762 = vrot.slane %v7760, 4
      %v7763 = vrot.slane %v7640, 5
      %v7764 = vsel %vm1247, %v7762, %v7763
      %v7765 = vrot.slane %v7641, 5
      %v7766 = vrot.slane %v7765, 4
      %v7767 = vrot.slane %v7642, 5
      %v7768 = vsel %vm1247, %v7766, %v7767
      %v7769 = vrot.slane %v7767, 4
      %v7770 = vrot.slane %v7643, 5
      %v7771 = vsel %vm1247, %v7769, %v7770
      %v7772 = vrot.slane %v7644, 5
      %v7773 = vrot.slane %v7772, 4
      %v7774 = vrot.slane %v7645, 5
      %v7775 = vsel %vm1247, %v7773, %v7774
      %v7776 = vrot.slane %v7774, 4
      %v7777 = vrot.slane %v7646, 5
      %v7778 = vsel %vm1247, %v7776, %v7777
      %v7779 = vrot.slane %v7647, 5
      %v7780 = vrot.slane %v7779, 4
      %v7781 = vrot.slane %v7648, 5
      %v7782 = vsel %vm1247, %v7780, %v7781
      %v7783 = vrot.slane %v7781, 4
      %v7784 = vrot.slane %v7649, 5
      %v7785 = vsel %vm1247, %v7783, %v7784
      %v7786 = vrot.slane %v7650, 5
      %v7787 = vrot.slane %v7786, 4
      %v7788 = vrot.slane %v7651, 5
      %v7789 = vsel %vm1247, %v7787, %v7788
      %v7790 = vrot.slane %v7788, 4
      %v7791 = vrot.slane %v7652, 5
      %v7792 = vsel %vm1247, %v7790, %v7791
      %v7793 = vrot.slane %v7653, 5
      %v7794 = vrot.slane %v7793, 4
      %v7795 = vrot.slane %v7654, 5
      %v7796 = vsel %vm1247, %v7794, %v7795
      %v7797 = vrot.slane %v7795, 4
      %v7798 = vrot.slane %v7655, 5
      %v7799 = vsel %vm1247, %v7797, %v7798
      %v7800 = vrot.slane %v7656, 5
      %v7801 = vrot.slane %v7800, 4
      %v7802 = vrot.slane %v7657, 5
      %v7803 = vsel %vm1247, %v7801, %v7802
      %v7804 = vrot.slane %v7802, 4
      %v7805 = vrot.slane %v7658, 5
      %v7806 = vsel %vm1247, %v7804, %v7805
      %v7807 = vrot.slane %v7659, 5
      %v7808 = vrot.slane %v7807, 4
      %v7809 = vrot.slane %v7660, 5
      %v7810 = vsel %vm1247, %v7808, %v7809
      %v7811 = vrot.slane %v7809, 4
      %v7812 = vrot.slane %v7661, 5
      %v7813 = vsel %vm1247, %v7811, %v7812
      %v7814 = vrot.slane %v7662, 5
      %v7815 = vrot.slane %v7814, 4
      %v7816 = vrot.slane %v7663, 5
      %v7817 = vsel %vm1247, %v7815, %v7816
      %v7818 = vrot.slane %v7816, 4
      %v7819 = vrot.slane %v7664, 5
      %v7820 = vsel %vm1247, %v7818, %v7819
      %v7821 = vrot.slane %v7665, 5
      %v7822 = vrot.slane %v7821, 4
      %v7823 = vrot.slane %v7666, 5
      %v7824 = vsel %vm1247, %v7822, %v7823
      %v7825 = vrot.slane %v7823, 4
      %v7826 = vrot.slane %v7667, 5
      %v7827 = vsel %vm1247, %v7825, %v7826
      %v7828 = vunpack.c.l.b16 %v7719
      %v7829 = vunpack.c.l.b16 %v7722
      %v7830 = vunpack.c.l.b16 %v7726
      %v7831 = vunpack.c.l.b16 %v7729
      %v7832 = vunpack.c.l.b16 %v7733
      %v7833 = vunpack.c.l.b16 %v7736
      %v7834 = vunpack.c.l.b16 %v7740
      %v7835 = vunpack.c.l.b16 %v7743
      %v7836 = vunpack.c.l.b16 %v7747
      %v7837 = vunpack.c.l.b16 %v7750
      %v7838 = vunpack.c.l.b16 %v7754
      %v7839 = vunpack.c.l.b16 %v7757
      %v7840 = vunpack.c.l.b16 %v7761
      %v7841 = vunpack.c.l.b16 %v7764
      %v7842 = vunpack.c.l.b16 %v7768
      %v7843 = vunpack.c.l.b16 %v7771
      %v7844 = vunpack.c.l.b16 %v7775
      %v7845 = vunpack.c.l.b16 %v7778
      %v7846 = vunpack.c.l.b16 %v7782
      %v7847 = vunpack.c.l.b16 %v7785
      %v7848 = vunpack.c.l.b16 %v7789
      %v7849 = vunpack.c.l.b16 %v7792
      %v7850 = vunpack.c.l.b16 %v7796
      %v7851 = vunpack.c.l.b16 %v7799
      %v7852 = vunpack.c.l.b16 %v7803
      %v7853 = vunpack.c.l.b16 %v7806
      %v7854 = vunpack.c.l.b16 %v7810
      %v7855 = vunpack.c.l.b16 %v7813
      %v7856 = vunpack.c.l.b16 %v7817
      %v7857 = vunpack.c.l.b16 %v7820
      %v7858 = vunpack.c.l.b16 %v7824
      %v7859 = vunpack.c.l.b16 %v7827
      %v7860 = vpack.c.b16 %v7829, %v7828
      %v7861 = vpack.c.b16 %v7831, %v7830
      %v7862 = vpack.c.b16 %v7833, %v7832
      %v7863 = vpack.c.b16 %v7835, %v7834
      %v7864 = vpack.c.b16 %v7837, %v7836
      %v7865 = vpack.c.b16 %v7839, %v7838
      %v7866 = vpack.c.b16 %v7841, %v7840
      %v7867 = vpack.c.b16 %v7843, %v7842
      %v7868 = vpack.c.b16 %v7845, %v7844
      %v7869 = vpack.c.b16 %v7847, %v7846
      %v7870 = vpack.c.b16 %v7849, %v7848
      %v7871 = vpack.c.b16 %v7851, %v7850
      %v7872 = vpack.c.b16 %v7853, %v7852
      %v7873 = vpack.c.b16 %v7855, %v7854
      %v7874 = vpack.c.b16 %v7857, %v7856
      %v7875 = vpack.c.b16 %v7859, %v7858
      %7892 = vst.msk [vmem:[#allocation4 + $0x8] sm:$0xff] %vm3811, %v7860
      %7893 = vst.msk [vmem:[#allocation4 + $0x18] sm:$0xff] %vm3811, %v7861
      %7894 = vst.msk [vmem:[#allocation4 + $0x28] sm:$0xff] %vm3811, %v7862
      %7895 = vst.msk [vmem:[#allocation4 + $0x38] sm:$0xff] %vm3811, %v7863
      %7896 = vst.msk [vmem:[#allocation4 + $0x48] sm:$0xff] %vm3811, %v7864
      %7897 = vst.msk [vmem:[#allocation4 + $0x58] sm:$0xff] %vm3811, %v7865
      %7898 = vst.msk [vmem:[#allocation4 + $0x68] sm:$0xff] %vm3811, %v7866
      %7899 = vst.msk [vmem:[#allocation4 + $0x78] sm:$0xff] %vm3811, %v7867
      %7900 = vst.msk [vmem:[#allocation4 + $0x88] sm:$0xff] %vm3811, %v7868
      %7901 = vst.msk [vmem:[#allocation4 + $0x98] sm:$0xff] %vm3811, %v7869
      %7902 = vst.msk [vmem:[#allocation4 + $0xa8] sm:$0xff] %vm3811, %v7870
      %7903 = vst.msk [vmem:[#allocation4 + $0xb8] sm:$0xff] %vm3811, %v7871
      %7904 = vst.msk [vmem:[#allocation4 + $0xc8] sm:$0xff] %vm3811, %v7872
      %7905 = vst.msk [vmem:[#allocation4 + $0xd8] sm:$0xff] %vm3811, %v7873
      %7906 = vst.msk [vmem:[#allocation4 + $0xe8] sm:$0xff] %vm3811, %v7874
      %7907 = vst.msk [vmem:[#allocation4 + $0xf8] sm:$0xff] %vm3811, %v7875
      %v7908 = vld [vmem:[#allocation4] sm:$0xff]
      %v7909 = vld [vmem:[#allocation4 + $0x8] sm:$0xff]
      %v7910 = vld [vmem:[#allocation4 + $0x10] sm:$0xff]
      %v7911 = vld [vmem:[#allocation4 + $0x18] sm:$0xff]
      %v7912 = vld [vmem:[#allocation4 + $0x20] sm:$0xff]
      %v7913 = vld [vmem:[#allocation4 + $0x28] sm:$0xff]
      %v7914 = vld [vmem:[#allocation4 + $0x30] sm:$0xff]
      %v7915 = vld [vmem:[#allocation4 + $0x38] sm:$0xff]
      %v7916 = vld [vmem:[#allocation4 + $0x40] sm:$0xff]
      %v7917 = vld [vmem:[#allocation4 + $0x48] sm:$0xff]
      %v7918 = vld [vmem:[#allocation4 + $0x50] sm:$0xff]
      %v7919 = vld [vmem:[#allocation4 + $0x58] sm:$0xff]
      %v7920 = vld [vmem:[#allocation4 + $0x60] sm:$0xff]
      %v7921 = vld [vmem:[#allocation4 + $0x68] sm:$0xff]
      %v7922 = vld [vmem:[#allocation4 + $0x70] sm:$0xff]
      %v7923 = vld [vmem:[#allocation4 + $0x78] sm:$0xff]
      %v7924 = vld [vmem:[#allocation4 + $0x80] sm:$0xff]
      %v7925 = vld [vmem:[#allocation4 + $0x88] sm:$0xff]
      %v7926 = vld [vmem:[#allocation4 + $0x90] sm:$0xff]
      %v7927 = vld [vmem:[#allocation4 + $0x98] sm:$0xff]
      %v7928 = vld [vmem:[#allocation4 + $0xa0] sm:$0xff]
      %v7929 = vld [vmem:[#allocation4 + $0xa8] sm:$0xff]
      %v7930 = vld [vmem:[#allocation4 + $0xb0] sm:$0xff]
      %v7931 = vld [vmem:[#allocation4 + $0xb8] sm:$0xff]
      %v7932 = vld [vmem:[#allocation4 + $0xc0] sm:$0xff]
      %v7933 = vld [vmem:[#allocation4 + $0xc8] sm:$0xff]
      %v7934 = vld [vmem:[#allocation4 + $0xd0] sm:$0xff]
      %v7935 = vld [vmem:[#allocation4 + $0xd8] sm:$0xff]
      %v7936 = vld [vmem:[#allocation4 + $0xe0] sm:$0xff]
      %v7937 = vld [vmem:[#allocation4 + $0xe8] sm:$0xff]
      %v7938 = vld [vmem:[#allocation4 + $0xf0] sm:$0xff]
      %v7939 = vld [vmem:[#allocation4 + $0xf8] sm:$0xff]
      %v7940 = vld [vmem:[%s5] sm:$0xf]
      %v7941 = vld [vmem:[%s5 + $0x4] sm:$0xf]
      %v7942 = vld [vmem:[%s5 + $0x8] sm:$0xf]
      %v7943 = vld [vmem:[%s5 + $0xc] sm:$0xf]
      %v7944 = vld [vmem:[%s5 + $0x10] sm:$0xf]
      %v7945 = vld [vmem:[%s5 + $0x14] sm:$0xf]
      %v7946 = vld [vmem:[%s5 + $0x18] sm:$0xf]
      %v7947 = vld [vmem:[%s5 + $0x1c] sm:$0xf]
      %v7948 = vld [vmem:[%s5 + $0x20] sm:$0xf]
      %v7949 = vld [vmem:[%s5 + $0x24] sm:$0xf]
      %v7950 = vld [vmem:[%s5 + $0x28] sm:$0xf]
      %v7951 = vld [vmem:[%s5 + $0x2c] sm:$0xf]
      %v7952 = vld [vmem:[%s5 + $0x30] sm:$0xf]
      %v7953 = vld [vmem:[%s5 + $0x34] sm:$0xf]
      %v7954 = vld [vmem:[%s5 + $0x38] sm:$0xf]
      %v7955 = vld [vmem:[%s5 + $0x3c] sm:$0xf]
      %v7956 = vld [vmem:[%s5 + $0x40] sm:$0xf]
      %v7957 = vld [vmem:[%s5 + $0x44] sm:$0xf]
      %v7976 = vunpack.c.l.b16 %v7940
      %v7977 = vunpack.c.l.b16 %v7941
      %v7978 = vunpack.c.l.b16 %v7942
      %v7979 = vunpack.c.l.b16 %v7943
      %v7980 = vunpack.c.l.b16 %v7944
      %v7981 = vunpack.c.l.b16 %v7945
      %v7982 = vunpack.c.l.b16 %v7946
      %v7983 = vunpack.c.l.b16 %v7947
      %v7984 = vunpack.c.l.b16 %v7948
      %v7985 = vunpack.c.l.b16 %v7949
      %v7986 = vunpack.c.l.b16 %v7950
      %v7987 = vunpack.c.l.b16 %v7951
      %v7988 = vunpack.c.l.b16 %v7952
      %v7989 = vunpack.c.l.b16 %v7953
      %v7990 = vunpack.c.l.b16 %v7954
      %v7991 = vunpack.c.l.b16 %v7955
      %v7992 = vunpack.c.l.b16 %v7956
      %v7993 = vunpack.c.l.b16 %v7957
      %v7994 = vpack.c.b16 %v7977, %v7976
      %v7995 = vpack.c.b16 %v7979, %v7978
      %v7996 = vpack.c.b16 %v7981, %v7980
      %v7997 = vpack.c.b16 %v7983, %v7982
      %v7998 = vpack.c.b16 %v7985, %v7984
      %v7999 = vpack.c.b16 %v7987, %v7986
      %v8000 = vpack.c.b16 %v7989, %v7988
      %v8001 = vpack.c.b16 %v7991, %v7990
      %v8002 = vpack.c.b16 %v7993, %v7992
      %v8013 = vsel %vm3811, %v7909, 0
      %v8016 = vsel %vm3811, %v7911, 0
      %v8019 = vsel %vm3811, %v7913, 0
      %v8022 = vsel %vm3811, %v7915, 0
      %v8025 = vsel %vm3811, %v7917, 0
      %v8028 = vsel %vm3811, %v7919, 0
      %v8031 = vsel %vm3811, %v7921, 0
      %v8034 = vsel %vm3811, %v7923, 0
      %v8037 = vsel %vm3811, %v7925, 0
      %v8040 = vsel %vm3811, %v7927, 0
      %v8043 = vsel %vm3811, %v7929, 0
      %v8046 = vsel %vm3811, %v7931, 0
      %v8049 = vsel %vm3811, %v7933, 0
      %v8052 = vsel %vm3811, %v7935, 0
      %v8055 = vsel %vm3811, %v7937, 0
      %v8058 = vsel %vm3811, %v7939, 0
      %8060 = vmatprep.subr.bf16.mxu0 0
      %8061 = vmatpush1.bf16.msra.mxu0 %v7994
      %8062 = vmatprep.subr.bf16.mxu0 0
      %8063 = vmatpush1.bf16.msra.mxu0 %v7995
      %8064 = vmatprep.subr.bf16.mxu0 0
      %8065 = vmatpush1.bf16.msra.mxu0 %v7996
      %8066 = vmatprep.subr.bf16.mxu0 0
      %8067 = vmatpush1.bf16.msra.mxu0 %v7997
      %8068 = vmatprep.subr.bf16.mxu0 0
      %8069 = vmatpush1.bf16.msra.mxu0 %v7998
      %8070 = vmatprep.subr.bf16.mxu0 0
      %8071 = vmatpush1.bf16.msra.mxu0 %v7999
      %8072 = vmatprep.subr.bf16.mxu0 0
      %8073 = vmatpush1.bf16.msra.mxu0 %v8000
      %8074 = vmatprep.subr.bf16.mxu0 0
      %8075 = vmatpush1.bf16.msra.mxu0 %v8001
      %8076 = vmatprep.subr.bf16.mxu0 0
      %8077 = vmatpush1.bf16.msra.mxu0 %v8002
      %8078 = vmatprep.subr.bf16.mxu0 0
      %8079 = vmatpush1.bf16.msra.mxu0 0
      %8080 = vmatprep.subr.bf16.mxu0 0
      %8081 = vmatpush1.bf16.msra.mxu0 0
      %8082 = vmatprep.subr.bf16.mxu0 0
      %8083 = vmatpush1.bf16.msra.mxu0 0
      %8084 = vmatprep.subr.bf16.mxu0 0
      %8085 = vmatpush1.bf16.msra.mxu0 0
      %8086 = vmatprep.subr.bf16.mxu0 0
      %8087 = vmatpush1.bf16.msra.mxu0 0
      %8088 = vmatprep.subr.bf16.mxu0 0
      %8089 = vmatpush1.bf16.msra.mxu0 0
      %8090 = vmatprep.subr.bf16.mxu0 0
      %8091 = vmatpush1.bf16.msra.mxu0 0
      %8092 = vmatprep.mubr.bf16.mxu0 %v8013
      %8093 = vmatmul.mubr.bf16.gmra.mrb[0].mxu0 %v7908
      %v8094 = vpop.f32.mrb[0].mxu0
      %v8095 = vadd.f32 0.0, %v8094
      %v8096 = vpop.f32.mrb[0].mxu0
      %v8097 = vpop.f32.mrb[0].mxu0
      %v8098 = vadd.f32 0.0, %v8097
      %v8099 = vpop.f32.mrb[0].mxu0
      %8100 = vmatprep.mubr.bf16.mxu0 %v8016
      %8101 = vmatmul.mubr.bf16.gmra.mrb[0].mxu0 %v7910
      %v8102 = vpop.f32.mrb[0].mxu0
      %v8103 = vadd.f32 0.0, %v8102
      %v8104 = vpop.f32.mrb[0].mxu0
      %v8105 = vpop.f32.mrb[0].mxu0
      %v8106 = vadd.f32 0.0, %v8105
      %v8107 = vpop.f32.mrb[0].mxu0
      %8108 = vmatprep.mubr.bf16.mxu0 %v8019
      %8109 = vmatmul.mubr.bf16.gmra.mrb[0].mxu0 %v7912
      %v8110 = vpop.f32.mrb[0].mxu0
      %v8111 = vadd.f32 0.0, %v8110
      %v8112 = vpop.f32.mrb[0].mxu0
      %v8113 = vpop.f32.mrb[0].mxu0
      %v8114 = vadd.f32 0.0, %v8113
      %v8115 = vpop.f32.mrb[0].mxu0
      %8116 = vmatprep.mubr.bf16.mxu0 %v8022
      %8117 = vmatmul.mubr.bf16.gmra.mrb[0].mxu0 %v7914
      %v8118 = vpop.f32.mrb[0].mxu0
      %v8119 = vadd.f32 0.0, %v8118
      %v8120 = vpop.f32.mrb[0].mxu0
      %v8121 = vpop.f32.mrb[0].mxu0
      %v8122 = vadd.f32 0.0, %v8121
      %v8123 = vpop.f32.mrb[0].mxu0
      %8124 = vmatprep.mubr.bf16.mxu0 %v8025
      %8125 = vmatmul.mubr.bf16.gmra.mrb[0].mxu0 %v7916
      %v8126 = vpop.f32.mrb[0].mxu0
      %v8127 = vadd.f32 0.0, %v8126
      %v8128 = vpop.f32.mrb[0].mxu0
      %v8129 = vpop.f32.mrb[0].mxu0
      %v8130 = vadd.f32 0.0, %v8129
      %v8131 = vpop.f32.mrb[0].mxu0
      %8132 = vmatprep.mubr.bf16.mxu0 %v8028
      %8133 = vmatmul.mubr.bf16.gmra.mrb[0].mxu0 %v7918
      %v8134 = vpop.f32.mrb[0].mxu0
      %v8135 = vadd.f32 0.0, %v8134
      %v8136 = vpop.f32.mrb[0].mxu0
      %v8137 = vpop.f32.mrb[0].mxu0
      %v8138 = vadd.f32 0.0, %v8137
      %v8139 = vpop.f32.mrb[0].mxu0
      %8140 = vmatprep.mubr.bf16.mxu0 %v8031
      %8141 = vmatmul.mubr.bf16.gmra.mrb[0].mxu0 %v7920
      %v8142 = vpop.f32.mrb[0].mxu0
      %v8143 = vadd.f32 0.0, %v8142
      %v8144 = vpop.f32.mrb[0].mxu0
      %v8145 = vpop.f32.mrb[0].mxu0
      %v8146 = vadd.f32 0.0, %v8145
      %v8147 = vpop.f32.mrb[0].mxu0
      %8148 = vmatprep.mubr.bf16.mxu0 %v8034
      %8149 = vmatmul.mubr.bf16.gmra.mrb[0].mxu0 %v7922
      %v8150 = vpop.f32.mrb[0].mxu0
      %v8151 = vadd.f32 0.0, %v8150
      %v8152 = vpop.f32.mrb[0].mxu0
      %v8153 = vpop.f32.mrb[0].mxu0
      %v8154 = vadd.f32 0.0, %v8153
      %v8155 = vpop.f32.mrb[0].mxu0
      %8156 = vmatprep.mubr.bf16.mxu0 %v8037
      %8157 = vmatmul.mubr.bf16.gmra.mrb[0].mxu0 %v7924
      %v8158 = vpop.f32.mrb[0].mxu0
      %v8159 = vadd.f32 0.0, %v8158
      %v8160 = vpop.f32.mrb[0].mxu0
      %v8161 = vpop.f32.mrb[0].mxu0
      %v8162 = vadd.f32 0.0, %v8161
      %v8163 = vpop.f32.mrb[0].mxu0
      %8164 = vmatprep.mubr.bf16.mxu0 %v8040
      %8165 = vmatmul.mubr.bf16.gmra.mrb[0].mxu0 %v7926
      %v8166 = vpop.f32.mrb[0].mxu0
      %v8167 = vadd.f32 0.0, %v8166
      %v8168 = vpop.f32.mrb[0].mxu0
      %v8169 = vpop.f32.mrb[0].mxu0
      %v8170 = vadd.f32 0.0, %v8169
      %v8171 = vpop.f32.mrb[0].mxu0
      %8172 = vmatprep.mubr.bf16.mxu0 %v8043
      %8173 = vmatmul.mubr.bf16.gmra.mrb[0].mxu0 %v7928
      %v8174 = vpop.f32.mrb[0].mxu0
      %v8175 = vadd.f32 0.0, %v8174
      %v8176 = vpop.f32.mrb[0].mxu0
      %v8177 = vpop.f32.mrb[0].mxu0
      %v8178 = vadd.f32 0.0, %v8177
      %v8179 = vpop.f32.mrb[0].mxu0
      %8180 = vmatprep.mubr.bf16.mxu0 %v8046
      %8181 = vmatmul.mubr.bf16.gmra.mrb[0].mxu0 %v7930
      %v8182 = vpop.f32.mrb[0].mxu0
      %v8183 = vadd.f32 0.0, %v8182
      %v8184 = vpop.f32.mrb[0].mxu0
      %v8185 = vpop.f32.mrb[0].mxu0
      %v8186 = vadd.f32 0.0, %v8185
      %v8187 = vpop.f32.mrb[0].mxu0
      %8188 = vmatprep.mubr.bf16.mxu0 %v8049
      %8189 = vmatmul.mubr.bf16.gmra.mrb[0].mxu0 %v7932
      %v8190 = vpop.f32.mrb[0].mxu0
      %v8191 = vadd.f32 0.0, %v8190
      %v8192 = vpop.f32.mrb[0].mxu0
      %v8193 = vpop.f32.mrb[0].mxu0
      %v8194 = vadd.f32 0.0, %v8193
      %v8195 = vpop.f32.mrb[0].mxu0
      %8196 = vmatprep.mubr.bf16.mxu0 %v8052
      %8197 = vmatmul.mubr.bf16.gmra.mrb[0].mxu0 %v7934
      %v8198 = vpop.f32.mrb[0].mxu0
      %v8199 = vadd.f32 0.0, %v8198
      %v8200 = vpop.f32.mrb[0].mxu0
      %v8201 = vpop.f32.mrb[0].mxu0
      %v8202 = vadd.f32 0.0, %v8201
      %v8203 = vpop.f32.mrb[0].mxu0
      %8204 = vmatprep.mubr.bf16.mxu0 %v8055
      %8205 = vmatmul.mubr.bf16.gmra.mrb[0].mxu0 %v7936
      %v8206 = vpop.f32.mrb[0].mxu0
      %v8207 = vadd.f32 0.0, %v8206
      %v8208 = vpop.f32.mrb[0].mxu0
      %v8209 = vpop.f32.mrb[0].mxu0
      %v8210 = vadd.f32 0.0, %v8209
      %v8211 = vpop.f32.mrb[0].mxu0
      %8212 = vmatprep.mubr.bf16.mxu0 %v8058
      %8213 = vmatmul.mubr.bf16.gmra.mrb[0].mxu0 %v7938
      %v8214 = vpop.f32.mrb[0].mxu0
      %v8215 = vadd.f32 0.0, %v8214
      %v8216 = vpop.f32.mrb[0].mxu0
      %v8217 = vpop.f32.mrb[0].mxu0
      %v8218 = vadd.f32 0.0, %v8217
      %v8219 = vpop.f32.mrb[0].mxu0
      %8220 = vdwg.mxu0
      %v8221 = vsel %vm3811, %v8095, 0.0
      %v8222 = vsel %vm3811, %v8098, 0.0
      %v8223 = vadd.f32 %v8221, %v8222
      %v8224 = vsel %vm3811, %v8103, 0.0
      %v8225 = vadd.f32 %v8223, %v8224
      %v8226 = vsel %vm3811, %v8106, 0.0
      %v8227 = vadd.f32 %v8225, %v8226
      %v8228 = vsel %vm3811, %v8111, 0.0
      %v8229 = vadd.f32 %v8227, %v8228
      %v8230 = vsel %vm3811, %v8114, 0.0
      %v8231 = vadd.f32 %v8229, %v8230
      %v8232 = vsel %vm3811, %v8119, 0.0
      %v8233 = vadd.f32 %v8231, %v8232
      %v8234 = vsel %vm3811, %v8122, 0.0
      %v8235 = vadd.f32 %v8233, %v8234
      %v8236 = vsel %vm3811, %v8127, 0.0
      %v8237 = vadd.f32 %v8235, %v8236
      %v8238 = vsel %vm3811, %v8130, 0.0
      %v8239 = vadd.f32 %v8237, %v8238
      %v8240 = vsel %vm3811, %v8135, 0.0
      %v8241 = vadd.f32 %v8239, %v8240
      %v8242 = vsel %vm3811, %v8138, 0.0
      %v8243 = vadd.f32 %v8241, %v8242
      %v8244 = vsel %vm3811, %v8143, 0.0
      %v8245 = vadd.f32 %v8243, %v8244
      %v8246 = vsel %vm3811, %v8146, 0.0
      %v8247 = vadd.f32 %v8245, %v8246
      %v8248 = vsel %vm3811, %v8151, 0.0
      %v8249 = vadd.f32 %v8247, %v8248
      %v8250 = vsel %vm3811, %v8154, 0.0
      %v8251 = vadd.f32 %v8249, %v8250
      %v8252 = vsel %vm3811, %v8159, 0.0
      %v8253 = vadd.f32 %v8251, %v8252
      %v8254 = vsel %vm3811, %v8162, 0.0
      %v8255 = vadd.f32 %v8253, %v8254
      %v8256 = vsel %vm3811, %v8167, 0.0
      %v8257 = vadd.f32 %v8255, %v8256
      %v8258 = vsel %vm3811, %v8170, 0.0
      %v8259 = vadd.f32 %v8257, %v8258
      %v8260 = vsel %vm3811, %v8175, 0.0
      %v8261 = vadd.f32 %v8259, %v8260
      %v8262 = vsel %vm3811, %v8178, 0.0
      %v8263 = vadd.f32 %v8261, %v8262
      %v8264 = vsel %vm3811, %v8183, 0.0
      %v8265 = vadd.f32 %v8263, %v8264
      %v8266 = vsel %vm3811, %v8186, 0.0
      %v8267 = vadd.f32 %v8265, %v8266
      %v8268 = vsel %vm3811, %v8191, 0.0
      %v8269 = vadd.f32 %v8267, %v8268
      %v8270 = vsel %vm3811, %v8194, 0.0
      %v8271 = vadd.f32 %v8269, %v8270
      %v8272 = vsel %vm3811, %v8199, 0.0
      %v8273 = vadd.f32 %v8271, %v8272
      %v8274 = vsel %vm3811, %v8202, 0.0
      %v8275 = vadd.f32 %v8273, %v8274
      %v8276 = vsel %vm3811, %v8207, 0.0
      %v8277 = vadd.f32 %v8275, %v8276
      %v8278 = vsel %vm3811, %v8210, 0.0
      %v8279 = vadd.f32 %v8277, %v8278
      %v8280 = vsel %vm3811, %v8215, 0.0
      %v8281 = vadd.f32 %v8279, %v8280
      %v8282 = vsel %vm3811, %v8218, 0.0
      %v8283 = vadd.f32 %v8281, %v8282
      %v8284 = vrot.slane %v8283, 4
      %v8285 = vadd.f32 %v8283, %v8284
      %v8286 = vrot.slane %v8285, 2
      %v8287 = vadd.f32 %v8285, %v8286
      %v8288 = vrot.slane %v8287, 1
      %v8289 = vadd.f32 %v8287, %v8288
      %v8290 = vmul.f32 %v8095, %v8095
      %v8291 = vmul.f32 %v8098, %v8098
      %v8292 = vmul.f32 %v8103, %v8103
      %v8293 = vmul.f32 %v8106, %v8106
      %v8294 = vmul.f32 %v8111, %v8111
      %v8295 = vmul.f32 %v8114, %v8114
      %v8296 = vmul.f32 %v8119, %v8119
      %v8297 = vmul.f32 %v8122, %v8122
      %v8298 = vmul.f32 %v8127, %v8127
      %v8299 = vmul.f32 %v8130, %v8130
      %v8300 = vmul.f32 %v8135, %v8135
      %v8301 = vmul.f32 %v8138, %v8138
      %v8302 = vmul.f32 %v8143, %v8143
      %v8303 = vmul.f32 %v8146, %v8146
      %v8304 = vmul.f32 %v8151, %v8151
      %v8305 = vmul.f32 %v8154, %v8154
      %v8306 = vmul.f32 %v8159, %v8159
      %v8307 = vmul.f32 %v8162, %v8162
      %v8308 = vmul.f32 %v8167, %v8167
      %v8309 = vmul.f32 %v8170, %v8170
      %v8310 = vmul.f32 %v8175, %v8175
      %v8311 = vmul.f32 %v8178, %v8178
      %v8312 = vmul.f32 %v8183, %v8183
      %v8313 = vmul.f32 %v8186, %v8186
      %v8314 = vmul.f32 %v8191, %v8191
      %v8315 = vmul.f32 %v8194, %v8194
      %v8316 = vmul.f32 %v8199, %v8199
      %v8317 = vmul.f32 %v8202, %v8202
      %v8318 = vmul.f32 %v8207, %v8207
      %v8319 = vmul.f32 %v8210, %v8210
      %v8320 = vmul.f32 %v8215, %v8215
      %v8321 = vmul.f32 %v8218, %v8218
      %v8322 = vsel %vm3811, %v8290, 0.0
      %v8323 = vsel %vm3811, %v8291, 0.0
      %v8324 = vadd.f32 %v8322, %v8323
      %v8325 = vsel %vm3811, %v8292, 0.0
      %v8326 = vadd.f32 %v8324, %v8325
      %v8327 = vsel %vm3811, %v8293, 0.0
      %v8328 = vadd.f32 %v8326, %v8327
      %v8329 = vsel %vm3811, %v8294, 0.0
      %v8330 = vadd.f32 %v8328, %v8329
      %v8331 = vsel %vm3811, %v8295, 0.0
      %v8332 = vadd.f32 %v8330, %v8331
      %v8333 = vsel %vm3811, %v8296, 0.0
      %v8334 = vadd.f32 %v8332, %v8333
      %v8335 = vsel %vm3811, %v8297, 0.0
      %v8336 = vadd.f32 %v8334, %v8335
      %v8337 = vsel %vm3811, %v8298, 0.0
      %v8338 = vadd.f32 %v8336, %v8337
      %v8339 = vsel %vm3811, %v8299, 0.0
      %v8340 = vadd.f32 %v8338, %v8339
      %v8341 = vsel %vm3811, %v8300, 0.0
      %v8342 = vadd.f32 %v8340, %v8341
      %v8343 = vsel %vm3811, %v8301, 0.0
      %v8344 = vadd.f32 %v8342, %v8343
      %v8345 = vsel %vm3811, %v8302, 0.0
      %v8346 = vadd.f32 %v8344, %v8345
      %v8347 = vsel %vm3811, %v8303, 0.0
      %v8348 = vadd.f32 %v8346, %v8347
      %v8349 = vsel %vm3811, %v8304, 0.0
      %v8350 = vadd.f32 %v8348, %v8349
      %v8351 = vsel %vm3811, %v8305, 0.0
      %v8352 = vadd.f32 %v8350, %v8351
      %v8353 = vsel %vm3811, %v8306, 0.0
      %v8354 = vadd.f32 %v8352, %v8353
      %v8355 = vsel %vm3811, %v8307, 0.0
      %v8356 = vadd.f32 %v8354, %v8355
      %v8357 = vsel %vm3811, %v8308, 0.0
      %v8358 = vadd.f32 %v8356, %v8357
      %v8359 = vsel %vm3811, %v8309, 0.0
      %v8360 = vadd.f32 %v8358, %v8359
      %v8361 = vsel %vm3811, %v8310, 0.0
      %v8362 = vadd.f32 %v8360, %v8361
      %v8363 = vsel %vm3811, %v8311, 0.0
      %v8364 = vadd.f32 %v8362, %v8363
      %v8365 = vsel %vm3811, %v8312, 0.0
      %v8366 = vadd.f32 %v8364, %v8365
      %v8367 = vsel %vm3811, %v8313, 0.0
      %v8368 = vadd.f32 %v8366, %v8367
      %v8369 = vsel %vm3811, %v8314, 0.0
      %v8370 = vadd.f32 %v8368, %v8369
      %v8371 = vsel %vm3811, %v8315, 0.0
      %v8372 = vadd.f32 %v8370, %v8371
      %v8373 = vsel %vm3811, %v8316, 0.0
      %v8374 = vadd.f32 %v8372, %v8373
      %v8375 = vsel %vm3811, %v8317, 0.0
      %v8376 = vadd.f32 %v8374, %v8375
      %v8377 = vsel %vm3811, %v8318, 0.0
      %v8378 = vadd.f32 %v8376, %v8377
      %v8379 = vsel %vm3811, %v8319, 0.0
      %v8380 = vadd.f32 %v8378, %v8379
      %v8381 = vsel %vm3811, %v8320, 0.0
      %v8382 = vadd.f32 %v8380, %v8381
      %v8383 = vsel %vm3811, %v8321, 0.0
      %v8384 = vadd.f32 %v8382, %v8383
      %v8385 = vrot.slane %v8384, 4
      %v8386 = vadd.f32 %v8384, %v8385
      %v8387 = vrot.slane %v8386, 2
      %v8388 = vadd.f32 %v8386, %v8387
      %v8389 = vrot.slane %v8388, 1
      %v8390 = vadd.f32 %v8388, %v8389
      %v8391 = vld [vmem:[%s6] sm:$0xff]
      %v8392 = vld [vmem:[%s6 + $0x8] sm:$0xff]
      %v8394 = vsel %vm3811, %v8289, 0
      %8396 = vmatprep.subr.mxu0 0.0
      %8397 = vmatpush1.msra.mxu0 %v8391
      %8398 = vmatprep.subr.mxu0 0.0
      %8399 = vmatpush1.msra.mxu0 %v8392
      %8400 = vmatprep.subr.mxu0 0.0
      %8401 = vmatpush1.msra.mxu0 0.0
      %8402 = vmatprep.subr.mxu0 0.0
      %8403 = vmatpush1.msra.mxu0 0.0
      %8404 = vmatprep.subr.mxu0 0.0
      %8405 = vmatpush1.msra.mxu0 0.0
      %8406 = vmatprep.subr.mxu0 0.0
      %8407 = vmatpush1.msra.mxu0 0.0
      %8408 = vmatprep.subr.mxu0 0.0
      %8409 = vmatpush1.msra.mxu0 0.0
      %8410 = vmatprep.subr.mxu0 0.0
      %8411 = vmatpush1.msra.mxu0 0.0
      %8412 = vmatprep.subr.mxu0 0.0
      %8413 = vmatpush1.msra.mxu0 0.0
      %8414 = vmatprep.subr.mxu0 0.0
      %8415 = vmatpush1.msra.mxu0 0.0
      %8416 = vmatprep.subr.mxu0 0.0
      %8417 = vmatpush1.msra.mxu0 0.0
      %8418 = vmatprep.subr.mxu0 0.0
      %8419 = vmatpush1.msra.mxu0 0.0
      %8420 = vmatprep.subr.mxu0 0.0
      %8421 = vmatpush1.msra.mxu0 0.0
      %8422 = vmatprep.subr.mxu0 0.0
      %8423 = vmatpush1.msra.mxu0 0.0
      %8424 = vmatprep.subr.mxu0 0.0
      %8425 = vmatpush1.msra.mxu0 0.0
      %8426 = vmatprep.subr.mxu0 0.0
      %8427 = vmatpush1.msra.mxu0 0.0
      %8428 = vmatprep.subr.mxu0 0.0
      %8429 = vmatpush1.msra.mxu0 0.0
      %8430 = vmatprep.subr.mxu0 0.0
      %8431 = vmatpush1.msra.mxu0 0.0
      %8432 = vmatprep.subr.mxu0 0.0
      %8433 = vmatpush1.msra.mxu0 0.0
      %8434 = vmatprep.subr.mxu0 0.0
      %8435 = vmatpush1.msra.mxu0 0.0
      %8436 = vmatprep.subr.mxu0 0.0
      %8437 = vmatpush1.msra.mxu0 0.0
      %8438 = vmatprep.subr.mxu0 0.0
      %8439 = vmatpush1.msra.mxu0 0.0
      %8440 = vmatprep.subr.mxu0 0.0
      %8441 = vmatpush1.msra.mxu0 0.0
      %8442 = vmatprep.subr.mxu0 0.0
      %8443 = vmatpush1.msra.mxu0 0.0
      %8444 = vmatprep.subr.mxu0 0.0
      %8445 = vmatpush1.msra.mxu0 0.0
      %8446 = vmatprep.subr.mxu0 0.0
      %8447 = vmatpush1.msra.mxu0 0.0
      %8448 = vmatprep.subr.mxu0 0.0
      %8449 = vmatpush1.msra.mxu0 0.0
      %8450 = vmatprep.subr.mxu0 0.0
      %8451 = vmatpush1.msra.mxu0 0.0
      %8452 = vmatprep.subr.mxu0 0.0
      %8453 = vmatpush1.msra.mxu0 0.0
      %8454 = vmatprep.subr.mxu0 0.0
      %8455 = vmatpush1.msra.mxu0 0.0
      %8456 = vmatprep.subr.mxu0 0.0
      %8457 = vmatpush1.msra.mxu0 0.0
      %8458 = vmatprep.subr.mxu0 0.0
      %8459 = vmatpush1.msra.mxu0 0.0
      %8460 = vmatprep.mubr.f32.mxu0 0.0
      %8461 = vmatmul.mubr.f32.gmra.mrb[0].mxu0 %v8394
      %v8462 = vpop.f32.mrb[0].mxu0
      %v8463 = vadd.f32 0.0, %v8462
      %v8464 = vpop.f32.mrb[0].mxu0
      %8465 = vdwg.mxu0
      %v8467 = vsel %vm3811, %v8390, 0
      %8469 = vmatprep.subr.mxu0 0.0
      %8470 = vmatpush1.msra.mxu0 %v8391
      %8471 = vmatprep.subr.mxu0 0.0
      %8472 = vmatpush1.msra.mxu0 %v8392
      %8473 = vmatprep.subr.mxu0 0.0
      %8474 = vmatpush1.msra.mxu0 0.0
      %8475 = vmatprep.subr.mxu0 0.0
      %8476 = vmatpush1.msra.mxu0 0.0
      %8477 = vmatprep.subr.mxu0 0.0
      %8478 = vmatpush1.msra.mxu0 0.0
      %8479 = vmatprep.subr.mxu0 0.0
      %8480 = vmatpush1.msra.mxu0 0.0
      %8481 = vmatprep.subr.mxu0 0.0
      %8482 = vmatpush1.msra.mxu0 0.0
      %8483 = vmatprep.subr.mxu0 0.0
      %8484 = vmatpush1.msra.mxu0 0.0
      %8485 = vmatprep.subr.mxu0 0.0
      %8486 = vmatpush1.msra.mxu0 0.0
      %8487 = vmatprep.subr.mxu0 0.0
      %8488 = vmatpush1.msra.mxu0 0.0
      %8489 = vmatprep.subr.mxu0 0.0
      %8490 = vmatpush1.msra.mxu0 0.0
      %8491 = vmatprep.subr.mxu0 0.0
      %8492 = vmatpush1.msra.mxu0 0.0
      %8493 = vmatprep.subr.mxu0 0.0
      %8494 = vmatpush1.msra.mxu0 0.0
      %8495 = vmatprep.subr.mxu0 0.0
      %8496 = vmatpush1.msra.mxu0 0.0
      %8497 = vmatprep.subr.mxu0 0.0
      %8498 = vmatpush1.msra.mxu0 0.0
      %8499 = vmatprep.subr.mxu0 0.0
      %8500 = vmatpush1.msra.mxu0 0.0
      %8501 = vmatprep.subr.mxu0 0.0
      %8502 = vmatpush1.msra.mxu0 0.0
      %8503 = vmatprep.subr.mxu0 0.0
      %8504 = vmatpush1.msra.mxu0 0.0
      %8505 = vmatprep.subr.mxu0 0.0
      %8506 = vmatpush1.msra.mxu0 0.0
      %8507 = vmatprep.subr.mxu0 0.0
      %8508 = vmatpush1.msra.mxu0 0.0
      %8509 = vmatprep.subr.mxu0 0.0
      %8510 = vmatpush1.msra.mxu0 0.0
      %8511 = vmatprep.subr.mxu0 0.0
      %8512 = vmatpush1.msra.mxu0 0.0
      %8513 = vmatprep.subr.mxu0 0.0
      %8514 = vmatpush1.msra.mxu0 0.0
      %8515 = vmatprep.subr.mxu0 0.0
      %8516 = vmatpush1.msra.mxu0 0.0
      %8517 = vmatprep.subr.mxu0 0.0
      %8518 = vmatpush1.msra.mxu0 0.0
      %8519 = vmatprep.subr.mxu0 0.0
      %8520 = vmatpush1.msra.mxu0 0.0
      %8521 = vmatprep.subr.mxu0 0.0
      %8522 = vmatpush1.msra.mxu0 0.0
      %8523 = vmatprep.subr.mxu0 0.0
      %8524 = vmatpush1.msra.mxu0 0.0
      %8525 = vmatprep.subr.mxu0 0.0
      %8526 = vmatpush1.msra.mxu0 0.0
      %8527 = vmatprep.subr.mxu0 0.0
      %8528 = vmatpush1.msra.mxu0 0.0
      %8529 = vmatprep.subr.mxu0 0.0
      %8530 = vmatpush1.msra.mxu0 0.0
      %8531 = vmatprep.subr.mxu0 0.0
      %8532 = vmatpush1.msra.mxu0 0.0
      %8533 = vmatprep.mubr.f32.mxu0 0.0
      %8534 = vmatmul.mubr.f32.gmra.mrb[0].mxu0 %v8467
      %v8535 = vpop.f32.mrb[0].mxu0
      %v8536 = vadd.f32 0.0, %v8535
      %v8537 = vpop.f32.mrb[0].mxu0
      %8538 = vdwg.mxu0
      %v8539 = vmul.f32 %v8463, %v8463
      %v8540 = vsub.f32 %v8536, %v8539
      %v8541 = vld [vmem:[%s7] sm:$0x1]
      %v8542 = vadd.f32 %v8540, 1e-05
      %v8543 = vrsqrt.pop %v8542
      %v8544 = vmul.f32 %v8541, %v8543
      %v8545 = vld [vmem:[%s8] sm:$0x1]
      %v8546 = vmul.f32 %v8463, %v8544
      %v8547 = vsub.f32 %v8545, %v8546
      %v8549 = vlaneseq
      %v8550 = vshrl.u32 %v8549, 7
      %v8551 = vsub.s32 0, %v8550
      %v8552 = vrot.slane %v8544, %v8551
      %v8554 = vmul.f32 %v8095, %v8552
      %v8555 = vmul.f32 %v8098, %v8552
      %v8556 = vmul.f32 %v8103, %v8552
      %v8557 = vmul.f32 %v8106, %v8552
      %v8558 = vmul.f32 %v8111, %v8552
      %v8559 = vmul.f32 %v8114, %v8552
      %v8560 = vmul.f32 %v8119, %v8552
      %v8561 = vmul.f32 %v8122, %v8552
      %v8562 = vmul.f32 %v8127, %v8552
      %v8563 = vmul.f32 %v8130, %v8552
      %v8564 = vmul.f32 %v8135, %v8552
      %v8565 = vmul.f32 %v8138, %v8552
      %v8566 = vmul.f32 %v8143, %v8552
      %v8567 = vmul.f32 %v8146, %v8552
      %v8568 = vmul.f32 %v8151, %v8552
      %v8569 = vmul.f32 %v8154, %v8552
      %v8570 = vmul.f32 %v8159, %v8552
      %v8571 = vmul.f32 %v8162, %v8552
      %v8572 = vmul.f32 %v8167, %v8552
      %v8573 = vmul.f32 %v8170, %v8552
      %v8574 = vmul.f32 %v8175, %v8552
      %v8575 = vmul.f32 %v8178, %v8552
      %v8576 = vmul.f32 %v8183, %v8552
      %v8577 = vmul.f32 %v8186, %v8552
      %v8578 = vmul.f32 %v8191, %v8552
      %v8579 = vmul.f32 %v8194, %v8552
      %v8580 = vmul.f32 %v8199, %v8552
      %v8581 = vmul.f32 %v8202, %v8552
      %v8582 = vmul.f32 %v8207, %v8552
      %v8583 = vmul.f32 %v8210, %v8552
      %v8584 = vmul.f32 %v8215, %v8552
      %v8585 = vmul.f32 %v8218, %v8552
      %v8587 = vlaneseq
      %v8588 = vshrl.u32 %v8587, 7
      %v8589 = vsub.s32 0, %v8588
      %v8590 = vrot.slane %v8547, %v8589
      %v8592 = vadd.f32 %v8554, %v8590
      %v8593 = vadd.f32 %v8555, %v8590
      %v8594 = vadd.f32 %v8556, %v8590
      %v8595 = vadd.f32 %v8557, %v8590
      %v8596 = vadd.f32 %v8558, %v8590
      %v8597 = vadd.f32 %v8559, %v8590
      %v8598 = vadd.f32 %v8560, %v8590
      %v8599 = vadd.f32 %v8561, %v8590
      %v8600 = vadd.f32 %v8562, %v8590
      %v8601 = vadd.f32 %v8563, %v8590
      %v8602 = vadd.f32 %v8564, %v8590
      %v8603 = vadd.f32 %v8565, %v8590
      %v8604 = vadd.f32 %v8566, %v8590
      %v8605 = vadd.f32 %v8567, %v8590
      %v8606 = vadd.f32 %v8568, %v8590
      %v8607 = vadd.f32 %v8569, %v8590
      %v8608 = vadd.f32 %v8570, %v8590
      %v8609 = vadd.f32 %v8571, %v8590
      %v8610 = vadd.f32 %v8572, %v8590
      %v8611 = vadd.f32 %v8573, %v8590
      %v8612 = vadd.f32 %v8574, %v8590
      %v8613 = vadd.f32 %v8575, %v8590
      %v8614 = vadd.f32 %v8576, %v8590
      %v8615 = vadd.f32 %v8577, %v8590
      %v8616 = vadd.f32 %v8578, %v8590
      %v8617 = vadd.f32 %v8579, %v8590
      %v8618 = vadd.f32 %v8580, %v8590
      %v8619 = vadd.f32 %v8581, %v8590
      %v8620 = vadd.f32 %v8582, %v8590
      %v8621 = vadd.f32 %v8583, %v8590
      %v8622 = vadd.f32 %v8584, %v8590
      %v8623 = vadd.f32 %v8585, %v8590
      %vm8624 = vcmp.gt.f32.partialorder %v8592, 0.0
      %vm8625 = vcmp.gt.f32.partialorder %v8593, 0.0
      %vm8626 = vcmp.gt.f32.partialorder %v8594, 0.0
      %vm8627 = vcmp.gt.f32.partialorder %v8595, 0.0
      %vm8628 = vcmp.gt.f32.partialorder %v8596, 0.0
      %vm8629 = vcmp.gt.f32.partialorder %v8597, 0.0
      %vm8630 = vcmp.gt.f32.partialorder %v8598, 0.0
      %vm8631 = vcmp.gt.f32.partialorder %v8599, 0.0
      %vm8632 = vcmp.gt.f32.partialorder %v8600, 0.0
      %vm8633 = vcmp.gt.f32.partialorder %v8601, 0.0
      %vm8634 = vcmp.gt.f32.partialorder %v8602, 0.0
      %vm8635 = vcmp.gt.f32.partialorder %v8603, 0.0
      %vm8636 = vcmp.gt.f32.partialorder %v8604, 0.0
      %vm8637 = vcmp.gt.f32.partialorder %v8605, 0.0
      %vm8638 = vcmp.gt.f32.partialorder %v8606, 0.0
      %vm8639 = vcmp.gt.f32.partialorder %v8607, 0.0
      %vm8640 = vcmp.gt.f32.partialorder %v8608, 0.0
      %vm8641 = vcmp.gt.f32.partialorder %v8609, 0.0
      %vm8642 = vcmp.gt.f32.partialorder %v8610, 0.0
      %vm8643 = vcmp.gt.f32.partialorder %v8611, 0.0
      %vm8644 = vcmp.gt.f32.partialorder %v8612, 0.0
      %vm8645 = vcmp.gt.f32.partialorder %v8613, 0.0
      %vm8646 = vcmp.gt.f32.partialorder %v8614, 0.0
      %vm8647 = vcmp.gt.f32.partialorder %v8615, 0.0
      %vm8648 = vcmp.gt.f32.partialorder %v8616, 0.0
      %vm8649 = vcmp.gt.f32.partialorder %v8617, 0.0
      %vm8650 = vcmp.gt.f32.partialorder %v8618, 0.0
      %vm8651 = vcmp.gt.f32.partialorder %v8619, 0.0
      %vm8652 = vcmp.gt.f32.partialorder %v8620, 0.0
      %vm8653 = vcmp.gt.f32.partialorder %v8621, 0.0
      %vm8654 = vcmp.gt.f32.partialorder %v8622, 0.0
      %vm8655 = vcmp.gt.f32.partialorder %v8623, 0.0
      %v8656 = vmul.f32 %v8592, 0.01
      %v8657 = vmul.f32 %v8593, 0.01
      %v8658 = vmul.f32 %v8594, 0.01
      %v8659 = vmul.f32 %v8595, 0.01
      %v8660 = vmul.f32 %v8596, 0.01
      %v8661 = vmul.f32 %v8597, 0.01
      %v8662 = vmul.f32 %v8598, 0.01
      %v8663 = vmul.f32 %v8599, 0.01
      %v8664 = vmul.f32 %v8600, 0.01
      %v8665 = vmul.f32 %v8601, 0.01
      %v8666 = vmul.f32 %v8602, 0.01
      %v8667 = vmul.f32 %v8603, 0.01
      %v8668 = vmul.f32 %v8604, 0.01
      %v8669 = vmul.f32 %v8605, 0.01
      %v8670 = vmul.f32 %v8606, 0.01
      %v8671 = vmul.f32 %v8607, 0.01
      %v8672 = vmul.f32 %v8608, 0.01
      %v8673 = vmul.f32 %v8609, 0.01
      %v8674 = vmul.f32 %v8610, 0.01
      %v8675 = vmul.f32 %v8611, 0.01
      %v8676 = vmul.f32 %v8612, 0.01
      %v8677 = vmul.f32 %v8613, 0.01
      %v8678 = vmul.f32 %v8614, 0.01
      %v8679 = vmul.f32 %v8615, 0.01
      %v8680 = vmul.f32 %v8616, 0.01
      %v8681 = vmul.f32 %v8617, 0.01
      %v8682 = vmul.f32 %v8618, 0.01
      %v8683 = vmul.f32 %v8619, 0.01
      %v8684 = vmul.f32 %v8620, 0.01
      %v8685 = vmul.f32 %v8621, 0.01
      %v8686 = vmul.f32 %v8622, 0.01
      %v8687 = vmul.f32 %v8623, 0.01
      %v8688 = vsel %vm8624, %v8592, %v8656
      %v8689 = vsel %vm8625, %v8593, %v8657
      %v8690 = vsel %vm8626, %v8594, %v8658
      %v8691 = vsel %vm8627, %v8595, %v8659
      %v8692 = vsel %vm8628, %v8596, %v8660
      %v8693 = vsel %vm8629, %v8597, %v8661
      %v8694 = vsel %vm8630, %v8598, %v8662
      %v8695 = vsel %vm8631, %v8599, %v8663
      %v8696 = vsel %vm8632, %v8600, %v8664
      %v8697 = vsel %vm8633, %v8601, %v8665
      %v8698 = vsel %vm8634, %v8602, %v8666
      %v8699 = vsel %vm8635, %v8603, %v8667
      %v8700 = vsel %vm8636, %v8604, %v8668
      %v8701 = vsel %vm8637, %v8605, %v8669
      %v8702 = vsel %vm8638, %v8606, %v8670
      %v8703 = vsel %vm8639, %v8607, %v8671
      %v8704 = vsel %vm8640, %v8608, %v8672
      %v8705 = vsel %vm8641, %v8609, %v8673
      %v8706 = vsel %vm8642, %v8610, %v8674
      %v8707 = vsel %vm8643, %v8611, %v8675
      %v8708 = vsel %vm8644, %v8612, %v8676
      %v8709 = vsel %vm8645, %v8613, %v8677
      %v8710 = vsel %vm8646, %v8614, %v8678
      %v8711 = vsel %vm8647, %v8615, %v8679
      %v8712 = vsel %vm8648, %v8616, %v8680
      %v8713 = vsel %vm8649, %v8617, %v8681
      %v8714 = vsel %vm8650, %v8618, %v8682
      %v8715 = vsel %vm8651, %v8619, %v8683
      %v8716 = vsel %vm8652, %v8620, %v8684
      %v8717 = vsel %vm8653, %v8621, %v8685
      %v8718 = vsel %vm8654, %v8622, %v8686
      %v8719 = vsel %vm8655, %v8623, %v8687
      %8720 = vst.msk [vmem:[%s332] sm:$0xff] %vm3811, %v8688
      %8721 = vst.msk [vmem:[%s332 + $0x8] sm:$0xff] %vm3811, %v8689
      %8722 = vst.msk [vmem:[%s332 + $0x10] sm:$0xff] %vm3811, %v8690
      %8723 = vst.msk [vmem:[%s332 + $0x18] sm:$0xff] %vm3811, %v8691
      %8724 = vst.msk [vmem:[%s332 + $0x20] sm:$0xff] %vm3811, %v8692
      %8725 = vst.msk [vmem:[%s332 + $0x28] sm:$0xff] %vm3811, %v8693
      %8726 = vst.msk [vmem:[%s332 + $0x30] sm:$0xff] %vm3811, %v8694
      %8727 = vst.msk [vmem:[%s332 + $0x38] sm:$0xff] %vm3811, %v8695
      %8728 = vst.msk [vmem:[%s332 + $0x40] sm:$0xff] %vm3811, %v8696
      %8729 = vst.msk [vmem:[%s332 + $0x48] sm:$0xff] %vm3811, %v8697
      %8730 = vst.msk [vmem:[%s332 + $0x50] sm:$0xff] %vm3811, %v8698
      %8731 = vst.msk [vmem:[%s332 + $0x58] sm:$0xff] %vm3811, %v8699
      %8732 = vst.msk [vmem:[%s332 + $0x60] sm:$0xff] %vm3811, %v8700
      %8733 = vst.msk [vmem:[%s332 + $0x68] sm:$0xff] %vm3811, %v8701
      %8734 = vst.msk [vmem:[%s332 + $0x70] sm:$0xff] %vm3811, %v8702
      %8735 = vst.msk [vmem:[%s332 + $0x78] sm:$0xff] %vm3811, %v8703
      %8736 = vst.msk [vmem:[%s332 + $0x80] sm:$0xff] %vm3811, %v8704
      %8737 = vst.msk [vmem:[%s332 + $0x88] sm:$0xff] %vm3811, %v8705
      %8738 = vst.msk [vmem:[%s332 + $0x90] sm:$0xff] %vm3811, %v8706
      %8739 = vst.msk [vmem:[%s332 + $0x98] sm:$0xff] %vm3811, %v8707
      %8740 = vst.msk [vmem:[%s332 + $0xa0] sm:$0xff] %vm3811, %v8708
      %8741 = vst.msk [vmem:[%s332 + $0xa8] sm:$0xff] %vm3811, %v8709
      %8742 = vst.msk [vmem:[%s332 + $0xb0] sm:$0xff] %vm3811, %v8710
      %8743 = vst.msk [vmem:[%s332 + $0xb8] sm:$0xff] %vm3811, %v8711
      %8744 = vst.msk [vmem:[%s332 + $0xc0] sm:$0xff] %vm3811, %v8712
      %8745 = vst.msk [vmem:[%s332 + $0xc8] sm:$0xff] %vm3811, %v8713
      %8746 = vst.msk [vmem:[%s332 + $0xd0] sm:$0xff] %vm3811, %v8714
      %8747 = vst.msk [vmem:[%s332 + $0xd8] sm:$0xff] %vm3811, %v8715
      %8748 = vst.msk [vmem:[%s332 + $0xe0] sm:$0xff] %vm3811, %v8716
      %8749 = vst.msk [vmem:[%s332 + $0xe8] sm:$0xff] %vm3811, %v8717
      %8750 = vst.msk [vmem:[%s332 + $0xf0] sm:$0xff] %vm3811, %v8718
      %8751 = vst.msk [vmem:[%s332 + $0xf8] sm:$0xff] %vm3811, %v8719
      %p8752 = scmp.lt.s32.totalorder %s20, 1
      %s8753 = scalar_select %p8752, %s20, 1
      %s8754 = smul.addr %s8753, 32
      %s8755 = smul.addr %s8754, 8
      %s8756 = scalar_lea.vmem %s9, %s8755
      // Predicated region
      $region57: #{_double_conv_impl.1} parent=55 // pred_check
        %p8757 = pneg %p232
      $region58: #{_double_conv_impl.1} parent=55 // pred_check_branch
        %8759 = sbr.rel (%p8757) target = $region60
      $region59: #{_double_conv_impl.1} parent=55 // pred_region
        _
      $region60: #{_double_conv_impl.1} parent=55 // pred_fallthru
        _
    $region56: #{_double_conv_impl.1} parent=5 // pred_fallthru
      _
    %p8760 = scmp.le.s32.totalorder 2, %s15
    // Predicated region
    $region61: #{_double_conv_impl.1} parent=5 // pred_check
      %p8761 = pneg %p8760
    $region62: #{_double_conv_impl.1} parent=5 // pred_check_branch
      %8763 = sbr.rel (%p8761) target = $region64
    $region63: #{_double_conv_impl.1} parent=5 // pred_region
      %s8764 = ssub.s32 %s15, 2
      // Predicated region
      $region65: #{_double_conv_impl.1} parent=63 // pred_check
        %p8765 = pneg %p238
      $region66: #{_double_conv_impl.1} parent=63 // pred_check_branch
        %8767 = sbr.rel (%p8765) target = $region68
      $region67: #{_double_conv_impl.1} parent=63 // pred_region
        %p8768 = scmp.lt.s32.totalorder %s21, 1
        %s8769 = scalar_select %p8768, %s21, 1
        %s8770 = smul.addr %s8769, 32
        %s8771 = smul.addr %s8770, 8
        %s8772 = scalar_lea.vmem %s9, %s8771
      $region68: #{_double_conv_impl.1} parent=63 // pred_fallthru
        _
    $region64: #{_double_conv_impl.1} parent=5 // pred_fallthru
      _
  $region6: #{_double_conv_impl.1} parent=0 // loop_footer
    %s19 = sadd.s32 1, %s15
  $region7: #{_double_conv_impl.1} parent=0 // loop_footer_branch
    %14 = sbr.rel target = $region3
  $region8: #{_double_conv_impl.1} parent=0 // loop_exit
    _

</llo_original>
